<compile_context>
chip_gen: v7x
topology: tpu7x:2x2x1
jax: 0.10.0
libtpu: 0.0.40
codegen_flags: <defaults>
</compile_context>

<pallas_src>
import functools
import math

import jax
import jax.numpy as jnp
from jax.experimental import pallas as pl
from jax.experimental.pallas import tpu as pltpu


# ---------------------------------------------------------------------------
# In-kernel helpers
# ---------------------------------------------------------------------------
def _layer_norm(x, gamma, beta, eps=1e-5):
    mu = jnp.mean(x, axis=-1, keepdims=True)
    var = jnp.mean((x - mu) ** 2, axis=-1, keepdims=True)
    return (x - mu) * jax.lax.rsqrt(var + eps) * gamma + beta


def _head_batched_attention(q3, k3, v3, head_mask, *, head_dim, mxu_dtype,
                            exact_softmax):
    """Head-batched attention without per-head lane slicing.

    q3: (Bt, Nq, E), k3/v3: (Bt, M, E), head_mask: (H, 1, E).
    Queries are expanded to (Bt, H*Nq, E) with all columns outside head h
    zeroed, so one batched score matmul and one batched context matmul cover
    every head; heads are recombined with the same mask plus a sum over H.
    Returns (attn (Bt, Nq, E) f32, softmax weights p (Bt, H*Nq, M) f32).
    """
    bt, nq, e = q3.shape
    h = head_mask.shape[0]
    inv_scale = 1.0 / math.sqrt(head_dim)

    # (Bt,1,Nq,E) * (1,H,1,E) -> (Bt,H,Nq,E) masked, pre-scaled queries.
    qm = ((q3 * inv_scale)[:, None, :, :] * head_mask[None]).reshape(bt, h * nq, e)

    s = jnp.einsum('bqe,bme->bqm', qm.astype(mxu_dtype), k3.astype(mxu_dtype),
                   preferred_element_type=jnp.float32)            # (Bt,H*Nq,M)
    s = s - jnp.max(s, axis=-1, keepdims=True)
    es = jnp.exp(s)
    denom = jnp.sum(es, axis=-1, keepdims=True)
    if exact_softmax:
        p = es / denom                                            # exact (stored)
    else:
        p = es * pl.reciprocal(denom, approx=True)                # EUP slot

    ctx = jnp.einsum('bqm,bme->bqe', p.astype(mxu_dtype), v3.astype(mxu_dtype),
                     preferred_element_type=jnp.float32)          # (Bt,H*Nq,E)
    attn = jnp.sum(ctx.reshape(bt, h, nq, e) * head_mask[None], axis=1)
    return attn, p


def _mhcac_branch(x3, p3, wq_ref, wkv_ref, w1_ref, w2_ref, vE_ref, vW_ref,
                  qmask, head_mask, *, head_dim, mxu_dtype):
    """One MHCACLayer forward for a block of `Bt` batch elements."""
    bt, np_, e = x3.shape
    m, d = p3.shape[1], p3.shape[2]
    rows = bt * np_

    # ---- per-expert Q projection as ONE deep matmul (K = Np*E) ------------
    # X_blk[b, n, :] = x[b, n] placed in expert-n's E-wide column block.
    xb = jnp.concatenate([x3] * np_, axis=-1) * qmask[None]       # (Bt,Np,Np*E)
    bq = vE_ref[0:np_, :]                                         # (Np, E)
    q3 = jnp.dot(xb.reshape(rows, np_ * e).astype(mxu_dtype),
                 wq_ref[...].astype(mxu_dtype),
                 preferred_element_type=jnp.float32).reshape(bt, np_, e)
    q3 = q3 + bq[None, :, :]

    # ---- fused K/V projection on the whole (Bt*M, D) slab ------------------
    bkv = vW_ref[0:1, 0:2 * e]                                    # (1, 2E)
    kv = jnp.dot(p3.reshape(bt * m, d).astype(mxu_dtype),
                 wkv_ref[...].astype(mxu_dtype),
                 preferred_element_type=jnp.float32) + bkv        # (Bt*M, 2E)
    kv3 = kv.reshape(bt, m, 2 * e)
    k3 = kv3[:, :, :e]
    v3 = kv3[:, :, e:]

    attn3, p = _head_batched_attention(q3, k3, v3, head_mask,
                                       head_dim=head_dim, mxu_dtype=mxu_dtype,
                                       exact_softmax=True)

    # ---- residual + LayerNorm + FFN on the (Bt*Np, E) slab ------------------
    n1_g = vE_ref[np_:np_ + 1, :]
    n1_b = vE_ref[np_ + 1:np_ + 2, :]
    n2_g = vE_ref[np_ + 2:np_ + 3, :]
    n2_b = vE_ref[np_ + 3:np_ + 4, :]
    ff_b2 = vE_ref[np_ + 4:np_ + 5, :]
    ff_b1 = vW_ref[1:2, :]

    x = x3.reshape(rows, e)
    h1 = _layer_norm(x + attn3.reshape(rows, e), n1_g, n1_b)
    ff = jnp.dot(h1.astype(mxu_dtype), w1_ref[...].astype(mxu_dtype),
                 preferred_element_type=jnp.float32) + ff_b1
    ff = jnp.maximum(ff, 0.0)
    ff = jnp.dot(ff.astype(mxu_dtype), w2_ref[...].astype(mxu_dtype),
                 preferred_element_type=jnp.float32) + ff_b2
    out = _layer_norm(h1 + ff, n2_g, n2_b)
    return out, p                                   # (rows, E), (Bt, H*Np, M)


def _fusion_branch(vit_s, cnn_s, wf_ref, wqkv_ref, wo_ref, vE_ref, bqkv_ref,
                   head_mask, *, block_b, n_pad, head_dim, mxu_dtype):
    """Fusion FFN + LayerNorm + self-attention + out-proj + LayerNorm."""
    rows, e = vit_s.shape
    bf_ = vE_ref[0:1, :]
    nf_g = vE_ref[1:2, :]
    nf_b = vE_ref[2:3, :]
    bo = vE_ref[3:4, :]
    ns_g = vE_ref[4:5, :]
    ns_b = vE_ref[5:6, :]

    # concat([vit, cnn]) @ Wf  ==  vit @ Wf[:E] + cnn @ Wf[E:]  (no lane concat)
    wf = wf_ref[...].astype(mxu_dtype)
    f = (jnp.dot(vit_s.astype(mxu_dtype), wf[:e, :],
                 preferred_element_type=jnp.float32)
         + jnp.dot(cnn_s.astype(mxu_dtype), wf[e:, :],
                   preferred_element_type=jnp.float32)
         + bf_)
    f = jnp.maximum(f, 0.0)
    x = _layer_norm(f, nf_g, nf_b)                               # (rows, E)

    # Fused QKV projection: one matmul, lane slices at E offsets.
    qkv = jnp.dot(x.astype(mxu_dtype), wqkv_ref[...].astype(mxu_dtype),
                  preferred_element_type=jnp.float32) + bqkv_ref[...]
    q3 = qkv[:, :e].reshape(block_b, n_pad, e)
    k3 = qkv[:, e:2 * e].reshape(block_b, n_pad, e)
    v3 = qkv[:, 2 * e:].reshape(block_b, n_pad, e)

    attn3, _ = _head_batched_attention(q3, k3, v3, head_mask,
                                       head_dim=head_dim, mxu_dtype=mxu_dtype,
                                       exact_softmax=False)
    refined = jnp.dot(attn3.reshape(rows, e).astype(mxu_dtype),
                      wo_ref[...].astype(mxu_dtype),
                      preferred_element_type=jnp.float32) + bo
    return _layer_norm(refined + x, ns_g, ns_b)


# ---------------------------------------------------------------------------
# Fused kernel: full ExpertTokenCrossAttention forward, Bt batch elements/step
# ---------------------------------------------------------------------------
def _etca_kernel(
    # batched data blocks
    vit_x_ref, cnn_x_ref, vit_p_ref, cnn_p_ref,
    # replicated masks (hoisted out of the body)
    qmask_ref, hmask_ref,
    # vit MHCAC params
    vit_wq_ref, vit_wkv_ref, vit_w1_ref, vit_w2_ref, vit_vE_ref, vit_vW_ref,
    # cnn MHCAC params
    cnn_wq_ref, cnn_wkv_ref, cnn_w1_ref, cnn_w2_ref, cnn_vE_ref, cnn_vW_ref,
    # fusion params
    wf_ref, wqkv_ref, wo_ref, fus_vE_ref, fus_bqkv_ref,
    # outputs
    tok_ref, vit_out_ref, cnn_out_ref, vit_attw_ref, cnn_attw_ref,
    *, head_dim, n_pad, block_b, mxu_dtype):
    bt, np_ = block_b, n_pad
    e = vit_x_ref.shape[-1]
    qmask = qmask_ref[...]          # (Np, Np*E)
    head_mask = hmask_ref[...]      # (H, 1, E)

    vit_out, vit_w = _mhcac_branch(
        vit_x_ref[...], vit_p_ref[...],
        vit_wq_ref, vit_wkv_ref, vit_w1_ref, vit_w2_ref, vit_vE_ref, vit_vW_ref,
        qmask, head_mask, head_dim=head_dim, mxu_dtype=mxu_dtype)
    cnn_out, cnn_w = _mhcac_branch(
        cnn_x_ref[...], cnn_p_ref[...],
        cnn_wq_ref, cnn_wkv_ref, cnn_w1_ref, cnn_w2_ref, cnn_vE_ref, cnn_vW_ref,
        qmask, head_mask, head_dim=head_dim, mxu_dtype=mxu_dtype)
    tokens = _fusion_branch(
        vit_out, cnn_out, wf_ref, wqkv_ref, wo_ref, fus_vE_ref, fus_bqkv_ref,
        head_mask, block_b=bt, n_pad=np_, head_dim=head_dim, mxu_dtype=mxu_dtype)

    tok_ref[...] = tokens.reshape(bt, np_, e).astype(tok_ref.dtype)
    vit_out_ref[...] = vit_out.reshape(bt, np_, e).astype(vit_out_ref.dtype)
    cnn_out_ref[...] = cnn_out.reshape(bt, np_, e).astype(cnn_out_ref.dtype)
    vit_attw_ref[...] = vit_w.astype(vit_attw_ref.dtype)   # (Bt, H*Np, Mv)
    cnn_attw_ref[...] = cnn_w.astype(cnn_attw_ref.dtype)   # (Bt, H*Np, Mc)


# ---------------------------------------------------------------------------
# Wrapper helpers
# ---------------------------------------------------------------------------
def _pick_block_b(batch, max_block=8):
    """Fold as much batch into one grid step as possible (<= max_block rows of
    batch) while keeping >= 2 grid steps (v7x second TensorCore)."""
    divisors = [d for d in range(1, min(batch, max_block) + 1) if batch % d == 0]
    bb = max(divisors)
    if batch // bb < 2:
        two_step = [d for d in divisors if batch // d >= 2]
        if two_step:
            bb = max(two_step)
    return bb


def _build_masks(n_pad, embed_dim, num_heads, head_dim):
    col = jnp.arange(n_pad * embed_dim, dtype=jnp.int32)[None, :]
    row = jnp.arange(n_pad, dtype=jnp.int32)[:, None]
    qmask = (col // embed_dim == row).astype(jnp.float32)          # (Np, Np*E)
    lane = jnp.arange(embed_dim, dtype=jnp.int32)[None, None, :]
    hid = jnp.arange(num_heads, dtype=jnp.int32)[:, None, None]
    hmask = (lane // head_dim == hid).astype(jnp.float32)          # (H, 1, E)
    return qmask, hmask


def _pack_mhcac_params(p, n, n_pad, e):
    # Stacked per-expert weight for the block-diagonal Q projection.
    wq_stk = jnp.transpose(p["wq"], (0, 2, 1)).reshape(n * e, e)   # (N*E, E)
    wq_stk = jnp.pad(wq_stk, ((0, (n_pad - n) * e), (0, 0)))       # (Np*E, E)
    bq = jnp.pad(p["bq"], ((0, n_pad - n), (0, 0)))                # (Np, E)
    vec_e = jnp.concatenate(
        [bq, p["n1_g"], p["n1_b"], p["n2_g"], p["n2_b"], p["ff_b2"]], axis=0)
    bkv_pad = jnp.pad(p["bkv"], ((0, 0), (0, 2 * e)))              # (1, 4E)
    vec_w = jnp.concatenate([bkv_pad, p["ff_b1"]], axis=0)         # (2, 4E)
    return [wq_stk, p["wkv"], p["ff_w1"], p["ff_w2"], vec_e, vec_w]


def _pack_fusion_params(p):
    vec_e = jnp.concatenate(
        [p["bf"], p["nf_g"], p["nf_b"], p["bo"], p["ns_g"], p["ns_b"]], axis=0)
    return [p["wf"], p["wqkv"], p["wo"], vec_e, p["bqkv"]]


# ---------------------------------------------------------------------------
# Wrapper
# ---------------------------------------------------------------------------
def expert_token_cross_attention(cnn_expert_tokens, vit_expert_tokens,
                                 cnn_patches, vit_patches,
                                 vit_params, cnn_params, fusion_params,
                                 num_heads, *, use_bf16_mxu=True, block_b=None):
    B, N, E = vit_expert_tokens.shape
    _, Mv, Dv = vit_patches.shape
    _, Mc, Dc = cnn_patches.shape
    assert E % num_heads == 0
    H = num_heads
    head_dim = E // H
    Np = -(-N // 8) * 8                        # pad experts to sublane multiple
    mxu_dtype = jnp.bfloat16 if use_bf16_mxu else jnp.float32

    bb = _pick_block_b(B) if block_b is None else block_b
    assert B % bb == 0
    grid = (B // bb,)

    # Pad the (tiny) expert-token inputs 14 -> 16 once in the wrapper.
    pad_n = Np - N
    vit_x = jnp.pad(vit_expert_tokens, ((0, 0), (0, pad_n), (0, 0)))
    cnn_x = jnp.pad(cnn_expert_tokens, ((0, 0), (0, pad_n), (0, 0)))

    qmask, hmask = _build_masks(Np, E, H, head_dim)
    vit_args = _pack_mhcac_params(vit_params, N, Np, E)
    cnn_args = _pack_mhcac_params(cnn_params, N, Np, E)
    fus_args = _pack_fusion_params(fusion_params)

    # Patches stay f32: the bf16 cast happens in-kernel right before the MXU.
    args = ([vit_x, cnn_x, vit_patches, cnn_patches, qmask, hmask]
            + vit_args + cnn_args + fus_args)

    def batched(item_shape):
        rank = len(item_shape)
        return pl.BlockSpec((bb,) + tuple(item_shape),
                            lambda b, _r=rank: (b,) + (0,) * _r)

    def replicated(arr):
        rank = arr.ndim
        return pl.BlockSpec(arr.shape, lambda b, _r=rank: (0,) * _r)

    in_specs = ([batched((Np, E)), batched((Np, E)),
                 batched((Mv, Dv)), batched((Mc, Dc))]
                + [replicated(a) for a in args[4:]])

    out_specs = [batched((Np, E)), batched((Np, E)), batched((Np, E)),
                 batched((H * Np, Mv)), batched((H * Np, Mc))]
    out_shape = [jax.ShapeDtypeStruct((B, Np, E), jnp.float32),
                 jax.ShapeDtypeStruct((B, Np, E), jnp.float32),
                 jax.ShapeDtypeStruct((B, Np, E), jnp.float32),
                 jax.ShapeDtypeStruct((B, H * Np, Mv), jnp.float32),
                 jax.ShapeDtypeStruct((B, H * Np, Mc), jnp.float32)]

    kernel = functools.partial(_etca_kernel, head_dim=head_dim, n_pad=Np,
                               block_b=bb, mxu_dtype=mxu_dtype)

    tok, vit_att, cnn_att, vit_attw, cnn_attw = pl.pallas_call(
        kernel,
        grid=grid,
        in_specs=in_specs,
        out_specs=out_specs,
        out_shape=out_shape,
        compiler_params=pltpu.CompilerParams(
            dimension_semantics=("parallel",)),
    )(*args)

    # Strip expert-token padding; PyTorch returns lists of N tensors (B,1,H,M).
    tok = tok[:, :N, :]
    vit_att = vit_att[:, :N, :]
    cnn_att = cnn_att[:, :N, :]
    vit_w4 = vit_attw.reshape(B, H, Np, Mv)[:, :, :N, :]
    cnn_w4 = cnn_attw.reshape(B, H, Np, Mc)[:, :, :N, :]
    vit_weights = [vit_w4[:, :, i, :][:, None, :, :] for i in range(N)]
    cnn_weights = [cnn_w4[:, :, i, :][:, None, :, :] for i in range(N)]
    return tok, vit_att, cnn_att, vit_weights, cnn_weights


# ---------------------------------------------------------------------------
# Deterministic synthetic parameter initialization (shapes from __init__)
# ---------------------------------------------------------------------------
def _init_linear(key, in_dim, out_dim):
    kw, kb = jax.random.split(key)
    w_t = jax.random.normal(kw, (in_dim, out_dim), jnp.float32) * 0.02
    b = jax.random.normal(kb, (1, out_dim), jnp.float32) * 0.02
    return w_t, b


def init_mhcac_params(key, query_dim, key_value_dim, num_experts):
    ks = jax.random.split(key, 5)
    wq = jax.random.normal(ks[0], (num_experts, query_dim, query_dim),
                           jnp.float32) * 0.02          # PyTorch (out, in) layout
    bq = jax.random.normal(ks[1], (num_experts, query_dim), jnp.float32) * 0.02
    wkv, bkv = _init_linear(ks[2], key_value_dim, 2 * query_dim)
    ff_w1, ff_b1 = _init_linear(ks[3], query_dim, 4 * query_dim)
    ff_w2, ff_b2 = _init_linear(ks[4], 4 * query_dim, query_dim)
    return dict(
        wq=wq, bq=bq, wkv=wkv, bkv=bkv,
        n1_g=jnp.ones((1, query_dim), jnp.float32),
        n1_b=jnp.zeros((1, query_dim), jnp.float32),
        ff_w1=ff_w1, ff_b1=ff_b1, ff_w2=ff_w2, ff_b2=ff_b2,
        n2_g=jnp.ones((1, query_dim), jnp.float32),
        n2_b=jnp.zeros((1, query_dim), jnp.float32),
    )


def init_fusion_params(key, embed_dim):
    ks = jax.random.split(key, 3)
    wf, bf = _init_linear(ks[0], 2 * embed_dim, embed_dim)
    wqkv, bqkv = _init_linear(ks[1], embed_dim, 3 * embed_dim)  # fused Q|K|V
    wo, bo = _init_linear(ks[2], embed_dim, embed_dim)
    return dict(
        wf=wf, bf=bf,
        nf_g=jnp.ones((1, embed_dim), jnp.float32),
        nf_b=jnp.zeros((1, embed_dim), jnp.float32),
        wqkv=wqkv, bqkv=bqkv, wo=wo, bo=bo,
        ns_g=jnp.ones((1, embed_dim), jnp.float32),
        ns_b=jnp.zeros((1, embed_dim), jnp.float32),
    )


# ---------------------------------------------------------------------------
# Main
# ---------------------------------------------------------------------------
if __name__ == "__main__":
    B = 4                  # batch (block_b=2 -> 2 parallel grid steps)
    N = 14                 # num_abnormalities (expert tokens)
    E = 32                 # embed_dim
    H = 4                  # num_heads
    Mv, Dv = 16, 768       # vit patches: seq, feature (fixed by module)
    Mc, Dc = 16, 1408      # cnn patches: seq, feature (fixed by module)

    key = jax.random.PRNGKey(0)
    ks = jax.random.split(key, 7)
    cnn_expert = jax.random.normal(ks[0], (B, N, E), jnp.float32)
    vit_expert = jax.random.normal(ks[1], (B, N, E), jnp.float32)
    cnn_patches = jax.random.normal(ks[2], (B, Mc, Dc), jnp.float32)
    vit_patches = jax.random.normal(ks[3], (B, Mv, Dv), jnp.float32)

    vit_params = init_mhcac_params(ks[4], E, Dv, N)
    cnn_params = init_mhcac_params(ks[5], E, Dc, N)
    fusion_params = init_fusion_params(ks[6], E)

    # TODO(synk): dropout layers are treated as identity (inference mode).
    out = expert_token_cross_attention(cnn_expert, vit_expert,
                                       cnn_patches, vit_patches,
                                       vit_params, cnn_params, fusion_params,
                                       num_heads=H)
    jax.tree_util.tree_map(jax.block_until_ready, out)

    expert_tokens, vit_attended, cnn_attended, vit_w, cnn_w = out
    assert expert_tokens.shape == (B, N, E)
    assert vit_attended.shape == (B, N, E)
    assert cnn_attended.shape == (B, N, E)
    assert len(vit_w) == N and vit_w[0].shape == (B, 1, H, Mv)
    assert len(cnn_w) == N and cnn_w[0].shape == (B, 1, H, Mc)
    print("KERNEL_OK")
</pallas_src>

<mosaic_0001>
module attributes {stable_mosaic.version = 11 : i64} {
  func.func @_etca_kernel(%arg0: i32, %arg1: memref<2x16x32xf32, #tpu.memory_space<vmem>>, %arg2: memref<2x16x32xf32, #tpu.memory_space<vmem>>, %arg3: memref<2x16x768xf32, #tpu.memory_space<vmem>>, %arg4: memref<2x16x1408xf32, #tpu.memory_space<vmem>>, %arg5: memref<16x512xf32, #tpu.memory_space<vmem>>, %arg6: memref<4x1x32xf32, #tpu.memory_space<vmem>>, %arg7: memref<512x32xf32, #tpu.memory_space<vmem>>, %arg8: memref<768x64xf32, #tpu.memory_space<vmem>>, %arg9: memref<32x128xf32, #tpu.memory_space<vmem>>, %arg10: memref<128x32xf32, #tpu.memory_space<vmem>>, %arg11: memref<21x32xf32, #tpu.memory_space<vmem>>, %arg12: memref<2x128xf32, #tpu.memory_space<vmem>>, %arg13: memref<512x32xf32, #tpu.memory_space<vmem>>, %arg14: memref<1408x64xf32, #tpu.memory_space<vmem>>, %arg15: memref<32x128xf32, #tpu.memory_space<vmem>>, %arg16: memref<128x32xf32, #tpu.memory_space<vmem>>, %arg17: memref<21x32xf32, #tpu.memory_space<vmem>>, %arg18: memref<2x128xf32, #tpu.memory_space<vmem>>, %arg19: memref<64x32xf32, #tpu.memory_space<vmem>>, %arg20: memref<32x96xf32, #tpu.memory_space<vmem>>, %arg21: memref<32x32xf32, #tpu.memory_space<vmem>>, %arg22: memref<6x32xf32, #tpu.memory_space<vmem>>, %arg23: memref<1x96xf32, #tpu.memory_space<vmem>>, %arg24: memref<2x16x32xf32, #tpu.memory_space<vmem>>, %arg25: memref<2x16x32xf32, #tpu.memory_space<vmem>>, %arg26: memref<2x16x32xf32, #tpu.memory_space<vmem>>, %arg27: memref<2x64x16xf32, #tpu.memory_space<vmem>>, %arg28: memref<2x64x16xf32, #tpu.memory_space<vmem>>) attributes {dimension_semantics = [#tpu.dimension_semantics<parallel>], iteration_bounds = array<i64: 2>, scalar_prefetch = 0 : i64, scratch_operands = 0 : i64, tpu.core_type = #tpu.core_type<tc>, window_params = [{transform_indices = @transform_0, window_bounds = array<i64: 2, 16, 32>}, {transform_indices = @transform_1, window_bounds = array<i64: 2, 16, 32>}, {transform_indices = @transform_2, window_bounds = array<i64: 2, 16, 768>}, {transform_indices = @transform_3, window_bounds = array<i64: 2, 16, 1408>}, {pipeline_mode = #tpu.pipeline_mode<synchronous>, transform_indices = @transform_4, window_bounds = array<i64: 16, 512>}, {pipeline_mode = #tpu.pipeline_mode<synchronous>, transform_indices = @transform_5, window_bounds = array<i64: 4, 1, 32>}, {pipeline_mode = #tpu.pipeline_mode<synchronous>, transform_indices = @transform_6, window_bounds = array<i64: 512, 32>}, {pipeline_mode = #tpu.pipeline_mode<synchronous>, transform_indices = @transform_7, window_bounds = array<i64: 768, 64>}, {pipeline_mode = #tpu.pipeline_mode<synchronous>, transform_indices = @transform_8, window_bounds = array<i64: 32, 128>}, {pipeline_mode = #tpu.pipeline_mode<synchronous>, transform_indices = @transform_9, window_bounds = array<i64: 128, 32>}, {pipeline_mode = #tpu.pipeline_mode<synchronous>, transform_indices = @transform_10, window_bounds = array<i64: 21, 32>}, {pipeline_mode = #tpu.pipeline_mode<synchronous>, transform_indices = @transform_11, window_bounds = array<i64: 2, 128>}, {pipeline_mode = #tpu.pipeline_mode<synchronous>, transform_indices = @transform_12, window_bounds = array<i64: 512, 32>}, {pipeline_mode = #tpu.pipeline_mode<synchronous>, transform_indices = @transform_13, window_bounds = array<i64: 1408, 64>}, {pipeline_mode = #tpu.pipeline_mode<synchronous>, transform_indices = @transform_14, window_bounds = array<i64: 32, 128>}, {pipeline_mode = #tpu.pipeline_mode<synchronous>, transform_indices = @transform_15, window_bounds = array<i64: 128, 32>}, {pipeline_mode = #tpu.pipeline_mode<synchronous>, transform_indices = @transform_16, window_bounds = array<i64: 21, 32>}, {pipeline_mode = #tpu.pipeline_mode<synchronous>, transform_indices = @transform_17, window_bounds = array<i64: 2, 128>}, {pipeline_mode = #tpu.pipeline_mode<synchronous>, transform_indices = @transform_18, window_bounds = array<i64: 64, 32>}, {pipeline_mode = #tpu.pipeline_mode<synchronous>, transform_indices = @transform_19, window_bounds = array<i64: 32, 96>}, {pipeline_mode = #tpu.pipeline_mode<synchronous>, transform_indices = @transform_20, window_bounds = array<i64: 32, 32>}, {pipeline_mode = #tpu.pipeline_mode<synchronous>, transform_indices = @transform_21, window_bounds = array<i64: 6, 32>}, {pipeline_mode = #tpu.pipeline_mode<synchronous>, transform_indices = @transform_22, window_bounds = array<i64: 1, 96>}, {transform_indices = @transform_23, window_bounds = array<i64: 2, 16, 32>}, {transform_indices = @transform_24, window_bounds = array<i64: 2, 16, 32>}, {transform_indices = @transform_25, window_bounds = array<i64: 2, 16, 32>}, {transform_indices = @transform_26, window_bounds = array<i64: 2, 64, 16>}, {transform_indices = @transform_27, window_bounds = array<i64: 2, 64, 16>}]} {
    %c0 = arith.constant 0 : index
    %c0_0 = arith.constant 0 : index
    %0 = vector.load %arg5[%c0, %c0_0] : memref<16x512xf32, #tpu.memory_space<vmem>>, vector<16x512xf32>
    %c0_1 = arith.constant 0 : index
    %c0_2 = arith.constant 0 : index
    %c0_3 = arith.constant 0 : index
    %1 = vector.load %arg6[%c0_1, %c0_2, %c0_3] : memref<4x1x32xf32, #tpu.memory_space<vmem>>, vector<4x1x32xf32>
    %c0_4 = arith.constant 0 : index
    %c0_5 = arith.constant 0 : index
    %c0_6 = arith.constant 0 : index
    %2 = vector.load %arg1[%c0_4, %c0_5, %c0_6] : memref<2x16x32xf32, #tpu.memory_space<vmem>>, vector<2x16x32xf32>
    %c0_7 = arith.constant 0 : index
    %c0_8 = arith.constant 0 : index
    %c0_9 = arith.constant 0 : index
    %3 = vector.load %arg3[%c0_7, %c0_8, %c0_9] : memref<2x16x768xf32, #tpu.memory_space<vmem>>, vector<2x16x768xf32>
    %4 = tpu.concatenate %2, %2, %2, %2, %2, %2, %2, %2, %2, %2, %2, %2, %2, %2, %2, %2 in 2 : vector<2x16x32xf32>, vector<2x16x32xf32>, vector<2x16x32xf32>, vector<2x16x32xf32>, vector<2x16x32xf32>, vector<2x16x32xf32>, vector<2x16x32xf32>, vector<2x16x32xf32>, vector<2x16x32xf32>, vector<2x16x32xf32>, vector<2x16x32xf32>, vector<2x16x32xf32>, vector<2x16x32xf32>, vector<2x16x32xf32>, vector<2x16x32xf32>, vector<2x16x32xf32> -> vector<2x16x512xf32>
    %5 = vector.shape_cast %0 : vector<16x512xf32> to vector<1x16x512xf32>
    %6 = vector.broadcast %5 : vector<1x16x512xf32> to vector<2x16x512xf32>
    %7 = arith.mulf %4, %6 : vector<2x16x512xf32>
    %c0_10 = arith.constant 0 : index
    %c0_11 = arith.constant 0 : index
    %8 = vector.load %arg11[%c0_10, %c0_11] : memref<21x32xf32, #tpu.memory_space<vmem>>, vector<16x32xf32>
    %9 = vector.shape_cast %7 : vector<2x16x512xf32> to vector<32x512xf32>
    %10 = arith.truncf %9 : vector<32x512xf32> to vector<32x512xbf16>
    %c0_12 = arith.constant 0 : index
    %c0_13 = arith.constant 0 : index
    %11 = vector.load %arg7[%c0_12, %c0_13] : memref<512x32xf32, #tpu.memory_space<vmem>>, vector<512x32xf32>
    %12 = arith.truncf %11 : vector<512x32xf32> to vector<512x32xbf16>
    %cst = arith.constant dense<0.000000e+00> : vector<32x32xf32>
    %13 = tpu.matmul %10, %12, %cst {dimension_numbers = #tpu.dot_dimension_numbers<[1], [0], [0], [1], [0, 0, 1, 1], [], []>} : vector<32x512xbf16>, vector<512x32xbf16>, vector<32x32xf32> -> vector<32x32xf32>
    %14 = vector.shape_cast %13 : vector<32x32xf32> to vector<2x16x32xf32>
    %15 = vector.shape_cast %8 : vector<16x32xf32> to vector<1x16x32xf32>
    %16 = vector.broadcast %15 : vector<1x16x32xf32> to vector<2x16x32xf32>
    %17 = arith.addf %14, %16 : vector<2x16x32xf32>
    %c0_14 = arith.constant 0 : index
    %c0_15 = arith.constant 0 : index
    %18 = vector.load %arg12[%c0_14, %c0_15] : memref<2x128xf32, #tpu.memory_space<vmem>>, vector<1x64xf32>
    %19 = vector.shape_cast %3 : vector<2x16x768xf32> to vector<32x768xf32>
    %20 = arith.truncf %19 : vector<32x768xf32> to vector<32x768xbf16>
    %c0_16 = arith.constant 0 : index
    %c0_17 = arith.constant 0 : index
    %21 = vector.load %arg8[%c0_16, %c0_17] : memref<768x64xf32, #tpu.memory_space<vmem>>, vector<768x64xf32>
    %22 = arith.truncf %21 : vector<768x64xf32> to vector<768x64xbf16>
    %cst_18 = arith.constant dense<0.000000e+00> : vector<32x64xf32>
    %23 = tpu.matmul %20, %22, %cst_18 {dimension_numbers = #tpu.dot_dimension_numbers<[1], [0], [0], [1], [0, 0, 1, 1], [], []>} : vector<32x768xbf16>, vector<768x64xbf16>, vector<32x64xf32> -> vector<32x64xf32>
    %24 = vector.broadcast %18 : vector<1x64xf32> to vector<32x64xf32>
    %25 = arith.addf %23, %24 : vector<32x64xf32>
    %26 = vector.shape_cast %25 : vector<32x64xf32> to vector<2x16x64xf32>
    %27 = vector.extract_strided_slice %26 {offsets = [0, 0, 0], sizes = [2, 16, 32], strides = [1, 1, 1]} : vector<2x16x64xf32> to vector<2x16x32xf32>
    %28 = vector.extract_strided_slice %26 {offsets = [0, 0, 32], sizes = [2, 16, 32], strides = [1, 1, 1]} : vector<2x16x64xf32> to vector<2x16x32xf32>
    %cst_19 = arith.constant 0.353553385 : f32
    %29 = vector.broadcast %cst_19 : f32 to vector<2x16x32xf32>
    %30 = arith.mulf %17, %29 : vector<2x16x32xf32>
    %31 = vector.shape_cast %30 : vector<2x16x32xf32> to vector<2x1x16x32xf32>
    %32 = vector.shape_cast %1 : vector<4x1x32xf32> to vector<1x4x1x32xf32>
    %33 = vector.broadcast %31 : vector<2x1x16x32xf32> to vector<2x4x16x32xf32>
    %34 = vector.broadcast %32 : vector<1x4x1x32xf32> to vector<2x4x16x32xf32>
    %35 = arith.mulf %33, %34 : vector<2x4x16x32xf32>
    %36 = vector.shape_cast %35 : vector<2x4x16x32xf32> to vector<2x64x32xf32>
    %37 = arith.truncf %36 : vector<2x64x32xf32> to vector<2x64x32xbf16>
    %38 = arith.truncf %27 : vector<2x16x32xf32> to vector<2x16x32xbf16>
    "tpu.trace_start"() <{level = 10 : i32, message = "bqe,bme->bqm"}> : () -> ()
    %cst_20 = arith.constant dense<0.000000e+00> : vector<2x64x16xf32>
    %39 = tpu.matmul %37, %38, %cst_20 {dimension_numbers = #tpu.dot_dimension_numbers<[2], [2], [1], [1], [0, 0, 0, 1, 1, 1], [0], [0]>} : vector<2x64x32xbf16>, vector<2x16x32xbf16>, vector<2x64x16xf32> -> vector<2x64x16xf32>
    "tpu.trace_stop"() : () -> ()
    %cst_21 = arith.constant dense<0xFF800000> : vector<2x64xf32>
    %40 = vector.multi_reduction <maximumf>, %39, %cst_21 [2] : vector<2x64x16xf32> to vector<2x64xf32>
    %41 = vector.shape_cast %40 : vector<2x64xf32> to vector<2x64x1xf32>
    %42 = vector.broadcast %41 : vector<2x64x1xf32> to vector<2x64x16xf32>
    %43 = arith.subf %39, %42 : vector<2x64x16xf32>
    %44 = math.exp %43 : vector<2x64x16xf32>
    %cst_22 = arith.constant dense<0.000000e+00> : vector<2x64xf32>
    %45 = vector.multi_reduction <add>, %44, %cst_22 [2] : vector<2x64x16xf32> to vector<2x64xf32>
    %46 = vector.shape_cast %45 : vector<2x64xf32> to vector<2x64x1xf32>
    %47 = vector.broadcast %46 : vector<2x64x1xf32> to vector<2x64x16xf32>
    %48 = arith.divf %44, %47 : vector<2x64x16xf32>
    %49 = arith.truncf %48 : vector<2x64x16xf32> to vector<2x64x16xbf16>
    %50 = arith.truncf %28 : vector<2x16x32xf32> to vector<2x16x32xbf16>
    "tpu.trace_start"() <{level = 10 : i32, message = "bqm,bme->bqe"}> : () -> ()
    %cst_23 = arith.constant dense<0.000000e+00> : vector<2x64x32xf32>
    %51 = tpu.matmul %49, %50, %cst_23 {dimension_numbers = #tpu.dot_dimension_numbers<[2], [1], [1], [2], [0, 0, 0, 1, 1, 2], [0], [0]>} : vector<2x64x16xbf16>, vector<2x16x32xbf16>, vector<2x64x32xf32> -> vector<2x64x32xf32>
    "tpu.trace_stop"() : () -> ()
    %52 = vector.shape_cast %51 : vector<2x64x32xf32> to vector<2x4x16x32xf32>
    %53 = vector.shape_cast %1 : vector<4x1x32xf32> to vector<1x4x1x32xf32>
    %54 = vector.broadcast %53 : vector<1x4x1x32xf32> to vector<2x4x16x32xf32>
    %55 = arith.mulf %52, %54 : vector<2x4x16x32xf32>
    %cst_24 = arith.constant dense<0.000000e+00> : vector<2x16x32xf32>
    %56 = vector.multi_reduction <add>, %55, %cst_24 [1] : vector<2x4x16x32xf32> to vector<2x16x32xf32>
    %c16 = arith.constant 16 : index
    %c0_25 = arith.constant 0 : index
    %57 = vector.load %arg11[%c16, %c0_25] : memref<21x32xf32, #tpu.memory_space<vmem>>, vector<1x32xf32>
    %c17 = arith.constant 17 : index
    %c0_26 = arith.constant 0 : index
    %58 = vector.load %arg11[%c17, %c0_26] : memref<21x32xf32, #tpu.memory_space<vmem>>, vector<1x32xf32>
    %c18 = arith.constant 18 : index
    %c0_27 = arith.constant 0 : index
    %59 = vector.load %arg11[%c18, %c0_27] : memref<21x32xf32, #tpu.memory_space<vmem>>, vector<1x32xf32>
    %c19 = arith.constant 19 : index
    %c0_28 = arith.constant 0 : index
    %60 = vector.load %arg11[%c19, %c0_28] : memref<21x32xf32, #tpu.memory_space<vmem>>, vector<1x32xf32>
    %c20 = arith.constant 20 : index
    %c0_29 = arith.constant 0 : index
    %61 = vector.load %arg11[%c20, %c0_29] : memref<21x32xf32, #tpu.memory_space<vmem>>, vector<1x32xf32>
    %c1 = arith.constant 1 : index
    %c0_30 = arith.constant 0 : index
    %62 = vector.load %arg12[%c1, %c0_30] : memref<2x128xf32, #tpu.memory_space<vmem>>, vector<1x128xf32>
    %63 = vector.shape_cast %2 : vector<2x16x32xf32> to vector<32x32xf32>
    %64 = vector.shape_cast %56 : vector<2x16x32xf32> to vector<32x32xf32>
    %65 = arith.addf %63, %64 : vector<32x32xf32>
    %cst_31 = arith.constant dense<0.000000e+00> : vector<32xf32>
    %66 = vector.multi_reduction <add>, %65, %cst_31 [1] : vector<32x32xf32> to vector<32xf32>
    %67 = vector.shape_cast %66 : vector<32xf32> to vector<32x1xf32>
    %cst_32 = arith.constant 3.200000e+01 : f32
    %68 = vector.broadcast %cst_32 : f32 to vector<32x1xf32>
    %69 = arith.divf %67, %68 : vector<32x1xf32>
    %70 = vector.broadcast %69 : vector<32x1xf32> to vector<32x32xf32>
    %71 = arith.subf %65, %70 : vector<32x32xf32>
    %72 = arith.mulf %71, %71 : vector<32x32xf32>
    %cst_33 = arith.constant dense<0.000000e+00> : vector<32xf32>
    %73 = vector.multi_reduction <add>, %72, %cst_33 [1] : vector<32x32xf32> to vector<32xf32>
    %74 = vector.shape_cast %73 : vector<32xf32> to vector<32x1xf32>
    %cst_34 = arith.constant 3.200000e+01 : f32
    %75 = vector.broadcast %cst_34 : f32 to vector<32x1xf32>
    %76 = arith.divf %74, %75 : vector<32x1xf32>
    %77 = vector.broadcast %69 : vector<32x1xf32> to vector<32x32xf32>
    %78 = arith.subf %65, %77 : vector<32x32xf32>
    %cst_35 = arith.constant 9.99999974E-6 : f32
    %79 = vector.broadcast %cst_35 : f32 to vector<32x1xf32>
    %80 = arith.addf %76, %79 : vector<32x1xf32>
    %81 = math.rsqrt %80 : vector<32x1xf32>
    %82 = vector.broadcast %81 : vector<32x1xf32> to vector<32x32xf32>
    %83 = arith.mulf %78, %82 : vector<32x32xf32>
    %84 = vector.broadcast %57 : vector<1x32xf32> to vector<32x32xf32>
    %85 = arith.mulf %83, %84 : vector<32x32xf32>
    %86 = vector.broadcast %58 : vector<1x32xf32> to vector<32x32xf32>
    %87 = arith.addf %85, %86 : vector<32x32xf32>
    %88 = arith.truncf %87 : vector<32x32xf32> to vector<32x32xbf16>
    %c0_36 = arith.constant 0 : index
    %c0_37 = arith.constant 0 : index
    %89 = vector.load %arg9[%c0_36, %c0_37] : memref<32x128xf32, #tpu.memory_space<vmem>>, vector<32x128xf32>
    %90 = arith.truncf %89 : vector<32x128xf32> to vector<32x128xbf16>
    %cst_38 = arith.constant dense<0.000000e+00> : vector<32x128xf32>
    %91 = tpu.matmul %88, %90, %cst_38 {dimension_numbers = #tpu.dot_dimension_numbers<[1], [0], [0], [1], [0, 0, 1, 1], [], []>} : vector<32x32xbf16>, vector<32x128xbf16>, vector<32x128xf32> -> vector<32x128xf32>
    %92 = vector.broadcast %62 : vector<1x128xf32> to vector<32x128xf32>
    %93 = arith.addf %91, %92 : vector<32x128xf32>
    %cst_39 = arith.constant 0.000000e+00 : f32
    %94 = vector.broadcast %cst_39 : f32 to vector<32x128xf32>
    %95 = arith.maximumf %93, %94 : vector<32x128xf32>
    %96 = arith.truncf %95 : vector<32x128xf32> to vector<32x128xbf16>
    %c0_40 = arith.constant 0 : index
    %c0_41 = arith.constant 0 : index
    %97 = vector.load %arg10[%c0_40, %c0_41] : memref<128x32xf32, #tpu.memory_space<vmem>>, vector<128x32xf32>
    %98 = arith.truncf %97 : vector<128x32xf32> to vector<128x32xbf16>
    %cst_42 = arith.constant dense<0.000000e+00> : vector<32x32xf32>
    %99 = tpu.matmul %96, %98, %cst_42 {dimension_numbers = #tpu.dot_dimension_numbers<[1], [0], [0], [1], [0, 0, 1, 1], [], []>} : vector<32x128xbf16>, vector<128x32xbf16>, vector<32x32xf32> -> vector<32x32xf32>
    %100 = vector.broadcast %61 : vector<1x32xf32> to vector<32x32xf32>
    %101 = arith.addf %99, %100 : vector<32x32xf32>
    %102 = arith.addf %87, %101 : vector<32x32xf32>
    %cst_43 = arith.constant dense<0.000000e+00> : vector<32xf32>
    %103 = vector.multi_reduction <add>, %102, %cst_43 [1] : vector<32x32xf32> to vector<32xf32>
    %104 = vector.shape_cast %103 : vector<32xf32> to vector<32x1xf32>
    %cst_44 = arith.constant 3.200000e+01 : f32
    %105 = vector.broadcast %cst_44 : f32 to vector<32x1xf32>
    %106 = arith.divf %104, %105 : vector<32x1xf32>
    %107 = vector.broadcast %106 : vector<32x1xf32> to vector<32x32xf32>
    %108 = arith.subf %102, %107 : vector<32x32xf32>
    %109 = arith.mulf %108, %108 : vector<32x32xf32>
    %cst_45 = arith.constant dense<0.000000e+00> : vector<32xf32>
    %110 = vector.multi_reduction <add>, %109, %cst_45 [1] : vector<32x32xf32> to vector<32xf32>
    %111 = vector.shape_cast %110 : vector<32xf32> to vector<32x1xf32>
    %cst_46 = arith.constant 3.200000e+01 : f32
    %112 = vector.broadcast %cst_46 : f32 to vector<32x1xf32>
    %113 = arith.divf %111, %112 : vector<32x1xf32>
    %114 = vector.broadcast %106 : vector<32x1xf32> to vector<32x32xf32>
    %115 = arith.subf %102, %114 : vector<32x32xf32>
    %cst_47 = arith.constant 9.99999974E-6 : f32
    %116 = vector.broadcast %cst_47 : f32 to vector<32x1xf32>
    %117 = arith.addf %113, %116 : vector<32x1xf32>
    %118 = math.rsqrt %117 : vector<32x1xf32>
    %119 = vector.broadcast %118 : vector<32x1xf32> to vector<32x32xf32>
    %120 = arith.mulf %115, %119 : vector<32x32xf32>
    %121 = vector.broadcast %59 : vector<1x32xf32> to vector<32x32xf32>
    %122 = arith.mulf %120, %121 : vector<32x32xf32>
    %123 = vector.broadcast %60 : vector<1x32xf32> to vector<32x32xf32>
    %124 = arith.addf %122, %123 : vector<32x32xf32>
    %c0_48 = arith.constant 0 : index
    %c0_49 = arith.constant 0 : index
    %c0_50 = arith.constant 0 : index
    %125 = vector.load %arg2[%c0_48, %c0_49, %c0_50] : memref<2x16x32xf32, #tpu.memory_space<vmem>>, vector<2x16x32xf32>
    %c0_51 = arith.constant 0 : index
    %c0_52 = arith.constant 0 : index
    %c0_53 = arith.constant 0 : index
    %126 = vector.load %arg4[%c0_51, %c0_52, %c0_53] : memref<2x16x1408xf32, #tpu.memory_space<vmem>>, vector<2x16x1408xf32>
    %127 = tpu.concatenate %125, %125, %125, %125, %125, %125, %125, %125, %125, %125, %125, %125, %125, %125, %125, %125 in 2 : vector<2x16x32xf32>, vector<2x16x32xf32>, vector<2x16x32xf32>, vector<2x16x32xf32>, vector<2x16x32xf32>, vector<2x16x32xf32>, vector<2x16x32xf32>, vector<2x16x32xf32>, vector<2x16x32xf32>, vector<2x16x32xf32>, vector<2x16x32xf32>, vector<2x16x32xf32>, vector<2x16x32xf32>, vector<2x16x32xf32>, vector<2x16x32xf32>, vector<2x16x32xf32> -> vector<2x16x512xf32>
    %128 = vector.shape_cast %0 : vector<16x512xf32> to vector<1x16x512xf32>
    %129 = vector.broadcast %128 : vector<1x16x512xf32> to vector<2x16x512xf32>
    %130 = arith.mulf %127, %129 : vector<2x16x512xf32>
    %c0_54 = arith.constant 0 : index
    %c0_55 = arith.constant 0 : index
    %131 = vector.load %arg17[%c0_54, %c0_55] : memref<21x32xf32, #tpu.memory_space<vmem>>, vector<16x32xf32>
    %132 = vector.shape_cast %130 : vector<2x16x512xf32> to vector<32x512xf32>
    %133 = arith.truncf %132 : vector<32x512xf32> to vector<32x512xbf16>
    %c0_56 = arith.constant 0 : index
    %c0_57 = arith.constant 0 : index
    %134 = vector.load %arg13[%c0_56, %c0_57] : memref<512x32xf32, #tpu.memory_space<vmem>>, vector<512x32xf32>
    %135 = arith.truncf %134 : vector<512x32xf32> to vector<512x32xbf16>
    %cst_58 = arith.constant dense<0.000000e+00> : vector<32x32xf32>
    %136 = tpu.matmul %133, %135, %cst_58 {dimension_numbers = #tpu.dot_dimension_numbers<[1], [0], [0], [1], [0, 0, 1, 1], [], []>} : vector<32x512xbf16>, vector<512x32xbf16>, vector<32x32xf32> -> vector<32x32xf32>
    %137 = vector.shape_cast %136 : vector<32x32xf32> to vector<2x16x32xf32>
    %138 = vector.shape_cast %131 : vector<16x32xf32> to vector<1x16x32xf32>
    %139 = vector.broadcast %138 : vector<1x16x32xf32> to vector<2x16x32xf32>
    %140 = arith.addf %137, %139 : vector<2x16x32xf32>
    %c0_59 = arith.constant 0 : index
    %c0_60 = arith.constant 0 : index
    %141 = vector.load %arg18[%c0_59, %c0_60] : memref<2x128xf32, #tpu.memory_space<vmem>>, vector<1x64xf32>
    %142 = vector.shape_cast %126 : vector<2x16x1408xf32> to vector<32x1408xf32>
    %143 = arith.truncf %142 : vector<32x1408xf32> to vector<32x1408xbf16>
    %c0_61 = arith.constant 0 : index
    %c0_62 = arith.constant 0 : index
    %144 = vector.load %arg14[%c0_61, %c0_62] : memref<1408x64xf32, #tpu.memory_space<vmem>>, vector<1408x64xf32>
    %145 = arith.truncf %144 : vector<1408x64xf32> to vector<1408x64xbf16>
    %cst_63 = arith.constant dense<0.000000e+00> : vector<32x64xf32>
    %146 = tpu.matmul %143, %145, %cst_63 {dimension_numbers = #tpu.dot_dimension_numbers<[1], [0], [0], [1], [0, 0, 1, 1], [], []>} : vector<32x1408xbf16>, vector<1408x64xbf16>, vector<32x64xf32> -> vector<32x64xf32>
    %147 = vector.broadcast %141 : vector<1x64xf32> to vector<32x64xf32>
    %148 = arith.addf %146, %147 : vector<32x64xf32>
    %149 = vector.shape_cast %148 : vector<32x64xf32> to vector<2x16x64xf32>
    %150 = vector.extract_strided_slice %149 {offsets = [0, 0, 0], sizes = [2, 16, 32], strides = [1, 1, 1]} : vector<2x16x64xf32> to vector<2x16x32xf32>
    %151 = vector.extract_strided_slice %149 {offsets = [0, 0, 32], sizes = [2, 16, 32], strides = [1, 1, 1]} : vector<2x16x64xf32> to vector<2x16x32xf32>
    %cst_64 = arith.constant 0.353553385 : f32
    %152 = vector.broadcast %cst_64 : f32 to vector<2x16x32xf32>
    %153 = arith.mulf %140, %152 : vector<2x16x32xf32>
    %154 = vector.shape_cast %153 : vector<2x16x32xf32> to vector<2x1x16x32xf32>
    %155 = vector.shape_cast %1 : vector<4x1x32xf32> to vector<1x4x1x32xf32>
    %156 = vector.broadcast %154 : vector<2x1x16x32xf32> to vector<2x4x16x32xf32>
    %157 = vector.broadcast %155 : vector<1x4x1x32xf32> to vector<2x4x16x32xf32>
    %158 = arith.mulf %156, %157 : vector<2x4x16x32xf32>
    %159 = vector.shape_cast %158 : vector<2x4x16x32xf32> to vector<2x64x32xf32>
    %160 = arith.truncf %159 : vector<2x64x32xf32> to vector<2x64x32xbf16>
    %161 = arith.truncf %150 : vector<2x16x32xf32> to vector<2x16x32xbf16>
    "tpu.trace_start"() <{level = 10 : i32, message = "bqe,bme->bqm"}> : () -> ()
    %cst_65 = arith.constant dense<0.000000e+00> : vector<2x64x16xf32>
    %162 = tpu.matmul %160, %161, %cst_65 {dimension_numbers = #tpu.dot_dimension_numbers<[2], [2], [1], [1], [0, 0, 0, 1, 1, 1], [0], [0]>} : vector<2x64x32xbf16>, vector<2x16x32xbf16>, vector<2x64x16xf32> -> vector<2x64x16xf32>
    "tpu.trace_stop"() : () -> ()
    %cst_66 = arith.constant dense<0xFF800000> : vector<2x64xf32>
    %163 = vector.multi_reduction <maximumf>, %162, %cst_66 [2] : vector<2x64x16xf32> to vector<2x64xf32>
    %164 = vector.shape_cast %163 : vector<2x64xf32> to vector<2x64x1xf32>
    %165 = vector.broadcast %164 : vector<2x64x1xf32> to vector<2x64x16xf32>
    %166 = arith.subf %162, %165 : vector<2x64x16xf32>
    %167 = math.exp %166 : vector<2x64x16xf32>
    %cst_67 = arith.constant dense<0.000000e+00> : vector<2x64xf32>
    %168 = vector.multi_reduction <add>, %167, %cst_67 [2] : vector<2x64x16xf32> to vector<2x64xf32>
    %169 = vector.shape_cast %168 : vector<2x64xf32> to vector<2x64x1xf32>
    %170 = vector.broadcast %169 : vector<2x64x1xf32> to vector<2x64x16xf32>
    %171 = arith.divf %167, %170 : vector<2x64x16xf32>
    %172 = arith.truncf %171 : vector<2x64x16xf32> to vector<2x64x16xbf16>
    %173 = arith.truncf %151 : vector<2x16x32xf32> to vector<2x16x32xbf16>
    "tpu.trace_start"() <{level = 10 : i32, message = "bqm,bme->bqe"}> : () -> ()
    %cst_68 = arith.constant dense<0.000000e+00> : vector<2x64x32xf32>
    %174 = tpu.matmul %172, %173, %cst_68 {dimension_numbers = #tpu.dot_dimension_numbers<[2], [1], [1], [2], [0, 0, 0, 1, 1, 2], [0], [0]>} : vector<2x64x16xbf16>, vector<2x16x32xbf16>, vector<2x64x32xf32> -> vector<2x64x32xf32>
    "tpu.trace_stop"() : () -> ()
    %175 = vector.shape_cast %174 : vector<2x64x32xf32> to vector<2x4x16x32xf32>
    %176 = vector.shape_cast %1 : vector<4x1x32xf32> to vector<1x4x1x32xf32>
    %177 = vector.broadcast %176 : vector<1x4x1x32xf32> to vector<2x4x16x32xf32>
    %178 = arith.mulf %175, %177 : vector<2x4x16x32xf32>
    %cst_69 = arith.constant dense<0.000000e+00> : vector<2x16x32xf32>
    %179 = vector.multi_reduction <add>, %178, %cst_69 [1] : vector<2x4x16x32xf32> to vector<2x16x32xf32>
    %c16_70 = arith.constant 16 : index
    %c0_71 = arith.constant 0 : index
    %180 = vector.load %arg17[%c16_70, %c0_71] : memref<21x32xf32, #tpu.memory_space<vmem>>, vector<1x32xf32>
    %c17_72 = arith.constant 17 : index
    %c0_73 = arith.constant 0 : index
    %181 = vector.load %arg17[%c17_72, %c0_73] : memref<21x32xf32, #tpu.memory_space<vmem>>, vector<1x32xf32>
    %c18_74 = arith.constant 18 : index
    %c0_75 = arith.constant 0 : index
    %182 = vector.load %arg17[%c18_74, %c0_75] : memref<21x32xf32, #tpu.memory_space<vmem>>, vector<1x32xf32>
    %c19_76 = arith.constant 19 : index
    %c0_77 = arith.constant 0 : index
    %183 = vector.load %arg17[%c19_76, %c0_77] : memref<21x32xf32, #tpu.memory_space<vmem>>, vector<1x32xf32>
    %c20_78 = arith.constant 20 : index
    %c0_79 = arith.constant 0 : index
    %184 = vector.load %arg17[%c20_78, %c0_79] : memref<21x32xf32, #tpu.memory_space<vmem>>, vector<1x32xf32>
    %c1_80 = arith.constant 1 : index
    %c0_81 = arith.constant 0 : index
    %185 = vector.load %arg18[%c1_80, %c0_81] : memref<2x128xf32, #tpu.memory_space<vmem>>, vector<1x128xf32>
    %186 = vector.shape_cast %125 : vector<2x16x32xf32> to vector<32x32xf32>
    %187 = vector.shape_cast %179 : vector<2x16x32xf32> to vector<32x32xf32>
    %188 = arith.addf %186, %187 : vector<32x32xf32>
    %cst_82 = arith.constant dense<0.000000e+00> : vector<32xf32>
    %189 = vector.multi_reduction <add>, %188, %cst_82 [1] : vector<32x32xf32> to vector<32xf32>
    %190 = vector.shape_cast %189 : vector<32xf32> to vector<32x1xf32>
    %cst_83 = arith.constant 3.200000e+01 : f32
    %191 = vector.broadcast %cst_83 : f32 to vector<32x1xf32>
    %192 = arith.divf %190, %191 : vector<32x1xf32>
    %193 = vector.broadcast %192 : vector<32x1xf32> to vector<32x32xf32>
    %194 = arith.subf %188, %193 : vector<32x32xf32>
    %195 = arith.mulf %194, %194 : vector<32x32xf32>
    %cst_84 = arith.constant dense<0.000000e+00> : vector<32xf32>
    %196 = vector.multi_reduction <add>, %195, %cst_84 [1] : vector<32x32xf32> to vector<32xf32>
    %197 = vector.shape_cast %196 : vector<32xf32> to vector<32x1xf32>
    %cst_85 = arith.constant 3.200000e+01 : f32
    %198 = vector.broadcast %cst_85 : f32 to vector<32x1xf32>
    %199 = arith.divf %197, %198 : vector<32x1xf32>
    %200 = vector.broadcast %192 : vector<32x1xf32> to vector<32x32xf32>
    %201 = arith.subf %188, %200 : vector<32x32xf32>
    %cst_86 = arith.constant 9.99999974E-6 : f32
    %202 = vector.broadcast %cst_86 : f32 to vector<32x1xf32>
    %203 = arith.addf %199, %202 : vector<32x1xf32>
    %204 = math.rsqrt %203 : vector<32x1xf32>
    %205 = vector.broadcast %204 : vector<32x1xf32> to vector<32x32xf32>
    %206 = arith.mulf %201, %205 : vector<32x32xf32>
    %207 = vector.broadcast %180 : vector<1x32xf32> to vector<32x32xf32>
    %208 = arith.mulf %206, %207 : vector<32x32xf32>
    %209 = vector.broadcast %181 : vector<1x32xf32> to vector<32x32xf32>
    %210 = arith.addf %208, %209 : vector<32x32xf32>
    %211 = arith.truncf %210 : vector<32x32xf32> to vector<32x32xbf16>
    %c0_87 = arith.constant 0 : index
    %c0_88 = arith.constant 0 : index
    %212 = vector.load %arg15[%c0_87, %c0_88] : memref<32x128xf32, #tpu.memory_space<vmem>>, vector<32x128xf32>
    %213 = arith.truncf %212 : vector<32x128xf32> to vector<32x128xbf16>
    %cst_89 = arith.constant dense<0.000000e+00> : vector<32x128xf32>
    %214 = tpu.matmul %211, %213, %cst_89 {dimension_numbers = #tpu.dot_dimension_numbers<[1], [0], [0], [1], [0, 0, 1, 1], [], []>} : vector<32x32xbf16>, vector<32x128xbf16>, vector<32x128xf32> -> vector<32x128xf32>
    %215 = vector.broadcast %185 : vector<1x128xf32> to vector<32x128xf32>
    %216 = arith.addf %214, %215 : vector<32x128xf32>
    %cst_90 = arith.constant 0.000000e+00 : f32
    %217 = vector.broadcast %cst_90 : f32 to vector<32x128xf32>
    %218 = arith.maximumf %216, %217 : vector<32x128xf32>
    %219 = arith.truncf %218 : vector<32x128xf32> to vector<32x128xbf16>
    %c0_91 = arith.constant 0 : index
    %c0_92 = arith.constant 0 : index
    %220 = vector.load %arg16[%c0_91, %c0_92] : memref<128x32xf32, #tpu.memory_space<vmem>>, vector<128x32xf32>
    %221 = arith.truncf %220 : vector<128x32xf32> to vector<128x32xbf16>
    %cst_93 = arith.constant dense<0.000000e+00> : vector<32x32xf32>
    %222 = tpu.matmul %219, %221, %cst_93 {dimension_numbers = #tpu.dot_dimension_numbers<[1], [0], [0], [1], [0, 0, 1, 1], [], []>} : vector<32x128xbf16>, vector<128x32xbf16>, vector<32x32xf32> -> vector<32x32xf32>
    %223 = vector.broadcast %184 : vector<1x32xf32> to vector<32x32xf32>
    %224 = arith.addf %222, %223 : vector<32x32xf32>
    %225 = arith.addf %210, %224 : vector<32x32xf32>
    %cst_94 = arith.constant dense<0.000000e+00> : vector<32xf32>
    %226 = vector.multi_reduction <add>, %225, %cst_94 [1] : vector<32x32xf32> to vector<32xf32>
    %227 = vector.shape_cast %226 : vector<32xf32> to vector<32x1xf32>
    %cst_95 = arith.constant 3.200000e+01 : f32
    %228 = vector.broadcast %cst_95 : f32 to vector<32x1xf32>
    %229 = arith.divf %227, %228 : vector<32x1xf32>
    %230 = vector.broadcast %229 : vector<32x1xf32> to vector<32x32xf32>
    %231 = arith.subf %225, %230 : vector<32x32xf32>
    %232 = arith.mulf %231, %231 : vector<32x32xf32>
    %cst_96 = arith.constant dense<0.000000e+00> : vector<32xf32>
    %233 = vector.multi_reduction <add>, %232, %cst_96 [1] : vector<32x32xf32> to vector<32xf32>
    %234 = vector.shape_cast %233 : vector<32xf32> to vector<32x1xf32>
    %cst_97 = arith.constant 3.200000e+01 : f32
    %235 = vector.broadcast %cst_97 : f32 to vector<32x1xf32>
    %236 = arith.divf %234, %235 : vector<32x1xf32>
    %237 = vector.broadcast %229 : vector<32x1xf32> to vector<32x32xf32>
    %238 = arith.subf %225, %237 : vector<32x32xf32>
    %cst_98 = arith.constant 9.99999974E-6 : f32
    %239 = vector.broadcast %cst_98 : f32 to vector<32x1xf32>
    %240 = arith.addf %236, %239 : vector<32x1xf32>
    %241 = math.rsqrt %240 : vector<32x1xf32>
    %242 = vector.broadcast %241 : vector<32x1xf32> to vector<32x32xf32>
    %243 = arith.mulf %238, %242 : vector<32x32xf32>
    %244 = vector.broadcast %182 : vector<1x32xf32> to vector<32x32xf32>
    %245 = arith.mulf %243, %244 : vector<32x32xf32>
    %246 = vector.broadcast %183 : vector<1x32xf32> to vector<32x32xf32>
    %247 = arith.addf %245, %246 : vector<32x32xf32>
    %c0_99 = arith.constant 0 : index
    %c0_100 = arith.constant 0 : index
    %248 = vector.load %arg22[%c0_99, %c0_100] : memref<6x32xf32, #tpu.memory_space<vmem>>, vector<1x32xf32>
    %c1_101 = arith.constant 1 : index
    %c0_102 = arith.constant 0 : index
    %249 = vector.load %arg22[%c1_101, %c0_102] : memref<6x32xf32, #tpu.memory_space<vmem>>, vector<1x32xf32>
    %c2 = arith.constant 2 : index
    %c0_103 = arith.constant 0 : index
    %250 = vector.load %arg22[%c2, %c0_103] : memref<6x32xf32, #tpu.memory_space<vmem>>, vector<1x32xf32>
    %c3 = arith.constant 3 : index
    %c0_104 = arith.constant 0 : index
    %251 = vector.load %arg22[%c3, %c0_104] : memref<6x32xf32, #tpu.memory_space<vmem>>, vector<1x32xf32>
    %c4 = arith.constant 4 : index
    %c0_105 = arith.constant 0 : index
    %252 = vector.load %arg22[%c4, %c0_105] : memref<6x32xf32, #tpu.memory_space<vmem>>, vector<1x32xf32>
    %c5 = arith.constant 5 : index
    %c0_106 = arith.constant 0 : index
    %253 = vector.load %arg22[%c5, %c0_106] : memref<6x32xf32, #tpu.memory_space<vmem>>, vector<1x32xf32>
    %c0_107 = arith.constant 0 : index
    %c0_108 = arith.constant 0 : index
    %254 = vector.load %arg19[%c0_107, %c0_108] : memref<64x32xf32, #tpu.memory_space<vmem>>, vector<64x32xf32>
    %255 = arith.truncf %254 : vector<64x32xf32> to vector<64x32xbf16>
    %256 = arith.truncf %124 : vector<32x32xf32> to vector<32x32xbf16>
    %257 = vector.extract_strided_slice %255 {offsets = [0, 0], sizes = [32, 32], strides = [1, 1]} : vector<64x32xbf16> to vector<32x32xbf16>
    %cst_109 = arith.constant dense<0.000000e+00> : vector<32x32xf32>
    %258 = tpu.matmul %256, %257, %cst_109 {dimension_numbers = #tpu.dot_dimension_numbers<[1], [0], [0], [1], [0, 0, 1, 1], [], []>} : vector<32x32xbf16>, vector<32x32xbf16>, vector<32x32xf32> -> vector<32x32xf32>
    %259 = arith.truncf %247 : vector<32x32xf32> to vector<32x32xbf16>
    %260 = vector.extract_strided_slice %255 {offsets = [32, 0], sizes = [32, 32], strides = [1, 1]} : vector<64x32xbf16> to vector<32x32xbf16>
    %cst_110 = arith.constant dense<0.000000e+00> : vector<32x32xf32>
    %261 = tpu.matmul %259, %260, %cst_110 {dimension_numbers = #tpu.dot_dimension_numbers<[1], [0], [0], [1], [0, 0, 1, 1], [], []>} : vector<32x32xbf16>, vector<32x32xbf16>, vector<32x32xf32> -> vector<32x32xf32>
    %262 = arith.addf %258, %261 : vector<32x32xf32>
    %263 = vector.broadcast %248 : vector<1x32xf32> to vector<32x32xf32>
    %264 = arith.addf %262, %263 : vector<32x32xf32>
    %cst_111 = arith.constant 0.000000e+00 : f32
    %265 = vector.broadcast %cst_111 : f32 to vector<32x32xf32>
    %266 = arith.maximumf %264, %265 : vector<32x32xf32>
    %cst_112 = arith.constant dense<0.000000e+00> : vector<32xf32>
    %267 = vector.multi_reduction <add>, %266, %cst_112 [1] : vector<32x32xf32> to vector<32xf32>
    %268 = vector.shape_cast %267 : vector<32xf32> to vector<32x1xf32>
    %cst_113 = arith.constant 3.200000e+01 : f32
    %269 = vector.broadcast %cst_113 : f32 to vector<32x1xf32>
    %270 = arith.divf %268, %269 : vector<32x1xf32>
    %271 = vector.broadcast %270 : vector<32x1xf32> to vector<32x32xf32>
    %272 = arith.subf %266, %271 : vector<32x32xf32>
    %273 = arith.mulf %272, %272 : vector<32x32xf32>
    %cst_114 = arith.constant dense<0.000000e+00> : vector<32xf32>
    %274 = vector.multi_reduction <add>, %273, %cst_114 [1] : vector<32x32xf32> to vector<32xf32>
    %275 = vector.shape_cast %274 : vector<32xf32> to vector<32x1xf32>
    %cst_115 = arith.constant 3.200000e+01 : f32
    %276 = vector.broadcast %cst_115 : f32 to vector<32x1xf32>
    %277 = arith.divf %275, %276 : vector<32x1xf32>
    %278 = vector.broadcast %270 : vector<32x1xf32> to vector<32x32xf32>
    %279 = arith.subf %266, %278 : vector<32x32xf32>
    %cst_116 = arith.constant 9.99999974E-6 : f32
    %280 = vector.broadcast %cst_116 : f32 to vector<32x1xf32>
    %281 = arith.addf %277, %280 : vector<32x1xf32>
    %282 = math.rsqrt %281 : vector<32x1xf32>
    %283 = vector.broadcast %282 : vector<32x1xf32> to vector<32x32xf32>
    %284 = arith.mulf %279, %283 : vector<32x32xf32>
    %285 = vector.broadcast %249 : vector<1x32xf32> to vector<32x32xf32>
    %286 = arith.mulf %284, %285 : vector<32x32xf32>
    %287 = vector.broadcast %250 : vector<1x32xf32> to vector<32x32xf32>
    %288 = arith.addf %286, %287 : vector<32x32xf32>
    %289 = arith.truncf %288 : vector<32x32xf32> to vector<32x32xbf16>
    %c0_117 = arith.constant 0 : index
    %c0_118 = arith.constant 0 : index
    %290 = vector.load %arg20[%c0_117, %c0_118] : memref<32x96xf32, #tpu.memory_space<vmem>>, vector<32x96xf32>
    %291 = arith.truncf %290 : vector<32x96xf32> to vector<32x96xbf16>
    %cst_119 = arith.constant dense<0.000000e+00> : vector<32x96xf32>
    %292 = tpu.matmul %289, %291, %cst_119 {dimension_numbers = #tpu.dot_dimension_numbers<[1], [0], [0], [1], [0, 0, 1, 1], [], []>} : vector<32x32xbf16>, vector<32x96xbf16>, vector<32x96xf32> -> vector<32x96xf32>
    %c0_120 = arith.constant 0 : index
    %c0_121 = arith.constant 0 : index
    %293 = vector.load %arg23[%c0_120, %c0_121] : memref<1x96xf32, #tpu.memory_space<vmem>>, vector<1x96xf32>
    %294 = vector.broadcast %293 : vector<1x96xf32> to vector<32x96xf32>
    %295 = arith.addf %292, %294 : vector<32x96xf32>
    %296 = vector.extract_strided_slice %295 {offsets = [0, 0], sizes = [32, 32], strides = [1, 1]} : vector<32x96xf32> to vector<32x32xf32>
    %297 = vector.shape_cast %296 : vector<32x32xf32> to vector<2x16x32xf32>
    %298 = vector.extract_strided_slice %295 {offsets = [0, 32], sizes = [32, 32], strides = [1, 1]} : vector<32x96xf32> to vector<32x32xf32>
    %299 = vector.shape_cast %298 : vector<32x32xf32> to vector<2x16x32xf32>
    %300 = vector.extract_strided_slice %295 {offsets = [0, 64], sizes = [32, 32], strides = [1, 1]} : vector<32x96xf32> to vector<32x32xf32>
    %301 = vector.shape_cast %300 : vector<32x32xf32> to vector<2x16x32xf32>
    %cst_122 = arith.constant 0.353553385 : f32
    %302 = vector.broadcast %cst_122 : f32 to vector<2x16x32xf32>
    %303 = arith.mulf %297, %302 : vector<2x16x32xf32>
    %304 = vector.shape_cast %303 : vector<2x16x32xf32> to vector<2x1x16x32xf32>
    %305 = vector.shape_cast %1 : vector<4x1x32xf32> to vector<1x4x1x32xf32>
    %306 = vector.broadcast %304 : vector<2x1x16x32xf32> to vector<2x4x16x32xf32>
    %307 = vector.broadcast %305 : vector<1x4x1x32xf32> to vector<2x4x16x32xf32>
    %308 = arith.mulf %306, %307 : vector<2x4x16x32xf32>
    %309 = vector.shape_cast %308 : vector<2x4x16x32xf32> to vector<2x64x32xf32>
    %310 = arith.truncf %309 : vector<2x64x32xf32> to vector<2x64x32xbf16>
    %311 = arith.truncf %299 : vector<2x16x32xf32> to vector<2x16x32xbf16>
    "tpu.trace_start"() <{level = 10 : i32, message = "bqe,bme->bqm"}> : () -> ()
    %cst_123 = arith.constant dense<0.000000e+00> : vector<2x64x16xf32>
    %312 = tpu.matmul %310, %311, %cst_123 {dimension_numbers = #tpu.dot_dimension_numbers<[2], [2], [1], [1], [0, 0, 0, 1, 1, 1], [0], [0]>} : vector<2x64x32xbf16>, vector<2x16x32xbf16>, vector<2x64x16xf32> -> vector<2x64x16xf32>
    "tpu.trace_stop"() : () -> ()
    %cst_124 = arith.constant dense<0xFF800000> : vector<2x64xf32>
    %313 = vector.multi_reduction <maximumf>, %312, %cst_124 [2] : vector<2x64x16xf32> to vector<2x64xf32>
    %314 = vector.shape_cast %313 : vector<2x64xf32> to vector<2x64x1xf32>
    %315 = vector.broadcast %314 : vector<2x64x1xf32> to vector<2x64x16xf32>
    %316 = arith.subf %312, %315 : vector<2x64x16xf32>
    %317 = math.exp %316 : vector<2x64x16xf32>
    %cst_125 = arith.constant dense<0.000000e+00> : vector<2x64xf32>
    %318 = vector.multi_reduction <add>, %317, %cst_125 [2] : vector<2x64x16xf32> to vector<2x64xf32>
    %319 = vector.shape_cast %318 : vector<2x64xf32> to vector<2x64x1xf32>
    %320 = tpu.reciprocal %319 {approx = true} : vector<2x64x1xf32> -> vector<2x64x1xf32>
    %321 = vector.broadcast %320 : vector<2x64x1xf32> to vector<2x64x16xf32>
    %322 = arith.mulf %317, %321 : vector<2x64x16xf32>
    %323 = arith.truncf %322 : vector<2x64x16xf32> to vector<2x64x16xbf16>
    %324 = arith.truncf %301 : vector<2x16x32xf32> to vector<2x16x32xbf16>
    "tpu.trace_start"() <{level = 10 : i32, message = "bqm,bme->bqe"}> : () -> ()
    %cst_126 = arith.constant dense<0.000000e+00> : vector<2x64x32xf32>
    %325 = tpu.matmul %323, %324, %cst_126 {dimension_numbers = #tpu.dot_dimension_numbers<[2], [1], [1], [2], [0, 0, 0, 1, 1, 2], [0], [0]>} : vector<2x64x16xbf16>, vector<2x16x32xbf16>, vector<2x64x32xf32> -> vector<2x64x32xf32>
    "tpu.trace_stop"() : () -> ()
    %326 = vector.shape_cast %325 : vector<2x64x32xf32> to vector<2x4x16x32xf32>
    %327 = vector.shape_cast %1 : vector<4x1x32xf32> to vector<1x4x1x32xf32>
    %328 = vector.broadcast %327 : vector<1x4x1x32xf32> to vector<2x4x16x32xf32>
    %329 = arith.mulf %326, %328 : vector<2x4x16x32xf32>
    %cst_127 = arith.constant dense<0.000000e+00> : vector<2x16x32xf32>
    %330 = vector.multi_reduction <add>, %329, %cst_127 [1] : vector<2x4x16x32xf32> to vector<2x16x32xf32>
    %331 = vector.shape_cast %330 : vector<2x16x32xf32> to vector<32x32xf32>
    %332 = arith.truncf %331 : vector<32x32xf32> to vector<32x32xbf16>
    %c0_128 = arith.constant 0 : index
    %c0_129 = arith.constant 0 : index
    %333 = vector.load %arg21[%c0_128, %c0_129] : memref<32x32xf32, #tpu.memory_space<vmem>>, vector<32x32xf32>
    %334 = arith.truncf %333 : vector<32x32xf32> to vector<32x32xbf16>
    %cst_130 = arith.constant dense<0.000000e+00> : vector<32x32xf32>
    %335 = tpu.matmul %332, %334, %cst_130 {dimension_numbers = #tpu.dot_dimension_numbers<[1], [0], [0], [1], [0, 0, 1, 1], [], []>} : vector<32x32xbf16>, vector<32x32xbf16>, vector<32x32xf32> -> vector<32x32xf32>
    %336 = vector.broadcast %251 : vector<1x32xf32> to vector<32x32xf32>
    %337 = arith.addf %335, %336 : vector<32x32xf32>
    %338 = arith.addf %337, %288 : vector<32x32xf32>
    %cst_131 = arith.constant dense<0.000000e+00> : vector<32xf32>
    %339 = vector.multi_reduction <add>, %338, %cst_131 [1] : vector<32x32xf32> to vector<32xf32>
    %340 = vector.shape_cast %339 : vector<32xf32> to vector<32x1xf32>
    %cst_132 = arith.constant 3.200000e+01 : f32
    %341 = vector.broadcast %cst_132 : f32 to vector<32x1xf32>
    %342 = arith.divf %340, %341 : vector<32x1xf32>
    %343 = vector.broadcast %342 : vector<32x1xf32> to vector<32x32xf32>
    %344 = arith.subf %338, %343 : vector<32x32xf32>
    %345 = arith.mulf %344, %344 : vector<32x32xf32>
    %cst_133 = arith.constant dense<0.000000e+00> : vector<32xf32>
    %346 = vector.multi_reduction <add>, %345, %cst_133 [1] : vector<32x32xf32> to vector<32xf32>
    %347 = vector.shape_cast %346 : vector<32xf32> to vector<32x1xf32>
    %cst_134 = arith.constant 3.200000e+01 : f32
    %348 = vector.broadcast %cst_134 : f32 to vector<32x1xf32>
    %349 = arith.divf %347, %348 : vector<32x1xf32>
    %350 = vector.broadcast %342 : vector<32x1xf32> to vector<32x32xf32>
    %351 = arith.subf %338, %350 : vector<32x32xf32>
    %cst_135 = arith.constant 9.99999974E-6 : f32
    %352 = vector.broadcast %cst_135 : f32 to vector<32x1xf32>
    %353 = arith.addf %349, %352 : vector<32x1xf32>
    %354 = math.rsqrt %353 : vector<32x1xf32>
    %355 = vector.broadcast %354 : vector<32x1xf32> to vector<32x32xf32>
    %356 = arith.mulf %351, %355 : vector<32x32xf32>
    %357 = vector.broadcast %252 : vector<1x32xf32> to vector<32x32xf32>
    %358 = arith.mulf %356, %357 : vector<32x32xf32>
    %359 = vector.broadcast %253 : vector<1x32xf32> to vector<32x32xf32>
    %360 = arith.addf %358, %359 : vector<32x32xf32>
    %361 = vector.shape_cast %360 : vector<32x32xf32> to vector<2x16x32xf32>
    %c0_136 = arith.constant 0 : index
    %c0_137 = arith.constant 0 : index
    %c0_138 = arith.constant 0 : index
    %362 = vector.load %arg24[%c0_136, %c0_137, %c0_138] : memref<2x16x32xf32, #tpu.memory_space<vmem>>, vector<2x16x32xf32>
    tpu.vector_store %arg24[%c0_136, %c0_137, %c0_138], %361 {strides = array<i32>} : memref<2x16x32xf32, #tpu.memory_space<vmem>>, vector<2x16x32xf32>,
    %363 = vector.shape_cast %124 : vector<32x32xf32> to vector<2x16x32xf32>
    %c0_139 = arith.constant 0 : index
    %c0_140 = arith.constant 0 : index
    %c0_141 = arith.constant 0 : index
    %364 = vector.load %arg25[%c0_139, %c0_140, %c0_141] : memref<2x16x32xf32, #tpu.memory_space<vmem>>, vector<2x16x32xf32>
    tpu.vector_store %arg25[%c0_139, %c0_140, %c0_141], %363 {strides = array<i32>} : memref<2x16x32xf32, #tpu.memory_space<vmem>>, vector<2x16x32xf32>,
    %365 = vector.shape_cast %247 : vector<32x32xf32> to vector<2x16x32xf32>
    %c0_142 = arith.constant 0 : index
    %c0_143 = arith.constant 0 : index
    %c0_144 = arith.constant 0 : index
    %366 = vector.load %arg26[%c0_142, %c0_143, %c0_144] : memref<2x16x32xf32, #tpu.memory_space<vmem>>, vector<2x16x32xf32>
    tpu.vector_store %arg26[%c0_142, %c0_143, %c0_144], %365 {strides = array<i32>} : memref<2x16x32xf32, #tpu.memory_space<vmem>>, vector<2x16x32xf32>,
    %c0_145 = arith.constant 0 : index
    %c0_146 = arith.constant 0 : index
    %c0_147 = arith.constant 0 : index
    %367 = vector.load %arg27[%c0_145, %c0_146, %c0_147] : memref<2x64x16xf32, #tpu.memory_space<vmem>>, vector<2x64x16xf32>
    tpu.vector_store %arg27[%c0_145, %c0_146, %c0_147], %48 {strides = array<i32>} : memref<2x64x16xf32, #tpu.memory_space<vmem>>, vector<2x64x16xf32>,
    %c0_148 = arith.constant 0 : index
    %c0_149 = arith.constant 0 : index
    %c0_150 = arith.constant 0 : index
    %368 = vector.load %arg28[%c0_148, %c0_149, %c0_150] : memref<2x64x16xf32, #tpu.memory_space<vmem>>, vector<2x64x16xf32>
    tpu.vector_store %arg28[%c0_148, %c0_149, %c0_150], %171 {strides = array<i32>} : memref<2x64x16xf32, #tpu.memory_space<vmem>>, vector<2x64x16xf32>,
    return
  }
  func.func @transform_0(%arg0: i32) -> (i32, i32, i32) {
    %c0_i32 = arith.constant 0 : i32
    %c0_i32_0 = arith.constant 0 : i32
    %c0_i32_1 = arith.constant 0 : i32
    return %arg0, %c0_i32, %c0_i32_0 : i32, i32, i32
  }
  func.func @transform_1(%arg0: i32) -> (i32, i32, i32) {
    %c0_i32 = arith.constant 0 : i32
    %c0_i32_0 = arith.constant 0 : i32
    %c0_i32_1 = arith.constant 0 : i32
    return %arg0, %c0_i32, %c0_i32_0 : i32, i32, i32
  }
  func.func @transform_2(%arg0: i32) -> (i32, i32, i32) {
    %c0_i32 = arith.constant 0 : i32
    %c0_i32_0 = arith.constant 0 : i32
    %c0_i32_1 = arith.constant 0 : i32
    return %arg0, %c0_i32, %c0_i32_0 : i32, i32, i32
  }
  func.func @transform_3(%arg0: i32) -> (i32, i32, i32) {
    %c0_i32 = arith.constant 0 : i32
    %c0_i32_0 = arith.constant 0 : i32
    %c0_i32_1 = arith.constant 0 : i32
    return %arg0, %c0_i32, %c0_i32_0 : i32, i32, i32
  }
  func.func @transform_4(%arg0: i32) -> (i32, i32) {
    %c0_i32 = arith.constant 0 : i32
    %c0_i32_0 = arith.constant 0 : i32
    %c0_i32_1 = arith.constant 0 : i32
    return %c0_i32, %c0_i32_0 : i32, i32
  }
  func.func @transform_5(%arg0: i32) -> (i32, i32, i32) {
    %c0_i32 = arith.constant 0 : i32
    %c0_i32_0 = arith.constant 0 : i32
    %c0_i32_1 = arith.constant 0 : i32
    %c0_i32_2 = arith.constant 0 : i32
    return %c0_i32, %c0_i32_0, %c0_i32_1 : i32, i32, i32
  }
  func.func @transform_6(%arg0: i32) -> (i32, i32) {
    %c0_i32 = arith.constant 0 : i32
    %c0_i32_0 = arith.constant 0 : i32
    %c0_i32_1 = arith.constant 0 : i32
    return %c0_i32, %c0_i32_0 : i32, i32
  }
  func.func @transform_7(%arg0: i32) -> (i32, i32) {
    %c0_i32 = arith.constant 0 : i32
    %c0_i32_0 = arith.constant 0 : i32
    %c0_i32_1 = arith.constant 0 : i32
    return %c0_i32, %c0_i32_0 : i32, i32
  }
  func.func @transform_8(%arg0: i32) -> (i32, i32) {
    %c0_i32 = arith.constant 0 : i32
    %c0_i32_0 = arith.constant 0 : i32
    %c0_i32_1 = arith.constant 0 : i32
    return %c0_i32, %c0_i32_0 : i32, i32
  }
  func.func @transform_9(%arg0: i32) -> (i32, i32) {
    %c0_i32 = arith.constant 0 : i32
    %c0_i32_0 = arith.constant 0 : i32
    %c0_i32_1 = arith.constant 0 : i32
    return %c0_i32, %c0_i32_0 : i32, i32
  }
  func.func @transform_10(%arg0: i32) -> (i32, i32) {
    %c0_i32 = arith.constant 0 : i32
    %c0_i32_0 = arith.constant 0 : i32
    %c0_i32_1 = arith.constant 0 : i32
    return %c0_i32, %c0_i32_0 : i32, i32
  }
  func.func @transform_11(%arg0: i32) -> (i32, i32) {
    %c0_i32 = arith.constant 0 : i32
    %c0_i32_0 = arith.constant 0 : i32
    %c0_i32_1 = arith.constant 0 : i32
    return %c0_i32, %c0_i32_0 : i32, i32
  }
  func.func @transform_12(%arg0: i32) -> (i32, i32) {
    %c0_i32 = arith.constant 0 : i32
    %c0_i32_0 = arith.constant 0 : i32
    %c0_i32_1 = arith.constant 0 : i32
    return %c0_i32, %c0_i32_0 : i32, i32
  }
  func.func @transform_13(%arg0: i32) -> (i32, i32) {
    %c0_i32 = arith.constant 0 : i32
    %c0_i32_0 = arith.constant 0 : i32
    %c0_i32_1 = arith.constant 0 : i32
    return %c0_i32, %c0_i32_0 : i32, i32
  }
  func.func @transform_14(%arg0: i32) -> (i32, i32) {
    %c0_i32 = arith.constant 0 : i32
    %c0_i32_0 = arith.constant 0 : i32
    %c0_i32_1 = arith.constant 0 : i32
    return %c0_i32, %c0_i32_0 : i32, i32
  }
  func.func @transform_15(%arg0: i32) -> (i32, i32) {
    %c0_i32 = arith.constant 0 : i32
    %c0_i32_0 = arith.constant 0 : i32
    %c0_i32_1 = arith.constant 0 : i32
    return %c0_i32, %c0_i32_0 : i32, i32
  }
  func.func @transform_16(%arg0: i32) -> (i32, i32) {
    %c0_i32 = arith.constant 0 : i32
    %c0_i32_0 = arith.constant 0 : i32
    %c0_i32_1 = arith.constant 0 : i32
    return %c0_i32, %c0_i32_0 : i32, i32
  }
  func.func @transform_17(%arg0: i32) -> (i32, i32) {
    %c0_i32 = arith.constant 0 : i32
    %c0_i32_0 = arith.constant 0 : i32
    %c0_i32_1 = arith.constant 0 : i32
    return %c0_i32, %c0_i32_0 : i32, i32
  }
  func.func @transform_18(%arg0: i32) -> (i32, i32) {
    %c0_i32 = arith.constant 0 : i32
    %c0_i32_0 = arith.constant 0 : i32
    %c0_i32_1 = arith.constant 0 : i32
    return %c0_i32, %c0_i32_0 : i32, i32
  }
  func.func @transform_19(%arg0: i32) -> (i32, i32) {
    %c0_i32 = arith.constant 0 : i32
    %c0_i32_0 = arith.constant 0 : i32
    %c0_i32_1 = arith.constant 0 : i32
    return %c0_i32, %c0_i32_0 : i32, i32
  }
  func.func @transform_20(%arg0: i32) -> (i32, i32) {
    %c0_i32 = arith.constant 0 : i32
    %c0_i32_0 = arith.constant 0 : i32
    %c0_i32_1 = arith.constant 0 : i32
    return %c0_i32, %c0_i32_0 : i32, i32
  }
  func.func @transform_21(%arg0: i32) -> (i32, i32) {
    %c0_i32 = arith.constant 0 : i32
    %c0_i32_0 = arith.constant 0 : i32
    %c0_i32_1 = arith.constant 0 : i32
    return %c0_i32, %c0_i32_0 : i32, i32
  }
  func.func @transform_22(%arg0: i32) -> (i32, i32) {
    %c0_i32 = arith.constant 0 : i32
    %c0_i32_0 = arith.constant 0 : i32
    %c0_i32_1 = arith.constant 0 : i32
    return %c0_i32, %c0_i32_0 : i32, i32
  }
  func.func @transform_23(%arg0: i32) -> (i32, i32, i32) {
    %c0_i32 = arith.constant 0 : i32
    %c0_i32_0 = arith.constant 0 : i32
    %c0_i32_1 = arith.constant 0 : i32
    return %arg0, %c0_i32, %c0_i32_0 : i32, i32, i32
  }
  func.func @transform_24(%arg0: i32) -> (i32, i32, i32) {
    %c0_i32 = arith.constant 0 : i32
    %c0_i32_0 = arith.constant 0 : i32
    %c0_i32_1 = arith.constant 0 : i32
    return %arg0, %c0_i32, %c0_i32_0 : i32, i32, i32
  }
  func.func @transform_25(%arg0: i32) -> (i32, i32, i32) {
    %c0_i32 = arith.constant 0 : i32
    %c0_i32_0 = arith.constant 0 : i32
    %c0_i32_1 = arith.constant 0 : i32
    return %arg0, %c0_i32, %c0_i32_0 : i32, i32, i32
  }
  func.func @transform_26(%arg0: i32) -> (i32, i32, i32) {
    %c0_i32 = arith.constant 0 : i32
    %c0_i32_0 = arith.constant 0 : i32
    %c0_i32_1 = arith.constant 0 : i32
    return %arg0, %c0_i32, %c0_i32_0 : i32, i32, i32
  }
  func.func @transform_27(%arg0: i32) -> (i32, i32, i32) {
    %c0_i32 = arith.constant 0 : i32
    %c0_i32_0 = arith.constant 0 : i32
    %c0_i32_1 = arith.constant 0 : i32
    return %arg0, %c0_i32, %c0_i32_0 : i32, i32, i32
  }
}

</mosaic_0001>

<llo_original>
// kernel: tpu_custom_call.1
$region0: #{tpu_custom_call.1}
  #allocation0 [shape = 'u32[]', space=smem, size = 0x4, offset = 0x4, fixed_abs, tag = 'smem constant byte address 0x4 - core index']
  #allocation1 [shape = 'u32[144,128]{1,0:T(1,128)}', space=vmem, size = 0x12000, scoped, tag = 'internal scratch']
  %s0 = inlined_call_operand.vmem [shape: f32[4,16,32], index: 0, kind: input, shape index: {}]
  %s1 = inlined_call_operand.vmem [shape: f32[4,16,32], index: 1, kind: input, shape index: {}]
  %s2 = inlined_call_operand.vmem [shape: f32[4,16,768], index: 2, kind: input, shape index: {}]
  %s3 = inlined_call_operand.vmem [shape: f32[4,16,1408], index: 3, kind: input, shape index: {}]
  %s4 = inlined_call_operand.vmem [shape: f32[16,512], index: 4, kind: input, shape index: {}]
  %s5 = inlined_call_operand.vmem [shape: f32[4,1,32], index: 5, kind: input, shape index: {}]
  %s6 = inlined_call_operand.vmem [shape: f32[512,32], index: 6, kind: input, shape index: {}]
  %s7 = inlined_call_operand.vmem [shape: f32[768,64], index: 7, kind: input, shape index: {}]
  %s8 = inlined_call_operand.vmem [shape: f32[32,128], index: 8, kind: input, shape index: {}]
  %s9 = inlined_call_operand.vmem [shape: f32[128,32], index: 9, kind: input, shape index: {}]
  %s10 = inlined_call_operand.vmem [shape: f32[21,32], index: 10, kind: input, shape index: {}]
  %s11 = inlined_call_operand.vmem [shape: f32[2,128], index: 11, kind: input, shape index: {}]
  %s12 = inlined_call_operand.vmem [shape: f32[512,32], index: 12, kind: input, shape index: {}]
  %s13 = inlined_call_operand.vmem [shape: f32[1408,64], index: 13, kind: input, shape index: {}]
  %s14 = inlined_call_operand.vmem [shape: f32[32,128], index: 14, kind: input, shape index: {}]
  %s15 = inlined_call_operand.vmem [shape: f32[128,32], index: 15, kind: input, shape index: {}]
  %s16 = inlined_call_operand.vmem [shape: f32[21,32], index: 16, kind: input, shape index: {}]
  %s17 = inlined_call_operand.vmem [shape: f32[2,128], index: 17, kind: input, shape index: {}]
  %s18 = inlined_call_operand.vmem [shape: f32[64,32], index: 18, kind: input, shape index: {}]
  %s19 = inlined_call_operand.vmem [shape: f32[32,96], index: 19, kind: input, shape index: {}]
  %s20 = inlined_call_operand.vmem [shape: f32[32,32], index: 20, kind: input, shape index: {}]
  %s21 = inlined_call_operand.vmem [shape: f32[6,32], index: 21, kind: input, shape index: {}]
  %s22 = inlined_call_operand.vmem [shape: f32[1,96], index: 22, kind: input, shape index: {}]
  %s23 = inlined_call_operand.hbm [shape: f32[4,16,32], index: 23, kind: output, shape index: {0}]
  %s24 = inlined_call_operand.hbm [shape: f32[4,16,32], index: 24, kind: output, shape index: {1}]
  %s25 = inlined_call_operand.hbm [shape: f32[4,16,32], index: 25, kind: output, shape index: {2}]
  %s26 = inlined_call_operand.vmem [shape: f32[4,64,16], index: 26, kind: output, shape index: {3}]
  %s27 = inlined_call_operand.vmem [shape: f32[4,64,16], index: 27, kind: output, shape index: {4}]
  %28 = xla_tuple %s23, %s24, %s25, %s26, %s27
  %s29 = sld [smem:[#allocation0]]
  $region157: #{tpu_custom_call.1} parent=0
    _
  %s31 = ssub.s32 1, %s29
  %s32 = scalar_select 0, %s31, %s29
  $region1: #{tpu_custom_call.1} parent=0
    #allocation2 [shape = 'u8[32768]{0}', space=vmem, size = 0x8000, scoped, tag = 'output window, operand 0']
    #allocation3 [shape = 's32[2]{0}', space=sflag, size = 0x8, scoped, tag = 'scoped memory for tpu_custom_call.1']
    #allocation4 [shape = 'u8[32768]{0}', space=vmem, size = 0x8000, scoped, tag = 'output window, operand 1']
    #allocation5 [shape = 's32[2]{0}', space=sflag, size = 0x8, scoped, tag = 'scoped memory for tpu_custom_call.1']
    #allocation6 [shape = 'u8[32768]{0}', space=vmem, size = 0x8000, scoped, tag = 'output window, operand 2']
    %33 = vsyncpa [#allocation3], 0
    %s34 = scalar_lea.sflag [#allocation3], 1
    %35 = vsyncpa %s34, 0
    %36 = vsyncpa [#allocation5], 0
    %s37 = scalar_lea.sflag [#allocation5], 1
    %38 = vsyncpa %s37, 0
    loop: start=0, step=1, limit=4
    $region2: #{tpu_custom_call.1} parent=1 // loop_pre_header
      _
    $region3: #{tpu_custom_call.1} parent=1 // loop_header
      %s40 = sphi 0, %s44
      %p41 = scmp.ge.s32.totalorder %s40, 4
      %s50 = sphi 0, %s52
      %s53 = sphi 0, %s50
      %s54 = sphi 0, %s53
      %s70 = sphi 0, %s54
      %s76 = sphi 0, %s78
      %s79 = sphi 0, %s76
      %s80 = sphi 0, %s79
      %s96 = sphi 0, %s80
      %s102 = sphi 0, %s104
      %s105 = sphi 0, %s102
      %s106 = sphi 0, %s105
      %s122 = sphi 0, %s106
      %s128 = sphi 0, %s130
      %s131 = sphi 0, %s128
      %s132 = sphi 0, %s131
      %s148 = sphi 0, %s132
      %s152 = sphi 0, %s152
      %s154 = sphi 0, %s152
      %s155 = sphi 0, %s154
      %s169 = sphi 0, %s155
      %s173 = sphi 0, %s173
      %s175 = sphi 0, %s173
      %s176 = sphi 0, %s175
      %s190 = sphi 0, %s176
      %s194 = sphi 0, %s194
      %s196 = sphi 0, %s194
      %s197 = sphi 0, %s196
      %s211 = sphi 0, %s197
      %s215 = sphi 0, %s215
      %s217 = sphi 0, %s215
      %s218 = sphi 0, %s217
      %s232 = sphi 0, %s218
      %s236 = sphi 0, %s236
      %s238 = sphi 0, %s236
      %s239 = sphi 0, %s238
      %s253 = sphi 0, %s239
      %s257 = sphi 0, %s257
      %s259 = sphi 0, %s257
      %s260 = sphi 0, %s259
      %s274 = sphi 0, %s260
      %s278 = sphi 0, %s278
      %s280 = sphi 0, %s278
      %s281 = sphi 0, %s280
      %s295 = sphi 0, %s281
      %s299 = sphi 0, %s299
      %s301 = sphi 0, %s299
      %s302 = sphi 0, %s301
      %s316 = sphi 0, %s302
      %s320 = sphi 0, %s320
      %s322 = sphi 0, %s320
      %s323 = sphi 0, %s322
      %s337 = sphi 0, %s323
      %s341 = sphi 0, %s341
      %s343 = sphi 0, %s341
      %s344 = sphi 0, %s343
      %s358 = sphi 0, %s344
      %s362 = sphi 0, %s362
      %s364 = sphi 0, %s362
      %s365 = sphi 0, %s364
      %s379 = sphi 0, %s365
      %s383 = sphi 0, %s383
      %s385 = sphi 0, %s383
      %s386 = sphi 0, %s385
      %s400 = sphi 0, %s386
      %s404 = sphi 0, %s404
      %s406 = sphi 0, %s404
      %s407 = sphi 0, %s406
      %s421 = sphi 0, %s407
      %s425 = sphi 0, %s425
      %s427 = sphi 0, %s425
      %s428 = sphi 0, %s427
      %s442 = sphi 0, %s428
      %s446 = sphi 0, %s446
      %s448 = sphi 0, %s446
      %s449 = sphi 0, %s448
      %s463 = sphi 0, %s449
      %s467 = sphi 0, %s467
      %s469 = sphi 0, %s467
      %s470 = sphi 0, %s469
      %s484 = sphi 0, %s470
      %s488 = sphi 0, %s488
      %s490 = sphi 0, %s488
      %s491 = sphi 0, %s490
      %s505 = sphi 0, %s491
      %s509 = sphi 0, %s509
      %s511 = sphi 0, %s509
      %s512 = sphi 0, %s511
      %s526 = sphi 0, %s512
      %s530 = sphi 0, %s530
      %s532 = sphi 0, %s530
      %s533 = sphi 0, %s532
      %s547 = sphi 0, %s533
      %s553 = sphi 0, %s555
      %s556 = sphi 0, %s553
      %s557 = sphi 0, %s556
      %s573 = sphi 0, %s557
      %s579 = sphi 0, %s581
      %s582 = sphi 0, %s579
      %s583 = sphi 0, %s582
      %s599 = sphi 0, %s583
      %s605 = sphi 0, %s607
      %s608 = sphi 0, %s605
      %s609 = sphi 0, %s608
      %s625 = sphi 0, %s609
      %s631 = sphi 0, %s633
      %s634 = sphi 0, %s631
      %s635 = sphi 0, %s634
      %s651 = sphi 0, %s635
      %s657 = sphi 0, %s659
      %s660 = sphi 0, %s657
      %s661 = sphi 0, %s660
      %s677 = sphi 0, %s661
    $region4: #{tpu_custom_call.1} parent=1 // loop_header_branch
      %43 = sbr.rel (%p41) target = $region8
    $region5: #{tpu_custom_call.1} parent=1 // loop_body
      %s45 = ssub.s32 %s40, 1
      %s46 = ssub.s32 %s40, 2
      %s47 = sadd.s32 %s40, 1
      %s48 = ssub.s32 %s40, %s47
      %p49 = scmp.eq.s32.totalorder %s48, 0
      %s51 = sadd.s32 %s50, 1
      %s52 = scalar_select %p49, %s50, %s51
      %p55 = pneg %p49
      %p56 = scmp.eq.s32.totalorder %s40, 1
      %p57 = por %p55, %p56
      %p58 = scmp.ne.s32.totalorder %s50, %s53
      %p59 = scmp.eq.s32.totalorder %s40, 0
      %p60 = por %p58, %p59
      %p61 = scmp.ne.s32.totalorder %s50, %s53
      %p62 = scmp.eq.s32.totalorder %s45, 1
      %p63 = por %p61, %p62
      %p64 = scmp.ne.s32.totalorder %s53, %s54
      %p65 = scmp.eq.s32.totalorder %s45, 0
      %p66 = por %p64, %p65
      %p67 = scmp.ne.s32.totalorder %s53, %s54
      %p68 = scmp.eq.s32.totalorder %s46, 1
      %p69 = por %p67, %p68
      %p71 = scmp.ne.s32.totalorder %s54, %s70
      %p72 = scmp.eq.s32.totalorder %s46, 0
      %p73 = por %p71, %p72
      %s74 = ssub.s32 %s40, %s47
      %p75 = scmp.eq.s32.totalorder %s74, 0
      %s77 = sadd.s32 %s76, 1
      %s78 = scalar_select %p75, %s76, %s77
      %p81 = pneg %p75
      %p82 = scmp.eq.s32.totalorder %s40, 1
      %p83 = por %p81, %p82
      %p84 = scmp.ne.s32.totalorder %s76, %s79
      %p85 = scmp.eq.s32.totalorder %s40, 0
      %p86 = por %p84, %p85
      %p87 = scmp.ne.s32.totalorder %s76, %s79
      %p88 = scmp.eq.s32.totalorder %s45, 1
      %p89 = por %p87, %p88
      %p90 = scmp.ne.s32.totalorder %s79, %s80
      %p91 = scmp.eq.s32.totalorder %s45, 0
      %p92 = por %p90, %p91
      %p93 = scmp.ne.s32.totalorder %s79, %s80
      %p94 = scmp.eq.s32.totalorder %s46, 1
      %p95 = por %p93, %p94
      %p97 = scmp.ne.s32.totalorder %s80, %s96
      %p98 = scmp.eq.s32.totalorder %s46, 0
      %p99 = por %p97, %p98
      %s100 = ssub.s32 %s40, %s47
      %p101 = scmp.eq.s32.totalorder %s100, 0
      %s103 = sadd.s32 %s102, 1
      %s104 = scalar_select %p101, %s102, %s103
      %p107 = pneg %p101
      %p108 = scmp.eq.s32.totalorder %s40, 1
      %p109 = por %p107, %p108
      %p110 = scmp.ne.s32.totalorder %s102, %s105
      %p111 = scmp.eq.s32.totalorder %s40, 0
      %p112 = por %p110, %p111
      %p113 = scmp.ne.s32.totalorder %s102, %s105
      %p114 = scmp.eq.s32.totalorder %s45, 1
      %p115 = por %p113, %p114
      %p116 = scmp.ne.s32.totalorder %s105, %s106
      %p117 = scmp.eq.s32.totalorder %s45, 0
      %p118 = por %p116, %p117
      %p119 = scmp.ne.s32.totalorder %s105, %s106
      %p120 = scmp.eq.s32.totalorder %s46, 1
      %p121 = por %p119, %p120
      %p123 = scmp.ne.s32.totalorder %s106, %s122
      %p124 = scmp.eq.s32.totalorder %s46, 0
      %p125 = por %p123, %p124
      %s126 = ssub.s32 %s40, %s47
      %p127 = scmp.eq.s32.totalorder %s126, 0
      %s129 = sadd.s32 %s128, 1
      %s130 = scalar_select %p127, %s128, %s129
      %p133 = pneg %p127
      %p134 = scmp.eq.s32.totalorder %s40, 1
      %p135 = por %p133, %p134
      %p136 = scmp.ne.s32.totalorder %s128, %s131
      %p137 = scmp.eq.s32.totalorder %s40, 0
      %p138 = por %p136, %p137
      %p139 = scmp.ne.s32.totalorder %s128, %s131
      %p140 = scmp.eq.s32.totalorder %s45, 1
      %p141 = por %p139, %p140
      %p142 = scmp.ne.s32.totalorder %s131, %s132
      %p143 = scmp.eq.s32.totalorder %s45, 0
      %p144 = por %p142, %p143
      %p145 = scmp.ne.s32.totalorder %s131, %s132
      %p146 = scmp.eq.s32.totalorder %s46, 1
      %p147 = por %p145, %p146
      %p149 = scmp.ne.s32.totalorder %s132, %s148
      %p150 = scmp.eq.s32.totalorder %s46, 0
      %p151 = por %p149, %p150
      %s153 = sadd.s32 %s152, 1
      %p156 = scmp.eq.s32.totalorder %s40, 1
      %p157 = scmp.ne.s32.totalorder %s152, %s154
      %p158 = scmp.eq.s32.totalorder %s40, 0
      %p159 = por %p157, %p158
      %p160 = scmp.ne.s32.totalorder %s152, %s154
      %p161 = scmp.eq.s32.totalorder %s45, 1
      %p162 = por %p160, %p161
      %p163 = scmp.ne.s32.totalorder %s154, %s155
      %p164 = scmp.eq.s32.totalorder %s45, 0
      %p165 = por %p163, %p164
      %p166 = scmp.ne.s32.totalorder %s154, %s155
      %p167 = scmp.eq.s32.totalorder %s46, 1
      %p168 = por %p166, %p167
      %p170 = scmp.ne.s32.totalorder %s155, %s169
      %p171 = scmp.eq.s32.totalorder %s46, 0
      %p172 = por %p170, %p171
      %s174 = sadd.s32 %s173, 1
      %p177 = scmp.eq.s32.totalorder %s40, 1
      %p178 = scmp.ne.s32.totalorder %s173, %s175
      %p179 = scmp.eq.s32.totalorder %s40, 0
      %p180 = por %p178, %p179
      %p181 = scmp.ne.s32.totalorder %s173, %s175
      %p182 = scmp.eq.s32.totalorder %s45, 1
      %p183 = por %p181, %p182
      %p184 = scmp.ne.s32.totalorder %s175, %s176
      %p185 = scmp.eq.s32.totalorder %s45, 0
      %p186 = por %p184, %p185
      %p187 = scmp.ne.s32.totalorder %s175, %s176
      %p188 = scmp.eq.s32.totalorder %s46, 1
      %p189 = por %p187, %p188
      %p191 = scmp.ne.s32.totalorder %s176, %s190
      %p192 = scmp.eq.s32.totalorder %s46, 0
      %p193 = por %p191, %p192
      %s195 = sadd.s32 %s194, 1
      %p198 = scmp.eq.s32.totalorder %s40, 1
      %p199 = scmp.ne.s32.totalorder %s194, %s196
      %p200 = scmp.eq.s32.totalorder %s40, 0
      %p201 = por %p199, %p200
      %p202 = scmp.ne.s32.totalorder %s194, %s196
      %p203 = scmp.eq.s32.totalorder %s45, 1
      %p204 = por %p202, %p203
      %p205 = scmp.ne.s32.totalorder %s196, %s197
      %p206 = scmp.eq.s32.totalorder %s45, 0
      %p207 = por %p205, %p206
      %p208 = scmp.ne.s32.totalorder %s196, %s197
      %p209 = scmp.eq.s32.totalorder %s46, 1
      %p210 = por %p208, %p209
      %p212 = scmp.ne.s32.totalorder %s197, %s211
      %p213 = scmp.eq.s32.totalorder %s46, 0
      %p214 = por %p212, %p213
      %s216 = sadd.s32 %s215, 1
      %p219 = scmp.eq.s32.totalorder %s40, 1
      %p220 = scmp.ne.s32.totalorder %s215, %s217
      %p221 = scmp.eq.s32.totalorder %s40, 0
      %p222 = por %p220, %p221
      %p223 = scmp.ne.s32.totalorder %s215, %s217
      %p224 = scmp.eq.s32.totalorder %s45, 1
      %p225 = por %p223, %p224
      %p226 = scmp.ne.s32.totalorder %s217, %s218
      %p227 = scmp.eq.s32.totalorder %s45, 0
      %p228 = por %p226, %p227
      %p229 = scmp.ne.s32.totalorder %s217, %s218
      %p230 = scmp.eq.s32.totalorder %s46, 1
      %p231 = por %p229, %p230
      %p233 = scmp.ne.s32.totalorder %s218, %s232
      %p234 = scmp.eq.s32.totalorder %s46, 0
      %p235 = por %p233, %p234
      %s237 = sadd.s32 %s236, 1
      %p240 = scmp.eq.s32.totalorder %s40, 1
      %p241 = scmp.ne.s32.totalorder %s236, %s238
      %p242 = scmp.eq.s32.totalorder %s40, 0
      %p243 = por %p241, %p242
      %p244 = scmp.ne.s32.totalorder %s236, %s238
      %p245 = scmp.eq.s32.totalorder %s45, 1
      %p246 = por %p244, %p245
      %p247 = scmp.ne.s32.totalorder %s238, %s239
      %p248 = scmp.eq.s32.totalorder %s45, 0
      %p249 = por %p247, %p248
      %p250 = scmp.ne.s32.totalorder %s238, %s239
      %p251 = scmp.eq.s32.totalorder %s46, 1
      %p252 = por %p250, %p251
      %p254 = scmp.ne.s32.totalorder %s239, %s253
      %p255 = scmp.eq.s32.totalorder %s46, 0
      %p256 = por %p254, %p255
      %s258 = sadd.s32 %s257, 1
      %p261 = scmp.eq.s32.totalorder %s40, 1
      %p262 = scmp.ne.s32.totalorder %s257, %s259
      %p263 = scmp.eq.s32.totalorder %s40, 0
      %p264 = por %p262, %p263
      %p265 = scmp.ne.s32.totalorder %s257, %s259
      %p266 = scmp.eq.s32.totalorder %s45, 1
      %p267 = por %p265, %p266
      %p268 = scmp.ne.s32.totalorder %s259, %s260
      %p269 = scmp.eq.s32.totalorder %s45, 0
      %p270 = por %p268, %p269
      %p271 = scmp.ne.s32.totalorder %s259, %s260
      %p272 = scmp.eq.s32.totalorder %s46, 1
      %p273 = por %p271, %p272
      %p275 = scmp.ne.s32.totalorder %s260, %s274
      %p276 = scmp.eq.s32.totalorder %s46, 0
      %p277 = por %p275, %p276
      %s279 = sadd.s32 %s278, 1
      %p282 = scmp.eq.s32.totalorder %s40, 1
      %p283 = scmp.ne.s32.totalorder %s278, %s280
      %p284 = scmp.eq.s32.totalorder %s40, 0
      %p285 = por %p283, %p284
      %p286 = scmp.ne.s32.totalorder %s278, %s280
      %p287 = scmp.eq.s32.totalorder %s45, 1
      %p288 = por %p286, %p287
      %p289 = scmp.ne.s32.totalorder %s280, %s281
      %p290 = scmp.eq.s32.totalorder %s45, 0
      %p291 = por %p289, %p290
      %p292 = scmp.ne.s32.totalorder %s280, %s281
      %p293 = scmp.eq.s32.totalorder %s46, 1
      %p294 = por %p292, %p293
      %p296 = scmp.ne.s32.totalorder %s281, %s295
      %p297 = scmp.eq.s32.totalorder %s46, 0
      %p298 = por %p296, %p297
      %s300 = sadd.s32 %s299, 1
      %p303 = scmp.eq.s32.totalorder %s40, 1
      %p304 = scmp.ne.s32.totalorder %s299, %s301
      %p305 = scmp.eq.s32.totalorder %s40, 0
      %p306 = por %p304, %p305
      %p307 = scmp.ne.s32.totalorder %s299, %s301
      %p308 = scmp.eq.s32.totalorder %s45, 1
      %p309 = por %p307, %p308
      %p310 = scmp.ne.s32.totalorder %s301, %s302
      %p311 = scmp.eq.s32.totalorder %s45, 0
      %p312 = por %p310, %p311
      %p313 = scmp.ne.s32.totalorder %s301, %s302
      %p314 = scmp.eq.s32.totalorder %s46, 1
      %p315 = por %p313, %p314
      %p317 = scmp.ne.s32.totalorder %s302, %s316
      %p318 = scmp.eq.s32.totalorder %s46, 0
      %p319 = por %p317, %p318
      %s321 = sadd.s32 %s320, 1
      %p324 = scmp.eq.s32.totalorder %s40, 1
      %p325 = scmp.ne.s32.totalorder %s320, %s322
      %p326 = scmp.eq.s32.totalorder %s40, 0
      %p327 = por %p325, %p326
      %p328 = scmp.ne.s32.totalorder %s320, %s322
      %p329 = scmp.eq.s32.totalorder %s45, 1
      %p330 = por %p328, %p329
      %p331 = scmp.ne.s32.totalorder %s322, %s323
      %p332 = scmp.eq.s32.totalorder %s45, 0
      %p333 = por %p331, %p332
      %p334 = scmp.ne.s32.totalorder %s322, %s323
      %p335 = scmp.eq.s32.totalorder %s46, 1
      %p336 = por %p334, %p335
      %p338 = scmp.ne.s32.totalorder %s323, %s337
      %p339 = scmp.eq.s32.totalorder %s46, 0
      %p340 = por %p338, %p339
      %s342 = sadd.s32 %s341, 1
      %p345 = scmp.eq.s32.totalorder %s40, 1
      %p346 = scmp.ne.s32.totalorder %s341, %s343
      %p347 = scmp.eq.s32.totalorder %s40, 0
      %p348 = por %p346, %p347
      %p349 = scmp.ne.s32.totalorder %s341, %s343
      %p350 = scmp.eq.s32.totalorder %s45, 1
      %p351 = por %p349, %p350
      %p352 = scmp.ne.s32.totalorder %s343, %s344
      %p353 = scmp.eq.s32.totalorder %s45, 0
      %p354 = por %p352, %p353
      %p355 = scmp.ne.s32.totalorder %s343, %s344
      %p356 = scmp.eq.s32.totalorder %s46, 1
      %p357 = por %p355, %p356
      %p359 = scmp.ne.s32.totalorder %s344, %s358
      %p360 = scmp.eq.s32.totalorder %s46, 0
      %p361 = por %p359, %p360
      %s363 = sadd.s32 %s362, 1
      %p366 = scmp.eq.s32.totalorder %s40, 1
      %p367 = scmp.ne.s32.totalorder %s362, %s364
      %p368 = scmp.eq.s32.totalorder %s40, 0
      %p369 = por %p367, %p368
      %p370 = scmp.ne.s32.totalorder %s362, %s364
      %p371 = scmp.eq.s32.totalorder %s45, 1
      %p372 = por %p370, %p371
      %p373 = scmp.ne.s32.totalorder %s364, %s365
      %p374 = scmp.eq.s32.totalorder %s45, 0
      %p375 = por %p373, %p374
      %p376 = scmp.ne.s32.totalorder %s364, %s365
      %p377 = scmp.eq.s32.totalorder %s46, 1
      %p378 = por %p376, %p377
      %p380 = scmp.ne.s32.totalorder %s365, %s379
      %p381 = scmp.eq.s32.totalorder %s46, 0
      %p382 = por %p380, %p381
      %s384 = sadd.s32 %s383, 1
      %p387 = scmp.eq.s32.totalorder %s40, 1
      %p388 = scmp.ne.s32.totalorder %s383, %s385
      %p389 = scmp.eq.s32.totalorder %s40, 0
      %p390 = por %p388, %p389
      %p391 = scmp.ne.s32.totalorder %s383, %s385
      %p392 = scmp.eq.s32.totalorder %s45, 1
      %p393 = por %p391, %p392
      %p394 = scmp.ne.s32.totalorder %s385, %s386
      %p395 = scmp.eq.s32.totalorder %s45, 0
      %p396 = por %p394, %p395
      %p397 = scmp.ne.s32.totalorder %s385, %s386
      %p398 = scmp.eq.s32.totalorder %s46, 1
      %p399 = por %p397, %p398
      %p401 = scmp.ne.s32.totalorder %s386, %s400
      %p402 = scmp.eq.s32.totalorder %s46, 0
      %p403 = por %p401, %p402
      %s405 = sadd.s32 %s404, 1
      %p408 = scmp.eq.s32.totalorder %s40, 1
      %p409 = scmp.ne.s32.totalorder %s404, %s406
      %p410 = scmp.eq.s32.totalorder %s40, 0
      %p411 = por %p409, %p410
      %p412 = scmp.ne.s32.totalorder %s404, %s406
      %p413 = scmp.eq.s32.totalorder %s45, 1
      %p414 = por %p412, %p413
      %p415 = scmp.ne.s32.totalorder %s406, %s407
      %p416 = scmp.eq.s32.totalorder %s45, 0
      %p417 = por %p415, %p416
      %p418 = scmp.ne.s32.totalorder %s406, %s407
      %p419 = scmp.eq.s32.totalorder %s46, 1
      %p420 = por %p418, %p419
      %p422 = scmp.ne.s32.totalorder %s407, %s421
      %p423 = scmp.eq.s32.totalorder %s46, 0
      %p424 = por %p422, %p423
      %s426 = sadd.s32 %s425, 1
      %p429 = scmp.eq.s32.totalorder %s40, 1
      %p430 = scmp.ne.s32.totalorder %s425, %s427
      %p431 = scmp.eq.s32.totalorder %s40, 0
      %p432 = por %p430, %p431
      %p433 = scmp.ne.s32.totalorder %s425, %s427
      %p434 = scmp.eq.s32.totalorder %s45, 1
      %p435 = por %p433, %p434
      %p436 = scmp.ne.s32.totalorder %s427, %s428
      %p437 = scmp.eq.s32.totalorder %s45, 0
      %p438 = por %p436, %p437
      %p439 = scmp.ne.s32.totalorder %s427, %s428
      %p440 = scmp.eq.s32.totalorder %s46, 1
      %p441 = por %p439, %p440
      %p443 = scmp.ne.s32.totalorder %s428, %s442
      %p444 = scmp.eq.s32.totalorder %s46, 0
      %p445 = por %p443, %p444
      %s447 = sadd.s32 %s446, 1
      %p450 = scmp.eq.s32.totalorder %s40, 1
      %p451 = scmp.ne.s32.totalorder %s446, %s448
      %p452 = scmp.eq.s32.totalorder %s40, 0
      %p453 = por %p451, %p452
      %p454 = scmp.ne.s32.totalorder %s446, %s448
      %p455 = scmp.eq.s32.totalorder %s45, 1
      %p456 = por %p454, %p455
      %p457 = scmp.ne.s32.totalorder %s448, %s449
      %p458 = scmp.eq.s32.totalorder %s45, 0
      %p459 = por %p457, %p458
      %p460 = scmp.ne.s32.totalorder %s448, %s449
      %p461 = scmp.eq.s32.totalorder %s46, 1
      %p462 = por %p460, %p461
      %p464 = scmp.ne.s32.totalorder %s449, %s463
      %p465 = scmp.eq.s32.totalorder %s46, 0
      %p466 = por %p464, %p465
      %s468 = sadd.s32 %s467, 1
      %p471 = scmp.eq.s32.totalorder %s40, 1
      %p472 = scmp.ne.s32.totalorder %s467, %s469
      %p473 = scmp.eq.s32.totalorder %s40, 0
      %p474 = por %p472, %p473
      %p475 = scmp.ne.s32.totalorder %s467, %s469
      %p476 = scmp.eq.s32.totalorder %s45, 1
      %p477 = por %p475, %p476
      %p478 = scmp.ne.s32.totalorder %s469, %s470
      %p479 = scmp.eq.s32.totalorder %s45, 0
      %p480 = por %p478, %p479
      %p481 = scmp.ne.s32.totalorder %s469, %s470
      %p482 = scmp.eq.s32.totalorder %s46, 1
      %p483 = por %p481, %p482
      %p485 = scmp.ne.s32.totalorder %s470, %s484
      %p486 = scmp.eq.s32.totalorder %s46, 0
      %p487 = por %p485, %p486
      %s489 = sadd.s32 %s488, 1
      %p492 = scmp.eq.s32.totalorder %s40, 1
      %p493 = scmp.ne.s32.totalorder %s488, %s490
      %p494 = scmp.eq.s32.totalorder %s40, 0
      %p495 = por %p493, %p494
      %p496 = scmp.ne.s32.totalorder %s488, %s490
      %p497 = scmp.eq.s32.totalorder %s45, 1
      %p498 = por %p496, %p497
      %p499 = scmp.ne.s32.totalorder %s490, %s491
      %p500 = scmp.eq.s32.totalorder %s45, 0
      %p501 = por %p499, %p500
      %p502 = scmp.ne.s32.totalorder %s490, %s491
      %p503 = scmp.eq.s32.totalorder %s46, 1
      %p504 = por %p502, %p503
      %p506 = scmp.ne.s32.totalorder %s491, %s505
      %p507 = scmp.eq.s32.totalorder %s46, 0
      %p508 = por %p506, %p507
      %s510 = sadd.s32 %s509, 1
      %p513 = scmp.eq.s32.totalorder %s40, 1
      %p514 = scmp.ne.s32.totalorder %s509, %s511
      %p515 = scmp.eq.s32.totalorder %s40, 0
      %p516 = por %p514, %p515
      %p517 = scmp.ne.s32.totalorder %s509, %s511
      %p518 = scmp.eq.s32.totalorder %s45, 1
      %p519 = por %p517, %p518
      %p520 = scmp.ne.s32.totalorder %s511, %s512
      %p521 = scmp.eq.s32.totalorder %s45, 0
      %p522 = por %p520, %p521
      %p523 = scmp.ne.s32.totalorder %s511, %s512
      %p524 = scmp.eq.s32.totalorder %s46, 1
      %p525 = por %p523, %p524
      %p527 = scmp.ne.s32.totalorder %s512, %s526
      %p528 = scmp.eq.s32.totalorder %s46, 0
      %p529 = por %p527, %p528
      %s531 = sadd.s32 %s530, 1
      %p534 = scmp.eq.s32.totalorder %s40, 1
      %p535 = scmp.ne.s32.totalorder %s530, %s532
      %p536 = scmp.eq.s32.totalorder %s40, 0
      %p537 = por %p535, %p536
      %p538 = scmp.ne.s32.totalorder %s530, %s532
      %p539 = scmp.eq.s32.totalorder %s45, 1
      %p540 = por %p538, %p539
      %p541 = scmp.ne.s32.totalorder %s532, %s533
      %p542 = scmp.eq.s32.totalorder %s45, 0
      %p543 = por %p541, %p542
      %p544 = scmp.ne.s32.totalorder %s532, %s533
      %p545 = scmp.eq.s32.totalorder %s46, 1
      %p546 = por %p544, %p545
      %p548 = scmp.ne.s32.totalorder %s533, %s547
      %p549 = scmp.eq.s32.totalorder %s46, 0
      %p550 = por %p548, %p549
      %s551 = ssub.s32 %s40, %s47
      %p552 = scmp.eq.s32.totalorder %s551, 0
      %s554 = sadd.s32 %s553, 1
      %s555 = scalar_select %p552, %s553, %s554
      %p558 = pneg %p552
      %p559 = scmp.eq.s32.totalorder %s40, 1
      %p560 = por %p558, %p559
      %p561 = scmp.ne.s32.totalorder %s553, %s556
      %p562 = scmp.eq.s32.totalorder %s40, 0
      %p563 = por %p561, %p562
      %p564 = scmp.ne.s32.totalorder %s553, %s556
      %p565 = scmp.eq.s32.totalorder %s45, 1
      %p566 = por %p564, %p565
      %p567 = scmp.ne.s32.totalorder %s556, %s557
      %p568 = scmp.eq.s32.totalorder %s45, 0
      %p569 = por %p567, %p568
      %p570 = scmp.ne.s32.totalorder %s556, %s557
      %p571 = scmp.eq.s32.totalorder %s46, 1
      %p572 = por %p570, %p571
      %p574 = scmp.ne.s32.totalorder %s557, %s573
      %p575 = scmp.eq.s32.totalorder %s46, 0
      %p576 = por %p574, %p575
      %s577 = ssub.s32 %s40, %s47
      %p578 = scmp.eq.s32.totalorder %s577, 0
      %s580 = sadd.s32 %s579, 1
      %s581 = scalar_select %p578, %s579, %s580
      %p584 = pneg %p578
      %p585 = scmp.eq.s32.totalorder %s40, 1
      %p586 = por %p584, %p585
      %p587 = scmp.ne.s32.totalorder %s579, %s582
      %p588 = scmp.eq.s32.totalorder %s40, 0
      %p589 = por %p587, %p588
      %p590 = scmp.ne.s32.totalorder %s579, %s582
      %p591 = scmp.eq.s32.totalorder %s45, 1
      %p592 = por %p590, %p591
      %p593 = scmp.ne.s32.totalorder %s582, %s583
      %p594 = scmp.eq.s32.totalorder %s45, 0
      %p595 = por %p593, %p594
      %p596 = scmp.ne.s32.totalorder %s582, %s583
      %p597 = scmp.eq.s32.totalorder %s46, 1
      %p598 = por %p596, %p597
      %p600 = scmp.ne.s32.totalorder %s583, %s599
      %p601 = scmp.eq.s32.totalorder %s46, 0
      %p602 = por %p600, %p601
      %s603 = ssub.s32 %s40, %s47
      %p604 = scmp.eq.s32.totalorder %s603, 0
      %s606 = sadd.s32 %s605, 1
      %s607 = scalar_select %p604, %s605, %s606
      %p610 = pneg %p604
      %p611 = scmp.eq.s32.totalorder %s40, 1
      %p612 = por %p610, %p611
      %p613 = scmp.ne.s32.totalorder %s605, %s608
      %p614 = scmp.eq.s32.totalorder %s40, 0
      %p615 = por %p613, %p614
      %p616 = scmp.ne.s32.totalorder %s605, %s608
      %p617 = scmp.eq.s32.totalorder %s45, 1
      %p618 = por %p616, %p617
      %p619 = scmp.ne.s32.totalorder %s608, %s609
      %p620 = scmp.eq.s32.totalorder %s45, 0
      %p621 = por %p619, %p620
      %p622 = scmp.ne.s32.totalorder %s608, %s609
      %p623 = scmp.eq.s32.totalorder %s46, 1
      %p624 = por %p622, %p623
      %p626 = scmp.ne.s32.totalorder %s609, %s625
      %p627 = scmp.eq.s32.totalorder %s46, 0
      %p628 = por %p626, %p627
      %s629 = ssub.s32 %s40, %s47
      %p630 = scmp.eq.s32.totalorder %s629, 0
      %s632 = sadd.s32 %s631, 1
      %s633 = scalar_select %p630, %s631, %s632
      %p636 = pneg %p630
      %p637 = scmp.eq.s32.totalorder %s40, 1
      %p638 = por %p636, %p637
      %p639 = scmp.ne.s32.totalorder %s631, %s634
      %p640 = scmp.eq.s32.totalorder %s40, 0
      %p641 = por %p639, %p640
      %p642 = scmp.ne.s32.totalorder %s631, %s634
      %p643 = scmp.eq.s32.totalorder %s45, 1
      %p644 = por %p642, %p643
      %p645 = scmp.ne.s32.totalorder %s634, %s635
      %p646 = scmp.eq.s32.totalorder %s45, 0
      %p647 = por %p645, %p646
      %p648 = scmp.ne.s32.totalorder %s634, %s635
      %p649 = scmp.eq.s32.totalorder %s46, 1
      %p650 = por %p648, %p649
      %p652 = scmp.ne.s32.totalorder %s635, %s651
      %p653 = scmp.eq.s32.totalorder %s46, 0
      %p654 = por %p652, %p653
      %s655 = ssub.s32 %s40, %s47
      %p656 = scmp.eq.s32.totalorder %s655, 0
      %s658 = sadd.s32 %s657, 1
      %s659 = scalar_select %p656, %s657, %s658
      %p662 = pneg %p656
      %p663 = scmp.eq.s32.totalorder %s40, 1
      %p664 = por %p662, %p663
      %p665 = scmp.ne.s32.totalorder %s657, %s660
      %p666 = scmp.eq.s32.totalorder %s40, 0
      %p667 = por %p665, %p666
      %p668 = scmp.ne.s32.totalorder %s657, %s660
      %p669 = scmp.eq.s32.totalorder %s45, 1
      %p670 = por %p668, %p669
      %p671 = scmp.ne.s32.totalorder %s660, %s661
      %p672 = scmp.eq.s32.totalorder %s45, 0
      %p673 = por %p671, %p672
      %p674 = scmp.ne.s32.totalorder %s660, %s661
      %p675 = scmp.eq.s32.totalorder %s46, 1
      %p676 = por %p674, %p675
      %p678 = scmp.ne.s32.totalorder %s661, %s677
      %p679 = scmp.eq.s32.totalorder %s46, 0
      %p680 = por %p678, %p679
      %p681 = scmp.le.s32.totalorder 1, %s40
      %p682 = scmp.lt.s32.totalorder %s40, 3
      %p683 = pnand %p681, %p682
      %p684 = pneg %p683
      // Predicated region
      $region9: #{tpu_custom_call.1} parent=5 // pred_check
        _
      $region10: #{tpu_custom_call.1} parent=5 // pred_check_branch
        %686 = sbr.rel (%p683) target = $region12
      $region11: #{tpu_custom_call.1} parent=5 // pred_region
        %s687 = ssub.s32 %s40, 1
        // Predicated region
        $region13: #{tpu_custom_call.1} parent=11 // pred_check
          %p688 = pneg %p165
        $region14: #{tpu_custom_call.1} parent=11 // pred_check_branch
          %690 = sbr.rel (%p688) target = $region16
        $region15: #{tpu_custom_call.1} parent=11 // pred_region
          _
        $region16: #{tpu_custom_call.1} parent=11 // pred_fallthru
          _
        // Predicated region
        $region17: #{tpu_custom_call.1} parent=11 // pred_check
          %p691 = pneg %p186
        $region18: #{tpu_custom_call.1} parent=11 // pred_check_branch
          %693 = sbr.rel (%p691) target = $region20
        $region19: #{tpu_custom_call.1} parent=11 // pred_region
          _
        $region20: #{tpu_custom_call.1} parent=11 // pred_fallthru
          _
        // Predicated region
        $region21: #{tpu_custom_call.1} parent=11 // pred_check
          %p694 = pneg %p207
        $region22: #{tpu_custom_call.1} parent=11 // pred_check_branch
          %696 = sbr.rel (%p694) target = $region24
        $region23: #{tpu_custom_call.1} parent=11 // pred_region
          _
        $region24: #{tpu_custom_call.1} parent=11 // pred_fallthru
          _
        // Predicated region
        $region25: #{tpu_custom_call.1} parent=11 // pred_check
          %p697 = pneg %p228
        $region26: #{tpu_custom_call.1} parent=11 // pred_check_branch
          %699 = sbr.rel (%p697) target = $region28
        $region27: #{tpu_custom_call.1} parent=11 // pred_region
          _
        $region28: #{tpu_custom_call.1} parent=11 // pred_fallthru
          _
        // Predicated region
        $region29: #{tpu_custom_call.1} parent=11 // pred_check
          %p700 = pneg %p249
        $region30: #{tpu_custom_call.1} parent=11 // pred_check_branch
          %702 = sbr.rel (%p700) target = $region32
        $region31: #{tpu_custom_call.1} parent=11 // pred_region
          _
        $region32: #{tpu_custom_call.1} parent=11 // pred_fallthru
          _
        // Predicated region
        $region33: #{tpu_custom_call.1} parent=11 // pred_check
          %p703 = pneg %p270
        $region34: #{tpu_custom_call.1} parent=11 // pred_check_branch
          %705 = sbr.rel (%p703) target = $region36
        $region35: #{tpu_custom_call.1} parent=11 // pred_region
          _
        $region36: #{tpu_custom_call.1} parent=11 // pred_fallthru
          _
        // Predicated region
        $region37: #{tpu_custom_call.1} parent=11 // pred_check
          %p706 = pneg %p291
        $region38: #{tpu_custom_call.1} parent=11 // pred_check_branch
          %708 = sbr.rel (%p706) target = $region40
        $region39: #{tpu_custom_call.1} parent=11 // pred_region
          _
        $region40: #{tpu_custom_call.1} parent=11 // pred_fallthru
          _
        // Predicated region
        $region41: #{tpu_custom_call.1} parent=11 // pred_check
          %p709 = pneg %p312
        $region42: #{tpu_custom_call.1} parent=11 // pred_check_branch
          %711 = sbr.rel (%p709) target = $region44
        $region43: #{tpu_custom_call.1} parent=11 // pred_region
          _
        $region44: #{tpu_custom_call.1} parent=11 // pred_fallthru
          _
        // Predicated region
        $region45: #{tpu_custom_call.1} parent=11 // pred_check
          %p712 = pneg %p333
        $region46: #{tpu_custom_call.1} parent=11 // pred_check_branch
          %714 = sbr.rel (%p712) target = $region48
        $region47: #{tpu_custom_call.1} parent=11 // pred_region
          _
        $region48: #{tpu_custom_call.1} parent=11 // pred_fallthru
          _
        // Predicated region
        $region49: #{tpu_custom_call.1} parent=11 // pred_check
          %p715 = pneg %p354
        $region50: #{tpu_custom_call.1} parent=11 // pred_check_branch
          %717 = sbr.rel (%p715) target = $region52
        $region51: #{tpu_custom_call.1} parent=11 // pred_region
          _
        $region52: #{tpu_custom_call.1} parent=11 // pred_fallthru
          _
        // Predicated region
        $region53: #{tpu_custom_call.1} parent=11 // pred_check
          %p718 = pneg %p375
        $region54: #{tpu_custom_call.1} parent=11 // pred_check_branch
          %720 = sbr.rel (%p718) target = $region56
        $region55: #{tpu_custom_call.1} parent=11 // pred_region
          _
        $region56: #{tpu_custom_call.1} parent=11 // pred_fallthru
          _
        // Predicated region
        $region57: #{tpu_custom_call.1} parent=11 // pred_check
          %p721 = pneg %p396
        $region58: #{tpu_custom_call.1} parent=11 // pred_check_branch
          %723 = sbr.rel (%p721) target = $region60
        $region59: #{tpu_custom_call.1} parent=11 // pred_region
          _
        $region60: #{tpu_custom_call.1} parent=11 // pred_fallthru
          _
        // Predicated region
        $region61: #{tpu_custom_call.1} parent=11 // pred_check
          %p724 = pneg %p417
        $region62: #{tpu_custom_call.1} parent=11 // pred_check_branch
          %726 = sbr.rel (%p724) target = $region64
        $region63: #{tpu_custom_call.1} parent=11 // pred_region
          _
        $region64: #{tpu_custom_call.1} parent=11 // pred_fallthru
          _
        // Predicated region
        $region65: #{tpu_custom_call.1} parent=11 // pred_check
          %p727 = pneg %p438
        $region66: #{tpu_custom_call.1} parent=11 // pred_check_branch
          %729 = sbr.rel (%p727) target = $region68
        $region67: #{tpu_custom_call.1} parent=11 // pred_region
          _
        $region68: #{tpu_custom_call.1} parent=11 // pred_fallthru
          _
        // Predicated region
        $region69: #{tpu_custom_call.1} parent=11 // pred_check
          %p730 = pneg %p459
        $region70: #{tpu_custom_call.1} parent=11 // pred_check_branch
          %732 = sbr.rel (%p730) target = $region72
        $region71: #{tpu_custom_call.1} parent=11 // pred_region
          _
        $region72: #{tpu_custom_call.1} parent=11 // pred_fallthru
          _
        // Predicated region
        $region73: #{tpu_custom_call.1} parent=11 // pred_check
          %p733 = pneg %p480
        $region74: #{tpu_custom_call.1} parent=11 // pred_check_branch
          %735 = sbr.rel (%p733) target = $region76
        $region75: #{tpu_custom_call.1} parent=11 // pred_region
          _
        $region76: #{tpu_custom_call.1} parent=11 // pred_fallthru
          _
        // Predicated region
        $region77: #{tpu_custom_call.1} parent=11 // pred_check
          %p736 = pneg %p501
        $region78: #{tpu_custom_call.1} parent=11 // pred_check_branch
          %738 = sbr.rel (%p736) target = $region80
        $region79: #{tpu_custom_call.1} parent=11 // pred_region
          _
        $region80: #{tpu_custom_call.1} parent=11 // pred_fallthru
          _
        // Predicated region
        $region81: #{tpu_custom_call.1} parent=11 // pred_check
          %p739 = pneg %p522
        $region82: #{tpu_custom_call.1} parent=11 // pred_check_branch
          %741 = sbr.rel (%p739) target = $region84
        $region83: #{tpu_custom_call.1} parent=11 // pred_region
          _
        $region84: #{tpu_custom_call.1} parent=11 // pred_fallthru
          _
        // Predicated region
        $region85: #{tpu_custom_call.1} parent=11 // pred_check
          %p742 = pneg %p543
        $region86: #{tpu_custom_call.1} parent=11 // pred_check_branch
          %744 = sbr.rel (%p742) target = $region88
        $region87: #{tpu_custom_call.1} parent=11 // pred_region
          _
        $region88: #{tpu_custom_call.1} parent=11 // pred_fallthru
          _
      $region12: #{tpu_custom_call.1} parent=5 // pred_fallthru
        _
      %p745 = scmp.lt.s32.totalorder %s40, 2
      // Predicated region
      $region89: #{tpu_custom_call.1} parent=5 // pred_check
        %p746 = pneg %p745
      $region90: #{tpu_custom_call.1} parent=5 // pred_check_branch
        %748 = sbr.rel (%p746) target = $region92
      $region91: #{tpu_custom_call.1} parent=5 // pred_region
        // Predicated region
        $region93: #{tpu_custom_call.1} parent=91 // pred_check
          %p749 = pneg %p60
        $region94: #{tpu_custom_call.1} parent=91 // pred_check_branch
          %751 = sbr.rel (%p749) target = $region96
        $region95: #{tpu_custom_call.1} parent=91 // pred_region
          %s752 = smul.u32 2, %s40
          %p753 = scmp.lt.s32.totalorder %s752, 3
          %s754 = scalar_select %p753, %s752, 3
          %s755 = smul.addr %s754, 2
          %s756 = smul.addr %s755, 8
          %s757 = scalar_lea.vmem %s0, %s756
          %s758 = smul.u32 2, %s40
        $region96: #{tpu_custom_call.1} parent=91 // pred_fallthru
          _
        // Predicated region
        $region97: #{tpu_custom_call.1} parent=91 // pred_check
          %p759 = pneg %p86
        $region98: #{tpu_custom_call.1} parent=91 // pred_check_branch
          %761 = sbr.rel (%p759) target = $region100
        $region99: #{tpu_custom_call.1} parent=91 // pred_region
          %s762 = smul.u32 2, %s40
          %p763 = scmp.lt.s32.totalorder %s762, 3
          %s764 = scalar_select %p763, %s762, 3
          %s765 = smul.addr %s764, 2
          %s766 = smul.addr %s765, 8
          %s767 = scalar_lea.vmem %s1, %s766
          %s768 = smul.u32 2, %s40
        $region100: #{tpu_custom_call.1} parent=91 // pred_fallthru
          _
        // Predicated region
        $region101: #{tpu_custom_call.1} parent=91 // pred_check
          %p769 = pneg %p112
        $region102: #{tpu_custom_call.1} parent=91 // pred_check_branch
          %771 = sbr.rel (%p769) target = $region104
        $region103: #{tpu_custom_call.1} parent=91 // pred_region
          %s772 = smul.u32 2, %s40
          %p773 = scmp.lt.s32.totalorder %s772, 3
          %s774 = scalar_select %p773, %s772, 3
          %s775 = smul.addr %s774, 12
          %s776 = smul.addr %s775, 8
          %s777 = scalar_lea.vmem %s2, %s776
          %s778 = smul.u32 2, %s40
        $region104: #{tpu_custom_call.1} parent=91 // pred_fallthru
          _
        // Predicated region
        $region105: #{tpu_custom_call.1} parent=91 // pred_check
          %p779 = pneg %p138
        $region106: #{tpu_custom_call.1} parent=91 // pred_check_branch
          %781 = sbr.rel (%p779) target = $region108
        $region107: #{tpu_custom_call.1} parent=91 // pred_region
          %s782 = smul.u32 2, %s40
          %p783 = scmp.lt.s32.totalorder %s782, 3
          %s784 = scalar_select %p783, %s782, 3
          %s785 = smul.addr %s784, 22
          %s786 = smul.addr %s785, 8
          %s787 = scalar_lea.vmem %s3, %s786
          %s788 = smul.u32 2, %s40
        $region108: #{tpu_custom_call.1} parent=91 // pred_fallthru
          _
      $region92: #{tpu_custom_call.1} parent=5 // pred_fallthru
        _
      %p789 = scmp.le.s32.totalorder 1, %s40
      %p790 = scmp.lt.s32.totalorder %s40, 3
      %p791 = pnand %p789, %p790
      %p792 = pneg %p791
      // Predicated region
      $region109: #{tpu_custom_call.1} parent=5 // pred_check
        _
      $region110: #{tpu_custom_call.1} parent=5 // pred_check_branch
        %794 = sbr.rel (%p791) target = $region112
      $region111: #{tpu_custom_call.1} parent=5 // pred_region
        %s795 = ssub.s32 %s40, 1
        %s796 = smul.u32 2, %s45
        %p797 = scmp.lt.s32.totalorder %s796, 3
        %s798 = scalar_select %p797, %s796, 3
        %s799 = smul.addr %s798, 2
        %s800 = smul.addr %s799, 8
        %s801 = scalar_lea.vmem %s0, %s800
        %p802 = pneg %p66
        %p803 = pneg %p63
        %s804 = smul.u32 2, %s45
        %p805 = scmp.lt.s32.totalorder %s804, 3
        %s806 = scalar_select %p805, %s804, 3
        %s807 = smul.addr %s806, 2
        %s808 = smul.addr %s807, 8
        %s809 = scalar_lea.vmem %s1, %s808
        %p810 = pneg %p92
        %p811 = pneg %p89
        %s812 = smul.u32 2, %s45
        %p813 = scmp.lt.s32.totalorder %s812, 3
        %s814 = scalar_select %p813, %s812, 3
        %s815 = smul.addr %s814, 12
        %s816 = smul.addr %s815, 8
        %s817 = scalar_lea.vmem %s2, %s816
        %p818 = pneg %p118
        %p819 = pneg %p115
        %s820 = smul.u32 2, %s45
        %p821 = scmp.lt.s32.totalorder %s820, 3
        %s822 = scalar_select %p821, %s820, 3
        %s823 = smul.addr %s822, 22
        %s824 = smul.addr %s823, 8
        %s825 = scalar_lea.vmem %s3, %s824
        %p826 = pneg %p144
        %p827 = pneg %p141
        %p828 = pneg %p165
        %p829 = pneg %p162
        %p830 = pneg %p186
        %p831 = pneg %p183
        %p832 = pneg %p207
        %p833 = pneg %p204
        %p834 = pneg %p228
        %p835 = pneg %p225
        %p836 = pneg %p249
        %p837 = pneg %p246
        %p838 = pneg %p270
        %p839 = pneg %p267
        %p840 = pneg %p291
        %p841 = pneg %p288
        %p842 = pneg %p312
        %p843 = pneg %p309
        %p844 = pneg %p333
        %p845 = pneg %p330
        %p846 = pneg %p354
        %p847 = pneg %p351
        %p848 = pneg %p375
        %p849 = pneg %p372
        %p850 = pneg %p396
        %p851 = pneg %p393
        %p852 = pneg %p417
        %p853 = pneg %p414
        %p854 = pneg %p438
        %p855 = pneg %p435
        %p856 = pneg %p459
        %p857 = pneg %p456
        %p858 = pneg %p480
        %p859 = pneg %p477
        %p860 = pneg %p501
        %p861 = pneg %p498
        %p862 = pneg %p522
        %p863 = pneg %p519
        %p864 = pneg %p543
        %p865 = pneg %p540
        %p866 = pneg %p569
        %p867 = pneg %p566
        %s868 = sand.u32 %s556, 1
        %s869 = scalar_lea.sflag [#allocation3], %s868
        %s870 = sand.u32 %s556, 1
        %s871 = smul.addr %s870, 32
        %s872 = scalar_lea.vmem [#allocation2], %s871
        %p873 = pneg %p595
        %p874 = pneg %p592
        %s875 = sand.u32 %s45, 1
        %s876 = scalar_lea.sflag [#allocation5], %s875
        %s877 = sand.u32 %s582, 1
        %s878 = smul.addr %s877, 32
        %s879 = scalar_lea.vmem [#allocation4], %s878
        %p880 = pneg %p621
        %p881 = pneg %p618
        %s882 = sand.u32 %s45, 1
        %s883 = scalar_lea.sflag [#allocation5], %s882
        %s884 = sand.u32 %s608, 1
        %s885 = smul.addr %s884, 32
        %s886 = scalar_lea.vmem [#allocation6], %s885
        %p887 = pneg %p647
        %p888 = pneg %p644
        %s889 = smul.u32 2, %s45
        %p890 = scmp.lt.s32.totalorder %s889, 3
        %s891 = scalar_select %p890, %s889, 3
        %s892 = smul.addr %s891, 8
        %s893 = smul.addr %s892, 8
        %s894 = scalar_lea.vmem %s26, %s893
        %p895 = pneg %p673
        %p896 = pneg %p670
        %s897 = smul.u32 2, %s45
        %p898 = scmp.lt.s32.totalorder %s897, 3
        %s899 = scalar_select %p898, %s897, 3
        %s900 = smul.addr %s899, 8
        %s901 = smul.addr %s900, 8
        %s902 = scalar_lea.vmem %s27, %s901
        %s903 = smul.u32 2, %s45
        %p904 = scmp.lt.s32.totalorder %s903, 3
        %s905 = scalar_select %p904, %s903, 3
        %s906 = smul.addr %s905, 2
        %s907 = smul.addr %s906, 8
        %s908 = scalar_lea.vmem %s0, %s907
        %s909 = smul.u32 2, %s45
        %s910 = smul.u32 2, %s45
        %p911 = scmp.lt.s32.totalorder %s910, 3
        %s912 = scalar_select %p911, %s910, 3
        %s913 = smul.addr %s912, 2
        %s914 = smul.addr %s913, 8
        %s915 = scalar_lea.vmem %s1, %s914
        %s916 = smul.u32 2, %s45
        %s917 = smul.u32 2, %s45
        %p918 = scmp.lt.s32.totalorder %s917, 3
        %s919 = scalar_select %p918, %s917, 3
        %s920 = smul.addr %s919, 12
        %s921 = smul.addr %s920, 8
        %s922 = scalar_lea.vmem %s2, %s921
        %s923 = smul.u32 2, %s45
        %s924 = smul.u32 2, %s45
        %p925 = scmp.lt.s32.totalorder %s924, 3
        %s926 = scalar_select %p925, %s924, 3
        %s927 = smul.addr %s926, 22
        %s928 = smul.addr %s927, 8
        %s929 = scalar_lea.vmem %s3, %s928
        %s930 = smul.u32 2, %s45
        %s931 = smul.u32 2, %s45
        %s932 = smul.u32 2, %s45
        %s933 = smul.u32 2, %s45
        %s934 = smul.u32 2, %s45
        %p935 = scmp.lt.s32.totalorder %s934, 3
        %s936 = scalar_select %p935, %s934, 3
        %s937 = smul.addr %s936, 8
        %s938 = smul.addr %s937, 8
        %s939 = scalar_lea.vmem %s26, %s938
        %s940 = smul.u32 2, %s45
        %s941 = smul.u32 2, %s45
        %p942 = scmp.lt.s32.totalorder %s941, 3
        %s943 = scalar_select %p942, %s941, 3
        %s944 = smul.addr %s943, 8
        %s945 = smul.addr %s944, 8
        %s946 = scalar_lea.vmem %s27, %s945
        %s947 = smul.u32 2, %s45
        %v949 = vld [vmem:[%s4] sm:$0xff]
        %v950 = vld [vmem:[%s4 + $0x8] sm:$0xff]
        %v951 = vld [vmem:[%s4 + $0x10] sm:$0xff]
        %v952 = vld [vmem:[%s4 + $0x18] sm:$0xff]
        %v953 = vld [vmem:[%s4 + $0x20] sm:$0xff]
        %v954 = vld [vmem:[%s4 + $0x28] sm:$0xff]
        %v955 = vld [vmem:[%s4 + $0x30] sm:$0xff]
        %v956 = vld [vmem:[%s4 + $0x38] sm:$0xff]
        %v957 = vld [vmem:[%s5] sm:$0x1]
        %v958 = vld [vmem:[%s5 + $0x1] sm:$0x1]
        %v959 = vld [vmem:[%s5 + $0x2] sm:$0x1]
        %v960 = vld [vmem:[%s5 + $0x3] sm:$0x1]
        %v961 = vld [vmem:[%s908] sm:$0xff]
        %v962 = vld [vmem:[%s908 + $0x8] sm:$0xff]
        %v963 = vld [vmem:[%s908 + $0x10] sm:$0xff]
        %v964 = vld [vmem:[%s908 + $0x18] sm:$0xff]
        %v965 = vld [vmem:[%s922] sm:$0xff]
        %v966 = vld [vmem:[%s922 + $0x8] sm:$0xff]
        %v967 = vld [vmem:[%s922 + $0x10] sm:$0xff]
        %v968 = vld [vmem:[%s922 + $0x18] sm:$0xff]
        %v969 = vld [vmem:[%s922 + $0x20] sm:$0xff]
        %v970 = vld [vmem:[%s922 + $0x28] sm:$0xff]
        %v971 = vld [vmem:[%s922 + $0x30] sm:$0xff]
        %v972 = vld [vmem:[%s922 + $0x38] sm:$0xff]
        %v973 = vld [vmem:[%s922 + $0x40] sm:$0xff]
        %v974 = vld [vmem:[%s922 + $0x48] sm:$0xff]
        %v975 = vld [vmem:[%s922 + $0x50] sm:$0xff]
        %v976 = vld [vmem:[%s922 + $0x58] sm:$0xff]
        %v977 = vld [vmem:[%s922 + $0x60] sm:$0xff]
        %v978 = vld [vmem:[%s922 + $0x68] sm:$0xff]
        %v979 = vld [vmem:[%s922 + $0x70] sm:$0xff]
        %v980 = vld [vmem:[%s922 + $0x78] sm:$0xff]
        %v981 = vld [vmem:[%s922 + $0x80] sm:$0xff]
        %v982 = vld [vmem:[%s922 + $0x88] sm:$0xff]
        %v983 = vld [vmem:[%s922 + $0x90] sm:$0xff]
        %v984 = vld [vmem:[%s922 + $0x98] sm:$0xff]
        %v985 = vld [vmem:[%s922 + $0xa0] sm:$0xff]
        %v986 = vld [vmem:[%s922 + $0xa8] sm:$0xff]
        %v987 = vld [vmem:[%s922 + $0xb0] sm:$0xff]
        %v988 = vld [vmem:[%s922 + $0xb8] sm:$0xff]
        %993 = vrot.lane.b32.xlu0 %v961, 32
        %v994 = vpop.permute.xlu0 %993
        %995 = vrot.lane.b32.xlu0 %v962, 32
        %v996 = vpop.permute.xlu0 %995
        %997 = vrot.lane.b32.xlu0 %v963, 32
        %v998 = vpop.permute.xlu0 %997
        %999 = vrot.lane.b32.xlu0 %v964, 32
        %v1000 = vpop.permute.xlu0 %999
        %1005 = vrot.lane.b32.xlu0 %v961, 64
        %v1006 = vpop.permute.xlu0 %1005
        %1007 = vrot.lane.b32.xlu0 %v962, 64
        %v1008 = vpop.permute.xlu0 %1007
        %1009 = vrot.lane.b32.xlu0 %v963, 64
        %v1010 = vpop.permute.xlu0 %1009
        %1011 = vrot.lane.b32.xlu0 %v964, 64
        %v1012 = vpop.permute.xlu0 %1011
        %1017 = vrot.lane.b32.xlu0 %v961, 96
        %v1018 = vpop.permute.xlu0 %1017
        %1019 = vrot.lane.b32.xlu0 %v962, 96
        %v1020 = vpop.permute.xlu0 %1019
        %1021 = vrot.lane.b32.xlu0 %v963, 96
        %v1022 = vpop.permute.xlu0 %1021
        %1023 = vrot.lane.b32.xlu0 %v964, 96
        %v1024 = vpop.permute.xlu0 %1023
        %vm1029 = vcmask 261120
        %v1030 = vsel %vm1029, %v961, %v994
        %v1031 = vsel %vm1029, %v962, %v996
        %v1032 = vsel %vm1029, %v963, %v998
        %v1033 = vsel %vm1029, %v964, %v1000
        %vm1034 = vcmask 523264
        %v1035 = vsel %vm1034, %v1030, %v1006
        %v1036 = vsel %vm1034, %v1031, %v1008
        %v1037 = vsel %vm1034, %v1032, %v1010
        %v1038 = vsel %vm1034, %v1033, %v1012
        %vm1039 = vcmask 785408
        %v1040 = vsel %vm1039, %v1035, %v1018
        %v1041 = vsel %vm1039, %v1036, %v1020
        %v1042 = vsel %vm1039, %v1037, %v1022
        %v1043 = vsel %vm1039, %v1038, %v1024
        %v1044 = vmul.f32 %v1040, %v949
        %v1045 = vmul.f32 %v1040, %v950
        %v1046 = vmul.f32 %v1040, %v951
        %v1047 = vmul.f32 %v1040, %v952
        %v1048 = vmul.f32 %v1041, %v953
        %v1049 = vmul.f32 %v1041, %v954
        %v1050 = vmul.f32 %v1041, %v955
        %v1051 = vmul.f32 %v1041, %v956
        %v1052 = vmul.f32 %v1042, %v949
        %v1053 = vmul.f32 %v1042, %v950
        %v1054 = vmul.f32 %v1042, %v951
        %v1055 = vmul.f32 %v1042, %v952
        %v1056 = vmul.f32 %v1043, %v953
        %v1057 = vmul.f32 %v1043, %v954
        %v1058 = vmul.f32 %v1043, %v955
        %v1059 = vmul.f32 %v1043, %v956
        %v1060 = vld [vmem:[%s10] sm:$0xff]
        %v1061 = vld [vmem:[%s10 + $0x8] sm:$0xff]
        %v1062 = vpack.c.bf16 %v1048, %v1044
        %v1063 = vpack.c.bf16 %v1049, %v1045
        %v1064 = vpack.c.bf16 %v1050, %v1046
        %v1065 = vpack.c.bf16 %v1051, %v1047
        %v1066 = vpack.c.bf16 %v1056, %v1052
        %v1067 = vpack.c.bf16 %v1057, %v1053
        %v1068 = vpack.c.bf16 %v1058, %v1054
        %v1069 = vpack.c.bf16 %v1059, %v1055
        %v1070 = vld [vmem:[%s6] sm:$0xff]
        %v1071 = vld [vmem:[%s6 + $0x8] sm:$0xff]
        %v1072 = vld [vmem:[%s6 + $0x10] sm:$0xff]
        %v1073 = vld [vmem:[%s6 + $0x18] sm:$0xff]
        %v1074 = vld [vmem:[%s6 + $0x20] sm:$0xff]
        %v1075 = vld [vmem:[%s6 + $0x28] sm:$0xff]
        %v1076 = vld [vmem:[%s6 + $0x30] sm:$0xff]
        %v1077 = vld [vmem:[%s6 + $0x38] sm:$0xff]
        %v1078 = vld [vmem:[%s6 + $0x40] sm:$0xff]
        %v1079 = vld [vmem:[%s6 + $0x48] sm:$0xff]
        %v1080 = vld [vmem:[%s6 + $0x50] sm:$0xff]
        %v1081 = vld [vmem:[%s6 + $0x58] sm:$0xff]
        %v1082 = vld [vmem:[%s6 + $0x60] sm:$0xff]
        %v1083 = vld [vmem:[%s6 + $0x68] sm:$0xff]
        %v1084 = vld [vmem:[%s6 + $0x70] sm:$0xff]
        %v1085 = vld [vmem:[%s6 + $0x78] sm:$0xff]
        %v1086 = vld [vmem:[%s6 + $0x80] sm:$0xff]
        %v1087 = vld [vmem:[%s6 + $0x88] sm:$0xff]
        %v1088 = vld [vmem:[%s6 + $0x90] sm:$0xff]
        %v1089 = vld [vmem:[%s6 + $0x98] sm:$0xff]
        %v1090 = vld [vmem:[%s6 + $0xa0] sm:$0xff]
        %v1091 = vld [vmem:[%s6 + $0xa8] sm:$0xff]
        %v1092 = vld [vmem:[%s6 + $0xb0] sm:$0xff]
        %v1093 = vld [vmem:[%s6 + $0xb8] sm:$0xff]
        %v1094 = vld [vmem:[%s6 + $0xc0] sm:$0xff]
        %v1095 = vld [vmem:[%s6 + $0xc8] sm:$0xff]
        %v1096 = vld [vmem:[%s6 + $0xd0] sm:$0xff]
        %v1097 = vld [vmem:[%s6 + $0xd8] sm:$0xff]
        %v1098 = vld [vmem:[%s6 + $0xe0] sm:$0xff]
        %v1099 = vld [vmem:[%s6 + $0xe8] sm:$0xff]
        %v1100 = vld [vmem:[%s6 + $0xf0] sm:$0xff]
        %v1101 = vld [vmem:[%s6 + $0xf8] sm:$0xff]
        %v1102 = vld [vmem:[%s6 + $0x100] sm:$0xff]
        %v1103 = vld [vmem:[%s6 + $0x108] sm:$0xff]
        %v1104 = vld [vmem:[%s6 + $0x110] sm:$0xff]
        %v1105 = vld [vmem:[%s6 + $0x118] sm:$0xff]
        %v1106 = vld [vmem:[%s6 + $0x120] sm:$0xff]
        %v1107 = vld [vmem:[%s6 + $0x128] sm:$0xff]
        %v1108 = vld [vmem:[%s6 + $0x130] sm:$0xff]
        %v1109 = vld [vmem:[%s6 + $0x138] sm:$0xff]
        %v1110 = vld [vmem:[%s6 + $0x140] sm:$0xff]
        %v1111 = vld [vmem:[%s6 + $0x148] sm:$0xff]
        %v1112 = vld [vmem:[%s6 + $0x150] sm:$0xff]
        %v1113 = vld [vmem:[%s6 + $0x158] sm:$0xff]
        %v1114 = vld [vmem:[%s6 + $0x160] sm:$0xff]
        %v1115 = vld [vmem:[%s6 + $0x168] sm:$0xff]
        %v1116 = vld [vmem:[%s6 + $0x170] sm:$0xff]
        %v1117 = vld [vmem:[%s6 + $0x178] sm:$0xff]
        %v1118 = vld [vmem:[%s6 + $0x180] sm:$0xff]
        %v1119 = vld [vmem:[%s6 + $0x188] sm:$0xff]
        %v1120 = vld [vmem:[%s6 + $0x190] sm:$0xff]
        %v1121 = vld [vmem:[%s6 + $0x198] sm:$0xff]
        %v1122 = vld [vmem:[%s6 + $0x1a0] sm:$0xff]
        %v1123 = vld [vmem:[%s6 + $0x1a8] sm:$0xff]
        %v1124 = vld [vmem:[%s6 + $0x1b0] sm:$0xff]
        %v1125 = vld [vmem:[%s6 + $0x1b8] sm:$0xff]
        %v1126 = vld [vmem:[%s6 + $0x1c0] sm:$0xff]
        %v1127 = vld [vmem:[%s6 + $0x1c8] sm:$0xff]
        %v1128 = vld [vmem:[%s6 + $0x1d0] sm:$0xff]
        %v1129 = vld [vmem:[%s6 + $0x1d8] sm:$0xff]
        %v1130 = vld [vmem:[%s6 + $0x1e0] sm:$0xff]
        %v1131 = vld [vmem:[%s6 + $0x1e8] sm:$0xff]
        %v1132 = vld [vmem:[%s6 + $0x1f0] sm:$0xff]
        %v1133 = vld [vmem:[%s6 + $0x1f8] sm:$0xff]
        %v1134 = vpack.c.bf16 %v1071, %v1070
        %v1135 = vpack.c.bf16 %v1073, %v1072
        %v1136 = vpack.c.bf16 %v1075, %v1074
        %v1137 = vpack.c.bf16 %v1077, %v1076
        %v1138 = vpack.c.bf16 %v1079, %v1078
        %v1139 = vpack.c.bf16 %v1081, %v1080
        %v1140 = vpack.c.bf16 %v1083, %v1082
        %v1141 = vpack.c.bf16 %v1085, %v1084
        %v1142 = vpack.c.bf16 %v1087, %v1086
        %v1143 = vpack.c.bf16 %v1089, %v1088
        %v1144 = vpack.c.bf16 %v1091, %v1090
        %v1145 = vpack.c.bf16 %v1093, %v1092
        %v1146 = vpack.c.bf16 %v1095, %v1094
        %v1147 = vpack.c.bf16 %v1097, %v1096
        %v1148 = vpack.c.bf16 %v1099, %v1098
        %v1149 = vpack.c.bf16 %v1101, %v1100
        %v1150 = vpack.c.bf16 %v1103, %v1102
        %v1151 = vpack.c.bf16 %v1105, %v1104
        %v1152 = vpack.c.bf16 %v1107, %v1106
        %v1153 = vpack.c.bf16 %v1109, %v1108
        %v1154 = vpack.c.bf16 %v1111, %v1110
        %v1155 = vpack.c.bf16 %v1113, %v1112
        %v1156 = vpack.c.bf16 %v1115, %v1114
        %v1157 = vpack.c.bf16 %v1117, %v1116
        %v1158 = vpack.c.bf16 %v1119, %v1118
        %v1159 = vpack.c.bf16 %v1121, %v1120
        %v1160 = vpack.c.bf16 %v1123, %v1122
        %v1161 = vpack.c.bf16 %v1125, %v1124
        %v1162 = vpack.c.bf16 %v1127, %v1126
        %v1163 = vpack.c.bf16 %v1129, %v1128
        %v1164 = vpack.c.bf16 %v1131, %v1130
        %v1165 = vpack.c.bf16 %v1133, %v1132
        %1166 = vmatprep.subr.bf16.mxu0 0
        %1167 = vmatpush1.bf16.msra.mxu0 %v1134
        %1168 = vmatprep.subr.bf16.mxu0 0
        %1169 = vmatpush1.bf16.msra.mxu0 %v1135
        %1170 = vmatprep.subr.bf16.mxu0 0
        %1171 = vmatpush1.bf16.msra.mxu0 %v1136
        %1172 = vmatprep.subr.bf16.mxu0 0
        %1173 = vmatpush1.bf16.msra.mxu0 %v1137
        %1174 = vmatprep.subr.bf16.mxu0 0
        %1175 = vmatpush1.bf16.msra.mxu0 %v1138
        %1176 = vmatprep.subr.bf16.mxu0 0
        %1177 = vmatpush1.bf16.msra.mxu0 %v1139
        %1178 = vmatprep.subr.bf16.mxu0 0
        %1179 = vmatpush1.bf16.msra.mxu0 %v1140
        %1180 = vmatprep.subr.bf16.mxu0 0
        %1181 = vmatpush1.bf16.msra.mxu0 %v1141
        %1182 = vmatprep.subr.bf16.mxu0 0
        %1183 = vmatpush1.bf16.msra.mxu0 %v1142
        %1184 = vmatprep.subr.bf16.mxu0 0
        %1185 = vmatpush1.bf16.msra.mxu0 %v1143
        %1186 = vmatprep.subr.bf16.mxu0 0
        %1187 = vmatpush1.bf16.msra.mxu0 %v1144
        %1188 = vmatprep.subr.bf16.mxu0 0
        %1189 = vmatpush1.bf16.msra.mxu0 %v1145
        %1190 = vmatprep.subr.bf16.mxu0 0
        %1191 = vmatpush1.bf16.msra.mxu0 %v1146
        %1192 = vmatprep.subr.bf16.mxu0 0
        %1193 = vmatpush1.bf16.msra.mxu0 %v1147
        %1194 = vmatprep.subr.bf16.mxu0 0
        %1195 = vmatpush1.bf16.msra.mxu0 %v1148
        %1196 = vmatprep.subr.bf16.mxu0 0
        %1197 = vmatpush1.bf16.msra.mxu0 %v1149
        %1198 = vmatprep.mubr.bf16.mxu0 %v1063
        %1199 = vmatmul.mubr.bf16.gmra.mrb[0].mxu0 %v1062
        %v1200 = vpop.f32.mrb[0].mxu0
        %v1201 = vadd.f32 0.0, %v1200
        %v1202 = vpop.f32.mrb[0].mxu0
        %v1203 = vpop.f32.mrb[0].mxu0
        %v1204 = vadd.f32 0.0, %v1203
        %v1205 = vpop.f32.mrb[0].mxu0
        %1206 = vmatprep.mubr.bf16.mxu0 %v1067
        %1207 = vmatmul.mubr.bf16.gmra.mrb[0].mxu0 %v1066
        %v1208 = vpop.f32.mrb[0].mxu0
        %v1209 = vadd.f32 0.0, %v1208
        %v1210 = vpop.f32.mrb[0].mxu0
        %v1211 = vpop.f32.mrb[0].mxu0
        %v1212 = vadd.f32 0.0, %v1211
        %v1213 = vpop.f32.mrb[0].mxu0
        %1214 = vdwg.mxu0
        %1215 = vmatprep.subr.bf16.mxu0 0
        %1216 = vmatpush1.bf16.msra.mxu0 %v1150
        %1217 = vmatprep.subr.bf16.mxu0 0
        %1218 = vmatpush1.bf16.msra.mxu0 %v1151
        %1219 = vmatprep.subr.bf16.mxu0 0
        %1220 = vmatpush1.bf16.msra.mxu0 %v1152
        %1221 = vmatprep.subr.bf16.mxu0 0
        %1222 = vmatpush1.bf16.msra.mxu0 %v1153
        %1223 = vmatprep.subr.bf16.mxu0 0
        %1224 = vmatpush1.bf16.msra.mxu0 %v1154
        %1225 = vmatprep.subr.bf16.mxu0 0
        %1226 = vmatpush1.bf16.msra.mxu0 %v1155
        %1227 = vmatprep.subr.bf16.mxu0 0
        %1228 = vmatpush1.bf16.msra.mxu0 %v1156
        %1229 = vmatprep.subr.bf16.mxu0 0
        %1230 = vmatpush1.bf16.msra.mxu0 %v1157
        %1231 = vmatprep.subr.bf16.mxu0 0
        %1232 = vmatpush1.bf16.msra.mxu0 %v1158
        %1233 = vmatprep.subr.bf16.mxu0 0
        %1234 = vmatpush1.bf16.msra.mxu0 %v1159
        %1235 = vmatprep.subr.bf16.mxu0 0
        %1236 = vmatpush1.bf16.msra.mxu0 %v1160
        %1237 = vmatprep.subr.bf16.mxu0 0
        %1238 = vmatpush1.bf16.msra.mxu0 %v1161
        %1239 = vmatprep.subr.bf16.mxu0 0
        %1240 = vmatpush1.bf16.msra.mxu0 %v1162
        %1241 = vmatprep.subr.bf16.mxu0 0
        %1242 = vmatpush1.bf16.msra.mxu0 %v1163
        %1243 = vmatprep.subr.bf16.mxu0 0
        %1244 = vmatpush1.bf16.msra.mxu0 %v1164
        %1245 = vmatprep.subr.bf16.mxu0 0
        %1246 = vmatpush1.bf16.msra.mxu0 %v1165
        %1247 = vmatprep.mubr.bf16.mxu0 %v1065
        %1248 = vmatmul.mubr.bf16.gmra.mrb[0].mxu0 %v1064
        %v1249 = vpop.f32.mrb[0].mxu0
        %v1250 = vadd.f32 %v1201, %v1249
        %v1251 = vpop.f32.mrb[0].mxu0
        %v1252 = vpop.f32.mrb[0].mxu0
        %v1253 = vadd.f32 %v1204, %v1252
        %v1254 = vpop.f32.mrb[0].mxu0
        %1255 = vmatprep.mubr.bf16.mxu0 %v1069
        %1256 = vmatmul.mubr.bf16.gmra.mrb[0].mxu0 %v1068
        %v1257 = vpop.f32.mrb[0].mxu0
        %v1258 = vadd.f32 %v1209, %v1257
        %v1259 = vpop.f32.mrb[0].mxu0
        %v1260 = vpop.f32.mrb[0].mxu0
        %v1261 = vadd.f32 %v1212, %v1260
        %v1262 = vpop.f32.mrb[0].mxu0
        %1263 = vdwg.mxu0
        %v1264 = vadd.f32 %v1250, %v1060
        %v1265 = vadd.f32 %v1253, %v1061
        %v1266 = vadd.f32 %v1258, %v1060
        %v1267 = vadd.f32 %v1261, %v1061
        %v1268 = vld [vmem:[%s11] sm:$0x1]
        %v1269 = vpack.c.bf16 %v971, %v965
        %v1270 = vpack.c.bf16 %v972, %v966
        %v1271 = vpack.c.bf16 %v973, %v967
        %v1272 = vpack.c.bf16 %v974, %v968
        %v1273 = vpack.c.bf16 %v975, %v969
        %v1274 = vpack.c.bf16 %v976, %v970
        %v1275 = vpack.c.bf16 %v983, %v977
        %v1276 = vpack.c.bf16 %v984, %v978
        %v1277 = vpack.c.bf16 %v985, %v979
        %v1278 = vpack.c.bf16 %v986, %v980
        %v1279 = vpack.c.bf16 %v987, %v981
        %v1280 = vpack.c.bf16 %v988, %v982
        %v1281 = vld [vmem:[%s7] sm:$0xff]
        %v1282 = vld [vmem:[%s7 + $0x8] sm:$0xff]
        %v1283 = vld [vmem:[%s7 + $0x10] sm:$0xff]
        %v1284 = vld [vmem:[%s7 + $0x18] sm:$0xff]
        %v1285 = vld [vmem:[%s7 + $0x20] sm:$0xff]
        %v1286 = vld [vmem:[%s7 + $0x28] sm:$0xff]
        %v1287 = vld [vmem:[%s7 + $0x30] sm:$0xff]
        %v1288 = vld [vmem:[%s7 + $0x38] sm:$0xff]
        %v1289 = vld [vmem:[%s7 + $0x40] sm:$0xff]
        %v1290 = vld [vmem:[%s7 + $0x48] sm:$0xff]
        %v1291 = vld [vmem:[%s7 + $0x50] sm:$0xff]
        %v1292 = vld [vmem:[%s7 + $0x58] sm:$0xff]
        %v1293 = vld [vmem:[%s7 + $0x60] sm:$0xff]
        %v1294 = vld [vmem:[%s7 + $0x68] sm:$0xff]
        %v1295 = vld [vmem:[%s7 + $0x70] sm:$0xff]
        %v1296 = vld [vmem:[%s7 + $0x78] sm:$0xff]
        %v1297 = vld [vmem:[%s7 + $0x80] sm:$0xff]
        %v1298 = vld [vmem:[%s7 + $0x88] sm:$0xff]
        %v1299 = vld [vmem:[%s7 + $0x90] sm:$0xff]
        %v1300 = vld [vmem:[%s7 + $0x98] sm:$0xff]
        %v1301 = vld [vmem:[%s7 + $0xa0] sm:$0xff]
        %v1302 = vld [vmem:[%s7 + $0xa8] sm:$0xff]
        %v1303 = vld [vmem:[%s7 + $0xb0] sm:$0xff]
        %v1304 = vld [vmem:[%s7 + $0xb8] sm:$0xff]
        %v1305 = vld [vmem:[%s7 + $0xc0] sm:$0xff]
        %v1306 = vld [vmem:[%s7 + $0xc8] sm:$0xff]
        %v1307 = vld [vmem:[%s7 + $0xd0] sm:$0xff]
        %v1308 = vld [vmem:[%s7 + $0xd8] sm:$0xff]
        %v1309 = vld [vmem:[%s7 + $0xe0] sm:$0xff]
        %v1310 = vld [vmem:[%s7 + $0xe8] sm:$0xff]
        %v1311 = vld [vmem:[%s7 + $0xf0] sm:$0xff]
        %v1312 = vld [vmem:[%s7 + $0xf8] sm:$0xff]
        %v1313 = vld [vmem:[%s7 + $0x100] sm:$0xff]
        %v1314 = vld [vmem:[%s7 + $0x108] sm:$0xff]
        %v1315 = vld [vmem:[%s7 + $0x110] sm:$0xff]
        %v1316 = vld [vmem:[%s7 + $0x118] sm:$0xff]
        %v1317 = vld [vmem:[%s7 + $0x120] sm:$0xff]
        %v1318 = vld [vmem:[%s7 + $0x128] sm:$0xff]
        %v1319 = vld [vmem:[%s7 + $0x130] sm:$0xff]
        %v1320 = vld [vmem:[%s7 + $0x138] sm:$0xff]
        %v1321 = vld [vmem:[%s7 + $0x140] sm:$0xff]
        %v1322 = vld [vmem:[%s7 + $0x148] sm:$0xff]
        %v1323 = vld [vmem:[%s7 + $0x150] sm:$0xff]
        %v1324 = vld [vmem:[%s7 + $0x158] sm:$0xff]
        %v1325 = vld [vmem:[%s7 + $0x160] sm:$0xff]
        %v1326 = vld [vmem:[%s7 + $0x168] sm:$0xff]
        %v1327 = vld [vmem:[%s7 + $0x170] sm:$0xff]
        %v1328 = vld [vmem:[%s7 + $0x178] sm:$0xff]
        %v1329 = vld [vmem:[%s7 + $0x180] sm:$0xff]
        %v1330 = vld [vmem:[%s7 + $0x188] sm:$0xff]
        %v1331 = vld [vmem:[%s7 + $0x190] sm:$0xff]
        %v1332 = vld [vmem:[%s7 + $0x198] sm:$0xff]
        %v1333 = vld [vmem:[%s7 + $0x1a0] sm:$0xff]
        %v1334 = vld [vmem:[%s7 + $0x1a8] sm:$0xff]
        %v1335 = vld [vmem:[%s7 + $0x1b0] sm:$0xff]
        %v1336 = vld [vmem:[%s7 + $0x1b8] sm:$0xff]
        %v1337 = vld [vmem:[%s7 + $0x1c0] sm:$0xff]
        %v1338 = vld [vmem:[%s7 + $0x1c8] sm:$0xff]
        %v1339 = vld [vmem:[%s7 + $0x1d0] sm:$0xff]
        %v1340 = vld [vmem:[%s7 + $0x1d8] sm:$0xff]
        %v1341 = vld [vmem:[%s7 + $0x1e0] sm:$0xff]
        %v1342 = vld [vmem:[%s7 + $0x1e8] sm:$0xff]
        %v1343 = vld [vmem:[%s7 + $0x1f0] sm:$0xff]
        %v1344 = vld [vmem:[%s7 + $0x1f8] sm:$0xff]
        %v1345 = vld [vmem:[%s7 + $0x200] sm:$0xff]
        %v1346 = vld [vmem:[%s7 + $0x208] sm:$0xff]
        %v1347 = vld [vmem:[%s7 + $0x210] sm:$0xff]
        %v1348 = vld [vmem:[%s7 + $0x218] sm:$0xff]
        %v1349 = vld [vmem:[%s7 + $0x220] sm:$0xff]
        %v1350 = vld [vmem:[%s7 + $0x228] sm:$0xff]
        %v1351 = vld [vmem:[%s7 + $0x230] sm:$0xff]
        %v1352 = vld [vmem:[%s7 + $0x238] sm:$0xff]
        %v1353 = vld [vmem:[%s7 + $0x240] sm:$0xff]
        %v1354 = vld [vmem:[%s7 + $0x248] sm:$0xff]
        %v1355 = vld [vmem:[%s7 + $0x250] sm:$0xff]
        %v1356 = vld [vmem:[%s7 + $0x258] sm:$0xff]
        %v1357 = vld [vmem:[%s7 + $0x260] sm:$0xff]
        %v1358 = vld [vmem:[%s7 + $0x268] sm:$0xff]
        %v1359 = vld [vmem:[%s7 + $0x270] sm:$0xff]
        %v1360 = vld [vmem:[%s7 + $0x278] sm:$0xff]
        %v1361 = vld [vmem:[%s7 + $0x280] sm:$0xff]
        %v1362 = vld [vmem:[%s7 + $0x288] sm:$0xff]
        %v1363 = vld [vmem:[%s7 + $0x290] sm:$0xff]
        %v1364 = vld [vmem:[%s7 + $0x298] sm:$0xff]
        %v1365 = vld [vmem:[%s7 + $0x2a0] sm:$0xff]
        %v1366 = vld [vmem:[%s7 + $0x2a8] sm:$0xff]
        %v1367 = vld [vmem:[%s7 + $0x2b0] sm:$0xff]
        %v1368 = vld [vmem:[%s7 + $0x2b8] sm:$0xff]
        %v1369 = vld [vmem:[%s7 + $0x2c0] sm:$0xff]
        %v1370 = vld [vmem:[%s7 + $0x2c8] sm:$0xff]
        %v1371 = vld [vmem:[%s7 + $0x2d0] sm:$0xff]
        %v1372 = vld [vmem:[%s7 + $0x2d8] sm:$0xff]
        %v1373 = vld [vmem:[%s7 + $0x2e0] sm:$0xff]
        %v1374 = vld [vmem:[%s7 + $0x2e8] sm:$0xff]
        %v1375 = vld [vmem:[%s7 + $0x2f0] sm:$0xff]
        %v1376 = vld [vmem:[%s7 + $0x2f8] sm:$0xff]
        %v1377 = vpack.c.bf16 %v1282, %v1281
        %v1378 = vpack.c.bf16 %v1284, %v1283
        %v1379 = vpack.c.bf16 %v1286, %v1285
        %v1380 = vpack.c.bf16 %v1288, %v1287
        %v1381 = vpack.c.bf16 %v1290, %v1289
        %v1382 = vpack.c.bf16 %v1292, %v1291
        %v1383 = vpack.c.bf16 %v1294, %v1293
        %v1384 = vpack.c.bf16 %v1296, %v1295
        %v1385 = vpack.c.bf16 %v1298, %v1297
        %v1386 = vpack.c.bf16 %v1300, %v1299
        %v1387 = vpack.c.bf16 %v1302, %v1301
        %v1388 = vpack.c.bf16 %v1304, %v1303
        %v1389 = vpack.c.bf16 %v1306, %v1305
        %v1390 = vpack.c.bf16 %v1308, %v1307
        %v1391 = vpack.c.bf16 %v1310, %v1309
        %v1392 = vpack.c.bf16 %v1312, %v1311
        %v1393 = vpack.c.bf16 %v1314, %v1313
        %v1394 = vpack.c.bf16 %v1316, %v1315
        %v1395 = vpack.c.bf16 %v1318, %v1317
        %v1396 = vpack.c.bf16 %v1320, %v1319
        %v1397 = vpack.c.bf16 %v1322, %v1321
        %v1398 = vpack.c.bf16 %v1324, %v1323
        %v1399 = vpack.c.bf16 %v1326, %v1325
        %v1400 = vpack.c.bf16 %v1328, %v1327
        %v1401 = vpack.c.bf16 %v1330, %v1329
        %v1402 = vpack.c.bf16 %v1332, %v1331
        %v1403 = vpack.c.bf16 %v1334, %v1333
        %v1404 = vpack.c.bf16 %v1336, %v1335
        %v1405 = vpack.c.bf16 %v1338, %v1337
        %v1406 = vpack.c.bf16 %v1340, %v1339
        %v1407 = vpack.c.bf16 %v1342, %v1341
        %v1408 = vpack.c.bf16 %v1344, %v1343
        %v1409 = vpack.c.bf16 %v1346, %v1345
        %v1410 = vpack.c.bf16 %v1348, %v1347
        %v1411 = vpack.c.bf16 %v1350, %v1349
        %v1412 = vpack.c.bf16 %v1352, %v1351
        %v1413 = vpack.c.bf16 %v1354, %v1353
        %v1414 = vpack.c.bf16 %v1356, %v1355
        %v1415 = vpack.c.bf16 %v1358, %v1357
        %v1416 = vpack.c.bf16 %v1360, %v1359
        %v1417 = vpack.c.bf16 %v1362, %v1361
        %v1418 = vpack.c.bf16 %v1364, %v1363
        %v1419 = vpack.c.bf16 %v1366, %v1365
        %v1420 = vpack.c.bf16 %v1368, %v1367
        %v1421 = vpack.c.bf16 %v1370, %v1369
        %v1422 = vpack.c.bf16 %v1372, %v1371
        %v1423 = vpack.c.bf16 %v1374, %v1373
        %v1424 = vpack.c.bf16 %v1376, %v1375
        %v1425 = vlaneseq
        %v1426 = vshrl.u32 %v1425, 7
        %v1427 = vsub.s32 0, %v1426
        %v1428 = vrot.slane %v1268, %v1427
        %1429 = vmatprep.subr.bf16.mxu0 0
        %1430 = vmatpush1.bf16.msra.mxu0 %v1377
        %1431 = vmatprep.subr.bf16.mxu0 0
        %1432 = vmatpush1.bf16.msra.mxu0 %v1378
        %1433 = vmatprep.subr.bf16.mxu0 0
        %1434 = vmatpush1.bf16.msra.mxu0 %v1379
        %1435 = vmatprep.subr.bf16.mxu0 0
        %1436 = vmatpush1.bf16.msra.mxu0 %v1380
        %1437 = vmatprep.subr.bf16.mxu0 0
        %1438 = vmatpush1.bf16.msra.mxu0 %v1381
        %1439 = vmatprep.subr.bf16.mxu0 0
        %1440 = vmatpush1.bf16.msra.mxu0 %v1382
        %1441 = vmatprep.subr.bf16.mxu0 0
        %1442 = vmatpush1.bf16.msra.mxu0 %v1383
        %1443 = vmatprep.subr.bf16.mxu0 0
        %1444 = vmatpush1.bf16.msra.mxu0 %v1384
        %1445 = vmatprep.subr.bf16.mxu0 0
        %1446 = vmatpush1.bf16.msra.mxu0 %v1385
        %1447 = vmatprep.subr.bf16.mxu0 0
        %1448 = vmatpush1.bf16.msra.mxu0 %v1386
        %1449 = vmatprep.subr.bf16.mxu0 0
        %1450 = vmatpush1.bf16.msra.mxu0 %v1387
        %1451 = vmatprep.subr.bf16.mxu0 0
        %1452 = vmatpush1.bf16.msra.mxu0 %v1388
        %1453 = vmatprep.subr.bf16.mxu0 0
        %1454 = vmatpush1.bf16.msra.mxu0 %v1389
        %1455 = vmatprep.subr.bf16.mxu0 0
        %1456 = vmatpush1.bf16.msra.mxu0 %v1390
        %1457 = vmatprep.subr.bf16.mxu0 0
        %1458 = vmatpush1.bf16.msra.mxu0 %v1391
        %1459 = vmatprep.subr.bf16.mxu0 0
        %1460 = vmatpush1.bf16.msra.mxu0 %v1392
        %1461 = vmatprep.mubr.bf16.mxu0 %v1270
        %1462 = vmatmul.mubr.bf16.gmra.mrb[0].mxu0 %v1269
        %v1463 = vpop.f32.mrb[0].mxu0
        %v1464 = vadd.f32 %v1428, %v1463
        %v1465 = vpop.f32.mrb[0].mxu0
        %v1466 = vpop.f32.mrb[0].mxu0
        %v1467 = vadd.f32 %v1428, %v1466
        %v1468 = vpop.f32.mrb[0].mxu0
        %1469 = vmatprep.mubr.bf16.mxu0 %v1276
        %1470 = vmatmul.mubr.bf16.gmra.mrb[0].mxu0 %v1275
        %v1471 = vpop.f32.mrb[0].mxu0
        %v1472 = vadd.f32 %v1428, %v1471
        %v1473 = vpop.f32.mrb[0].mxu0
        %v1474 = vpop.f32.mrb[0].mxu0
        %v1475 = vadd.f32 %v1428, %v1474
        %v1476 = vpop.f32.mrb[0].mxu0
        %1477 = vdwg.mxu0
        %1478 = vmatprep.subr.bf16.mxu0 0
        %1479 = vmatpush1.bf16.msra.mxu0 %v1393
        %1480 = vmatprep.subr.bf16.mxu0 0
        %1481 = vmatpush1.bf16.msra.mxu0 %v1394
        %1482 = vmatprep.subr.bf16.mxu0 0
        %1483 = vmatpush1.bf16.msra.mxu0 %v1395
        %1484 = vmatprep.subr.bf16.mxu0 0
        %1485 = vmatpush1.bf16.msra.mxu0 %v1396
        %1486 = vmatprep.subr.bf16.mxu0 0
        %1487 = vmatpush1.bf16.msra.mxu0 %v1397
        %1488 = vmatprep.subr.bf16.mxu0 0
        %1489 = vmatpush1.bf16.msra.mxu0 %v1398
        %1490 = vmatprep.subr.bf16.mxu0 0
        %1491 = vmatpush1.bf16.msra.mxu0 %v1399
        %1492 = vmatprep.subr.bf16.mxu0 0
        %1493 = vmatpush1.bf16.msra.mxu0 %v1400
        %1494 = vmatprep.subr.bf16.mxu0 0
        %1495 = vmatpush1.bf16.msra.mxu0 %v1401
        %1496 = vmatprep.subr.bf16.mxu0 0
        %1497 = vmatpush1.bf16.msra.mxu0 %v1402
        %1498 = vmatprep.subr.bf16.mxu0 0
        %1499 = vmatpush1.bf16.msra.mxu0 %v1403
        %1500 = vmatprep.subr.bf16.mxu0 0
        %1501 = vmatpush1.bf16.msra.mxu0 %v1404
        %1502 = vmatprep.subr.bf16.mxu0 0
        %1503 = vmatpush1.bf16.msra.mxu0 %v1405
        %1504 = vmatprep.subr.bf16.mxu0 0
        %1505 = vmatpush1.bf16.msra.mxu0 %v1406
        %1506 = vmatprep.subr.bf16.mxu0 0
        %1507 = vmatpush1.bf16.msra.mxu0 %v1407
        %1508 = vmatprep.subr.bf16.mxu0 0
        %1509 = vmatpush1.bf16.msra.mxu0 %v1408
        %1510 = vmatprep.mubr.bf16.mxu0 %v1272
        %1511 = vmatmul.mubr.bf16.gmra.mrb[0].mxu0 %v1271
        %v1512 = vpop.f32.mrb[0].mxu0
        %v1513 = vadd.f32 %v1464, %v1512
        %v1514 = vpop.f32.mrb[0].mxu0
        %v1515 = vpop.f32.mrb[0].mxu0
        %v1516 = vadd.f32 %v1467, %v1515
        %v1517 = vpop.f32.mrb[0].mxu0
        %1518 = vmatprep.mubr.bf16.mxu0 %v1278
        %1519 = vmatmul.mubr.bf16.gmra.mrb[0].mxu0 %v1277
        %v1520 = vpop.f32.mrb[0].mxu0
        %v1521 = vadd.f32 %v1472, %v1520
        %v1522 = vpop.f32.mrb[0].mxu0
        %v1523 = vpop.f32.mrb[0].mxu0
        %v1524 = vadd.f32 %v1475, %v1523
        %v1525 = vpop.f32.mrb[0].mxu0
        %1526 = vdwg.mxu0
        %1527 = vmatprep.subr.bf16.mxu0 0
        %1528 = vmatpush1.bf16.msra.mxu0 %v1409
        %1529 = vmatprep.subr.bf16.mxu0 0
        %1530 = vmatpush1.bf16.msra.mxu0 %v1410
        %1531 = vmatprep.subr.bf16.mxu0 0
        %1532 = vmatpush1.bf16.msra.mxu0 %v1411
        %1533 = vmatprep.subr.bf16.mxu0 0
        %1534 = vmatpush1.bf16.msra.mxu0 %v1412
        %1535 = vmatprep.subr.bf16.mxu0 0
        %1536 = vmatpush1.bf16.msra.mxu0 %v1413
        %1537 = vmatprep.subr.bf16.mxu0 0
        %1538 = vmatpush1.bf16.msra.mxu0 %v1414
        %1539 = vmatprep.subr.bf16.mxu0 0
        %1540 = vmatpush1.bf16.msra.mxu0 %v1415
        %1541 = vmatprep.subr.bf16.mxu0 0
        %1542 = vmatpush1.bf16.msra.mxu0 %v1416
        %1543 = vmatprep.subr.bf16.mxu0 0
        %1544 = vmatpush1.bf16.msra.mxu0 %v1417
        %1545 = vmatprep.subr.bf16.mxu0 0
        %1546 = vmatpush1.bf16.msra.mxu0 %v1418
        %1547 = vmatprep.subr.bf16.mxu0 0
        %1548 = vmatpush1.bf16.msra.mxu0 %v1419
        %1549 = vmatprep.subr.bf16.mxu0 0
        %1550 = vmatpush1.bf16.msra.mxu0 %v1420
        %1551 = vmatprep.subr.bf16.mxu0 0
        %1552 = vmatpush1.bf16.msra.mxu0 %v1421
        %1553 = vmatprep.subr.bf16.mxu0 0
        %1554 = vmatpush1.bf16.msra.mxu0 %v1422
        %1555 = vmatprep.subr.bf16.mxu0 0
        %1556 = vmatpush1.bf16.msra.mxu0 %v1423
        %1557 = vmatprep.subr.bf16.mxu0 0
        %1558 = vmatpush1.bf16.msra.mxu0 %v1424
        %1559 = vmatprep.mubr.bf16.mxu0 %v1274
        %1560 = vmatmul.mubr.bf16.gmra.mrb[0].mxu0 %v1273
        %v1561 = vpop.f32.mrb[0].mxu0
        %v1562 = vadd.f32 %v1513, %v1561
        %v1563 = vpop.f32.mrb[0].mxu0
        %v1564 = vpop.f32.mrb[0].mxu0
        %v1565 = vadd.f32 %v1516, %v1564
        %v1566 = vpop.f32.mrb[0].mxu0
        %1567 = vmatprep.mubr.bf16.mxu0 %v1280
        %1568 = vmatmul.mubr.bf16.gmra.mrb[0].mxu0 %v1279
        %v1569 = vpop.f32.mrb[0].mxu0
        %v1570 = vadd.f32 %v1521, %v1569
        %v1571 = vpop.f32.mrb[0].mxu0
        %v1572 = vpop.f32.mrb[0].mxu0
        %v1573 = vadd.f32 %v1524, %v1572
        %v1574 = vpop.f32.mrb[0].mxu0
        %1575 = vdwg.mxu0
        %v1576 = vmul.f32 %v1264, 0.35355338
        %v1577 = vmul.f32 %v1265, 0.35355338
        %v1578 = vmul.f32 %v1266, 0.35355338
        %v1579 = vmul.f32 %v1267, 0.35355338
        %v1584 = vlaneseq
        %v1585 = vshrl.u32 %v1584, 7
        %v1586 = vsub.s32 0, %v1585
        %v1587 = vrot.slane %v957, %v1586
        %v1588 = vlaneseq
        %v1589 = vshrl.u32 %v1588, 7
        %v1590 = vsub.s32 0, %v1589
        %v1591 = vrot.slane %v958, %v1590
        %v1592 = vlaneseq
        %v1593 = vshrl.u32 %v1592, 7
        %v1594 = vsub.s32 0, %v1593
        %v1595 = vrot.slane %v959, %v1594
        %v1596 = vlaneseq
        %v1597 = vshrl.u32 %v1596, 7
        %v1598 = vsub.s32 0, %v1597
        %v1599 = vrot.slane %v960, %v1598
        %v1604 = vmul.f32 %v1576, %v1587
        %v1605 = vmul.f32 %v1577, %v1587
        %v1606 = vmul.f32 %v1576, %v1591
        %v1607 = vmul.f32 %v1577, %v1591
        %v1608 = vmul.f32 %v1576, %v1595
        %v1609 = vmul.f32 %v1577, %v1595
        %v1610 = vmul.f32 %v1576, %v1599
        %v1611 = vmul.f32 %v1577, %v1599
        %v1612 = vmul.f32 %v1578, %v1587
        %v1613 = vmul.f32 %v1579, %v1587
        %v1614 = vmul.f32 %v1578, %v1591
        %v1615 = vmul.f32 %v1579, %v1591
        %v1616 = vmul.f32 %v1578, %v1595
        %v1617 = vmul.f32 %v1579, %v1595
        %v1618 = vmul.f32 %v1578, %v1599
        %v1619 = vmul.f32 %v1579, %v1599
        %v1620 = vpack.c.bf16 %v1605, %v1604
        %v1621 = vpack.c.bf16 %v1607, %v1606
        %v1622 = vpack.c.bf16 %v1609, %v1608
        %v1623 = vpack.c.bf16 %v1611, %v1610
        %v1624 = vpack.c.bf16 %v1613, %v1612
        %v1625 = vpack.c.bf16 %v1615, %v1614
        %v1626 = vpack.c.bf16 %v1617, %v1616
        %v1627 = vpack.c.bf16 %v1619, %v1618
        %v1628 = vpack.c.bf16 %v1565, %v1562
        %v1629 = vpack.c.bf16 %v1573, %v1570
        %v1631 = vsel %vm1029, %v1620, 0
        %v1634 = vsel %vm1029, %v1621, 0
        %v1637 = vsel %vm1029, %v1622, 0
        %v1640 = vsel %vm1029, %v1623, 0
        %v1643 = vsel %vm1029, %v1628, 0
        %1645 = vmatprep.subr.bf16.mxu0 0
        %1646 = vmatpush1.bf16.xpose.msra.mxu0 %v1643
        %1647 = vmatprep.subr.bf16.mxu0 0
        %1648 = vmatpush1.bf16.xpose.msra.mxu0 0
        %1649 = vmatprep.subr.bf16.mxu0 0
        %1650 = vmatpush1.bf16.xpose.msra.mxu0 0
        %1651 = vmatprep.subr.bf16.mxu0 0
        %1652 = vmatpush1.bf16.xpose.msra.mxu0 0
        %1653 = vmatprep.subr.bf16.mxu0 0
        %1654 = vmatpush1.bf16.xpose.msra.mxu0 0
        %1655 = vmatprep.subr.bf16.mxu0 0
        %1656 = vmatpush1.bf16.xpose.msra.mxu0 0
        %1657 = vmatprep.subr.bf16.mxu0 0
        %1658 = vmatpush1.bf16.xpose.msra.mxu0 0
        %1659 = vmatprep.subr.bf16.mxu0 0
        %1660 = vmatpush1.bf16.xpose.msra.mxu0 0
        %1661 = vmatprep.subr.bf16.mxu0 0
        %1662 = vmatpush1.bf16.xpose.msra.mxu0 0
        %1663 = vmatprep.subr.bf16.mxu0 0
        %1664 = vmatpush1.bf16.xpose.msra.mxu0 0
        %1665 = vmatprep.subr.bf16.mxu0 0
        %1666 = vmatpush1.bf16.xpose.msra.mxu0 0
        %1667 = vmatprep.subr.bf16.mxu0 0
        %1668 = vmatpush1.bf16.xpose.msra.mxu0 0
        %1669 = vmatprep.subr.bf16.mxu0 0
        %1670 = vmatpush1.bf16.xpose.msra.mxu0 0
        %1671 = vmatprep.subr.bf16.mxu0 0
        %1672 = vmatpush1.bf16.xpose.msra.mxu0 0
        %1673 = vmatprep.subr.bf16.mxu0 0
        %1674 = vmatpush1.bf16.xpose.msra.mxu0 0
        %1675 = vmatprep.subr.bf16.mxu0 0
        %1676 = vmatpush1.bf16.xpose.msra.mxu0 0
        %1677 = vmatprep.mubr.bf16.mxu0 0
        %1678 = vmatmul.mubr.bf16.gmra.mrb[0].mxu0 %v1631
        %v1679 = vpop.f32.mrb[0].mxu0
        %v1680 = vadd.f32 0.0, %v1679
        %v1681 = vpop.f32.mrb[0].mxu0
        %v1682 = vpop.f32.mrb[0].mxu0
        %v1683 = vadd.f32 0.0, %v1682
        %v1684 = vpop.f32.mrb[0].mxu0
        %1685 = vmatprep.mubr.bf16.mxu0 0
        %1686 = vmatmul.mubr.bf16.gmra.mrb[0].mxu0 %v1634
        %v1687 = vpop.f32.mrb[0].mxu0
        %v1688 = vadd.f32 0.0, %v1687
        %v1689 = vpop.f32.mrb[0].mxu0
        %v1690 = vpop.f32.mrb[0].mxu0
        %v1691 = vadd.f32 0.0, %v1690
        %v1692 = vpop.f32.mrb[0].mxu0
        %1693 = vmatprep.mubr.bf16.mxu0 0
        %1694 = vmatmul.mubr.bf16.gmra.mrb[0].mxu0 %v1637
        %v1695 = vpop.f32.mrb[0].mxu0
        %v1696 = vadd.f32 0.0, %v1695
        %v1697 = vpop.f32.mrb[0].mxu0
        %v1698 = vpop.f32.mrb[0].mxu0
        %v1699 = vadd.f32 0.0, %v1698
        %v1700 = vpop.f32.mrb[0].mxu0
        %1701 = vmatprep.mubr.bf16.mxu0 0
        %1702 = vmatmul.mubr.bf16.gmra.mrb[0].mxu0 %v1640
        %v1703 = vpop.f32.mrb[0].mxu0
        %v1704 = vadd.f32 0.0, %v1703
        %v1705 = vpop.f32.mrb[0].mxu0
        %v1706 = vpop.f32.mrb[0].mxu0
        %v1707 = vadd.f32 0.0, %v1706
        %v1708 = vpop.f32.mrb[0].mxu0
        %1709 = vdwg.mxu0
        %v1711 = vsel %vm1029, %v1624, 0
        %v1714 = vsel %vm1029, %v1625, 0
        %v1717 = vsel %vm1029, %v1626, 0
        %v1720 = vsel %vm1029, %v1627, 0
        %v1723 = vsel %vm1029, %v1629, 0
        %1725 = vmatprep.subr.bf16.mxu0 0
        %1726 = vmatpush1.bf16.xpose.msra.mxu0 %v1723
        %1727 = vmatprep.subr.bf16.mxu0 0
        %1728 = vmatpush1.bf16.xpose.msra.mxu0 0
        %1729 = vmatprep.subr.bf16.mxu0 0
        %1730 = vmatpush1.bf16.xpose.msra.mxu0 0
        %1731 = vmatprep.subr.bf16.mxu0 0
        %1732 = vmatpush1.bf16.xpose.msra.mxu0 0
        %1733 = vmatprep.subr.bf16.mxu0 0
        %1734 = vmatpush1.bf16.xpose.msra.mxu0 0
        %1735 = vmatprep.subr.bf16.mxu0 0
        %1736 = vmatpush1.bf16.xpose.msra.mxu0 0
        %1737 = vmatprep.subr.bf16.mxu0 0
        %1738 = vmatpush1.bf16.xpose.msra.mxu0 0
        %1739 = vmatprep.subr.bf16.mxu0 0
        %1740 = vmatpush1.bf16.xpose.msra.mxu0 0
        %1741 = vmatprep.subr.bf16.mxu0 0
        %1742 = vmatpush1.bf16.xpose.msra.mxu0 0
        %1743 = vmatprep.subr.bf16.mxu0 0
        %1744 = vmatpush1.bf16.xpose.msra.mxu0 0
        %1745 = vmatprep.subr.bf16.mxu0 0
        %1746 = vmatpush1.bf16.xpose.msra.mxu0 0
        %1747 = vmatprep.subr.bf16.mxu0 0
        %1748 = vmatpush1.bf16.xpose.msra.mxu0 0
        %1749 = vmatprep.subr.bf16.mxu0 0
        %1750 = vmatpush1.bf16.xpose.msra.mxu0 0
        %1751 = vmatprep.subr.bf16.mxu0 0
        %1752 = vmatpush1.bf16.xpose.msra.mxu0 0
        %1753 = vmatprep.subr.bf16.mxu0 0
        %1754 = vmatpush1.bf16.xpose.msra.mxu0 0
        %1755 = vmatprep.subr.bf16.mxu0 0
        %1756 = vmatpush1.bf16.xpose.msra.mxu0 0
        %1757 = vmatprep.mubr.bf16.mxu0 0
        %1758 = vmatmul.mubr.bf16.gmra.mrb[0].mxu0 %v1711
        %v1759 = vpop.f32.mrb[0].mxu0
        %v1760 = vadd.f32 0.0, %v1759
        %v1761 = vpop.f32.mrb[0].mxu0
        %v1762 = vpop.f32.mrb[0].mxu0
        %v1763 = vadd.f32 0.0, %v1762
        %v1764 = vpop.f32.mrb[0].mxu0
        %1765 = vmatprep.mubr.bf16.mxu0 0
        %1766 = vmatmul.mubr.bf16.gmra.mrb[0].mxu0 %v1714
        %v1767 = vpop.f32.mrb[0].mxu0
        %v1768 = vadd.f32 0.0, %v1767
        %v1769 = vpop.f32.mrb[0].mxu0
        %v1770 = vpop.f32.mrb[0].mxu0
        %v1771 = vadd.f32 0.0, %v1770
        %v1772 = vpop.f32.mrb[0].mxu0
        %1773 = vmatprep.mubr.bf16.mxu0 0
        %1774 = vmatmul.mubr.bf16.gmra.mrb[0].mxu0 %v1717
        %v1775 = vpop.f32.mrb[0].mxu0
        %v1776 = vadd.f32 0.0, %v1775
        %v1777 = vpop.f32.mrb[0].mxu0
        %v1778 = vpop.f32.mrb[0].mxu0
        %v1779 = vadd.f32 0.0, %v1778
        %v1780 = vpop.f32.mrb[0].mxu0
        %1781 = vmatprep.mubr.bf16.mxu0 0
        %1782 = vmatmul.mubr.bf16.gmra.mrb[0].mxu0 %v1720
        %v1783 = vpop.f32.mrb[0].mxu0
        %v1784 = vadd.f32 0.0, %v1783
        %v1785 = vpop.f32.mrb[0].mxu0
        %v1786 = vpop.f32.mrb[0].mxu0
        %v1787 = vadd.f32 0.0, %v1786
        %v1788 = vpop.f32.mrb[0].mxu0
        %1789 = vdwg.mxu0
        %vm1790 = vcmask 130048
        %v1791 = vsel %vm1790, %v1680, -inf
        %1792 = vmax.xlane.f32.xlu0 %v1791
        %v1793 = vpop.xlane.xlu0 %1792
        %v1794 = vsel %vm1790, %v1683, -inf
        %1795 = vmax.xlane.f32.xlu0 %v1794
        %v1796 = vpop.xlane.xlu0 %1795
        %v1797 = vsel %vm1790, %v1688, -inf
        %1798 = vmax.xlane.f32.xlu0 %v1797
        %v1799 = vpop.xlane.xlu0 %1798
        %v1800 = vsel %vm1790, %v1691, -inf
        %1801 = vmax.xlane.f32.xlu0 %v1800
        %v1802 = vpop.xlane.xlu0 %1801
        %v1803 = vsel %vm1790, %v1696, -inf
        %1804 = vmax.xlane.f32.xlu0 %v1803
        %v1805 = vpop.xlane.xlu0 %1804
        %v1806 = vsel %vm1790, %v1699, -inf
        %1807 = vmax.xlane.f32.xlu0 %v1806
        %v1808 = vpop.xlane.xlu0 %1807
        %v1809 = vsel %vm1790, %v1704, -inf
        %1810 = vmax.xlane.f32.xlu0 %v1809
        %v1811 = vpop.xlane.xlu0 %1810
        %v1812 = vsel %vm1790, %v1707, -inf
        %1813 = vmax.xlane.f32.xlu0 %v1812
        %v1814 = vpop.xlane.xlu0 %1813
        %v1815 = vsel %vm1790, %v1760, -inf
        %1816 = vmax.xlane.f32.xlu0 %v1815
        %v1817 = vpop.xlane.xlu0 %1816
        %v1818 = vsel %vm1790, %v1763, -inf
        %1819 = vmax.xlane.f32.xlu0 %v1818
        %v1820 = vpop.xlane.xlu0 %1819
        %v1821 = vsel %vm1790, %v1768, -inf
        %1822 = vmax.xlane.f32.xlu0 %v1821
        %v1823 = vpop.xlane.xlu0 %1822
        %v1824 = vsel %vm1790, %v1771, -inf
        %1825 = vmax.xlane.f32.xlu0 %v1824
        %v1826 = vpop.xlane.xlu0 %1825
        %v1827 = vsel %vm1790, %v1776, -inf
        %1828 = vmax.xlane.f32.xlu0 %v1827
        %v1829 = vpop.xlane.xlu0 %1828
        %v1830 = vsel %vm1790, %v1779, -inf
        %1831 = vmax.xlane.f32.xlu0 %v1830
        %v1832 = vpop.xlane.xlu0 %1831
        %v1833 = vsel %vm1790, %v1784, -inf
        %1834 = vmax.xlane.f32.xlu0 %v1833
        %v1835 = vpop.xlane.xlu0 %1834
        %v1836 = vsel %vm1790, %v1787, -inf
        %1837 = vmax.xlane.f32.xlu0 %v1836
        %v1838 = vpop.xlane.xlu0 %1837
        %v1839 = vsub.f32 %v1680, %v1793
        %v1840 = vsub.f32 %v1683, %v1796
        %v1841 = vsub.f32 %v1688, %v1799
        %v1842 = vsub.f32 %v1691, %v1802
        %v1843 = vsub.f32 %v1696, %v1805
        %v1844 = vsub.f32 %v1699, %v1808
        %v1845 = vsub.f32 %v1704, %v1811
        %v1846 = vsub.f32 %v1707, %v1814
        %v1847 = vsub.f32 %v1760, %v1817
        %v1848 = vsub.f32 %v1763, %v1820
        %v1849 = vsub.f32 %v1768, %v1823
        %v1850 = vsub.f32 %v1771, %v1826
        %v1851 = vsub.f32 %v1776, %v1829
        %v1852 = vsub.f32 %v1779, %v1832
        %v1853 = vsub.f32 %v1784, %v1835
        %v1854 = vsub.f32 %v1787, %v1838
        %v1855 = vmul.f32 %v1839, 1.442695
        %v1856 = vpow.pop %v1855
        %v1857 = vmul.f32 %v1840, 1.442695
        %v1858 = vpow.pop %v1857
        %v1859 = vmul.f32 %v1841, 1.442695
        %v1860 = vpow.pop %v1859
        %v1861 = vmul.f32 %v1842, 1.442695
        %v1862 = vpow.pop %v1861
        %v1863 = vmul.f32 %v1843, 1.442695
        %v1864 = vpow.pop %v1863
        %v1865 = vmul.f32 %v1844, 1.442695
        %v1866 = vpow.pop %v1865
        %v1867 = vmul.f32 %v1845, 1.442695
        %v1868 = vpow.pop %v1867
        %v1869 = vmul.f32 %v1846, 1.442695
        %v1870 = vpow.pop %v1869
        %v1871 = vmul.f32 %v1847, 1.442695
        %v1872 = vpow.pop %v1871
        %v1873 = vmul.f32 %v1848, 1.442695
        %v1874 = vpow.pop %v1873
        %v1875 = vmul.f32 %v1849, 1.442695
        %v1876 = vpow.pop %v1875
        %v1877 = vmul.f32 %v1850, 1.442695
        %v1878 = vpow.pop %v1877
        %v1879 = vmul.f32 %v1851, 1.442695
        %v1880 = vpow.pop %v1879
        %v1881 = vmul.f32 %v1852, 1.442695
        %v1882 = vpow.pop %v1881
        %v1883 = vmul.f32 %v1853, 1.442695
        %v1884 = vpow.pop %v1883
        %v1885 = vmul.f32 %v1854, 1.442695
        %v1886 = vpow.pop %v1885
        %v1887 = vsel %vm1790, %v1856, 0.0
        %1888 = vadd.xlane.f32.xlu0 %v1887
        %v1889 = vpop.xlane.xlu0 %1888
        %v1890 = vsel %vm1790, %v1858, 0.0
        %1891 = vadd.xlane.f32.xlu0 %v1890
        %v1892 = vpop.xlane.xlu0 %1891
        %v1893 = vsel %vm1790, %v1860, 0.0
        %1894 = vadd.xlane.f32.xlu0 %v1893
        %v1895 = vpop.xlane.xlu0 %1894
        %v1896 = vsel %vm1790, %v1862, 0.0
        %1897 = vadd.xlane.f32.xlu0 %v1896
        %v1898 = vpop.xlane.xlu0 %1897
        %v1899 = vsel %vm1790, %v1864, 0.0
        %1900 = vadd.xlane.f32.xlu0 %v1899
        %v1901 = vpop.xlane.xlu0 %1900
        %v1902 = vsel %vm1790, %v1866, 0.0
        %1903 = vadd.xlane.f32.xlu0 %v1902
        %v1904 = vpop.xlane.xlu0 %1903
        %v1905 = vsel %vm1790, %v1868, 0.0
        %1906 = vadd.xlane.f32.xlu0 %v1905
        %v1907 = vpop.xlane.xlu0 %1906
        %v1908 = vsel %vm1790, %v1870, 0.0
        %1909 = vadd.xlane.f32.xlu0 %v1908
        %v1910 = vpop.xlane.xlu0 %1909
        %v1911 = vsel %vm1790, %v1872, 0.0
        %1912 = vadd.xlane.f32.xlu0 %v1911
        %v1913 = vpop.xlane.xlu0 %1912
        %v1914 = vsel %vm1790, %v1874, 0.0
        %1915 = vadd.xlane.f32.xlu0 %v1914
        %v1916 = vpop.xlane.xlu0 %1915
        %v1917 = vsel %vm1790, %v1876, 0.0
        %1918 = vadd.xlane.f32.xlu0 %v1917
        %v1919 = vpop.xlane.xlu0 %1918
        %v1920 = vsel %vm1790, %v1878, 0.0
        %1921 = vadd.xlane.f32.xlu0 %v1920
        %v1922 = vpop.xlane.xlu0 %1921
        %v1923 = vsel %vm1790, %v1880, 0.0
        %1924 = vadd.xlane.f32.xlu0 %v1923
        %v1925 = vpop.xlane.xlu0 %1924
        %v1926 = vsel %vm1790, %v1882, 0.0
        %1927 = vadd.xlane.f32.xlu0 %v1926
        %v1928 = vpop.xlane.xlu0 %1927
        %v1929 = vsel %vm1790, %v1884, 0.0
        %1930 = vadd.xlane.f32.xlu0 %v1929
        %v1931 = vpop.xlane.xlu0 %1930
        %v1932 = vsel %vm1790, %v1886, 0.0
        %1933 = vadd.xlane.f32.xlu0 %v1932
        %v1934 = vpop.xlane.xlu0 %1933
        %v1935 = vrcp.pop %v1889
        %v1936 = vmul.f32 %v1856, %v1935
        %v1937 = vrcp.pop %v1892
        %v1938 = vmul.f32 %v1858, %v1937
        %v1939 = vrcp.pop %v1895
        %v1940 = vmul.f32 %v1860, %v1939
        %v1941 = vrcp.pop %v1898
        %v1942 = vmul.f32 %v1862, %v1941
        %v1943 = vrcp.pop %v1901
        %v1944 = vmul.f32 %v1864, %v1943
        %v1945 = vrcp.pop %v1904
        %v1946 = vmul.f32 %v1866, %v1945
        %v1947 = vrcp.pop %v1907
        %v1948 = vmul.f32 %v1868, %v1947
        %v1949 = vrcp.pop %v1910
        %v1950 = vmul.f32 %v1870, %v1949
        %v1951 = vrcp.pop %v1913
        %v1952 = vmul.f32 %v1872, %v1951
        %v1953 = vrcp.pop %v1916
        %v1954 = vmul.f32 %v1874, %v1953
        %v1955 = vrcp.pop %v1919
        %v1956 = vmul.f32 %v1876, %v1955
        %v1957 = vrcp.pop %v1922
        %v1958 = vmul.f32 %v1878, %v1957
        %v1959 = vrcp.pop %v1925
        %v1960 = vmul.f32 %v1880, %v1959
        %v1961 = vrcp.pop %v1928
        %v1962 = vmul.f32 %v1882, %v1961
        %v1963 = vrcp.pop %v1931
        %v1964 = vmul.f32 %v1884, %v1963
        %v1965 = vrcp.pop %v1934
        %v1966 = vmul.f32 %v1886, %v1965
        %v1967 = vpack.c.bf16 %v1938, %v1936
        %v1968 = vpack.c.bf16 %v1942, %v1940
        %v1969 = vpack.c.bf16 %v1946, %v1944
        %v1970 = vpack.c.bf16 %v1950, %v1948
        %v1971 = vpack.c.bf16 %v1954, %v1952
        %v1972 = vpack.c.bf16 %v1958, %v1956
        %v1973 = vpack.c.bf16 %v1962, %v1960
        %v1974 = vpack.c.bf16 %v1966, %v1964
        %1976 = vrot.lane.b32.xlu0 %v1628, 96
        %v1977 = vpop.permute.xlu0 %1976
        %v1980 = vsel %vm1790, %v1967, 0
        %v1983 = vsel %vm1790, %v1968, 0
        %v1986 = vsel %vm1790, %v1969, 0
        %v1989 = vsel %vm1790, %v1970, 0
        %1991 = vmatprep.subr.bf16.mxu0 0
        %1992 = vmatpush1.bf16.msra.mxu0 %v1977
        %1993 = vmatprep.subr.bf16.mxu0 0
        %1994 = vmatpush1.bf16.msra.mxu0 0
        %1995 = vmatprep.subr.bf16.mxu0 0
        %1996 = vmatpush1.bf16.msra.mxu0 0
        %1997 = vmatprep.subr.bf16.mxu0 0
        %1998 = vmatpush1.bf16.msra.mxu0 0
        %1999 = vmatprep.subr.bf16.mxu0 0
        %2000 = vmatpush1.bf16.msra.mxu0 0
        %2001 = vmatprep.subr.bf16.mxu0 0
        %2002 = vmatpush1.bf16.msra.mxu0 0
        %2003 = vmatprep.subr.bf16.mxu0 0
        %2004 = vmatpush1.bf16.msra.mxu0 0
        %2005 = vmatprep.subr.bf16.mxu0 0
        %2006 = vmatpush1.bf16.msra.mxu0 0
        %2007 = vmatprep.subr.bf16.mxu0 0
        %2008 = vmatpush1.bf16.msra.mxu0 0
        %2009 = vmatprep.subr.bf16.mxu0 0
        %2010 = vmatpush1.bf16.msra.mxu0 0
        %2011 = vmatprep.subr.bf16.mxu0 0
        %2012 = vmatpush1.bf16.msra.mxu0 0
        %2013 = vmatprep.subr.bf16.mxu0 0
        %2014 = vmatpush1.bf16.msra.mxu0 0
        %2015 = vmatprep.subr.bf16.mxu0 0
        %2016 = vmatpush1.bf16.msra.mxu0 0
        %2017 = vmatprep.subr.bf16.mxu0 0
        %2018 = vmatpush1.bf16.msra.mxu0 0
        %2019 = vmatprep.subr.bf16.mxu0 0
        %2020 = vmatpush1.bf16.msra.mxu0 0
        %2021 = vmatprep.subr.bf16.mxu0 0
        %2022 = vmatpush1.bf16.msra.mxu0 0
        %2023 = vmatprep.mubr.bf16.mxu0 0
        %2024 = vmatmul.mubr.bf16.gmra.mrb[0].mxu0 %v1980
        %v2025 = vpop.f32.mrb[0].mxu0
        %v2026 = vadd.f32 0.0, %v2025
        %v2027 = vpop.f32.mrb[0].mxu0
        %v2028 = vpop.f32.mrb[0].mxu0
        %v2029 = vadd.f32 0.0, %v2028
        %v2030 = vpop.f32.mrb[0].mxu0
        %2031 = vmatprep.mubr.bf16.mxu0 0
        %2032 = vmatmul.mubr.bf16.gmra.mrb[0].mxu0 %v1983
        %v2033 = vpop.f32.mrb[0].mxu0
        %v2034 = vadd.f32 0.0, %v2033
        %v2035 = vpop.f32.mrb[0].mxu0
        %v2036 = vpop.f32.mrb[0].mxu0
        %v2037 = vadd.f32 0.0, %v2036
        %v2038 = vpop.f32.mrb[0].mxu0
        %2039 = vmatprep.mubr.bf16.mxu0 0
        %2040 = vmatmul.mubr.bf16.gmra.mrb[0].mxu0 %v1986
        %v2041 = vpop.f32.mrb[0].mxu0
        %v2042 = vadd.f32 0.0, %v2041
        %v2043 = vpop.f32.mrb[0].mxu0
        %v2044 = vpop.f32.mrb[0].mxu0
        %v2045 = vadd.f32 0.0, %v2044
        %v2046 = vpop.f32.mrb[0].mxu0
        %2047 = vmatprep.mubr.bf16.mxu0 0
        %2048 = vmatmul.mubr.bf16.gmra.mrb[0].mxu0 %v1989
        %v2049 = vpop.f32.mrb[0].mxu0
        %v2050 = vadd.f32 0.0, %v2049
        %v2051 = vpop.f32.mrb[0].mxu0
        %v2052 = vpop.f32.mrb[0].mxu0
        %v2053 = vadd.f32 0.0, %v2052
        %v2054 = vpop.f32.mrb[0].mxu0
        %2055 = vdwg.mxu0
        %2057 = vrot.lane.b32.xlu0 %v1629, 96
        %v2058 = vpop.permute.xlu0 %2057
        %v2061 = vsel %vm1790, %v1971, 0
        %v2064 = vsel %vm1790, %v1972, 0
        %v2067 = vsel %vm1790, %v1973, 0
        %v2070 = vsel %vm1790, %v1974, 0
        %2072 = vmatprep.subr.bf16.mxu0 0
        %2073 = vmatpush1.bf16.msra.mxu0 %v2058
        %2074 = vmatprep.subr.bf16.mxu0 0
        %2075 = vmatpush1.bf16.msra.mxu0 0
        %2076 = vmatprep.subr.bf16.mxu0 0
        %2077 = vmatpush1.bf16.msra.mxu0 0
        %2078 = vmatprep.subr.bf16.mxu0 0
        %2079 = vmatpush1.bf16.msra.mxu0 0
        %2080 = vmatprep.subr.bf16.mxu0 0
        %2081 = vmatpush1.bf16.msra.mxu0 0
        %2082 = vmatprep.subr.bf16.mxu0 0
        %2083 = vmatpush1.bf16.msra.mxu0 0
        %2084 = vmatprep.subr.bf16.mxu0 0
        %2085 = vmatpush1.bf16.msra.mxu0 0
        %2086 = vmatprep.subr.bf16.mxu0 0
        %2087 = vmatpush1.bf16.msra.mxu0 0
        %2088 = vmatprep.subr.bf16.mxu0 0
        %2089 = vmatpush1.bf16.msra.mxu0 0
        %2090 = vmatprep.subr.bf16.mxu0 0
        %2091 = vmatpush1.bf16.msra.mxu0 0
        %2092 = vmatprep.subr.bf16.mxu0 0
        %2093 = vmatpush1.bf16.msra.mxu0 0
        %2094 = vmatprep.subr.bf16.mxu0 0
        %2095 = vmatpush1.bf16.msra.mxu0 0
        %2096 = vmatprep.subr.bf16.mxu0 0
        %2097 = vmatpush1.bf16.msra.mxu0 0
        %2098 = vmatprep.subr.bf16.mxu0 0
        %2099 = vmatpush1.bf16.msra.mxu0 0
        %2100 = vmatprep.subr.bf16.mxu0 0
        %2101 = vmatpush1.bf16.msra.mxu0 0
        %2102 = vmatprep.subr.bf16.mxu0 0
        %2103 = vmatpush1.bf16.msra.mxu0 0
        %2104 = vmatprep.mubr.bf16.mxu0 0
        %2105 = vmatmul.mubr.bf16.gmra.mrb[0].mxu0 %v2061
        %v2106 = vpop.f32.mrb[0].mxu0
        %v2107 = vadd.f32 0.0, %v2106
        %v2108 = vpop.f32.mrb[0].mxu0
        %v2109 = vpop.f32.mrb[0].mxu0
        %v2110 = vadd.f32 0.0, %v2109
        %v2111 = vpop.f32.mrb[0].mxu0
        %2112 = vmatprep.mubr.bf16.mxu0 0
        %2113 = vmatmul.mubr.bf16.gmra.mrb[0].mxu0 %v2064
        %v2114 = vpop.f32.mrb[0].mxu0
        %v2115 = vadd.f32 0.0, %v2114
        %v2116 = vpop.f32.mrb[0].mxu0
        %v2117 = vpop.f32.mrb[0].mxu0
        %v2118 = vadd.f32 0.0, %v2117
        %v2119 = vpop.f32.mrb[0].mxu0
        %2120 = vmatprep.mubr.bf16.mxu0 0
        %2121 = vmatmul.mubr.bf16.gmra.mrb[0].mxu0 %v2067
        %v2122 = vpop.f32.mrb[0].mxu0
        %v2123 = vadd.f32 0.0, %v2122
        %v2124 = vpop.f32.mrb[0].mxu0
        %v2125 = vpop.f32.mrb[0].mxu0
        %v2126 = vadd.f32 0.0, %v2125
        %v2127 = vpop.f32.mrb[0].mxu0
        %2128 = vmatprep.mubr.bf16.mxu0 0
        %2129 = vmatmul.mubr.bf16.gmra.mrb[0].mxu0 %v2070
        %v2130 = vpop.f32.mrb[0].mxu0
        %v2131 = vadd.f32 0.0, %v2130
        %v2132 = vpop.f32.mrb[0].mxu0
        %v2133 = vpop.f32.mrb[0].mxu0
        %v2134 = vadd.f32 0.0, %v2133
        %v2135 = vpop.f32.mrb[0].mxu0
        %2136 = vdwg.mxu0
        %v2137 = vmul.f32 %v2026, %v1587
        %v2138 = vmul.f32 %v2029, %v1587
        %v2139 = vmul.f32 %v2034, %v1591
        %v2140 = vmul.f32 %v2037, %v1591
        %v2141 = vmul.f32 %v2042, %v1595
        %v2142 = vmul.f32 %v2045, %v1595
        %v2143 = vmul.f32 %v2050, %v1599
        %v2144 = vmul.f32 %v2053, %v1599
        %v2145 = vmul.f32 %v2107, %v1587
        %v2146 = vmul.f32 %v2110, %v1587
        %v2147 = vmul.f32 %v2115, %v1591
        %v2148 = vmul.f32 %v2118, %v1591
        %v2149 = vmul.f32 %v2123, %v1595
        %v2150 = vmul.f32 %v2126, %v1595
        %v2151 = vmul.f32 %v2131, %v1599
        %v2152 = vmul.f32 %v2134, %v1599
        %v2153 = vsel %vm1029, %v2137, 0.0
        %v2154 = vsel %vm1029, %v2139, 0.0
        %v2155 = vadd.f32 %v2153, %v2154
        %v2156 = vsel %vm1029, %v2141, 0.0
        %v2157 = vadd.f32 %v2155, %v2156
        %v2158 = vsel %vm1029, %v2143, 0.0
        %v2159 = vadd.f32 %v2157, %v2158
        %v2160 = vsel %vm1029, %v2138, 0.0
        %v2161 = vsel %vm1029, %v2140, 0.0
        %v2162 = vadd.f32 %v2160, %v2161
        %v2163 = vsel %vm1029, %v2142, 0.0
        %v2164 = vadd.f32 %v2162, %v2163
        %v2165 = vsel %vm1029, %v2144, 0.0
        %v2166 = vadd.f32 %v2164, %v2165
        %v2167 = vsel %vm1029, %v2145, 0.0
        %v2168 = vsel %vm1029, %v2147, 0.0
        %v2169 = vadd.f32 %v2167, %v2168
        %v2170 = vsel %vm1029, %v2149, 0.0
        %v2171 = vadd.f32 %v2169, %v2170
        %v2172 = vsel %vm1029, %v2151, 0.0
        %v2173 = vadd.f32 %v2171, %v2172
        %v2174 = vsel %vm1029, %v2146, 0.0
        %v2175 = vsel %vm1029, %v2148, 0.0
        %v2176 = vadd.f32 %v2174, %v2175
        %v2177 = vsel %vm1029, %v2150, 0.0
        %v2178 = vadd.f32 %v2176, %v2177
        %v2179 = vsel %vm1029, %v2152, 0.0
        %v2180 = vadd.f32 %v2178, %v2179
        %v2181 = vld [vmem:[%s10 + $0x10] sm:$0x1]
        %v2182 = vld [vmem:[%s10 + $0x11] sm:$0x1]
        %v2183 = vld [vmem:[%s10 + $0x12] sm:$0x1]
        %v2184 = vld [vmem:[%s10 + $0x13] sm:$0x1]
        %v2185 = vld [vmem:[%s10 + $0x14] sm:$0x1]
        %v2186 = vld [vmem:[%s11 + $0x1] sm:$0x1]
        %v2187 = vadd.f32 %v961, %v2159
        %v2188 = vadd.f32 %v962, %v2166
        %v2189 = vadd.f32 %v963, %v2173
        %v2190 = vadd.f32 %v964, %v2180
        %v2191 = vsel %vm1029, %v2187, 0.0
        %2192 = vadd.xlane.f32.xlu0 %v2191
        %v2193 = vpop.xlane.xlu0 %2192
        %v2194 = vsel %vm1029, %v2188, 0.0
        %2195 = vadd.xlane.f32.xlu0 %v2194
        %v2196 = vpop.xlane.xlu0 %2195
        %v2197 = vsel %vm1029, %v2189, 0.0
        %2198 = vadd.xlane.f32.xlu0 %v2197
        %v2199 = vpop.xlane.xlu0 %2198
        %v2200 = vsel %vm1029, %v2190, 0.0
        %2201 = vadd.xlane.f32.xlu0 %v2200
        %v2202 = vpop.xlane.xlu0 %2201
        %v2203 = vrcp.pop 32.0
        %v2204 = vmul.f32 %v2193, %v2203
        %v2205 = vmul.f32 %v2196, %v2203
        %v2206 = vmul.f32 %v2199, %v2203
        %v2207 = vmul.f32 %v2202, %v2203
        %v2208 = vsub.f32 %v2187, %v2204
        %v2209 = vsub.f32 %v2188, %v2205
        %v2210 = vsub.f32 %v2189, %v2206
        %v2211 = vsub.f32 %v2190, %v2207
        %v2212 = vmul.f32 %v2208, %v2208
        %v2213 = vmul.f32 %v2209, %v2209
        %v2214 = vmul.f32 %v2210, %v2210
        %v2215 = vmul.f32 %v2211, %v2211
        %v2216 = vsel %vm1029, %v2212, 0.0
        %2217 = vadd.xlane.f32.xlu0 %v2216
        %v2218 = vpop.xlane.xlu0 %2217
        %v2219 = vsel %vm1029, %v2213, 0.0
        %2220 = vadd.xlane.f32.xlu0 %v2219
        %v2221 = vpop.xlane.xlu0 %2220
        %v2222 = vsel %vm1029, %v2214, 0.0
        %2223 = vadd.xlane.f32.xlu0 %v2222
        %v2224 = vpop.xlane.xlu0 %2223
        %v2225 = vsel %vm1029, %v2215, 0.0
        %2226 = vadd.xlane.f32.xlu0 %v2225
        %v2227 = vpop.xlane.xlu0 %2226
        %v2228 = vmul.f32 %v2218, %v2203
        %v2229 = vmul.f32 %v2221, %v2203
        %v2230 = vmul.f32 %v2224, %v2203
        %v2231 = vmul.f32 %v2227, %v2203
        %v2232 = vadd.f32 %v2228, 1e-05
        %v2233 = vadd.f32 %v2229, 1e-05
        %v2234 = vadd.f32 %v2230, 1e-05
        %v2235 = vadd.f32 %v2231, 1e-05
        %v2236 = vrsqrt.pop %v2232
        %v2237 = vrsqrt.pop %v2233
        %v2238 = vrsqrt.pop %v2234
        %v2239 = vrsqrt.pop %v2235
        %v2240 = vmul.f32 %v2208, %v2236
        %v2241 = vmul.f32 %v2209, %v2237
        %v2242 = vmul.f32 %v2210, %v2238
        %v2243 = vmul.f32 %v2211, %v2239
        %v2244 = vlaneseq
        %v2245 = vshrl.u32 %v2244, 7
        %v2246 = vsub.s32 0, %v2245
        %v2247 = vrot.slane %v2181, %v2246
        %v2248 = vmul.f32 %v2240, %v2247
        %v2249 = vmul.f32 %v2241, %v2247
        %v2250 = vmul.f32 %v2242, %v2247
        %v2251 = vmul.f32 %v2243, %v2247
        %v2252 = vlaneseq
        %v2253 = vshrl.u32 %v2252, 7
        %v2254 = vsub.s32 0, %v2253
        %v2255 = vrot.slane %v2182, %v2254
        %v2256 = vadd.f32 %v2248, %v2255
        %v2257 = vadd.f32 %v2249, %v2255
        %v2258 = vadd.f32 %v2250, %v2255
        %v2259 = vadd.f32 %v2251, %v2255
        %v2260 = vpack.c.bf16 %v2257, %v2256
        %v2261 = vpack.c.bf16 %v2259, %v2258
        %v2262 = vld [vmem:[%s8] sm:$0xff]
        %v2263 = vld [vmem:[%s8 + $0x8] sm:$0xff]
        %v2264 = vld [vmem:[%s8 + $0x10] sm:$0xff]
        %v2265 = vld [vmem:[%s8 + $0x18] sm:$0xff]
        %v2266 = vpack.c.bf16 %v2263, %v2262
        %v2267 = vpack.c.bf16 %v2265, %v2264
        %v2268 = vlaneseq
        %v2269 = vshrl.u32 %v2268, 7
        %v2270 = vsub.s32 0, %v2269
        %v2271 = vrot.slane %v2186, %v2270
        %v2273 = vsel %vm1029, %v2260, 0
        %v2276 = vsel %vm1029, %v2261, 0
        %2278 = vmatprep.subr.bf16.mxu0 0
        %2279 = vmatpush1.bf16.msra.mxu0 %v2266
        %2280 = vmatprep.subr.bf16.mxu0 0
        %2281 = vmatpush1.bf16.msra.mxu0 %v2267
        %2282 = vmatprep.subr.bf16.mxu0 0
        %2283 = vmatpush1.bf16.msra.mxu0 0
        %2284 = vmatprep.subr.bf16.mxu0 0
        %2285 = vmatpush1.bf16.msra.mxu0 0
        %2286 = vmatprep.subr.bf16.mxu0 0
        %2287 = vmatpush1.bf16.msra.mxu0 0
        %2288 = vmatprep.subr.bf16.mxu0 0
        %2289 = vmatpush1.bf16.msra.mxu0 0
        %2290 = vmatprep.subr.bf16.mxu0 0
        %2291 = vmatpush1.bf16.msra.mxu0 0
        %2292 = vmatprep.subr.bf16.mxu0 0
        %2293 = vmatpush1.bf16.msra.mxu0 0
        %2294 = vmatprep.subr.bf16.mxu0 0
        %2295 = vmatpush1.bf16.msra.mxu0 0
        %2296 = vmatprep.subr.bf16.mxu0 0
        %2297 = vmatpush1.bf16.msra.mxu0 0
        %2298 = vmatprep.subr.bf16.mxu0 0
        %2299 = vmatpush1.bf16.msra.mxu0 0
        %2300 = vmatprep.subr.bf16.mxu0 0
        %2301 = vmatpush1.bf16.msra.mxu0 0
        %2302 = vmatprep.subr.bf16.mxu0 0
        %2303 = vmatpush1.bf16.msra.mxu0 0
        %2304 = vmatprep.subr.bf16.mxu0 0
        %2305 = vmatpush1.bf16.msra.mxu0 0
        %2306 = vmatprep.subr.bf16.mxu0 0
        %2307 = vmatpush1.bf16.msra.mxu0 0
        %2308 = vmatprep.subr.bf16.mxu0 0
        %2309 = vmatpush1.bf16.msra.mxu0 0
        %2310 = vmatprep.mubr.bf16.mxu0 0
        %2311 = vmatmul.mubr.bf16.gmra.mrb[0].mxu0 %v2273
        %v2312 = vpop.f32.mrb[0].mxu0
        %v2313 = vadd.f32 %v2271, %v2312
        %v2314 = vpop.f32.mrb[0].mxu0
        %v2315 = vpop.f32.mrb[0].mxu0
        %v2316 = vadd.f32 %v2271, %v2315
        %v2317 = vpop.f32.mrb[0].mxu0
        %2318 = vmatprep.mubr.bf16.mxu0 0
        %2319 = vmatmul.mubr.bf16.gmra.mrb[0].mxu0 %v2276
        %v2320 = vpop.f32.mrb[0].mxu0
        %v2321 = vadd.f32 %v2271, %v2320
        %v2322 = vpop.f32.mrb[0].mxu0
        %v2323 = vpop.f32.mrb[0].mxu0
        %v2324 = vadd.f32 %v2271, %v2323
        %v2325 = vpop.f32.mrb[0].mxu0
        %2326 = vdwg.mxu0
        %v2327 = vmax.f32 %v2313, 0.0
        %v2328 = vmax.f32 %v2316, 0.0
        %v2329 = vmax.f32 %v2321, 0.0
        %v2330 = vmax.f32 %v2324, 0.0
        %v2331 = vpack.c.bf16 %v2328, %v2327
        %v2332 = vpack.c.bf16 %v2330, %v2329
        %v2333 = vld [vmem:[%s9] sm:$0xff]
        %v2334 = vld [vmem:[%s9 + $0x8] sm:$0xff]
        %v2335 = vld [vmem:[%s9 + $0x10] sm:$0xff]
        %v2336 = vld [vmem:[%s9 + $0x18] sm:$0xff]
        %v2337 = vld [vmem:[%s9 + $0x20] sm:$0xff]
        %v2338 = vld [vmem:[%s9 + $0x28] sm:$0xff]
        %v2339 = vld [vmem:[%s9 + $0x30] sm:$0xff]
        %v2340 = vld [vmem:[%s9 + $0x38] sm:$0xff]
        %v2341 = vld [vmem:[%s9 + $0x40] sm:$0xff]
        %v2342 = vld [vmem:[%s9 + $0x48] sm:$0xff]
        %v2343 = vld [vmem:[%s9 + $0x50] sm:$0xff]
        %v2344 = vld [vmem:[%s9 + $0x58] sm:$0xff]
        %v2345 = vld [vmem:[%s9 + $0x60] sm:$0xff]
        %v2346 = vld [vmem:[%s9 + $0x68] sm:$0xff]
        %v2347 = vld [vmem:[%s9 + $0x70] sm:$0xff]
        %v2348 = vld [vmem:[%s9 + $0x78] sm:$0xff]
        %v2349 = vpack.c.bf16 %v2334, %v2333
        %v2350 = vpack.c.bf16 %v2336, %v2335
        %v2351 = vpack.c.bf16 %v2338, %v2337
        %v2352 = vpack.c.bf16 %v2340, %v2339
        %v2353 = vpack.c.bf16 %v2342, %v2341
        %v2354 = vpack.c.bf16 %v2344, %v2343
        %v2355 = vpack.c.bf16 %v2346, %v2345
        %v2356 = vpack.c.bf16 %v2348, %v2347
        %v2357 = vlaneseq
        %v2358 = vshrl.u32 %v2357, 7
        %v2359 = vsub.s32 0, %v2358
        %v2360 = vrot.slane %v2185, %v2359
        %2361 = vmatprep.subr.bf16.mxu0 0
        %2362 = vmatpush1.bf16.msra.mxu0 %v2349
        %2363 = vmatprep.subr.bf16.mxu0 0
        %2364 = vmatpush1.bf16.msra.mxu0 %v2350
        %2365 = vmatprep.subr.bf16.mxu0 0
        %2366 = vmatpush1.bf16.msra.mxu0 %v2351
        %2367 = vmatprep.subr.bf16.mxu0 0
        %2368 = vmatpush1.bf16.msra.mxu0 %v2352
        %2369 = vmatprep.subr.bf16.mxu0 0
        %2370 = vmatpush1.bf16.msra.mxu0 %v2353
        %2371 = vmatprep.subr.bf16.mxu0 0
        %2372 = vmatpush1.bf16.msra.mxu0 %v2354
        %2373 = vmatprep.subr.bf16.mxu0 0
        %2374 = vmatpush1.bf16.msra.mxu0 %v2355
        %2375 = vmatprep.subr.bf16.mxu0 0
        %2376 = vmatpush1.bf16.msra.mxu0 %v2356
        %2377 = vmatprep.subr.bf16.mxu0 0
        %2378 = vmatpush1.bf16.msra.mxu0 0
        %2379 = vmatprep.subr.bf16.mxu0 0
        %2380 = vmatpush1.bf16.msra.mxu0 0
        %2381 = vmatprep.subr.bf16.mxu0 0
        %2382 = vmatpush1.bf16.msra.mxu0 0
        %2383 = vmatprep.subr.bf16.mxu0 0
        %2384 = vmatpush1.bf16.msra.mxu0 0
        %2385 = vmatprep.subr.bf16.mxu0 0
        %2386 = vmatpush1.bf16.msra.mxu0 0
        %2387 = vmatprep.subr.bf16.mxu0 0
        %2388 = vmatpush1.bf16.msra.mxu0 0
        %2389 = vmatprep.subr.bf16.mxu0 0
        %2390 = vmatpush1.bf16.msra.mxu0 0
        %2391 = vmatprep.subr.bf16.mxu0 0
        %2392 = vmatpush1.bf16.msra.mxu0 0
        %2393 = vmatprep.mubr.bf16.mxu0 0
        %2394 = vmatmul.mubr.bf16.gmra.mrb[0].mxu0 %v2331
        %v2395 = vpop.f32.mrb[0].mxu0
        %v2396 = vadd.f32 %v2360, %v2395
        %v2397 = vpop.f32.mrb[0].mxu0
        %v2398 = vpop.f32.mrb[0].mxu0
        %v2399 = vadd.f32 %v2360, %v2398
        %v2400 = vpop.f32.mrb[0].mxu0
        %2401 = vmatprep.mubr.bf16.mxu0 0
        %2402 = vmatmul.mubr.bf16.gmra.mrb[0].mxu0 %v2332
        %v2403 = vpop.f32.mrb[0].mxu0
        %v2404 = vadd.f32 %v2360, %v2403
        %v2405 = vpop.f32.mrb[0].mxu0
        %v2406 = vpop.f32.mrb[0].mxu0
        %v2407 = vadd.f32 %v2360, %v2406
        %v2408 = vpop.f32.mrb[0].mxu0
        %2409 = vdwg.mxu0
        %v2410 = vadd.f32 %v2256, %v2396
        %v2411 = vadd.f32 %v2257, %v2399
        %v2412 = vadd.f32 %v2258, %v2404
        %v2413 = vadd.f32 %v2259, %v2407
        %v2414 = vsel %vm1029, %v2410, 0.0
        %2415 = vadd.xlane.f32.xlu0 %v2414
        %v2416 = vpop.xlane.xlu0 %2415
        %v2417 = vsel %vm1029, %v2411, 0.0
        %2418 = vadd.xlane.f32.xlu0 %v2417
        %v2419 = vpop.xlane.xlu0 %2418
        %v2420 = vsel %vm1029, %v2412, 0.0
        %2421 = vadd.xlane.f32.xlu0 %v2420
        %v2422 = vpop.xlane.xlu0 %2421
        %v2423 = vsel %vm1029, %v2413, 0.0
        %2424 = vadd.xlane.f32.xlu0 %v2423
        %v2425 = vpop.xlane.xlu0 %2424
        %v2426 = vmul.f32 %v2416, %v2203
        %v2427 = vmul.f32 %v2419, %v2203
        %v2428 = vmul.f32 %v2422, %v2203
        %v2429 = vmul.f32 %v2425, %v2203
        %v2430 = vsub.f32 %v2410, %v2426
        %v2431 = vsub.f32 %v2411, %v2427
        %v2432 = vsub.f32 %v2412, %v2428
        %v2433 = vsub.f32 %v2413, %v2429
        %v2434 = vmul.f32 %v2430, %v2430
        %v2435 = vmul.f32 %v2431, %v2431
        %v2436 = vmul.f32 %v2432, %v2432
        %v2437 = vmul.f32 %v2433, %v2433
        %v2438 = vsel %vm1029, %v2434, 0.0
        %2439 = vadd.xlane.f32.xlu0 %v2438
        %v2440 = vpop.xlane.xlu0 %2439
        %v2441 = vsel %vm1029, %v2435, 0.0
        %2442 = vadd.xlane.f32.xlu0 %v2441
        %v2443 = vpop.xlane.xlu0 %2442
        %v2444 = vsel %vm1029, %v2436, 0.0
        %2445 = vadd.xlane.f32.xlu0 %v2444
        %v2446 = vpop.xlane.xlu0 %2445
        %v2447 = vsel %vm1029, %v2437, 0.0
        %2448 = vadd.xlane.f32.xlu0 %v2447
        %v2449 = vpop.xlane.xlu0 %2448
        %v2450 = vmul.f32 %v2440, %v2203
        %v2451 = vmul.f32 %v2443, %v2203
        %v2452 = vmul.f32 %v2446, %v2203
        %v2453 = vmul.f32 %v2449, %v2203
        %v2454 = vadd.f32 %v2450, 1e-05
        %v2455 = vadd.f32 %v2451, 1e-05
        %v2456 = vadd.f32 %v2452, 1e-05
        %v2457 = vadd.f32 %v2453, 1e-05
        %v2458 = vrsqrt.pop %v2454
        %v2459 = vrsqrt.pop %v2455
        %v2460 = vrsqrt.pop %v2456
        %v2461 = vrsqrt.pop %v2457
        %v2462 = vmul.f32 %v2430, %v2458
        %v2463 = vmul.f32 %v2431, %v2459
        %v2464 = vmul.f32 %v2432, %v2460
        %v2465 = vmul.f32 %v2433, %v2461
        %v2466 = vlaneseq
        %v2467 = vshrl.u32 %v2466, 7
        %v2468 = vsub.s32 0, %v2467
        %v2469 = vrot.slane %v2183, %v2468
        %v2470 = vmul.f32 %v2462, %v2469
        %v2471 = vmul.f32 %v2463, %v2469
        %v2472 = vmul.f32 %v2464, %v2469
        %v2473 = vmul.f32 %v2465, %v2469
        %v2474 = vlaneseq
        %v2475 = vshrl.u32 %v2474, 7
        %v2476 = vsub.s32 0, %v2475
        %v2477 = vrot.slane %v2184, %v2476
        %v2478 = vadd.f32 %v2470, %v2477
        %v2479 = vadd.f32 %v2471, %v2477
        %v2480 = vadd.f32 %v2472, %v2477
        %v2481 = vadd.f32 %v2473, %v2477
        %v2482 = vld [vmem:[%s915] sm:$0xff]
        %v2483 = vld [vmem:[%s915 + $0x8] sm:$0xff]
        %v2484 = vld [vmem:[%s915 + $0x10] sm:$0xff]
        %v2485 = vld [vmem:[%s915 + $0x18] sm:$0xff]
        %v2486 = vld [vmem:[%s929] sm:$0xff]
        %v2487 = vld [vmem:[%s929 + $0x8] sm:$0xff]
        %v2488 = vld [vmem:[%s929 + $0x10] sm:$0xff]
        %v2489 = vld [vmem:[%s929 + $0x18] sm:$0xff]
        %v2490 = vld [vmem:[%s929 + $0x20] sm:$0xff]
        %v2491 = vld [vmem:[%s929 + $0x28] sm:$0xff]
        %v2492 = vld [vmem:[%s929 + $0x30] sm:$0xff]
        %v2493 = vld [vmem:[%s929 + $0x38] sm:$0xff]
        %v2494 = vld [vmem:[%s929 + $0x40] sm:$0xff]
        %v2495 = vld [vmem:[%s929 + $0x48] sm:$0xff]
        %v2496 = vld [vmem:[%s929 + $0x50] sm:$0xff]
        %v2497 = vld [vmem:[%s929 + $0x58] sm:$0xff]
        %v2498 = vld [vmem:[%s929 + $0x60] sm:$0xff]
        %v2499 = vld [vmem:[%s929 + $0x68] sm:$0xff]
        %v2500 = vld [vmem:[%s929 + $0x70] sm:$0xff]
        %v2501 = vld [vmem:[%s929 + $0x78] sm:$0xff]
        %v2502 = vld [vmem:[%s929 + $0x80] sm:$0xff]
        %v2503 = vld [vmem:[%s929 + $0x88] sm:$0xff]
        %v2504 = vld [vmem:[%s929 + $0x90] sm:$0xff]
        %v2505 = vld [vmem:[%s929 + $0x98] sm:$0xff]
        %v2506 = vld [vmem:[%s929 + $0xa0] sm:$0xff]
        %v2507 = vld [vmem:[%s929 + $0xa8] sm:$0xff]
        %v2508 = vld [vmem:[%s929 + $0xb0] sm:$0xff]
        %v2509 = vld [vmem:[%s929 + $0xb8] sm:$0xff]
        %v2510 = vld [vmem:[%s929 + $0xc0] sm:$0xff]
        %v2511 = vld [vmem:[%s929 + $0xc8] sm:$0xff]
        %v2512 = vld [vmem:[%s929 + $0xd0] sm:$0xff]
        %v2513 = vld [vmem:[%s929 + $0xd8] sm:$0xff]
        %v2514 = vld [vmem:[%s929 + $0xe0] sm:$0xff]
        %v2515 = vld [vmem:[%s929 + $0xe8] sm:$0xff]
        %v2516 = vld [vmem:[%s929 + $0xf0] sm:$0xff]
        %v2517 = vld [vmem:[%s929 + $0xf8] sm:$0xff]
        %v2518 = vld [vmem:[%s929 + $0x100] sm:$0xff]
        %v2519 = vld [vmem:[%s929 + $0x108] sm:$0xff]
        %v2520 = vld [vmem:[%s929 + $0x110] sm:$0xff]
        %v2521 = vld [vmem:[%s929 + $0x118] sm:$0xff]
        %v2522 = vld [vmem:[%s929 + $0x120] sm:$0xff]
        %v2523 = vld [vmem:[%s929 + $0x128] sm:$0xff]
        %v2524 = vld [vmem:[%s929 + $0x130] sm:$0xff]
        %v2525 = vld [vmem:[%s929 + $0x138] sm:$0xff]
        %v2526 = vld [vmem:[%s929 + $0x140] sm:$0xff]
        %v2527 = vld [vmem:[%s929 + $0x148] sm:$0xff]
        %v2528 = vld [vmem:[%s929 + $0x150] sm:$0xff]
        %v2529 = vld [vmem:[%s929 + $0x158] sm:$0xff]
        %2534 = vrot.lane.b32.xlu0 %v2482, 32
        %v2535 = vpop.permute.xlu0 %2534
        %2536 = vrot.lane.b32.xlu0 %v2483, 32
        %v2537 = vpop.permute.xlu0 %2536
        %2538 = vrot.lane.b32.xlu0 %v2484, 32
        %v2539 = vpop.permute.xlu0 %2538
        %2540 = vrot.lane.b32.xlu0 %v2485, 32
        %v2541 = vpop.permute.xlu0 %2540
        %2546 = vrot.lane.b32.xlu0 %v2482, 64
        %v2547 = vpop.permute.xlu0 %2546
        %2548 = vrot.lane.b32.xlu0 %v2483, 64
        %v2549 = vpop.permute.xlu0 %2548
        %2550 = vrot.lane.b32.xlu0 %v2484, 64
        %v2551 = vpop.permute.xlu0 %2550
        %2552 = vrot.lane.b32.xlu0 %v2485, 64
        %v2553 = vpop.permute.xlu0 %2552
        %2558 = vrot.lane.b32.xlu0 %v2482, 96
        %v2559 = vpop.permute.xlu0 %2558
        %2560 = vrot.lane.b32.xlu0 %v2483, 96
        %v2561 = vpop.permute.xlu0 %2560
        %2562 = vrot.lane.b32.xlu0 %v2484, 96
        %v2563 = vpop.permute.xlu0 %2562
        %2564 = vrot.lane.b32.xlu0 %v2485, 96
        %v2565 = vpop.permute.xlu0 %2564
        %v2570 = vsel %vm1029, %v2482, %v2535
        %v2571 = vsel %vm1029, %v2483, %v2537
        %v2572 = vsel %vm1029, %v2484, %v2539
        %v2573 = vsel %vm1029, %v2485, %v2541
        %v2574 = vsel %vm1034, %v2570, %v2547
        %v2575 = vsel %vm1034, %v2571, %v2549
        %v2576 = vsel %vm1034, %v2572, %v2551
        %v2577 = vsel %vm1034, %v2573, %v2553
        %v2578 = vsel %vm1039, %v2574, %v2559
        %v2579 = vsel %vm1039, %v2575, %v2561
        %v2580 = vsel %vm1039, %v2576, %v2563
        %v2581 = vsel %vm1039, %v2577, %v2565
        %v2582 = vmul.f32 %v2578, %v949
        %v2583 = vmul.f32 %v2578, %v950
        %v2584 = vmul.f32 %v2578, %v951
        %v2585 = vmul.f32 %v2578, %v952
        %v2586 = vmul.f32 %v2579, %v953
        %v2587 = vmul.f32 %v2579, %v954
        %v2588 = vmul.f32 %v2579, %v955
        %v2589 = vmul.f32 %v2579, %v956
        %v2590 = vmul.f32 %v2580, %v949
        %v2591 = vmul.f32 %v2580, %v950
        %v2592 = vmul.f32 %v2580, %v951
        %v2593 = vmul.f32 %v2580, %v952
        %v2594 = vmul.f32 %v2581, %v953
        %v2595 = vmul.f32 %v2581, %v954
        %v2596 = vmul.f32 %v2581, %v955
        %v2597 = vmul.f32 %v2581, %v956
        %v2598 = vld [vmem:[%s16] sm:$0xff]
        %v2599 = vld [vmem:[%s16 + $0x8] sm:$0xff]
        %v2600 = vpack.c.bf16 %v2586, %v2582
        %v2601 = vpack.c.bf16 %v2587, %v2583
        %v2602 = vpack.c.bf16 %v2588, %v2584
        %v2603 = vpack.c.bf16 %v2589, %v2585
        %v2604 = vpack.c.bf16 %v2594, %v2590
        %v2605 = vpack.c.bf16 %v2595, %v2591
        %v2606 = vpack.c.bf16 %v2596, %v2592
        %v2607 = vpack.c.bf16 %v2597, %v2593
        %v2608 = vld [vmem:[%s12] sm:$0xff]
        %v2609 = vld [vmem:[%s12 + $0x8] sm:$0xff]
        %v2610 = vld [vmem:[%s12 + $0x10] sm:$0xff]
        %v2611 = vld [vmem:[%s12 + $0x18] sm:$0xff]
        %v2612 = vld [vmem:[%s12 + $0x20] sm:$0xff]
        %v2613 = vld [vmem:[%s12 + $0x28] sm:$0xff]
        %v2614 = vld [vmem:[%s12 + $0x30] sm:$0xff]
        %v2615 = vld [vmem:[%s12 + $0x38] sm:$0xff]
        %v2616 = vld [vmem:[%s12 + $0x40] sm:$0xff]
        %v2617 = vld [vmem:[%s12 + $0x48] sm:$0xff]
        %v2618 = vld [vmem:[%s12 + $0x50] sm:$0xff]
        %v2619 = vld [vmem:[%s12 + $0x58] sm:$0xff]
        %v2620 = vld [vmem:[%s12 + $0x60] sm:$0xff]
        %v2621 = vld [vmem:[%s12 + $0x68] sm:$0xff]
        %v2622 = vld [vmem:[%s12 + $0x70] sm:$0xff]
        %v2623 = vld [vmem:[%s12 + $0x78] sm:$0xff]
        %v2624 = vld [vmem:[%s12 + $0x80] sm:$0xff]
        %v2625 = vld [vmem:[%s12 + $0x88] sm:$0xff]
        %v2626 = vld [vmem:[%s12 + $0x90] sm:$0xff]
        %v2627 = vld [vmem:[%s12 + $0x98] sm:$0xff]
        %v2628 = vld [vmem:[%s12 + $0xa0] sm:$0xff]
        %v2629 = vld [vmem:[%s12 + $0xa8] sm:$0xff]
        %v2630 = vld [vmem:[%s12 + $0xb0] sm:$0xff]
        %v2631 = vld [vmem:[%s12 + $0xb8] sm:$0xff]
        %v2632 = vld [vmem:[%s12 + $0xc0] sm:$0xff]
        %v2633 = vld [vmem:[%s12 + $0xc8] sm:$0xff]
        %v2634 = vld [vmem:[%s12 + $0xd0] sm:$0xff]
        %v2635 = vld [vmem:[%s12 + $0xd8] sm:$0xff]
        %v2636 = vld [vmem:[%s12 + $0xe0] sm:$0xff]
        %v2637 = vld [vmem:[%s12 + $0xe8] sm:$0xff]
        %v2638 = vld [vmem:[%s12 + $0xf0] sm:$0xff]
        %v2639 = vld [vmem:[%s12 + $0xf8] sm:$0xff]
        %v2640 = vld [vmem:[%s12 + $0x100] sm:$0xff]
        %v2641 = vld [vmem:[%s12 + $0x108] sm:$0xff]
        %v2642 = vld [vmem:[%s12 + $0x110] sm:$0xff]
        %v2643 = vld [vmem:[%s12 + $0x118] sm:$0xff]
        %v2644 = vld [vmem:[%s12 + $0x120] sm:$0xff]
        %v2645 = vld [vmem:[%s12 + $0x128] sm:$0xff]
        %v2646 = vld [vmem:[%s12 + $0x130] sm:$0xff]
        %v2647 = vld [vmem:[%s12 + $0x138] sm:$0xff]
        %v2648 = vld [vmem:[%s12 + $0x140] sm:$0xff]
        %v2649 = vld [vmem:[%s12 + $0x148] sm:$0xff]
        %v2650 = vld [vmem:[%s12 + $0x150] sm:$0xff]
        %v2651 = vld [vmem:[%s12 + $0x158] sm:$0xff]
        %v2652 = vld [vmem:[%s12 + $0x160] sm:$0xff]
        %v2653 = vld [vmem:[%s12 + $0x168] sm:$0xff]
        %v2654 = vld [vmem:[%s12 + $0x170] sm:$0xff]
        %v2655 = vld [vmem:[%s12 + $0x178] sm:$0xff]
        %v2656 = vld [vmem:[%s12 + $0x180] sm:$0xff]
        %v2657 = vld [vmem:[%s12 + $0x188] sm:$0xff]
        %v2658 = vld [vmem:[%s12 + $0x190] sm:$0xff]
        %v2659 = vld [vmem:[%s12 + $0x198] sm:$0xff]
        %v2660 = vld [vmem:[%s12 + $0x1a0] sm:$0xff]
        %v2661 = vld [vmem:[%s12 + $0x1a8] sm:$0xff]
        %v2662 = vld [vmem:[%s12 + $0x1b0] sm:$0xff]
        %v2663 = vld [vmem:[%s12 + $0x1b8] sm:$0xff]
        %v2664 = vld [vmem:[%s12 + $0x1c0] sm:$0xff]
        %v2665 = vld [vmem:[%s12 + $0x1c8] sm:$0xff]
        %v2666 = vld [vmem:[%s12 + $0x1d0] sm:$0xff]
        %v2667 = vld [vmem:[%s12 + $0x1d8] sm:$0xff]
        %v2668 = vld [vmem:[%s12 + $0x1e0] sm:$0xff]
        %v2669 = vld [vmem:[%s12 + $0x1e8] sm:$0xff]
        %v2670 = vld [vmem:[%s12 + $0x1f0] sm:$0xff]
        %v2671 = vld [vmem:[%s12 + $0x1f8] sm:$0xff]
        %v2672 = vpack.c.bf16 %v2609, %v2608
        %v2673 = vpack.c.bf16 %v2611, %v2610
        %v2674 = vpack.c.bf16 %v2613, %v2612
        %v2675 = vpack.c.bf16 %v2615, %v2614
        %v2676 = vpack.c.bf16 %v2617, %v2616
        %v2677 = vpack.c.bf16 %v2619, %v2618
        %v2678 = vpack.c.bf16 %v2621, %v2620
        %v2679 = vpack.c.bf16 %v2623, %v2622
        %v2680 = vpack.c.bf16 %v2625, %v2624
        %v2681 = vpack.c.bf16 %v2627, %v2626
        %v2682 = vpack.c.bf16 %v2629, %v2628
        %v2683 = vpack.c.bf16 %v2631, %v2630
        %v2684 = vpack.c.bf16 %v2633, %v2632
        %v2685 = vpack.c.bf16 %v2635, %v2634
        %v2686 = vpack.c.bf16 %v2637, %v2636
        %v2687 = vpack.c.bf16 %v2639, %v2638
        %v2688 = vpack.c.bf16 %v2641, %v2640
        %v2689 = vpack.c.bf16 %v2643, %v2642
        %v2690 = vpack.c.bf16 %v2645, %v2644
        %v2691 = vpack.c.bf16 %v2647, %v2646
        %v2692 = vpack.c.bf16 %v2649, %v2648
        %v2693 = vpack.c.bf16 %v2651, %v2650
        %v2694 = vpack.c.bf16 %v2653, %v2652
        %v2695 = vpack.c.bf16 %v2655, %v2654
        %v2696 = vpack.c.bf16 %v2657, %v2656
        %v2697 = vpack.c.bf16 %v2659, %v2658
        %v2698 = vpack.c.bf16 %v2661, %v2660
        %v2699 = vpack.c.bf16 %v2663, %v2662
        %v2700 = vpack.c.bf16 %v2665, %v2664
        %v2701 = vpack.c.bf16 %v2667, %v2666
        %v2702 = vpack.c.bf16 %v2669, %v2668
        %v2703 = vpack.c.bf16 %v2671, %v2670
        %2704 = vmatprep.subr.bf16.mxu0 0
        %2705 = vmatpush1.bf16.msra.mxu0 %v2672
        %2706 = vmatprep.subr.bf16.mxu0 0
        %2707 = vmatpush1.bf16.msra.mxu0 %v2673
        %2708 = vmatprep.subr.bf16.mxu0 0
        %2709 = vmatpush1.bf16.msra.mxu0 %v2674
        %2710 = vmatprep.subr.bf16.mxu0 0
        %2711 = vmatpush1.bf16.msra.mxu0 %v2675
        %2712 = vmatprep.subr.bf16.mxu0 0
        %2713 = vmatpush1.bf16.msra.mxu0 %v2676
        %2714 = vmatprep.subr.bf16.mxu0 0
        %2715 = vmatpush1.bf16.msra.mxu0 %v2677
        %2716 = vmatprep.subr.bf16.mxu0 0
        %2717 = vmatpush1.bf16.msra.mxu0 %v2678
        %2718 = vmatprep.subr.bf16.mxu0 0
        %2719 = vmatpush1.bf16.msra.mxu0 %v2679
        %2720 = vmatprep.subr.bf16.mxu0 0
        %2721 = vmatpush1.bf16.msra.mxu0 %v2680
        %2722 = vmatprep.subr.bf16.mxu0 0
        %2723 = vmatpush1.bf16.msra.mxu0 %v2681
        %2724 = vmatprep.subr.bf16.mxu0 0
        %2725 = vmatpush1.bf16.msra.mxu0 %v2682
        %2726 = vmatprep.subr.bf16.mxu0 0
        %2727 = vmatpush1.bf16.msra.mxu0 %v2683
        %2728 = vmatprep.subr.bf16.mxu0 0
        %2729 = vmatpush1.bf16.msra.mxu0 %v2684
        %2730 = vmatprep.subr.bf16.mxu0 0
        %2731 = vmatpush1.bf16.msra.mxu0 %v2685
        %2732 = vmatprep.subr.bf16.mxu0 0
        %2733 = vmatpush1.bf16.msra.mxu0 %v2686
        %2734 = vmatprep.subr.bf16.mxu0 0
        %2735 = vmatpush1.bf16.msra.mxu0 %v2687
        %2736 = vmatprep.mubr.bf16.mxu0 %v2601
        %2737 = vmatmul.mubr.bf16.gmra.mrb[0].mxu0 %v2600
        %v2738 = vpop.f32.mrb[0].mxu0
        %v2739 = vadd.f32 0.0, %v2738
        %v2740 = vpop.f32.mrb[0].mxu0
        %v2741 = vpop.f32.mrb[0].mxu0
        %v2742 = vadd.f32 0.0, %v2741
        %v2743 = vpop.f32.mrb[0].mxu0
        %2744 = vmatprep.mubr.bf16.mxu0 %v2605
        %2745 = vmatmul.mubr.bf16.gmra.mrb[0].mxu0 %v2604
        %v2746 = vpop.f32.mrb[0].mxu0
        %v2747 = vadd.f32 0.0, %v2746
        %v2748 = vpop.f32.mrb[0].mxu0
        %v2749 = vpop.f32.mrb[0].mxu0
        %v2750 = vadd.f32 0.0, %v2749
        %v2751 = vpop.f32.mrb[0].mxu0
        %2752 = vdwg.mxu0
        %2753 = vmatprep.subr.bf16.mxu0 0
        %2754 = vmatpush1.bf16.msra.mxu0 %v2688
        %2755 = vmatprep.subr.bf16.mxu0 0
        %2756 = vmatpush1.bf16.msra.mxu0 %v2689
        %2757 = vmatprep.subr.bf16.mxu0 0
        %2758 = vmatpush1.bf16.msra.mxu0 %v2690
        %2759 = vmatprep.subr.bf16.mxu0 0
        %2760 = vmatpush1.bf16.msra.mxu0 %v2691
        %2761 = vmatprep.subr.bf16.mxu0 0
        %2762 = vmatpush1.bf16.msra.mxu0 %v2692
        %2763 = vmatprep.subr.bf16.mxu0 0
        %2764 = vmatpush1.bf16.msra.mxu0 %v2693
        %2765 = vmatprep.subr.bf16.mxu0 0
        %2766 = vmatpush1.bf16.msra.mxu0 %v2694
        %2767 = vmatprep.subr.bf16.mxu0 0
        %2768 = vmatpush1.bf16.msra.mxu0 %v2695
        %2769 = vmatprep.subr.bf16.mxu0 0
        %2770 = vmatpush1.bf16.msra.mxu0 %v2696
        %2771 = vmatprep.subr.bf16.mxu0 0
        %2772 = vmatpush1.bf16.msra.mxu0 %v2697
        %2773 = vmatprep.subr.bf16.mxu0 0
        %2774 = vmatpush1.bf16.msra.mxu0 %v2698
        %2775 = vmatprep.subr.bf16.mxu0 0
        %2776 = vmatpush1.bf16.msra.mxu0 %v2699
        %2777 = vmatprep.subr.bf16.mxu0 0
        %2778 = vmatpush1.bf16.msra.mxu0 %v2700
        %2779 = vmatprep.subr.bf16.mxu0 0
        %2780 = vmatpush1.bf16.msra.mxu0 %v2701
        %2781 = vmatprep.subr.bf16.mxu0 0
        %2782 = vmatpush1.bf16.msra.mxu0 %v2702
        %2783 = vmatprep.subr.bf16.mxu0 0
        %2784 = vmatpush1.bf16.msra.mxu0 %v2703
        %2785 = vmatprep.mubr.bf16.mxu0 %v2603
        %2786 = vmatmul.mubr.bf16.gmra.mrb[0].mxu0 %v2602
        %v2787 = vpop.f32.mrb[0].mxu0
        %v2788 = vadd.f32 %v2739, %v2787
        %v2789 = vpop.f32.mrb[0].mxu0
        %v2790 = vpop.f32.mrb[0].mxu0
        %v2791 = vadd.f32 %v2742, %v2790
        %v2792 = vpop.f32.mrb[0].mxu0
        %2793 = vmatprep.mubr.bf16.mxu0 %v2607
        %2794 = vmatmul.mubr.bf16.gmra.mrb[0].mxu0 %v2606
        %v2795 = vpop.f32.mrb[0].mxu0
        %v2796 = vadd.f32 %v2747, %v2795
        %v2797 = vpop.f32.mrb[0].mxu0
        %v2798 = vpop.f32.mrb[0].mxu0
        %v2799 = vadd.f32 %v2750, %v2798
        %v2800 = vpop.f32.mrb[0].mxu0
        %2801 = vdwg.mxu0
        %v2802 = vadd.f32 %v2788, %v2598
        %v2803 = vadd.f32 %v2791, %v2599
        %v2804 = vadd.f32 %v2796, %v2598
        %v2805 = vadd.f32 %v2799, %v2599
        %v2806 = vld [vmem:[%s17] sm:$0x1]
        %v2807 = vpack.c.bf16 %v2497, %v2486
        %v2808 = vpack.c.bf16 %v2498, %v2487
        %v2809 = vpack.c.bf16 %v2499, %v2488
        %v2810 = vpack.c.bf16 %v2500, %v2489
        %v2811 = vpack.c.bf16 %v2501, %v2490
        %v2812 = vpack.c.bf16 %v2502, %v2491
        %v2813 = vpack.c.bf16 %v2503, %v2492
        %v2814 = vpack.c.bf16 %v2504, %v2493
        %v2815 = vpack.c.bf16 %v2505, %v2494
        %v2816 = vpack.c.bf16 %v2506, %v2495
        %v2817 = vpack.c.bf16 %v2507, %v2496
        %v2818 = vpack.c.bf16 %v2519, %v2508
        %v2819 = vpack.c.bf16 %v2520, %v2509
        %v2820 = vpack.c.bf16 %v2521, %v2510
        %v2821 = vpack.c.bf16 %v2522, %v2511
        %v2822 = vpack.c.bf16 %v2523, %v2512
        %v2823 = vpack.c.bf16 %v2524, %v2513
        %v2824 = vpack.c.bf16 %v2525, %v2514
        %v2825 = vpack.c.bf16 %v2526, %v2515
        %v2826 = vpack.c.bf16 %v2527, %v2516
        %v2827 = vpack.c.bf16 %v2528, %v2517
        %v2828 = vpack.c.bf16 %v2529, %v2518
        %v2829 = vld [vmem:[%s13] sm:$0xff]
        %v2830 = vld [vmem:[%s13 + $0x8] sm:$0xff]
        %v2831 = vld [vmem:[%s13 + $0x10] sm:$0xff]
        %v2832 = vld [vmem:[%s13 + $0x18] sm:$0xff]
        %v2833 = vld [vmem:[%s13 + $0x20] sm:$0xff]
        %v2834 = vld [vmem:[%s13 + $0x28] sm:$0xff]
        %v2835 = vld [vmem:[%s13 + $0x30] sm:$0xff]
        %v2836 = vld [vmem:[%s13 + $0x38] sm:$0xff]
        %v2837 = vld [vmem:[%s13 + $0x40] sm:$0xff]
        %v2838 = vld [vmem:[%s13 + $0x48] sm:$0xff]
        %v2839 = vld [vmem:[%s13 + $0x50] sm:$0xff]
        %v2840 = vld [vmem:[%s13 + $0x58] sm:$0xff]
        %v2841 = vld [vmem:[%s13 + $0x60] sm:$0xff]
        %v2842 = vld [vmem:[%s13 + $0x68] sm:$0xff]
        %v2843 = vld [vmem:[%s13 + $0x70] sm:$0xff]
        %v2844 = vld [vmem:[%s13 + $0x78] sm:$0xff]
        %v2845 = vld [vmem:[%s13 + $0x80] sm:$0xff]
        %v2846 = vld [vmem:[%s13 + $0x88] sm:$0xff]
        %v2847 = vld [vmem:[%s13 + $0x90] sm:$0xff]
        %v2848 = vld [vmem:[%s13 + $0x98] sm:$0xff]
        %v2849 = vld [vmem:[%s13 + $0xa0] sm:$0xff]
        %v2850 = vld [vmem:[%s13 + $0xa8] sm:$0xff]
        %v2851 = vld [vmem:[%s13 + $0xb0] sm:$0xff]
        %v2852 = vld [vmem:[%s13 + $0xb8] sm:$0xff]
        %v2853 = vld [vmem:[%s13 + $0xc0] sm:$0xff]
        %v2854 = vld [vmem:[%s13 + $0xc8] sm:$0xff]
        %v2855 = vld [vmem:[%s13 + $0xd0] sm:$0xff]
        %v2856 = vld [vmem:[%s13 + $0xd8] sm:$0xff]
        %v2857 = vld [vmem:[%s13 + $0xe0] sm:$0xff]
        %v2858 = vld [vmem:[%s13 + $0xe8] sm:$0xff]
        %v2859 = vld [vmem:[%s13 + $0xf0] sm:$0xff]
        %v2860 = vld [vmem:[%s13 + $0xf8] sm:$0xff]
        %v2861 = vld [vmem:[%s13 + $0x100] sm:$0xff]
        %v2862 = vld [vmem:[%s13 + $0x108] sm:$0xff]
        %v2863 = vld [vmem:[%s13 + $0x110] sm:$0xff]
        %v2864 = vld [vmem:[%s13 + $0x118] sm:$0xff]
        %v2865 = vld [vmem:[%s13 + $0x120] sm:$0xff]
        %v2866 = vld [vmem:[%s13 + $0x128] sm:$0xff]
        %v2867 = vld [vmem:[%s13 + $0x130] sm:$0xff]
        %v2868 = vld [vmem:[%s13 + $0x138] sm:$0xff]
        %v2869 = vld [vmem:[%s13 + $0x140] sm:$0xff]
        %v2870 = vld [vmem:[%s13 + $0x148] sm:$0xff]
        %v2871 = vld [vmem:[%s13 + $0x150] sm:$0xff]
        %v2872 = vld [vmem:[%s13 + $0x158] sm:$0xff]
        %v2873 = vld [vmem:[%s13 + $0x160] sm:$0xff]
        %v2874 = vld [vmem:[%s13 + $0x168] sm:$0xff]
        %v2875 = vld [vmem:[%s13 + $0x170] sm:$0xff]
        %v2876 = vld [vmem:[%s13 + $0x178] sm:$0xff]
        %v2877 = vld [vmem:[%s13 + $0x180] sm:$0xff]
        %v2878 = vld [vmem:[%s13 + $0x188] sm:$0xff]
        %v2879 = vld [vmem:[%s13 + $0x190] sm:$0xff]
        %v2880 = vld [vmem:[%s13 + $0x198] sm:$0xff]
        %v2881 = vld [vmem:[%s13 + $0x1a0] sm:$0xff]
        %v2882 = vld [vmem:[%s13 + $0x1a8] sm:$0xff]
        %v2883 = vld [vmem:[%s13 + $0x1b0] sm:$0xff]
        %v2884 = vld [vmem:[%s13 + $0x1b8] sm:$0xff]
        %v2885 = vld [vmem:[%s13 + $0x1c0] sm:$0xff]
        %v2886 = vld [vmem:[%s13 + $0x1c8] sm:$0xff]
        %v2887 = vld [vmem:[%s13 + $0x1d0] sm:$0xff]
        %v2888 = vld [vmem:[%s13 + $0x1d8] sm:$0xff]
        %v2889 = vld [vmem:[%s13 + $0x1e0] sm:$0xff]
        %v2890 = vld [vmem:[%s13 + $0x1e8] sm:$0xff]
        %v2891 = vld [vmem:[%s13 + $0x1f0] sm:$0xff]
        %v2892 = vld [vmem:[%s13 + $0x1f8] sm:$0xff]
        %v2893 = vld [vmem:[%s13 + $0x200] sm:$0xff]
        %v2894 = vld [vmem:[%s13 + $0x208] sm:$0xff]
        %v2895 = vld [vmem:[%s13 + $0x210] sm:$0xff]
        %v2896 = vld [vmem:[%s13 + $0x218] sm:$0xff]
        %v2897 = vld [vmem:[%s13 + $0x220] sm:$0xff]
        %v2898 = vld [vmem:[%s13 + $0x228] sm:$0xff]
        %v2899 = vld [vmem:[%s13 + $0x230] sm:$0xff]
        %v2900 = vld [vmem:[%s13 + $0x238] sm:$0xff]
        %v2901 = vld [vmem:[%s13 + $0x240] sm:$0xff]
        %v2902 = vld [vmem:[%s13 + $0x248] sm:$0xff]
        %v2903 = vld [vmem:[%s13 + $0x250] sm:$0xff]
        %v2904 = vld [vmem:[%s13 + $0x258] sm:$0xff]
        %v2905 = vld [vmem:[%s13 + $0x260] sm:$0xff]
        %v2906 = vld [vmem:[%s13 + $0x268] sm:$0xff]
        %v2907 = vld [vmem:[%s13 + $0x270] sm:$0xff]
        %v2908 = vld [vmem:[%s13 + $0x278] sm:$0xff]
        %v2909 = vld [vmem:[%s13 + $0x280] sm:$0xff]
        %v2910 = vld [vmem:[%s13 + $0x288] sm:$0xff]
        %v2911 = vld [vmem:[%s13 + $0x290] sm:$0xff]
        %v2912 = vld [vmem:[%s13 + $0x298] sm:$0xff]
        %v2913 = vld [vmem:[%s13 + $0x2a0] sm:$0xff]
        %v2914 = vld [vmem:[%s13 + $0x2a8] sm:$0xff]
        %v2915 = vld [vmem:[%s13 + $0x2b0] sm:$0xff]
        %v2916 = vld [vmem:[%s13 + $0x2b8] sm:$0xff]
        %v2917 = vld [vmem:[%s13 + $0x2c0] sm:$0xff]
        %v2918 = vld [vmem:[%s13 + $0x2c8] sm:$0xff]
        %v2919 = vld [vmem:[%s13 + $0x2d0] sm:$0xff]
        %v2920 = vld [vmem:[%s13 + $0x2d8] sm:$0xff]
        %v2921 = vld [vmem:[%s13 + $0x2e0] sm:$0xff]
        %v2922 = vld [vmem:[%s13 + $0x2e8] sm:$0xff]
        %v2923 = vld [vmem:[%s13 + $0x2f0] sm:$0xff]
        %v2924 = vld [vmem:[%s13 + $0x2f8] sm:$0xff]
        %v2925 = vld [vmem:[%s13 + $0x300] sm:$0xff]
        %v2926 = vld [vmem:[%s13 + $0x308] sm:$0xff]
        %v2927 = vld [vmem:[%s13 + $0x310] sm:$0xff]
        %v2928 = vld [vmem:[%s13 + $0x318] sm:$0xff]
        %v2929 = vld [vmem:[%s13 + $0x320] sm:$0xff]
        %v2930 = vld [vmem:[%s13 + $0x328] sm:$0xff]
        %v2931 = vld [vmem:[%s13 + $0x330] sm:$0xff]
        %v2932 = vld [vmem:[%s13 + $0x338] sm:$0xff]
        %v2933 = vld [vmem:[%s13 + $0x340] sm:$0xff]
        %v2934 = vld [vmem:[%s13 + $0x348] sm:$0xff]
        %v2935 = vld [vmem:[%s13 + $0x350] sm:$0xff]
        %v2936 = vld [vmem:[%s13 + $0x358] sm:$0xff]
        %v2937 = vld [vmem:[%s13 + $0x360] sm:$0xff]
        %v2938 = vld [vmem:[%s13 + $0x368] sm:$0xff]
        %v2939 = vld [vmem:[%s13 + $0x370] sm:$0xff]
        %v2940 = vld [vmem:[%s13 + $0x378] sm:$0xff]
        %v2941 = vld [vmem:[%s13 + $0x380] sm:$0xff]
        %v2942 = vld [vmem:[%s13 + $0x388] sm:$0xff]
        %v2943 = vld [vmem:[%s13 + $0x390] sm:$0xff]
        %v2944 = vld [vmem:[%s13 + $0x398] sm:$0xff]
        %v2945 = vld [vmem:[%s13 + $0x3a0] sm:$0xff]
        %v2946 = vld [vmem:[%s13 + $0x3a8] sm:$0xff]
        %v2947 = vld [vmem:[%s13 + $0x3b0] sm:$0xff]
        %v2948 = vld [vmem:[%s13 + $0x3b8] sm:$0xff]
        %v2949 = vld [vmem:[%s13 + $0x3c0] sm:$0xff]
        %v2950 = vld [vmem:[%s13 + $0x3c8] sm:$0xff]
        %v2951 = vld [vmem:[%s13 + $0x3d0] sm:$0xff]
        %v2952 = vld [vmem:[%s13 + $0x3d8] sm:$0xff]
        %v2953 = vld [vmem:[%s13 + $0x3e0] sm:$0xff]
        %v2954 = vld [vmem:[%s13 + $0x3e8] sm:$0xff]
        %v2955 = vld [vmem:[%s13 + $0x3f0] sm:$0xff]
        %v2956 = vld [vmem:[%s13 + $0x3f8] sm:$0xff]
        %v2957 = vld [vmem:[%s13 + $0x400] sm:$0xff]
        %v2958 = vld [vmem:[%s13 + $0x408] sm:$0xff]
        %v2959 = vld [vmem:[%s13 + $0x410] sm:$0xff]
        %v2960 = vld [vmem:[%s13 + $0x418] sm:$0xff]
        %v2961 = vld [vmem:[%s13 + $0x420] sm:$0xff]
        %v2962 = vld [vmem:[%s13 + $0x428] sm:$0xff]
        %v2963 = vld [vmem:[%s13 + $0x430] sm:$0xff]
        %v2964 = vld [vmem:[%s13 + $0x438] sm:$0xff]
        %v2965 = vld [vmem:[%s13 + $0x440] sm:$0xff]
        %v2966 = vld [vmem:[%s13 + $0x448] sm:$0xff]
        %v2967 = vld [vmem:[%s13 + $0x450] sm:$0xff]
        %v2968 = vld [vmem:[%s13 + $0x458] sm:$0xff]
        %v2969 = vld [vmem:[%s13 + $0x460] sm:$0xff]
        %v2970 = vld [vmem:[%s13 + $0x468] sm:$0xff]
        %v2971 = vld [vmem:[%s13 + $0x470] sm:$0xff]
        %v2972 = vld [vmem:[%s13 + $0x478] sm:$0xff]
        %v2973 = vld [vmem:[%s13 + $0x480] sm:$0xff]
        %v2974 = vld [vmem:[%s13 + $0x488] sm:$0xff]
        %v2975 = vld [vmem:[%s13 + $0x490] sm:$0xff]
        %v2976 = vld [vmem:[%s13 + $0x498] sm:$0xff]
        %v2977 = vld [vmem:[%s13 + $0x4a0] sm:$0xff]
        %v2978 = vld [vmem:[%s13 + $0x4a8] sm:$0xff]
        %v2979 = vld [vmem:[%s13 + $0x4b0] sm:$0xff]
        %v2980 = vld [vmem:[%s13 + $0x4b8] sm:$0xff]
        %v2981 = vld [vmem:[%s13 + $0x4c0] sm:$0xff]
        %v2982 = vld [vmem:[%s13 + $0x4c8] sm:$0xff]
        %v2983 = vld [vmem:[%s13 + $0x4d0] sm:$0xff]
        %v2984 = vld [vmem:[%s13 + $0x4d8] sm:$0xff]
        %v2985 = vld [vmem:[%s13 + $0x4e0] sm:$0xff]
        %v2986 = vld [vmem:[%s13 + $0x4e8] sm:$0xff]
        %v2987 = vld [vmem:[%s13 + $0x4f0] sm:$0xff]
        %v2988 = vld [vmem:[%s13 + $0x4f8] sm:$0xff]
        %v2989 = vld [vmem:[%s13 + $0x500] sm:$0xff]
        %v2990 = vld [vmem:[%s13 + $0x508] sm:$0xff]
        %v2991 = vld [vmem:[%s13 + $0x510] sm:$0xff]
        %v2992 = vld [vmem:[%s13 + $0x518] sm:$0xff]
        %v2993 = vld [vmem:[%s13 + $0x520] sm:$0xff]
        %v2994 = vld [vmem:[%s13 + $0x528] sm:$0xff]
        %v2995 = vld [vmem:[%s13 + $0x530] sm:$0xff]
        %v2996 = vld [vmem:[%s13 + $0x538] sm:$0xff]
        %v2997 = vld [vmem:[%s13 + $0x540] sm:$0xff]
        %v2998 = vld [vmem:[%s13 + $0x548] sm:$0xff]
        %v2999 = vld [vmem:[%s13 + $0x550] sm:$0xff]
        %v3000 = vld [vmem:[%s13 + $0x558] sm:$0xff]
        %v3001 = vld [vmem:[%s13 + $0x560] sm:$0xff]
        %v3002 = vld [vmem:[%s13 + $0x568] sm:$0xff]
        %v3003 = vld [vmem:[%s13 + $0x570] sm:$0xff]
        %v3004 = vld [vmem:[%s13 + $0x578] sm:$0xff]
        %v3005 = vpack.c.bf16 %v2830, %v2829
        %v3006 = vpack.c.bf16 %v2832, %v2831
        %v3007 = vpack.c.bf16 %v2834, %v2833
        %v3008 = vpack.c.bf16 %v2836, %v2835
        %v3009 = vpack.c.bf16 %v2838, %v2837
        %v3010 = vpack.c.bf16 %v2840, %v2839
        %v3011 = vpack.c.bf16 %v2842, %v2841
        %v3012 = vpack.c.bf16 %v2844, %v2843
        %v3013 = vpack.c.bf16 %v2846, %v2845
        %v3014 = vpack.c.bf16 %v2848, %v2847
        %v3015 = vpack.c.bf16 %v2850, %v2849
        %v3016 = vpack.c.bf16 %v2852, %v2851
        %v3017 = vpack.c.bf16 %v2854, %v2853
        %v3018 = vpack.c.bf16 %v2856, %v2855
        %v3019 = vpack.c.bf16 %v2858, %v2857
        %v3020 = vpack.c.bf16 %v2860, %v2859
        %v3021 = vpack.c.bf16 %v2862, %v2861
        %v3022 = vpack.c.bf16 %v2864, %v2863
        %v3023 = vpack.c.bf16 %v2866, %v2865
        %v3024 = vpack.c.bf16 %v2868, %v2867
        %v3025 = vpack.c.bf16 %v2870, %v2869
        %v3026 = vpack.c.bf16 %v2872, %v2871
        %v3027 = vpack.c.bf16 %v2874, %v2873
        %v3028 = vpack.c.bf16 %v2876, %v2875
        %v3029 = vpack.c.bf16 %v2878, %v2877
        %v3030 = vpack.c.bf16 %v2880, %v2879
        %v3031 = vpack.c.bf16 %v2882, %v2881
        %v3032 = vpack.c.bf16 %v2884, %v2883
        %v3033 = vpack.c.bf16 %v2886, %v2885
        %v3034 = vpack.c.bf16 %v2888, %v2887
        %v3035 = vpack.c.bf16 %v2890, %v2889
        %v3036 = vpack.c.bf16 %v2892, %v2891
        %v3037 = vpack.c.bf16 %v2894, %v2893
        %v3038 = vpack.c.bf16 %v2896, %v2895
        %v3039 = vpack.c.bf16 %v2898, %v2897
        %v3040 = vpack.c.bf16 %v2900, %v2899
        %v3041 = vpack.c.bf16 %v2902, %v2901
        %v3042 = vpack.c.bf16 %v2904, %v2903
        %v3043 = vpack.c.bf16 %v2906, %v2905
        %v3044 = vpack.c.bf16 %v2908, %v2907
        %v3045 = vpack.c.bf16 %v2910, %v2909
        %v3046 = vpack.c.bf16 %v2912, %v2911
        %v3047 = vpack.c.bf16 %v2914, %v2913
        %v3048 = vpack.c.bf16 %v2916, %v2915
        %v3049 = vpack.c.bf16 %v2918, %v2917
        %v3050 = vpack.c.bf16 %v2920, %v2919
        %v3051 = vpack.c.bf16 %v2922, %v2921
        %v3052 = vpack.c.bf16 %v2924, %v2923
        %v3053 = vpack.c.bf16 %v2926, %v2925
        %v3054 = vpack.c.bf16 %v2928, %v2927
        %v3055 = vpack.c.bf16 %v2930, %v2929
        %v3056 = vpack.c.bf16 %v2932, %v2931
        %v3057 = vpack.c.bf16 %v2934, %v2933
        %v3058 = vpack.c.bf16 %v2936, %v2935
        %v3059 = vpack.c.bf16 %v2938, %v2937
        %v3060 = vpack.c.bf16 %v2940, %v2939
        %v3061 = vpack.c.bf16 %v2942, %v2941
        %v3062 = vpack.c.bf16 %v2944, %v2943
        %v3063 = vpack.c.bf16 %v2946, %v2945
        %v3064 = vpack.c.bf16 %v2948, %v2947
        %v3065 = vpack.c.bf16 %v2950, %v2949
        %v3066 = vpack.c.bf16 %v2952, %v2951
        %v3067 = vpack.c.bf16 %v2954, %v2953
        %v3068 = vpack.c.bf16 %v2956, %v2955
        %v3069 = vpack.c.bf16 %v2958, %v2957
        %v3070 = vpack.c.bf16 %v2960, %v2959
        %v3071 = vpack.c.bf16 %v2962, %v2961
        %v3072 = vpack.c.bf16 %v2964, %v2963
        %v3073 = vpack.c.bf16 %v2966, %v2965
        %v3074 = vpack.c.bf16 %v2968, %v2967
        %v3075 = vpack.c.bf16 %v2970, %v2969
        %v3076 = vpack.c.bf16 %v2972, %v2971
        %v3077 = vpack.c.bf16 %v2974, %v2973
        %v3078 = vpack.c.bf16 %v2976, %v2975
        %v3079 = vpack.c.bf16 %v2978, %v2977
        %v3080 = vpack.c.bf16 %v2980, %v2979
        %v3081 = vpack.c.bf16 %v2982, %v2981
        %v3082 = vpack.c.bf16 %v2984, %v2983
        %v3083 = vpack.c.bf16 %v2986, %v2985
        %v3084 = vpack.c.bf16 %v2988, %v2987
        %v3085 = vpack.c.bf16 %v2990, %v2989
        %v3086 = vpack.c.bf16 %v2992, %v2991
        %v3087 = vpack.c.bf16 %v2994, %v2993
        %v3088 = vpack.c.bf16 %v2996, %v2995
        %v3089 = vpack.c.bf16 %v2998, %v2997
        %v3090 = vpack.c.bf16 %v3000, %v2999
        %v3091 = vpack.c.bf16 %v3002, %v3001
        %v3092 = vpack.c.bf16 %v3004, %v3003
        %v3093 = vlaneseq
        %v3094 = vshrl.u32 %v3093, 7
        %v3095 = vsub.s32 0, %v3094
        %v3096 = vrot.slane %v2806, %v3095
        %3097 = vmatprep.subr.bf16.mxu0 0
        %3098 = vmatpush1.bf16.msra.mxu0 %v3005
        %3099 = vmatprep.subr.bf16.mxu0 0
        %3100 = vmatpush1.bf16.msra.mxu0 %v3006
        %3101 = vmatprep.subr.bf16.mxu0 0
        %3102 = vmatpush1.bf16.msra.mxu0 %v3007
        %3103 = vmatprep.subr.bf16.mxu0 0
        %3104 = vmatpush1.bf16.msra.mxu0 %v3008
        %3105 = vmatprep.subr.bf16.mxu0 0
        %3106 = vmatpush1.bf16.msra.mxu0 %v3009
        %3107 = vmatprep.subr.bf16.mxu0 0
        %3108 = vmatpush1.bf16.msra.mxu0 %v3010
        %3109 = vmatprep.subr.bf16.mxu0 0
        %3110 = vmatpush1.bf16.msra.mxu0 %v3011
        %3111 = vmatprep.subr.bf16.mxu0 0
        %3112 = vmatpush1.bf16.msra.mxu0 %v3012
        %3113 = vmatprep.subr.bf16.mxu0 0
        %3114 = vmatpush1.bf16.msra.mxu0 %v3013
        %3115 = vmatprep.subr.bf16.mxu0 0
        %3116 = vmatpush1.bf16.msra.mxu0 %v3014
        %3117 = vmatprep.subr.bf16.mxu0 0
        %3118 = vmatpush1.bf16.msra.mxu0 %v3015
        %3119 = vmatprep.subr.bf16.mxu0 0
        %3120 = vmatpush1.bf16.msra.mxu0 %v3016
        %3121 = vmatprep.subr.bf16.mxu0 0
        %3122 = vmatpush1.bf16.msra.mxu0 %v3017
        %3123 = vmatprep.subr.bf16.mxu0 0
        %3124 = vmatpush1.bf16.msra.mxu0 %v3018
        %3125 = vmatprep.subr.bf16.mxu0 0
        %3126 = vmatpush1.bf16.msra.mxu0 %v3019
        %3127 = vmatprep.subr.bf16.mxu0 0
        %3128 = vmatpush1.bf16.msra.mxu0 %v3020
        %3129 = vmatprep.mubr.bf16.mxu0 %v2808
        %3130 = vmatmul.mubr.bf16.gmra.mrb[0].mxu0 %v2807
        %v3131 = vpop.f32.mrb[0].mxu0
        %v3132 = vadd.f32 %v3096, %v3131
        %v3133 = vpop.f32.mrb[0].mxu0
        %v3134 = vpop.f32.mrb[0].mxu0
        %v3135 = vadd.f32 %v3096, %v3134
        %v3136 = vpop.f32.mrb[0].mxu0
        %3137 = vmatprep.mubr.bf16.mxu0 %v2819
        %3138 = vmatmul.mubr.bf16.gmra.mrb[0].mxu0 %v2818
        %v3139 = vpop.f32.mrb[0].mxu0
        %v3140 = vadd.f32 %v3096, %v3139
        %v3141 = vpop.f32.mrb[0].mxu0
        %v3142 = vpop.f32.mrb[0].mxu0
        %v3143 = vadd.f32 %v3096, %v3142
        %v3144 = vpop.f32.mrb[0].mxu0
        %3145 = vdwg.mxu0
        %3146 = vmatprep.subr.bf16.mxu0 0
        %3147 = vmatpush1.bf16.msra.mxu0 %v3021
        %3148 = vmatprep.subr.bf16.mxu0 0
        %3149 = vmatpush1.bf16.msra.mxu0 %v3022
        %3150 = vmatprep.subr.bf16.mxu0 0
        %3151 = vmatpush1.bf16.msra.mxu0 %v3023
        %3152 = vmatprep.subr.bf16.mxu0 0
        %3153 = vmatpush1.bf16.msra.mxu0 %v3024
        %3154 = vmatprep.subr.bf16.mxu0 0
        %3155 = vmatpush1.bf16.msra.mxu0 %v3025
        %3156 = vmatprep.subr.bf16.mxu0 0
        %3157 = vmatpush1.bf16.msra.mxu0 %v3026
        %3158 = vmatprep.subr.bf16.mxu0 0
        %3159 = vmatpush1.bf16.msra.mxu0 %v3027
        %3160 = vmatprep.subr.bf16.mxu0 0
        %3161 = vmatpush1.bf16.msra.mxu0 %v3028
        %3162 = vmatprep.subr.bf16.mxu0 0
        %3163 = vmatpush1.bf16.msra.mxu0 %v3029
        %3164 = vmatprep.subr.bf16.mxu0 0
        %3165 = vmatpush1.bf16.msra.mxu0 %v3030
        %3166 = vmatprep.subr.bf16.mxu0 0
        %3167 = vmatpush1.bf16.msra.mxu0 %v3031
        %3168 = vmatprep.subr.bf16.mxu0 0
        %3169 = vmatpush1.bf16.msra.mxu0 %v3032
        %3170 = vmatprep.subr.bf16.mxu0 0
        %3171 = vmatpush1.bf16.msra.mxu0 %v3033
        %3172 = vmatprep.subr.bf16.mxu0 0
        %3173 = vmatpush1.bf16.msra.mxu0 %v3034
        %3174 = vmatprep.subr.bf16.mxu0 0
        %3175 = vmatpush1.bf16.msra.mxu0 %v3035
        %3176 = vmatprep.subr.bf16.mxu0 0
        %3177 = vmatpush1.bf16.msra.mxu0 %v3036
        %3178 = vmatprep.mubr.bf16.mxu0 %v2810
        %3179 = vmatmul.mubr.bf16.gmra.mrb[0].mxu0 %v2809
        %v3180 = vpop.f32.mrb[0].mxu0
        %v3181 = vadd.f32 %v3132, %v3180
        %v3182 = vpop.f32.mrb[0].mxu0
        %v3183 = vpop.f32.mrb[0].mxu0
        %v3184 = vadd.f32 %v3135, %v3183
        %v3185 = vpop.f32.mrb[0].mxu0
        %3186 = vmatprep.mubr.bf16.mxu0 %v2821
        %3187 = vmatmul.mubr.bf16.gmra.mrb[0].mxu0 %v2820
        %v3188 = vpop.f32.mrb[0].mxu0
        %v3189 = vadd.f32 %v3140, %v3188
        %v3190 = vpop.f32.mrb[0].mxu0
        %v3191 = vpop.f32.mrb[0].mxu0
        %v3192 = vadd.f32 %v3143, %v3191
        %v3193 = vpop.f32.mrb[0].mxu0
        %3194 = vdwg.mxu0
        %3195 = vmatprep.subr.bf16.mxu0 0
        %3196 = vmatpush1.bf16.msra.mxu0 %v3037
        %3197 = vmatprep.subr.bf16.mxu0 0
        %3198 = vmatpush1.bf16.msra.mxu0 %v3038
        %3199 = vmatprep.subr.bf16.mxu0 0
        %3200 = vmatpush1.bf16.msra.mxu0 %v3039
        %3201 = vmatprep.subr.bf16.mxu0 0
        %3202 = vmatpush1.bf16.msra.mxu0 %v3040
        %3203 = vmatprep.subr.bf16.mxu0 0
        %3204 = vmatpush1.bf16.msra.mxu0 %v3041
        %3205 = vmatprep.subr.bf16.mxu0 0
        %3206 = vmatpush1.bf16.msra.mxu0 %v3042
        %3207 = vmatprep.subr.bf16.mxu0 0
        %3208 = vmatpush1.bf16.msra.mxu0 %v3043
        %3209 = vmatprep.subr.bf16.mxu0 0
        %3210 = vmatpush1.bf16.msra.mxu0 %v3044
        %3211 = vmatprep.subr.bf16.mxu0 0
        %3212 = vmatpush1.bf16.msra.mxu0 %v3045
        %3213 = vmatprep.subr.bf16.mxu0 0
        %3214 = vmatpush1.bf16.msra.mxu0 %v3046
        %3215 = vmatprep.subr.bf16.mxu0 0
        %3216 = vmatpush1.bf16.msra.mxu0 %v3047
        %3217 = vmatprep.subr.bf16.mxu0 0
        %3218 = vmatpush1.bf16.msra.mxu0 %v3048
        %3219 = vmatprep.subr.bf16.mxu0 0
        %3220 = vmatpush1.bf16.msra.mxu0 %v3049
        %3221 = vmatprep.subr.bf16.mxu0 0
        %3222 = vmatpush1.bf16.msra.mxu0 %v3050
        %3223 = vmatprep.subr.bf16.mxu0 0
        %3224 = vmatpush1.bf16.msra.mxu0 %v3051
        %3225 = vmatprep.subr.bf16.mxu0 0
        %3226 = vmatpush1.bf16.msra.mxu0 %v3052
        %3227 = vmatprep.mubr.bf16.mxu0 %v2812
        %3228 = vmatmul.mubr.bf16.gmra.mrb[0].mxu0 %v2811
        %v3229 = vpop.f32.mrb[0].mxu0
        %v3230 = vadd.f32 %v3181, %v3229
        %v3231 = vpop.f32.mrb[0].mxu0
        %v3232 = vpop.f32.mrb[0].mxu0
        %v3233 = vadd.f32 %v3184, %v3232
        %v3234 = vpop.f32.mrb[0].mxu0
        %3235 = vmatprep.mubr.bf16.mxu0 %v2823
        %3236 = vmatmul.mubr.bf16.gmra.mrb[0].mxu0 %v2822
        %v3237 = vpop.f32.mrb[0].mxu0
        %v3238 = vadd.f32 %v3189, %v3237
        %v3239 = vpop.f32.mrb[0].mxu0
        %v3240 = vpop.f32.mrb[0].mxu0
        %v3241 = vadd.f32 %v3192, %v3240
        %v3242 = vpop.f32.mrb[0].mxu0
        %3243 = vdwg.mxu0
        %3244 = vmatprep.subr.bf16.mxu0 0
        %3245 = vmatpush1.bf16.msra.mxu0 %v3053
        %3246 = vmatprep.subr.bf16.mxu0 0
        %3247 = vmatpush1.bf16.msra.mxu0 %v3054
        %3248 = vmatprep.subr.bf16.mxu0 0
        %3249 = vmatpush1.bf16.msra.mxu0 %v3055
        %3250 = vmatprep.subr.bf16.mxu0 0
        %3251 = vmatpush1.bf16.msra.mxu0 %v3056
        %3252 = vmatprep.subr.bf16.mxu0 0
        %3253 = vmatpush1.bf16.msra.mxu0 %v3057
        %3254 = vmatprep.subr.bf16.mxu0 0
        %3255 = vmatpush1.bf16.msra.mxu0 %v3058
        %3256 = vmatprep.subr.bf16.mxu0 0
        %3257 = vmatpush1.bf16.msra.mxu0 %v3059
        %3258 = vmatprep.subr.bf16.mxu0 0
        %3259 = vmatpush1.bf16.msra.mxu0 %v3060
        %3260 = vmatprep.subr.bf16.mxu0 0
        %3261 = vmatpush1.bf16.msra.mxu0 %v3061
        %3262 = vmatprep.subr.bf16.mxu0 0
        %3263 = vmatpush1.bf16.msra.mxu0 %v3062
        %3264 = vmatprep.subr.bf16.mxu0 0
        %3265 = vmatpush1.bf16.msra.mxu0 %v3063
        %3266 = vmatprep.subr.bf16.mxu0 0
        %3267 = vmatpush1.bf16.msra.mxu0 %v3064
        %3268 = vmatprep.subr.bf16.mxu0 0
        %3269 = vmatpush1.bf16.msra.mxu0 %v3065
        %3270 = vmatprep.subr.bf16.mxu0 0
        %3271 = vmatpush1.bf16.msra.mxu0 %v3066
        %3272 = vmatprep.subr.bf16.mxu0 0
        %3273 = vmatpush1.bf16.msra.mxu0 %v3067
        %3274 = vmatprep.subr.bf16.mxu0 0
        %3275 = vmatpush1.bf16.msra.mxu0 %v3068
        %3276 = vmatprep.mubr.bf16.mxu0 %v2814
        %3277 = vmatmul.mubr.bf16.gmra.mrb[0].mxu0 %v2813
        %v3278 = vpop.f32.mrb[0].mxu0
        %v3279 = vadd.f32 %v3230, %v3278
        %v3280 = vpop.f32.mrb[0].mxu0
        %v3281 = vpop.f32.mrb[0].mxu0
        %v3282 = vadd.f32 %v3233, %v3281
        %v3283 = vpop.f32.mrb[0].mxu0
        %3284 = vmatprep.mubr.bf16.mxu0 %v2825
        %3285 = vmatmul.mubr.bf16.gmra.mrb[0].mxu0 %v2824
        %v3286 = vpop.f32.mrb[0].mxu0
        %v3287 = vadd.f32 %v3238, %v3286
        %v3288 = vpop.f32.mrb[0].mxu0
        %v3289 = vpop.f32.mrb[0].mxu0
        %v3290 = vadd.f32 %v3241, %v3289
        %v3291 = vpop.f32.mrb[0].mxu0
        %3292 = vdwg.mxu0
        %3293 = vmatprep.subr.bf16.mxu0 0
        %3294 = vmatpush1.bf16.msra.mxu0 %v3069
        %3295 = vmatprep.subr.bf16.mxu0 0
        %3296 = vmatpush1.bf16.msra.mxu0 %v3070
        %3297 = vmatprep.subr.bf16.mxu0 0
        %3298 = vmatpush1.bf16.msra.mxu0 %v3071
        %3299 = vmatprep.subr.bf16.mxu0 0
        %3300 = vmatpush1.bf16.msra.mxu0 %v3072
        %3301 = vmatprep.subr.bf16.mxu0 0
        %3302 = vmatpush1.bf16.msra.mxu0 %v3073
        %3303 = vmatprep.subr.bf16.mxu0 0
        %3304 = vmatpush1.bf16.msra.mxu0 %v3074
        %3305 = vmatprep.subr.bf16.mxu0 0
        %3306 = vmatpush1.bf16.msra.mxu0 %v3075
        %3307 = vmatprep.subr.bf16.mxu0 0
        %3308 = vmatpush1.bf16.msra.mxu0 %v3076
        %3309 = vmatprep.subr.bf16.mxu0 0
        %3310 = vmatpush1.bf16.msra.mxu0 %v3077
        %3311 = vmatprep.subr.bf16.mxu0 0
        %3312 = vmatpush1.bf16.msra.mxu0 %v3078
        %3313 = vmatprep.subr.bf16.mxu0 0
        %3314 = vmatpush1.bf16.msra.mxu0 %v3079
        %3315 = vmatprep.subr.bf16.mxu0 0
        %3316 = vmatpush1.bf16.msra.mxu0 %v3080
        %3317 = vmatprep.subr.bf16.mxu0 0
        %3318 = vmatpush1.bf16.msra.mxu0 %v3081
        %3319 = vmatprep.subr.bf16.mxu0 0
        %3320 = vmatpush1.bf16.msra.mxu0 %v3082
        %3321 = vmatprep.subr.bf16.mxu0 0
        %3322 = vmatpush1.bf16.msra.mxu0 %v3083
        %3323 = vmatprep.subr.bf16.mxu0 0
        %3324 = vmatpush1.bf16.msra.mxu0 %v3084
        %3325 = vmatprep.mubr.bf16.mxu0 %v2816
        %3326 = vmatmul.mubr.bf16.gmra.mrb[0].mxu0 %v2815
        %v3327 = vpop.f32.mrb[0].mxu0
        %v3328 = vadd.f32 %v3279, %v3327
        %v3329 = vpop.f32.mrb[0].mxu0
        %v3330 = vpop.f32.mrb[0].mxu0
        %v3331 = vadd.f32 %v3282, %v3330
        %v3332 = vpop.f32.mrb[0].mxu0
        %3333 = vmatprep.mubr.bf16.mxu0 %v2827
        %3334 = vmatmul.mubr.bf16.gmra.mrb[0].mxu0 %v2826
        %v3335 = vpop.f32.mrb[0].mxu0
        %v3336 = vadd.f32 %v3287, %v3335
        %v3337 = vpop.f32.mrb[0].mxu0
        %v3338 = vpop.f32.mrb[0].mxu0
        %v3339 = vadd.f32 %v3290, %v3338
        %v3340 = vpop.f32.mrb[0].mxu0
        %3341 = vdwg.mxu0
        %3342 = vmatprep.subr.bf16.mxu0 0
        %3343 = vmatpush1.bf16.msra.mxu0 %v3085
        %3344 = vmatprep.subr.bf16.mxu0 0
        %3345 = vmatpush1.bf16.msra.mxu0 %v3086
        %3346 = vmatprep.subr.bf16.mxu0 0
        %3347 = vmatpush1.bf16.msra.mxu0 %v3087
        %3348 = vmatprep.subr.bf16.mxu0 0
        %3349 = vmatpush1.bf16.msra.mxu0 %v3088
        %3350 = vmatprep.subr.bf16.mxu0 0
        %3351 = vmatpush1.bf16.msra.mxu0 %v3089
        %3352 = vmatprep.subr.bf16.mxu0 0
        %3353 = vmatpush1.bf16.msra.mxu0 %v3090
        %3354 = vmatprep.subr.bf16.mxu0 0
        %3355 = vmatpush1.bf16.msra.mxu0 %v3091
        %3356 = vmatprep.subr.bf16.mxu0 0
        %3357 = vmatpush1.bf16.msra.mxu0 %v3092
        %3358 = vmatprep.subr.bf16.mxu0 0
        %3359 = vmatpush1.bf16.msra.mxu0 0
        %3360 = vmatprep.subr.bf16.mxu0 0
        %3361 = vmatpush1.bf16.msra.mxu0 0
        %3362 = vmatprep.subr.bf16.mxu0 0
        %3363 = vmatpush1.bf16.msra.mxu0 0
        %3364 = vmatprep.subr.bf16.mxu0 0
        %3365 = vmatpush1.bf16.msra.mxu0 0
        %3366 = vmatprep.subr.bf16.mxu0 0
        %3367 = vmatpush1.bf16.msra.mxu0 0
        %3368 = vmatprep.subr.bf16.mxu0 0
        %3369 = vmatpush1.bf16.msra.mxu0 0
        %3370 = vmatprep.subr.bf16.mxu0 0
        %3371 = vmatpush1.bf16.msra.mxu0 0
        %3372 = vmatprep.subr.bf16.mxu0 0
        %3373 = vmatpush1.bf16.msra.mxu0 0
        %3374 = vmatprep.mubr.bf16.mxu0 0
        %3375 = vmatmul.mubr.bf16.gmra.mrb[0].mxu0 %v2817
        %v3376 = vpop.f32.mrb[0].mxu0
        %v3377 = vadd.f32 %v3328, %v3376
        %v3378 = vpop.f32.mrb[0].mxu0
        %v3379 = vpop.f32.mrb[0].mxu0
        %v3380 = vadd.f32 %v3331, %v3379
        %v3381 = vpop.f32.mrb[0].mxu0
        %3382 = vmatprep.mubr.bf16.mxu0 0
        %3383 = vmatmul.mubr.bf16.gmra.mrb[0].mxu0 %v2828
        %v3384 = vpop.f32.mrb[0].mxu0
        %v3385 = vadd.f32 %v3336, %v3384
        %v3386 = vpop.f32.mrb[0].mxu0
        %v3387 = vpop.f32.mrb[0].mxu0
        %v3388 = vadd.f32 %v3339, %v3387
        %v3389 = vpop.f32.mrb[0].mxu0
        %3390 = vdwg.mxu0
        %v3391 = vmul.f32 %v2802, 0.35355338
        %v3392 = vmul.f32 %v2803, 0.35355338
        %v3393 = vmul.f32 %v2804, 0.35355338
        %v3394 = vmul.f32 %v2805, 0.35355338
        %v3395 = vmul.f32 %v3391, %v1587
        %v3396 = vmul.f32 %v3392, %v1587
        %v3397 = vmul.f32 %v3391, %v1591
        %v3398 = vmul.f32 %v3392, %v1591
        %v3399 = vmul.f32 %v3391, %v1595
        %v3400 = vmul.f32 %v3392, %v1595
        %v3401 = vmul.f32 %v3391, %v1599
        %v3402 = vmul.f32 %v3392, %v1599
        %v3403 = vmul.f32 %v3393, %v1587
        %v3404 = vmul.f32 %v3394, %v1587
        %v3405 = vmul.f32 %v3393, %v1591
        %v3406 = vmul.f32 %v3394, %v1591
        %v3407 = vmul.f32 %v3393, %v1595
        %v3408 = vmul.f32 %v3394, %v1595
        %v3409 = vmul.f32 %v3393, %v1599
        %v3410 = vmul.f32 %v3394, %v1599
        %v3411 = vpack.c.bf16 %v3396, %v3395
        %v3412 = vpack.c.bf16 %v3398, %v3397
        %v3413 = vpack.c.bf16 %v3400, %v3399
        %v3414 = vpack.c.bf16 %v3402, %v3401
        %v3415 = vpack.c.bf16 %v3404, %v3403
        %v3416 = vpack.c.bf16 %v3406, %v3405
        %v3417 = vpack.c.bf16 %v3408, %v3407
        %v3418 = vpack.c.bf16 %v3410, %v3409
        %v3419 = vpack.c.bf16 %v3380, %v3377
        %v3420 = vpack.c.bf16 %v3388, %v3385
        %v3422 = vsel %vm1029, %v3411, 0
        %v3425 = vsel %vm1029, %v3412, 0
        %v3428 = vsel %vm1029, %v3413, 0
        %v3431 = vsel %vm1029, %v3414, 0
        %v3434 = vsel %vm1029, %v3419, 0
        %3436 = vmatprep.subr.bf16.mxu0 0
        %3437 = vmatpush1.bf16.xpose.msra.mxu0 %v3434
        %3438 = vmatprep.subr.bf16.mxu0 0
        %3439 = vmatpush1.bf16.xpose.msra.mxu0 0
        %3440 = vmatprep.subr.bf16.mxu0 0
        %3441 = vmatpush1.bf16.xpose.msra.mxu0 0
        %3442 = vmatprep.subr.bf16.mxu0 0
        %3443 = vmatpush1.bf16.xpose.msra.mxu0 0
        %3444 = vmatprep.subr.bf16.mxu0 0
        %3445 = vmatpush1.bf16.xpose.msra.mxu0 0
        %3446 = vmatprep.subr.bf16.mxu0 0
        %3447 = vmatpush1.bf16.xpose.msra.mxu0 0
        %3448 = vmatprep.subr.bf16.mxu0 0
        %3449 = vmatpush1.bf16.xpose.msra.mxu0 0
        %3450 = vmatprep.subr.bf16.mxu0 0
        %3451 = vmatpush1.bf16.xpose.msra.mxu0 0
        %3452 = vmatprep.subr.bf16.mxu0 0
        %3453 = vmatpush1.bf16.xpose.msra.mxu0 0
        %3454 = vmatprep.subr.bf16.mxu0 0
        %3455 = vmatpush1.bf16.xpose.msra.mxu0 0
        %3456 = vmatprep.subr.bf16.mxu0 0
        %3457 = vmatpush1.bf16.xpose.msra.mxu0 0
        %3458 = vmatprep.subr.bf16.mxu0 0
        %3459 = vmatpush1.bf16.xpose.msra.mxu0 0
        %3460 = vmatprep.subr.bf16.mxu0 0
        %3461 = vmatpush1.bf16.xpose.msra.mxu0 0
        %3462 = vmatprep.subr.bf16.mxu0 0
        %3463 = vmatpush1.bf16.xpose.msra.mxu0 0
        %3464 = vmatprep.subr.bf16.mxu0 0
        %3465 = vmatpush1.bf16.xpose.msra.mxu0 0
        %3466 = vmatprep.subr.bf16.mxu0 0
        %3467 = vmatpush1.bf16.xpose.msra.mxu0 0
        %3468 = vmatprep.mubr.bf16.mxu0 0
        %3469 = vmatmul.mubr.bf16.gmra.mrb[0].mxu0 %v3422
        %v3470 = vpop.f32.mrb[0].mxu0
        %v3471 = vadd.f32 0.0, %v3470
        %v3472 = vpop.f32.mrb[0].mxu0
        %v3473 = vpop.f32.mrb[0].mxu0
        %v3474 = vadd.f32 0.0, %v3473
        %v3475 = vpop.f32.mrb[0].mxu0
        %3476 = vmatprep.mubr.bf16.mxu0 0
        %3477 = vmatmul.mubr.bf16.gmra.mrb[0].mxu0 %v3425
        %v3478 = vpop.f32.mrb[0].mxu0
        %v3479 = vadd.f32 0.0, %v3478
        %v3480 = vpop.f32.mrb[0].mxu0
        %v3481 = vpop.f32.mrb[0].mxu0
        %v3482 = vadd.f32 0.0, %v3481
        %v3483 = vpop.f32.mrb[0].mxu0
        %3484 = vmatprep.mubr.bf16.mxu0 0
        %3485 = vmatmul.mubr.bf16.gmra.mrb[0].mxu0 %v3428
        %v3486 = vpop.f32.mrb[0].mxu0
        %v3487 = vadd.f32 0.0, %v3486
        %v3488 = vpop.f32.mrb[0].mxu0
        %v3489 = vpop.f32.mrb[0].mxu0
        %v3490 = vadd.f32 0.0, %v3489
        %v3491 = vpop.f32.mrb[0].mxu0
        %3492 = vmatprep.mubr.bf16.mxu0 0
        %3493 = vmatmul.mubr.bf16.gmra.mrb[0].mxu0 %v3431
        %v3494 = vpop.f32.mrb[0].mxu0
        %v3495 = vadd.f32 0.0, %v3494
        %v3496 = vpop.f32.mrb[0].mxu0
        %v3497 = vpop.f32.mrb[0].mxu0
        %v3498 = vadd.f32 0.0, %v3497
        %v3499 = vpop.f32.mrb[0].mxu0
        %3500 = vdwg.mxu0
        %v3502 = vsel %vm1029, %v3415, 0
        %v3505 = vsel %vm1029, %v3416, 0
        %v3508 = vsel %vm1029, %v3417, 0
        %v3511 = vsel %vm1029, %v3418, 0
        %v3514 = vsel %vm1029, %v3420, 0
        %3516 = vmatprep.subr.bf16.mxu0 0
        %3517 = vmatpush1.bf16.xpose.msra.mxu0 %v3514
        %3518 = vmatprep.subr.bf16.mxu0 0
        %3519 = vmatpush1.bf16.xpose.msra.mxu0 0
        %3520 = vmatprep.subr.bf16.mxu0 0
        %3521 = vmatpush1.bf16.xpose.msra.mxu0 0
        %3522 = vmatprep.subr.bf16.mxu0 0
        %3523 = vmatpush1.bf16.xpose.msra.mxu0 0
        %3524 = vmatprep.subr.bf16.mxu0 0
        %3525 = vmatpush1.bf16.xpose.msra.mxu0 0
        %3526 = vmatprep.subr.bf16.mxu0 0
        %3527 = vmatpush1.bf16.xpose.msra.mxu0 0
        %3528 = vmatprep.subr.bf16.mxu0 0
        %3529 = vmatpush1.bf16.xpose.msra.mxu0 0
        %3530 = vmatprep.subr.bf16.mxu0 0
        %3531 = vmatpush1.bf16.xpose.msra.mxu0 0
        %3532 = vmatprep.subr.bf16.mxu0 0
        %3533 = vmatpush1.bf16.xpose.msra.mxu0 0
        %3534 = vmatprep.subr.bf16.mxu0 0
        %3535 = vmatpush1.bf16.xpose.msra.mxu0 0
        %3536 = vmatprep.subr.bf16.mxu0 0
        %3537 = vmatpush1.bf16.xpose.msra.mxu0 0
        %3538 = vmatprep.subr.bf16.mxu0 0
        %3539 = vmatpush1.bf16.xpose.msra.mxu0 0
        %3540 = vmatprep.subr.bf16.mxu0 0
        %3541 = vmatpush1.bf16.xpose.msra.mxu0 0
        %3542 = vmatprep.subr.bf16.mxu0 0
        %3543 = vmatpush1.bf16.xpose.msra.mxu0 0
        %3544 = vmatprep.subr.bf16.mxu0 0
        %3545 = vmatpush1.bf16.xpose.msra.mxu0 0
        %3546 = vmatprep.subr.bf16.mxu0 0
        %3547 = vmatpush1.bf16.xpose.msra.mxu0 0
        %3548 = vmatprep.mubr.bf16.mxu0 0
        %3549 = vmatmul.mubr.bf16.gmra.mrb[0].mxu0 %v3502
        %v3550 = vpop.f32.mrb[0].mxu0
        %v3551 = vadd.f32 0.0, %v3550
        %v3552 = vpop.f32.mrb[0].mxu0
        %v3553 = vpop.f32.mrb[0].mxu0
        %v3554 = vadd.f32 0.0, %v3553
        %v3555 = vpop.f32.mrb[0].mxu0
        %3556 = vmatprep.mubr.bf16.mxu0 0
        %3557 = vmatmul.mubr.bf16.gmra.mrb[0].mxu0 %v3505
        %v3558 = vpop.f32.mrb[0].mxu0
        %v3559 = vadd.f32 0.0, %v3558
        %v3560 = vpop.f32.mrb[0].mxu0
        %v3561 = vpop.f32.mrb[0].mxu0
        %v3562 = vadd.f32 0.0, %v3561
        %v3563 = vpop.f32.mrb[0].mxu0
        %3564 = vmatprep.mubr.bf16.mxu0 0
        %3565 = vmatmul.mubr.bf16.gmra.mrb[0].mxu0 %v3508
        %v3566 = vpop.f32.mrb[0].mxu0
        %v3567 = vadd.f32 0.0, %v3566
        %v3568 = vpop.f32.mrb[0].mxu0
        %v3569 = vpop.f32.mrb[0].mxu0
        %v3570 = vadd.f32 0.0, %v3569
        %v3571 = vpop.f32.mrb[0].mxu0
        %3572 = vmatprep.mubr.bf16.mxu0 0
        %3573 = vmatmul.mubr.bf16.gmra.mrb[0].mxu0 %v3511
        %v3574 = vpop.f32.mrb[0].mxu0
        %v3575 = vadd.f32 0.0, %v3574
        %v3576 = vpop.f32.mrb[0].mxu0
        %v3577 = vpop.f32.mrb[0].mxu0
        %v3578 = vadd.f32 0.0, %v3577
        %v3579 = vpop.f32.mrb[0].mxu0
        %3580 = vdwg.mxu0
        %v3581 = vsel %vm1790, %v3471, -inf
        %3582 = vmax.xlane.f32.xlu0 %v3581
        %v3583 = vpop.xlane.xlu0 %3582
        %v3584 = vsel %vm1790, %v3474, -inf
        %3585 = vmax.xlane.f32.xlu0 %v3584
        %v3586 = vpop.xlane.xlu0 %3585
        %v3587 = vsel %vm1790, %v3479, -inf
        %3588 = vmax.xlane.f32.xlu0 %v3587
        %v3589 = vpop.xlane.xlu0 %3588
        %v3590 = vsel %vm1790, %v3482, -inf
        %3591 = vmax.xlane.f32.xlu0 %v3590
        %v3592 = vpop.xlane.xlu0 %3591
        %v3593 = vsel %vm1790, %v3487, -inf
        %3594 = vmax.xlane.f32.xlu0 %v3593
        %v3595 = vpop.xlane.xlu0 %3594
        %v3596 = vsel %vm1790, %v3490, -inf
        %3597 = vmax.xlane.f32.xlu0 %v3596
        %v3598 = vpop.xlane.xlu0 %3597
        %v3599 = vsel %vm1790, %v3495, -inf
        %3600 = vmax.xlane.f32.xlu0 %v3599
        %v3601 = vpop.xlane.xlu0 %3600
        %v3602 = vsel %vm1790, %v3498, -inf
        %3603 = vmax.xlane.f32.xlu0 %v3602
        %v3604 = vpop.xlane.xlu0 %3603
        %v3605 = vsel %vm1790, %v3551, -inf
        %3606 = vmax.xlane.f32.xlu0 %v3605
        %v3607 = vpop.xlane.xlu0 %3606
        %v3608 = vsel %vm1790, %v3554, -inf
        %3609 = vmax.xlane.f32.xlu0 %v3608
        %v3610 = vpop.xlane.xlu0 %3609
        %v3611 = vsel %vm1790, %v3559, -inf
        %3612 = vmax.xlane.f32.xlu0 %v3611
        %v3613 = vpop.xlane.xlu0 %3612
        %v3614 = vsel %vm1790, %v3562, -inf
        %3615 = vmax.xlane.f32.xlu0 %v3614
        %v3616 = vpop.xlane.xlu0 %3615
        %v3617 = vsel %vm1790, %v3567, -inf
        %3618 = vmax.xlane.f32.xlu0 %v3617
        %v3619 = vpop.xlane.xlu0 %3618
        %v3620 = vsel %vm1790, %v3570, -inf
        %3621 = vmax.xlane.f32.xlu0 %v3620
        %v3622 = vpop.xlane.xlu0 %3621
        %v3623 = vsel %vm1790, %v3575, -inf
        %3624 = vmax.xlane.f32.xlu0 %v3623
        %v3625 = vpop.xlane.xlu0 %3624
        %v3626 = vsel %vm1790, %v3578, -inf
        %3627 = vmax.xlane.f32.xlu0 %v3626
        %v3628 = vpop.xlane.xlu0 %3627
        %v3629 = vsub.f32 %v3471, %v3583
        %v3630 = vsub.f32 %v3474, %v3586
        %v3631 = vsub.f32 %v3479, %v3589
        %v3632 = vsub.f32 %v3482, %v3592
        %v3633 = vsub.f32 %v3487, %v3595
        %v3634 = vsub.f32 %v3490, %v3598
        %v3635 = vsub.f32 %v3495, %v3601
        %v3636 = vsub.f32 %v3498, %v3604
        %v3637 = vsub.f32 %v3551, %v3607
        %v3638 = vsub.f32 %v3554, %v3610
        %v3639 = vsub.f32 %v3559, %v3613
        %v3640 = vsub.f32 %v3562, %v3616
        %v3641 = vsub.f32 %v3567, %v3619
        %v3642 = vsub.f32 %v3570, %v3622
        %v3643 = vsub.f32 %v3575, %v3625
        %v3644 = vsub.f32 %v3578, %v3628
        %v3645 = vmul.f32 %v3629, 1.442695
        %v3646 = vpow.pop %v3645
        %v3647 = vmul.f32 %v3630, 1.442695
        %v3648 = vpow.pop %v3647
        %v3649 = vmul.f32 %v3631, 1.442695
        %v3650 = vpow.pop %v3649
        %v3651 = vmul.f32 %v3632, 1.442695
        %v3652 = vpow.pop %v3651
        %v3653 = vmul.f32 %v3633, 1.442695
        %v3654 = vpow.pop %v3653
        %v3655 = vmul.f32 %v3634, 1.442695
        %v3656 = vpow.pop %v3655
        %v3657 = vmul.f32 %v3635, 1.442695
        %v3658 = vpow.pop %v3657
        %v3659 = vmul.f32 %v3636, 1.442695
        %v3660 = vpow.pop %v3659
        %v3661 = vmul.f32 %v3637, 1.442695
        %v3662 = vpow.pop %v3661
        %v3663 = vmul.f32 %v3638, 1.442695
        %v3664 = vpow.pop %v3663
        %v3665 = vmul.f32 %v3639, 1.442695
        %v3666 = vpow.pop %v3665
        %v3667 = vmul.f32 %v3640, 1.442695
        %v3668 = vpow.pop %v3667
        %v3669 = vmul.f32 %v3641, 1.442695
        %v3670 = vpow.pop %v3669
        %v3671 = vmul.f32 %v3642, 1.442695
        %v3672 = vpow.pop %v3671
        %v3673 = vmul.f32 %v3643, 1.442695
        %v3674 = vpow.pop %v3673
        %v3675 = vmul.f32 %v3644, 1.442695
        %v3676 = vpow.pop %v3675
        %v3677 = vsel %vm1790, %v3646, 0.0
        %3678 = vadd.xlane.f32.xlu0 %v3677
        %v3679 = vpop.xlane.xlu0 %3678
        %v3680 = vsel %vm1790, %v3648, 0.0
        %3681 = vadd.xlane.f32.xlu0 %v3680
        %v3682 = vpop.xlane.xlu0 %3681
        %v3683 = vsel %vm1790, %v3650, 0.0
        %3684 = vadd.xlane.f32.xlu0 %v3683
        %v3685 = vpop.xlane.xlu0 %3684
        %v3686 = vsel %vm1790, %v3652, 0.0
        %3687 = vadd.xlane.f32.xlu0 %v3686
        %v3688 = vpop.xlane.xlu0 %3687
        %v3689 = vsel %vm1790, %v3654, 0.0
        %3690 = vadd.xlane.f32.xlu0 %v3689
        %v3691 = vpop.xlane.xlu0 %3690
        %v3692 = vsel %vm1790, %v3656, 0.0
        %3693 = vadd.xlane.f32.xlu0 %v3692
        %v3694 = vpop.xlane.xlu0 %3693
        %v3695 = vsel %vm1790, %v3658, 0.0
        %3696 = vadd.xlane.f32.xlu0 %v3695
        %v3697 = vpop.xlane.xlu0 %3696
        %v3698 = vsel %vm1790, %v3660, 0.0
        %3699 = vadd.xlane.f32.xlu0 %v3698
        %v3700 = vpop.xlane.xlu0 %3699
        %v3701 = vsel %vm1790, %v3662, 0.0
        %3702 = vadd.xlane.f32.xlu0 %v3701
        %v3703 = vpop.xlane.xlu0 %3702
        %v3704 = vsel %vm1790, %v3664, 0.0
        %3705 = vadd.xlane.f32.xlu0 %v3704
        %v3706 = vpop.xlane.xlu0 %3705
        %v3707 = vsel %vm1790, %v3666, 0.0
        %3708 = vadd.xlane.f32.xlu0 %v3707
        %v3709 = vpop.xlane.xlu0 %3708
        %v3710 = vsel %vm1790, %v3668, 0.0
        %3711 = vadd.xlane.f32.xlu0 %v3710
        %v3712 = vpop.xlane.xlu0 %3711
        %v3713 = vsel %vm1790, %v3670, 0.0
        %3714 = vadd.xlane.f32.xlu0 %v3713
        %v3715 = vpop.xlane.xlu0 %3714
        %v3716 = vsel %vm1790, %v3672, 0.0
        %3717 = vadd.xlane.f32.xlu0 %v3716
        %v3718 = vpop.xlane.xlu0 %3717
        %v3719 = vsel %vm1790, %v3674, 0.0
        %3720 = vadd.xlane.f32.xlu0 %v3719
        %v3721 = vpop.xlane.xlu0 %3720
        %v3722 = vsel %vm1790, %v3676, 0.0
        %3723 = vadd.xlane.f32.xlu0 %v3722
        %v3724 = vpop.xlane.xlu0 %3723
        %v3725 = vrcp.pop %v3679
        %v3726 = vmul.f32 %v3646, %v3725
        %v3727 = vrcp.pop %v3682
        %v3728 = vmul.f32 %v3648, %v3727
        %v3729 = vrcp.pop %v3685
        %v3730 = vmul.f32 %v3650, %v3729
        %v3731 = vrcp.pop %v3688
        %v3732 = vmul.f32 %v3652, %v3731
        %v3733 = vrcp.pop %v3691
        %v3734 = vmul.f32 %v3654, %v3733
        %v3735 = vrcp.pop %v3694
        %v3736 = vmul.f32 %v3656, %v3735
        %v3737 = vrcp.pop %v3697
        %v3738 = vmul.f32 %v3658, %v3737
        %v3739 = vrcp.pop %v3700
        %v3740 = vmul.f32 %v3660, %v3739
        %v3741 = vrcp.pop %v3703
        %v3742 = vmul.f32 %v3662, %v3741
        %v3743 = vrcp.pop %v3706
        %v3744 = vmul.f32 %v3664, %v3743
        %v3745 = vrcp.pop %v3709
        %v3746 = vmul.f32 %v3666, %v3745
        %v3747 = vrcp.pop %v3712
        %v3748 = vmul.f32 %v3668, %v3747
        %v3749 = vrcp.pop %v3715
        %v3750 = vmul.f32 %v3670, %v3749
        %v3751 = vrcp.pop %v3718
        %v3752 = vmul.f32 %v3672, %v3751
        %v3753 = vrcp.pop %v3721
        %v3754 = vmul.f32 %v3674, %v3753
        %v3755 = vrcp.pop %v3724
        %v3756 = vmul.f32 %v3676, %v3755
        %v3757 = vpack.c.bf16 %v3728, %v3726
        %v3758 = vpack.c.bf16 %v3732, %v3730
        %v3759 = vpack.c.bf16 %v3736, %v3734
        %v3760 = vpack.c.bf16 %v3740, %v3738
        %v3761 = vpack.c.bf16 %v3744, %v3742
        %v3762 = vpack.c.bf16 %v3748, %v3746
        %v3763 = vpack.c.bf16 %v3752, %v3750
        %v3764 = vpack.c.bf16 %v3756, %v3754
        %3766 = vrot.lane.b32.xlu0 %v3419, 96
        %v3767 = vpop.permute.xlu0 %3766
        %v3770 = vsel %vm1790, %v3757, 0
        %v3773 = vsel %vm1790, %v3758, 0
        %v3776 = vsel %vm1790, %v3759, 0
        %v3779 = vsel %vm1790, %v3760, 0
        %3781 = vmatprep.subr.bf16.mxu0 0
        %3782 = vmatpush1.bf16.msra.mxu0 %v3767
        %3783 = vmatprep.subr.bf16.mxu0 0
        %3784 = vmatpush1.bf16.msra.mxu0 0
        %3785 = vmatprep.subr.bf16.mxu0 0
        %3786 = vmatpush1.bf16.msra.mxu0 0
        %3787 = vmatprep.subr.bf16.mxu0 0
        %3788 = vmatpush1.bf16.msra.mxu0 0
        %3789 = vmatprep.subr.bf16.mxu0 0
        %3790 = vmatpush1.bf16.msra.mxu0 0
        %3791 = vmatprep.subr.bf16.mxu0 0
        %3792 = vmatpush1.bf16.msra.mxu0 0
        %3793 = vmatprep.subr.bf16.mxu0 0
        %3794 = vmatpush1.bf16.msra.mxu0 0
        %3795 = vmatprep.subr.bf16.mxu0 0
        %3796 = vmatpush1.bf16.msra.mxu0 0
        %3797 = vmatprep.subr.bf16.mxu0 0
        %3798 = vmatpush1.bf16.msra.mxu0 0
        %3799 = vmatprep.subr.bf16.mxu0 0
        %3800 = vmatpush1.bf16.msra.mxu0 0
        %3801 = vmatprep.subr.bf16.mxu0 0
        %3802 = vmatpush1.bf16.msra.mxu0 0
        %3803 = vmatprep.subr.bf16.mxu0 0
        %3804 = vmatpush1.bf16.msra.mxu0 0
        %3805 = vmatprep.subr.bf16.mxu0 0
        %3806 = vmatpush1.bf16.msra.mxu0 0
        %3807 = vmatprep.subr.bf16.mxu0 0
        %3808 = vmatpush1.bf16.msra.mxu0 0
        %3809 = vmatprep.subr.bf16.mxu0 0
        %3810 = vmatpush1.bf16.msra.mxu0 0
        %3811 = vmatprep.subr.bf16.mxu0 0
        %3812 = vmatpush1.bf16.msra.mxu0 0
        %3813 = vmatprep.mubr.bf16.mxu0 0
        %3814 = vmatmul.mubr.bf16.gmra.mrb[0].mxu0 %v3770
        %v3815 = vpop.f32.mrb[0].mxu0
        %v3816 = vadd.f32 0.0, %v3815
        %v3817 = vpop.f32.mrb[0].mxu0
        %v3818 = vpop.f32.mrb[0].mxu0
        %v3819 = vadd.f32 0.0, %v3818
        %v3820 = vpop.f32.mrb[0].mxu0
        %3821 = vmatprep.mubr.bf16.mxu0 0
        %3822 = vmatmul.mubr.bf16.gmra.mrb[0].mxu0 %v3773
        %v3823 = vpop.f32.mrb[0].mxu0
        %v3824 = vadd.f32 0.0, %v3823
        %v3825 = vpop.f32.mrb[0].mxu0
        %v3826 = vpop.f32.mrb[0].mxu0
        %v3827 = vadd.f32 0.0, %v3826
        %v3828 = vpop.f32.mrb[0].mxu0
        %3829 = vmatprep.mubr.bf16.mxu0 0
        %3830 = vmatmul.mubr.bf16.gmra.mrb[0].mxu0 %v3776
        %v3831 = vpop.f32.mrb[0].mxu0
        %v3832 = vadd.f32 0.0, %v3831
        %v3833 = vpop.f32.mrb[0].mxu0
        %v3834 = vpop.f32.mrb[0].mxu0
        %v3835 = vadd.f32 0.0, %v3834
        %v3836 = vpop.f32.mrb[0].mxu0
        %3837 = vmatprep.mubr.bf16.mxu0 0
        %3838 = vmatmul.mubr.bf16.gmra.mrb[0].mxu0 %v3779
        %v3839 = vpop.f32.mrb[0].mxu0
        %v3840 = vadd.f32 0.0, %v3839
        %v3841 = vpop.f32.mrb[0].mxu0
        %v3842 = vpop.f32.mrb[0].mxu0
        %v3843 = vadd.f32 0.0, %v3842
        %v3844 = vpop.f32.mrb[0].mxu0
        %3845 = vdwg.mxu0
        %3847 = vrot.lane.b32.xlu0 %v3420, 96
        %v3848 = vpop.permute.xlu0 %3847
        %v3851 = vsel %vm1790, %v3761, 0
        %v3854 = vsel %vm1790, %v3762, 0
        %v3857 = vsel %vm1790, %v3763, 0
        %v3860 = vsel %vm1790, %v3764, 0
        %3862 = vmatprep.subr.bf16.mxu0 0
        %3863 = vmatpush1.bf16.msra.mxu0 %v3848
        %3864 = vmatprep.subr.bf16.mxu0 0
        %3865 = vmatpush1.bf16.msra.mxu0 0
        %3866 = vmatprep.subr.bf16.mxu0 0
        %3867 = vmatpush1.bf16.msra.mxu0 0
        %3868 = vmatprep.subr.bf16.mxu0 0
        %3869 = vmatpush1.bf16.msra.mxu0 0
        %3870 = vmatprep.subr.bf16.mxu0 0
        %3871 = vmatpush1.bf16.msra.mxu0 0
        %3872 = vmatprep.subr.bf16.mxu0 0
        %3873 = vmatpush1.bf16.msra.mxu0 0
        %3874 = vmatprep.subr.bf16.mxu0 0
        %3875 = vmatpush1.bf16.msra.mxu0 0
        %3876 = vmatprep.subr.bf16.mxu0 0
        %3877 = vmatpush1.bf16.msra.mxu0 0
        %3878 = vmatprep.subr.bf16.mxu0 0
        %3879 = vmatpush1.bf16.msra.mxu0 0
        %3880 = vmatprep.subr.bf16.mxu0 0
        %3881 = vmatpush1.bf16.msra.mxu0 0
        %3882 = vmatprep.subr.bf16.mxu0 0
        %3883 = vmatpush1.bf16.msra.mxu0 0
        %3884 = vmatprep.subr.bf16.mxu0 0
        %3885 = vmatpush1.bf16.msra.mxu0 0
        %3886 = vmatprep.subr.bf16.mxu0 0
        %3887 = vmatpush1.bf16.msra.mxu0 0
        %3888 = vmatprep.subr.bf16.mxu0 0
        %3889 = vmatpush1.bf16.msra.mxu0 0
        %3890 = vmatprep.subr.bf16.mxu0 0
        %3891 = vmatpush1.bf16.msra.mxu0 0
        %3892 = vmatprep.subr.bf16.mxu0 0
        %3893 = vmatpush1.bf16.msra.mxu0 0
        %3894 = vmatprep.mubr.bf16.mxu0 0
        %3895 = vmatmul.mubr.bf16.gmra.mrb[0].mxu0 %v3851
        %v3896 = vpop.f32.mrb[0].mxu0
        %v3897 = vadd.f32 0.0, %v3896
        %v3898 = vpop.f32.mrb[0].mxu0
        %v3899 = vpop.f32.mrb[0].mxu0
        %v3900 = vadd.f32 0.0, %v3899
        %v3901 = vpop.f32.mrb[0].mxu0
        %3902 = vmatprep.mubr.bf16.mxu0 0
        %3903 = vmatmul.mubr.bf16.gmra.mrb[0].mxu0 %v3854
        %v3904 = vpop.f32.mrb[0].mxu0
        %v3905 = vadd.f32 0.0, %v3904
        %v3906 = vpop.f32.mrb[0].mxu0
        %v3907 = vpop.f32.mrb[0].mxu0
        %v3908 = vadd.f32 0.0, %v3907
        %v3909 = vpop.f32.mrb[0].mxu0
        %3910 = vmatprep.mubr.bf16.mxu0 0
        %3911 = vmatmul.mubr.bf16.gmra.mrb[0].mxu0 %v3857
        %v3912 = vpop.f32.mrb[0].mxu0
        %v3913 = vadd.f32 0.0, %v3912
        %v3914 = vpop.f32.mrb[0].mxu0
        %v3915 = vpop.f32.mrb[0].mxu0
        %v3916 = vadd.f32 0.0, %v3915
        %v3917 = vpop.f32.mrb[0].mxu0
        %3918 = vmatprep.mubr.bf16.mxu0 0
        %3919 = vmatmul.mubr.bf16.gmra.mrb[0].mxu0 %v3860
        %v3920 = vpop.f32.mrb[0].mxu0
        %v3921 = vadd.f32 0.0, %v3920
        %v3922 = vpop.f32.mrb[0].mxu0
        %v3923 = vpop.f32.mrb[0].mxu0
        %v3924 = vadd.f32 0.0, %v3923
        %v3925 = vpop.f32.mrb[0].mxu0
        %3926 = vdwg.mxu0
        %v3927 = vmul.f32 %v3816, %v1587
        %v3928 = vmul.f32 %v3819, %v1587
        %v3929 = vmul.f32 %v3824, %v1591
        %v3930 = vmul.f32 %v3827, %v1591
        %v3931 = vmul.f32 %v3832, %v1595
        %v3932 = vmul.f32 %v3835, %v1595
        %v3933 = vmul.f32 %v3840, %v1599
        %v3934 = vmul.f32 %v3843, %v1599
        %v3935 = vmul.f32 %v3897, %v1587
        %v3936 = vmul.f32 %v3900, %v1587
        %v3937 = vmul.f32 %v3905, %v1591
        %v3938 = vmul.f32 %v3908, %v1591
        %v3939 = vmul.f32 %v3913, %v1595
        %v3940 = vmul.f32 %v3916, %v1595
        %v3941 = vmul.f32 %v3921, %v1599
        %v3942 = vmul.f32 %v3924, %v1599
        %v3943 = vsel %vm1029, %v3927, 0.0
        %v3944 = vsel %vm1029, %v3929, 0.0
        %v3945 = vadd.f32 %v3943, %v3944
        %v3946 = vsel %vm1029, %v3931, 0.0
        %v3947 = vadd.f32 %v3945, %v3946
        %v3948 = vsel %vm1029, %v3933, 0.0
        %v3949 = vadd.f32 %v3947, %v3948
        %v3950 = vsel %vm1029, %v3928, 0.0
        %v3951 = vsel %vm1029, %v3930, 0.0
        %v3952 = vadd.f32 %v3950, %v3951
        %v3953 = vsel %vm1029, %v3932, 0.0
        %v3954 = vadd.f32 %v3952, %v3953
        %v3955 = vsel %vm1029, %v3934, 0.0
        %v3956 = vadd.f32 %v3954, %v3955
        %v3957 = vsel %vm1029, %v3935, 0.0
        %v3958 = vsel %vm1029, %v3937, 0.0
        %v3959 = vadd.f32 %v3957, %v3958
        %v3960 = vsel %vm1029, %v3939, 0.0
        %v3961 = vadd.f32 %v3959, %v3960
        %v3962 = vsel %vm1029, %v3941, 0.0
        %v3963 = vadd.f32 %v3961, %v3962
        %v3964 = vsel %vm1029, %v3936, 0.0
        %v3965 = vsel %vm1029, %v3938, 0.0
        %v3966 = vadd.f32 %v3964, %v3965
        %v3967 = vsel %vm1029, %v3940, 0.0
        %v3968 = vadd.f32 %v3966, %v3967
        %v3969 = vsel %vm1029, %v3942, 0.0
        %v3970 = vadd.f32 %v3968, %v3969
        %v3971 = vld [vmem:[%s16 + $0x10] sm:$0x1]
        %v3972 = vld [vmem:[%s16 + $0x11] sm:$0x1]
        %v3973 = vld [vmem:[%s16 + $0x12] sm:$0x1]
        %v3974 = vld [vmem:[%s16 + $0x13] sm:$0x1]
        %v3975 = vld [vmem:[%s16 + $0x14] sm:$0x1]
        %v3976 = vld [vmem:[%s17 + $0x1] sm:$0x1]
        %v3977 = vadd.f32 %v2482, %v3949
        %v3978 = vadd.f32 %v2483, %v3956
        %v3979 = vadd.f32 %v2484, %v3963
        %v3980 = vadd.f32 %v2485, %v3970
        %v3981 = vsel %vm1029, %v3977, 0.0
        %3982 = vadd.xlane.f32.xlu0 %v3981
        %v3983 = vpop.xlane.xlu0 %3982
        %v3984 = vsel %vm1029, %v3978, 0.0
        %3985 = vadd.xlane.f32.xlu0 %v3984
        %v3986 = vpop.xlane.xlu0 %3985
        %v3987 = vsel %vm1029, %v3979, 0.0
        %3988 = vadd.xlane.f32.xlu0 %v3987
        %v3989 = vpop.xlane.xlu0 %3988
        %v3990 = vsel %vm1029, %v3980, 0.0
        %3991 = vadd.xlane.f32.xlu0 %v3990
        %v3992 = vpop.xlane.xlu0 %3991
        %v3993 = vmul.f32 %v3983, %v2203
        %v3994 = vmul.f32 %v3986, %v2203
        %v3995 = vmul.f32 %v3989, %v2203
        %v3996 = vmul.f32 %v3992, %v2203
        %v3997 = vsub.f32 %v3977, %v3993
        %v3998 = vsub.f32 %v3978, %v3994
        %v3999 = vsub.f32 %v3979, %v3995
        %v4000 = vsub.f32 %v3980, %v3996
        %v4001 = vmul.f32 %v3997, %v3997
        %v4002 = vmul.f32 %v3998, %v3998
        %v4003 = vmul.f32 %v3999, %v3999
        %v4004 = vmul.f32 %v4000, %v4000
        %v4005 = vsel %vm1029, %v4001, 0.0
        %4006 = vadd.xlane.f32.xlu0 %v4005
        %v4007 = vpop.xlane.xlu0 %4006
        %v4008 = vsel %vm1029, %v4002, 0.0
        %4009 = vadd.xlane.f32.xlu0 %v4008
        %v4010 = vpop.xlane.xlu0 %4009
        %v4011 = vsel %vm1029, %v4003, 0.0
        %4012 = vadd.xlane.f32.xlu0 %v4011
        %v4013 = vpop.xlane.xlu0 %4012
        %v4014 = vsel %vm1029, %v4004, 0.0
        %4015 = vadd.xlane.f32.xlu0 %v4014
        %v4016 = vpop.xlane.xlu0 %4015
        %v4017 = vmul.f32 %v4007, %v2203
        %v4018 = vmul.f32 %v4010, %v2203
        %v4019 = vmul.f32 %v4013, %v2203
        %v4020 = vmul.f32 %v4016, %v2203
        %v4021 = vadd.f32 %v4017, 1e-05
        %v4022 = vadd.f32 %v4018, 1e-05
        %v4023 = vadd.f32 %v4019, 1e-05
        %v4024 = vadd.f32 %v4020, 1e-05
        %v4025 = vrsqrt.pop %v4021
        %v4026 = vrsqrt.pop %v4022
        %v4027 = vrsqrt.pop %v4023
        %v4028 = vrsqrt.pop %v4024
        %v4029 = vmul.f32 %v3997, %v4025
        %v4030 = vmul.f32 %v3998, %v4026
        %v4031 = vmul.f32 %v3999, %v4027
        %v4032 = vmul.f32 %v4000, %v4028
        %v4033 = vlaneseq
        %v4034 = vshrl.u32 %v4033, 7
        %v4035 = vsub.s32 0, %v4034
        %v4036 = vrot.slane %v3971, %v4035
        %v4037 = vmul.f32 %v4029, %v4036
        %v4038 = vmul.f32 %v4030, %v4036
        %v4039 = vmul.f32 %v4031, %v4036
        %v4040 = vmul.f32 %v4032, %v4036
        %v4041 = vlaneseq
        %v4042 = vshrl.u32 %v4041, 7
        %v4043 = vsub.s32 0, %v4042
        %v4044 = vrot.slane %v3972, %v4043
        %v4045 = vadd.f32 %v4037, %v4044
        %v4046 = vadd.f32 %v4038, %v4044
        %v4047 = vadd.f32 %v4039, %v4044
        %v4048 = vadd.f32 %v4040, %v4044
        %v4049 = vpack.c.bf16 %v4046, %v4045
        %v4050 = vpack.c.bf16 %v4048, %v4047
        %v4051 = vld [vmem:[%s14] sm:$0xff]
        %v4052 = vld [vmem:[%s14 + $0x8] sm:$0xff]
        %v4053 = vld [vmem:[%s14 + $0x10] sm:$0xff]
        %v4054 = vld [vmem:[%s14 + $0x18] sm:$0xff]
        %v4055 = vpack.c.bf16 %v4052, %v4051
        %v4056 = vpack.c.bf16 %v4054, %v4053
        %v4057 = vlaneseq
        %v4058 = vshrl.u32 %v4057, 7
        %v4059 = vsub.s32 0, %v4058
        %v4060 = vrot.slane %v3976, %v4059
        %v4062 = vsel %vm1029, %v4049, 0
        %v4065 = vsel %vm1029, %v4050, 0
        %4067 = vmatprep.subr.bf16.mxu0 0
        %4068 = vmatpush1.bf16.msra.mxu0 %v4055
        %4069 = vmatprep.subr.bf16.mxu0 0
        %4070 = vmatpush1.bf16.msra.mxu0 %v4056
        %4071 = vmatprep.subr.bf16.mxu0 0
        %4072 = vmatpush1.bf16.msra.mxu0 0
        %4073 = vmatprep.subr.bf16.mxu0 0
        %4074 = vmatpush1.bf16.msra.mxu0 0
        %4075 = vmatprep.subr.bf16.mxu0 0
        %4076 = vmatpush1.bf16.msra.mxu0 0
        %4077 = vmatprep.subr.bf16.mxu0 0
        %4078 = vmatpush1.bf16.msra.mxu0 0
        %4079 = vmatprep.subr.bf16.mxu0 0
        %4080 = vmatpush1.bf16.msra.mxu0 0
        %4081 = vmatprep.subr.bf16.mxu0 0
        %4082 = vmatpush1.bf16.msra.mxu0 0
        %4083 = vmatprep.subr.bf16.mxu0 0
        %4084 = vmatpush1.bf16.msra.mxu0 0
        %4085 = vmatprep.subr.bf16.mxu0 0
        %4086 = vmatpush1.bf16.msra.mxu0 0
        %4087 = vmatprep.subr.bf16.mxu0 0
        %4088 = vmatpush1.bf16.msra.mxu0 0
        %4089 = vmatprep.subr.bf16.mxu0 0
        %4090 = vmatpush1.bf16.msra.mxu0 0
        %4091 = vmatprep.subr.bf16.mxu0 0
        %4092 = vmatpush1.bf16.msra.mxu0 0
        %4093 = vmatprep.subr.bf16.mxu0 0
        %4094 = vmatpush1.bf16.msra.mxu0 0
        %4095 = vmatprep.subr.bf16.mxu0 0
        %4096 = vmatpush1.bf16.msra.mxu0 0
        %4097 = vmatprep.subr.bf16.mxu0 0
        %4098 = vmatpush1.bf16.msra.mxu0 0
        %4099 = vmatprep.mubr.bf16.mxu0 0
        %4100 = vmatmul.mubr.bf16.gmra.mrb[0].mxu0 %v4062
        %v4101 = vpop.f32.mrb[0].mxu0
        %v4102 = vadd.f32 %v4060, %v4101
        %v4103 = vpop.f32.mrb[0].mxu0
        %v4104 = vpop.f32.mrb[0].mxu0
        %v4105 = vadd.f32 %v4060, %v4104
        %v4106 = vpop.f32.mrb[0].mxu0
        %4107 = vmatprep.mubr.bf16.mxu0 0
        %4108 = vmatmul.mubr.bf16.gmra.mrb[0].mxu0 %v4065
        %v4109 = vpop.f32.mrb[0].mxu0
        %v4110 = vadd.f32 %v4060, %v4109
        %v4111 = vpop.f32.mrb[0].mxu0
        %v4112 = vpop.f32.mrb[0].mxu0
        %v4113 = vadd.f32 %v4060, %v4112
        %v4114 = vpop.f32.mrb[0].mxu0
        %4115 = vdwg.mxu0
        %v4116 = vmax.f32 %v4102, 0.0
        %v4117 = vmax.f32 %v4105, 0.0
        %v4118 = vmax.f32 %v4110, 0.0
        %v4119 = vmax.f32 %v4113, 0.0
        %v4120 = vpack.c.bf16 %v4117, %v4116
        %v4121 = vpack.c.bf16 %v4119, %v4118
        %v4122 = vld [vmem:[%s15] sm:$0xff]
        %v4123 = vld [vmem:[%s15 + $0x8] sm:$0xff]
        %v4124 = vld [vmem:[%s15 + $0x10] sm:$0xff]
        %v4125 = vld [vmem:[%s15 + $0x18] sm:$0xff]
        %v4126 = vld [vmem:[%s15 + $0x20] sm:$0xff]
        %v4127 = vld [vmem:[%s15 + $0x28] sm:$0xff]
        %v4128 = vld [vmem:[%s15 + $0x30] sm:$0xff]
        %v4129 = vld [vmem:[%s15 + $0x38] sm:$0xff]
        %v4130 = vld [vmem:[%s15 + $0x40] sm:$0xff]
        %v4131 = vld [vmem:[%s15 + $0x48] sm:$0xff]
        %v4132 = vld [vmem:[%s15 + $0x50] sm:$0xff]
        %v4133 = vld [vmem:[%s15 + $0x58] sm:$0xff]
        %v4134 = vld [vmem:[%s15 + $0x60] sm:$0xff]
        %v4135 = vld [vmem:[%s15 + $0x68] sm:$0xff]
        %v4136 = vld [vmem:[%s15 + $0x70] sm:$0xff]
        %v4137 = vld [vmem:[%s15 + $0x78] sm:$0xff]
        %v4138 = vpack.c.bf16 %v4123, %v4122
        %v4139 = vpack.c.bf16 %v4125, %v4124
        %v4140 = vpack.c.bf16 %v4127, %v4126
        %v4141 = vpack.c.bf16 %v4129, %v4128
        %v4142 = vpack.c.bf16 %v4131, %v4130
        %v4143 = vpack.c.bf16 %v4133, %v4132
        %v4144 = vpack.c.bf16 %v4135, %v4134
        %v4145 = vpack.c.bf16 %v4137, %v4136
        %v4146 = vlaneseq
        %v4147 = vshrl.u32 %v4146, 7
        %v4148 = vsub.s32 0, %v4147
        %v4149 = vrot.slane %v3975, %v4148
        %4150 = vmatprep.subr.bf16.mxu0 0
        %4151 = vmatpush1.bf16.msra.mxu0 %v4138
        %4152 = vmatprep.subr.bf16.mxu0 0
        %4153 = vmatpush1.bf16.msra.mxu0 %v4139
        %4154 = vmatprep.subr.bf16.mxu0 0
        %4155 = vmatpush1.bf16.msra.mxu0 %v4140
        %4156 = vmatprep.subr.bf16.mxu0 0
        %4157 = vmatpush1.bf16.msra.mxu0 %v4141
        %4158 = vmatprep.subr.bf16.mxu0 0
        %4159 = vmatpush1.bf16.msra.mxu0 %v4142
        %4160 = vmatprep.subr.bf16.mxu0 0
        %4161 = vmatpush1.bf16.msra.mxu0 %v4143
        %4162 = vmatprep.subr.bf16.mxu0 0
        %4163 = vmatpush1.bf16.msra.mxu0 %v4144
        %4164 = vmatprep.subr.bf16.mxu0 0
        %4165 = vmatpush1.bf16.msra.mxu0 %v4145
        %4166 = vmatprep.subr.bf16.mxu0 0
        %4167 = vmatpush1.bf16.msra.mxu0 0
        %4168 = vmatprep.subr.bf16.mxu0 0
        %4169 = vmatpush1.bf16.msra.mxu0 0
        %4170 = vmatprep.subr.bf16.mxu0 0
        %4171 = vmatpush1.bf16.msra.mxu0 0
        %4172 = vmatprep.subr.bf16.mxu0 0
        %4173 = vmatpush1.bf16.msra.mxu0 0
        %4174 = vmatprep.subr.bf16.mxu0 0
        %4175 = vmatpush1.bf16.msra.mxu0 0
        %4176 = vmatprep.subr.bf16.mxu0 0
        %4177 = vmatpush1.bf16.msra.mxu0 0
        %4178 = vmatprep.subr.bf16.mxu0 0
        %4179 = vmatpush1.bf16.msra.mxu0 0
        %4180 = vmatprep.subr.bf16.mxu0 0
        %4181 = vmatpush1.bf16.msra.mxu0 0
        %4182 = vmatprep.mubr.bf16.mxu0 0
        %4183 = vmatmul.mubr.bf16.gmra.mrb[0].mxu0 %v4120
        %v4184 = vpop.f32.mrb[0].mxu0
        %v4185 = vadd.f32 %v4149, %v4184
        %v4186 = vpop.f32.mrb[0].mxu0
        %v4187 = vpop.f32.mrb[0].mxu0
        %v4188 = vadd.f32 %v4149, %v4187
        %v4189 = vpop.f32.mrb[0].mxu0
        %4190 = vmatprep.mubr.bf16.mxu0 0
        %4191 = vmatmul.mubr.bf16.gmra.mrb[0].mxu0 %v4121
        %v4192 = vpop.f32.mrb[0].mxu0
        %v4193 = vadd.f32 %v4149, %v4192
        %v4194 = vpop.f32.mrb[0].mxu0
        %v4195 = vpop.f32.mrb[0].mxu0
        %v4196 = vadd.f32 %v4149, %v4195
        %v4197 = vpop.f32.mrb[0].mxu0
        %4198 = vdwg.mxu0
        %v4199 = vadd.f32 %v4045, %v4185
        %v4200 = vadd.f32 %v4046, %v4188
        %v4201 = vadd.f32 %v4047, %v4193
        %v4202 = vadd.f32 %v4048, %v4196
        %v4203 = vsel %vm1029, %v4199, 0.0
        %4204 = vadd.xlane.f32.xlu0 %v4203
        %v4205 = vpop.xlane.xlu0 %4204
        %v4206 = vsel %vm1029, %v4200, 0.0
        %4207 = vadd.xlane.f32.xlu0 %v4206
        %v4208 = vpop.xlane.xlu0 %4207
        %v4209 = vsel %vm1029, %v4201, 0.0
        %4210 = vadd.xlane.f32.xlu0 %v4209
        %v4211 = vpop.xlane.xlu0 %4210
        %v4212 = vsel %vm1029, %v4202, 0.0
        %4213 = vadd.xlane.f32.xlu0 %v4212
        %v4214 = vpop.xlane.xlu0 %4213
        %v4215 = vmul.f32 %v4205, %v2203
        %v4216 = vmul.f32 %v4208, %v2203
        %v4217 = vmul.f32 %v4211, %v2203
        %v4218 = vmul.f32 %v4214, %v2203
        %v4219 = vsub.f32 %v4199, %v4215
        %v4220 = vsub.f32 %v4200, %v4216
        %v4221 = vsub.f32 %v4201, %v4217
        %v4222 = vsub.f32 %v4202, %v4218
        %v4223 = vmul.f32 %v4219, %v4219
        %v4224 = vmul.f32 %v4220, %v4220
        %v4225 = vmul.f32 %v4221, %v4221
        %v4226 = vmul.f32 %v4222, %v4222
        %v4227 = vsel %vm1029, %v4223, 0.0
        %4228 = vadd.xlane.f32.xlu0 %v4227
        %v4229 = vpop.xlane.xlu0 %4228
        %v4230 = vsel %vm1029, %v4224, 0.0
        %4231 = vadd.xlane.f32.xlu0 %v4230
        %v4232 = vpop.xlane.xlu0 %4231
        %v4233 = vsel %vm1029, %v4225, 0.0
        %4234 = vadd.xlane.f32.xlu0 %v4233
        %v4235 = vpop.xlane.xlu0 %4234
        %v4236 = vsel %vm1029, %v4226, 0.0
        %4237 = vadd.xlane.f32.xlu0 %v4236
        %v4238 = vpop.xlane.xlu0 %4237
        %v4239 = vmul.f32 %v4229, %v2203
        %v4240 = vmul.f32 %v4232, %v2203
        %v4241 = vmul.f32 %v4235, %v2203
        %v4242 = vmul.f32 %v4238, %v2203
        %v4243 = vadd.f32 %v4239, 1e-05
        %v4244 = vadd.f32 %v4240, 1e-05
        %v4245 = vadd.f32 %v4241, 1e-05
        %v4246 = vadd.f32 %v4242, 1e-05
        %v4247 = vrsqrt.pop %v4243
        %v4248 = vrsqrt.pop %v4244
        %v4249 = vrsqrt.pop %v4245
        %v4250 = vrsqrt.pop %v4246
        %v4251 = vmul.f32 %v4219, %v4247
        %v4252 = vmul.f32 %v4220, %v4248
        %v4253 = vmul.f32 %v4221, %v4249
        %v4254 = vmul.f32 %v4222, %v4250
        %v4255 = vlaneseq
        %v4256 = vshrl.u32 %v4255, 7
        %v4257 = vsub.s32 0, %v4256
        %v4258 = vrot.slane %v3973, %v4257
        %v4259 = vmul.f32 %v4251, %v4258
        %v4260 = vmul.f32 %v4252, %v4258
        %v4261 = vmul.f32 %v4253, %v4258
        %v4262 = vmul.f32 %v4254, %v4258
        %v4263 = vlaneseq
        %v4264 = vshrl.u32 %v4263, 7
        %v4265 = vsub.s32 0, %v4264
        %v4266 = vrot.slane %v3974, %v4265
        %v4267 = vadd.f32 %v4259, %v4266
        %v4268 = vadd.f32 %v4260, %v4266
        %v4269 = vadd.f32 %v4261, %v4266
        %v4270 = vadd.f32 %v4262, %v4266
        %v4271 = vld [vmem:[%s21] sm:$0x1]
        %v4272 = vld [vmem:[%s21 + $0x1] sm:$0x1]
        %v4273 = vld [vmem:[%s21 + $0x2] sm:$0x1]
        %v4274 = vld [vmem:[%s21 + $0x3] sm:$0x1]
        %v4275 = vld [vmem:[%s21 + $0x4] sm:$0x1]
        %v4276 = vld [vmem:[%s21 + $0x5] sm:$0x1]
        %v4277 = vld [vmem:[%s18] sm:$0xff]
        %v4278 = vld [vmem:[%s18 + $0x8] sm:$0xff]
        %v4279 = vld [vmem:[%s18 + $0x10] sm:$0xff]
        %v4280 = vld [vmem:[%s18 + $0x18] sm:$0xff]
        %v4281 = vld [vmem:[%s18 + $0x20] sm:$0xff]
        %v4282 = vld [vmem:[%s18 + $0x28] sm:$0xff]
        %v4283 = vld [vmem:[%s18 + $0x30] sm:$0xff]
        %v4284 = vld [vmem:[%s18 + $0x38] sm:$0xff]
        %v4285 = vpack.c.bf16 %v4278, %v4277
        %v4286 = vpack.c.bf16 %v4280, %v4279
        %v4287 = vpack.c.bf16 %v4282, %v4281
        %v4288 = vpack.c.bf16 %v4284, %v4283
        %v4289 = vpack.c.bf16 %v2479, %v2478
        %v4290 = vpack.c.bf16 %v2481, %v2480
        %v4291 = vpack.c.bf16 %v4268, %v4267
        %v4292 = vpack.c.bf16 %v4270, %v4269
        %v4294 = vsel %vm1029, %v4291, 0
        %v4297 = vsel %vm1029, %v4292, 0
        %4299 = vmatprep.subr.bf16.mxu0 0
        %4300 = vmatpush1.bf16.msra.mxu0 %v4287
        %4301 = vmatprep.subr.bf16.mxu0 0
        %4302 = vmatpush1.bf16.msra.mxu0 %v4288
        %4303 = vmatprep.subr.bf16.mxu0 0
        %4304 = vmatpush1.bf16.msra.mxu0 0
        %4305 = vmatprep.subr.bf16.mxu0 0
        %4306 = vmatpush1.bf16.msra.mxu0 0
        %4307 = vmatprep.subr.bf16.mxu0 0
        %4308 = vmatpush1.bf16.msra.mxu0 0
        %4309 = vmatprep.subr.bf16.mxu0 0
        %4310 = vmatpush1.bf16.msra.mxu0 0
        %4311 = vmatprep.subr.bf16.mxu0 0
        %4312 = vmatpush1.bf16.msra.mxu0 0
        %4313 = vmatprep.subr.bf16.mxu0 0
        %4314 = vmatpush1.bf16.msra.mxu0 0
        %4315 = vmatprep.subr.bf16.mxu0 0
        %4316 = vmatpush1.bf16.msra.mxu0 0
        %4317 = vmatprep.subr.bf16.mxu0 0
        %4318 = vmatpush1.bf16.msra.mxu0 0
        %4319 = vmatprep.subr.bf16.mxu0 0
        %4320 = vmatpush1.bf16.msra.mxu0 0
        %4321 = vmatprep.subr.bf16.mxu0 0
        %4322 = vmatpush1.bf16.msra.mxu0 0
        %4323 = vmatprep.subr.bf16.mxu0 0
        %4324 = vmatpush1.bf16.msra.mxu0 0
        %4325 = vmatprep.subr.bf16.mxu0 0
        %4326 = vmatpush1.bf16.msra.mxu0 0
        %4327 = vmatprep.subr.bf16.mxu0 0
        %4328 = vmatpush1.bf16.msra.mxu0 0
        %4329 = vmatprep.subr.bf16.mxu0 0
        %4330 = vmatpush1.bf16.msra.mxu0 0
        %4331 = vmatprep.mubr.bf16.mxu0 0
        %4332 = vmatmul.mubr.bf16.gmra.mrb[0].mxu0 %v4294
        %v4333 = vpop.f32.mrb[0].mxu0
        %v4334 = vadd.f32 0.0, %v4333
        %v4335 = vpop.f32.mrb[0].mxu0
        %v4336 = vpop.f32.mrb[0].mxu0
        %v4337 = vadd.f32 0.0, %v4336
        %v4338 = vpop.f32.mrb[0].mxu0
        %4339 = vmatprep.mubr.bf16.mxu0 0
        %4340 = vmatmul.mubr.bf16.gmra.mrb[0].mxu0 %v4297
        %v4341 = vpop.f32.mrb[0].mxu0
        %v4342 = vadd.f32 0.0, %v4341
        %v4343 = vpop.f32.mrb[0].mxu0
        %v4344 = vpop.f32.mrb[0].mxu0
        %v4345 = vadd.f32 0.0, %v4344
        %v4346 = vpop.f32.mrb[0].mxu0
        %4347 = vdwg.mxu0
        %v4349 = vsel %vm1029, %v4289, 0
        %v4352 = vsel %vm1029, %v4290, 0
        %4354 = vmatprep.subr.bf16.mxu0 0
        %4355 = vmatpush1.bf16.msra.mxu0 %v4285
        %4356 = vmatprep.subr.bf16.mxu0 0
        %4357 = vmatpush1.bf16.msra.mxu0 %v4286
        %4358 = vmatprep.subr.bf16.mxu0 0
        %4359 = vmatpush1.bf16.msra.mxu0 0
        %4360 = vmatprep.subr.bf16.mxu0 0
        %4361 = vmatpush1.bf16.msra.mxu0 0
        %4362 = vmatprep.subr.bf16.mxu0 0
        %4363 = vmatpush1.bf16.msra.mxu0 0
        %4364 = vmatprep.subr.bf16.mxu0 0
        %4365 = vmatpush1.bf16.msra.mxu0 0
        %4366 = vmatprep.subr.bf16.mxu0 0
        %4367 = vmatpush1.bf16.msra.mxu0 0
        %4368 = vmatprep.subr.bf16.mxu0 0
        %4369 = vmatpush1.bf16.msra.mxu0 0
        %4370 = vmatprep.subr.bf16.mxu0 0
        %4371 = vmatpush1.bf16.msra.mxu0 0
        %4372 = vmatprep.subr.bf16.mxu0 0
        %4373 = vmatpush1.bf16.msra.mxu0 0
        %4374 = vmatprep.subr.bf16.mxu0 0
        %4375 = vmatpush1.bf16.msra.mxu0 0
        %4376 = vmatprep.subr.bf16.mxu0 0
        %4377 = vmatpush1.bf16.msra.mxu0 0
        %4378 = vmatprep.subr.bf16.mxu0 0
        %4379 = vmatpush1.bf16.msra.mxu0 0
        %4380 = vmatprep.subr.bf16.mxu0 0
        %4381 = vmatpush1.bf16.msra.mxu0 0
        %4382 = vmatprep.subr.bf16.mxu0 0
        %4383 = vmatpush1.bf16.msra.mxu0 0
        %4384 = vmatprep.subr.bf16.mxu0 0
        %4385 = vmatpush1.bf16.msra.mxu0 0
        %4386 = vmatprep.mubr.bf16.mxu0 0
        %4387 = vmatmul.mubr.bf16.gmra.mrb[0].mxu0 %v4349
        %v4388 = vpop.f32.mrb[0].mxu0
        %v4389 = vadd.f32 %v4334, %v4388
        %v4390 = vpop.f32.mrb[0].mxu0
        %v4391 = vpop.f32.mrb[0].mxu0
        %v4392 = vadd.f32 %v4337, %v4391
        %v4393 = vpop.f32.mrb[0].mxu0
        %4394 = vmatprep.mubr.bf16.mxu0 0
        %4395 = vmatmul.mubr.bf16.gmra.mrb[0].mxu0 %v4352
        %v4396 = vpop.f32.mrb[0].mxu0
        %v4397 = vadd.f32 %v4342, %v4396
        %v4398 = vpop.f32.mrb[0].mxu0
        %v4399 = vpop.f32.mrb[0].mxu0
        %v4400 = vadd.f32 %v4345, %v4399
        %v4401 = vpop.f32.mrb[0].mxu0
        %4402 = vdwg.mxu0
        %v4403 = vlaneseq
        %v4404 = vshrl.u32 %v4403, 7
        %v4405 = vsub.s32 0, %v4404
        %v4406 = vrot.slane %v4271, %v4405
        %v4407 = vadd.f32 %v4389, %v4406
        %v4408 = vadd.f32 %v4392, %v4406
        %v4409 = vadd.f32 %v4397, %v4406
        %v4410 = vadd.f32 %v4400, %v4406
        %v4411 = vmax.f32 %v4407, 0.0
        %v4412 = vmax.f32 %v4408, 0.0
        %v4413 = vmax.f32 %v4409, 0.0
        %v4414 = vmax.f32 %v4410, 0.0
        %v4415 = vsel %vm1029, %v4411, 0.0
        %4416 = vadd.xlane.f32.xlu0 %v4415
        %v4417 = vpop.xlane.xlu0 %4416
        %v4418 = vsel %vm1029, %v4412, 0.0
        %4419 = vadd.xlane.f32.xlu0 %v4418
        %v4420 = vpop.xlane.xlu0 %4419
        %v4421 = vsel %vm1029, %v4413, 0.0
        %4422 = vadd.xlane.f32.xlu0 %v4421
        %v4423 = vpop.xlane.xlu0 %4422
        %v4424 = vsel %vm1029, %v4414, 0.0
        %4425 = vadd.xlane.f32.xlu0 %v4424
        %v4426 = vpop.xlane.xlu0 %4425
        %v4427 = vmul.f32 %v4417, %v2203
        %v4428 = vmul.f32 %v4420, %v2203
        %v4429 = vmul.f32 %v4423, %v2203
        %v4430 = vmul.f32 %v4426, %v2203
        %v4431 = vsub.f32 %v4411, %v4427
        %v4432 = vsub.f32 %v4412, %v4428
        %v4433 = vsub.f32 %v4413, %v4429
        %v4434 = vsub.f32 %v4414, %v4430
        %v4435 = vmul.f32 %v4431, %v4431
        %v4436 = vmul.f32 %v4432, %v4432
        %v4437 = vmul.f32 %v4433, %v4433
        %v4438 = vmul.f32 %v4434, %v4434
        %v4439 = vsel %vm1029, %v4435, 0.0
        %4440 = vadd.xlane.f32.xlu0 %v4439
        %v4441 = vpop.xlane.xlu0 %4440
        %v4442 = vsel %vm1029, %v4436, 0.0
        %4443 = vadd.xlane.f32.xlu0 %v4442
        %v4444 = vpop.xlane.xlu0 %4443
        %v4445 = vsel %vm1029, %v4437, 0.0
        %4446 = vadd.xlane.f32.xlu0 %v4445
        %v4447 = vpop.xlane.xlu0 %4446
        %v4448 = vsel %vm1029, %v4438, 0.0
        %4449 = vadd.xlane.f32.xlu0 %v4448
        %v4450 = vpop.xlane.xlu0 %4449
        %v4451 = vmul.f32 %v4441, %v2203
        %v4452 = vmul.f32 %v4444, %v2203
        %v4453 = vmul.f32 %v4447, %v2203
        %v4454 = vmul.f32 %v4450, %v2203
        %v4455 = vadd.f32 %v4451, 1e-05
        %v4456 = vadd.f32 %v4452, 1e-05
        %v4457 = vadd.f32 %v4453, 1e-05
        %v4458 = vadd.f32 %v4454, 1e-05
        %v4459 = vrsqrt.pop %v4455
        %v4460 = vrsqrt.pop %v4456
        %v4461 = vrsqrt.pop %v4457
        %v4462 = vrsqrt.pop %v4458
        %v4463 = vmul.f32 %v4431, %v4459
        %v4464 = vmul.f32 %v4432, %v4460
        %v4465 = vmul.f32 %v4433, %v4461
        %v4466 = vmul.f32 %v4434, %v4462
        %v4467 = vlaneseq
        %v4468 = vshrl.u32 %v4467, 7
        %v4469 = vsub.s32 0, %v4468
        %v4470 = vrot.slane %v4272, %v4469
        %v4471 = vmul.f32 %v4463, %v4470
        %v4472 = vmul.f32 %v4464, %v4470
        %v4473 = vmul.f32 %v4465, %v4470
        %v4474 = vmul.f32 %v4466, %v4470
        %v4475 = vlaneseq
        %v4476 = vshrl.u32 %v4475, 7
        %v4477 = vsub.s32 0, %v4476
        %v4478 = vrot.slane %v4273, %v4477
        %v4479 = vadd.f32 %v4471, %v4478
        %v4480 = vadd.f32 %v4472, %v4478
        %v4481 = vadd.f32 %v4473, %v4478
        %v4482 = vadd.f32 %v4474, %v4478
        %v4483 = vpack.c.bf16 %v4480, %v4479
        %v4484 = vpack.c.bf16 %v4482, %v4481
        %v4485 = vld [vmem:[%s19] sm:$0xff]
        %v4486 = vld [vmem:[%s19 + $0x8] sm:$0xff]
        %v4487 = vld [vmem:[%s19 + $0x10] sm:$0xff]
        %v4488 = vld [vmem:[%s19 + $0x18] sm:$0xff]
        %v4489 = vpack.c.bf16 %v4486, %v4485
        %v4490 = vpack.c.bf16 %v4488, %v4487
        %v4491 = vld [vmem:[%s22] sm:$0x1]
        %v4493 = vlaneseq
        %v4494 = vshrl.u32 %v4493, 7
        %v4495 = vsub.s32 0, %v4494
        %v4496 = vrot.slane %v4491, %v4495
        %v4499 = vsel %vm1029, %v4483, 0
        %v4502 = vsel %vm1029, %v4484, 0
        %4504 = vmatprep.subr.bf16.mxu0 0
        %4505 = vmatpush1.bf16.msra.mxu0 %v4489
        %4506 = vmatprep.subr.bf16.mxu0 0
        %4507 = vmatpush1.bf16.msra.mxu0 %v4490
        %4508 = vmatprep.subr.bf16.mxu0 0
        %4509 = vmatpush1.bf16.msra.mxu0 0
        %4510 = vmatprep.subr.bf16.mxu0 0
        %4511 = vmatpush1.bf16.msra.mxu0 0
        %4512 = vmatprep.subr.bf16.mxu0 0
        %4513 = vmatpush1.bf16.msra.mxu0 0
        %4514 = vmatprep.subr.bf16.mxu0 0
        %4515 = vmatpush1.bf16.msra.mxu0 0
        %4516 = vmatprep.subr.bf16.mxu0 0
        %4517 = vmatpush1.bf16.msra.mxu0 0
        %4518 = vmatprep.subr.bf16.mxu0 0
        %4519 = vmatpush1.bf16.msra.mxu0 0
        %4520 = vmatprep.subr.bf16.mxu0 0
        %4521 = vmatpush1.bf16.msra.mxu0 0
        %4522 = vmatprep.subr.bf16.mxu0 0
        %4523 = vmatpush1.bf16.msra.mxu0 0
        %4524 = vmatprep.subr.bf16.mxu0 0
        %4525 = vmatpush1.bf16.msra.mxu0 0
        %4526 = vmatprep.subr.bf16.mxu0 0
        %4527 = vmatpush1.bf16.msra.mxu0 0
        %4528 = vmatprep.subr.bf16.mxu0 0
        %4529 = vmatpush1.bf16.msra.mxu0 0
        %4530 = vmatprep.subr.bf16.mxu0 0
        %4531 = vmatpush1.bf16.msra.mxu0 0
        %4532 = vmatprep.subr.bf16.mxu0 0
        %4533 = vmatpush1.bf16.msra.mxu0 0
        %4534 = vmatprep.subr.bf16.mxu0 0
        %4535 = vmatpush1.bf16.msra.mxu0 0
        %4536 = vmatprep.mubr.bf16.mxu0 0
        %4537 = vmatmul.mubr.bf16.gmra.mrb[0].mxu0 %v4499
        %v4538 = vpop.f32.mrb[0].mxu0
        %v4539 = vadd.f32 %v4496, %v4538
        %v4540 = vpop.f32.mrb[0].mxu0
        %v4541 = vpop.f32.mrb[0].mxu0
        %v4542 = vadd.f32 %v4496, %v4541
        %v4543 = vpop.f32.mrb[0].mxu0
        %4544 = vmatprep.mubr.bf16.mxu0 0
        %4545 = vmatmul.mubr.bf16.gmra.mrb[0].mxu0 %v4502
        %v4546 = vpop.f32.mrb[0].mxu0
        %v4547 = vadd.f32 %v4496, %v4546
        %v4548 = vpop.f32.mrb[0].mxu0
        %v4549 = vpop.f32.mrb[0].mxu0
        %v4550 = vadd.f32 %v4496, %v4549
        %v4551 = vpop.f32.mrb[0].mxu0
        %4552 = vdwg.mxu0
        %v4553 = vmul.f32 %v4539, 0.35355338
        %v4554 = vmul.f32 %v4542, 0.35355338
        %v4555 = vmul.f32 %v4547, 0.35355338
        %v4556 = vmul.f32 %v4550, 0.35355338
        %v4557 = vmul.f32 %v4553, %v1587
        %v4558 = vmul.f32 %v4554, %v1587
        %v4559 = vmul.f32 %v4553, %v1591
        %v4560 = vmul.f32 %v4554, %v1591
        %v4561 = vmul.f32 %v4553, %v1595
        %v4562 = vmul.f32 %v4554, %v1595
        %v4563 = vmul.f32 %v4553, %v1599
        %v4564 = vmul.f32 %v4554, %v1599
        %v4565 = vmul.f32 %v4555, %v1587
        %v4566 = vmul.f32 %v4556, %v1587
        %v4567 = vmul.f32 %v4555, %v1591
        %v4568 = vmul.f32 %v4556, %v1591
        %v4569 = vmul.f32 %v4555, %v1595
        %v4570 = vmul.f32 %v4556, %v1595
        %v4571 = vmul.f32 %v4555, %v1599
        %v4572 = vmul.f32 %v4556, %v1599
        %v4573 = vpack.c.bf16 %v4558, %v4557
        %v4574 = vpack.c.bf16 %v4560, %v4559
        %v4575 = vpack.c.bf16 %v4562, %v4561
        %v4576 = vpack.c.bf16 %v4564, %v4563
        %v4577 = vpack.c.bf16 %v4566, %v4565
        %v4578 = vpack.c.bf16 %v4568, %v4567
        %v4579 = vpack.c.bf16 %v4570, %v4569
        %v4580 = vpack.c.bf16 %v4572, %v4571
        %v4581 = vpack.c.bf16 %v4542, %v4539
        %v4582 = vpack.c.bf16 %v4550, %v4547
        %4584 = vrot.lane.b32.xlu0 %v4581, 96
        %v4585 = vpop.permute.xlu0 %4584
        %v4587 = vsel %vm1029, %v4573, 0
        %v4590 = vsel %vm1029, %v4574, 0
        %v4593 = vsel %vm1029, %v4575, 0
        %v4596 = vsel %vm1029, %v4576, 0
        %v4599 = vsel %vm1029, %v4585, 0
        %4601 = vmatprep.subr.bf16.mxu0 0
        %4602 = vmatpush1.bf16.xpose.msra.mxu0 %v4599
        %4603 = vmatprep.subr.bf16.mxu0 0
        %4604 = vmatpush1.bf16.xpose.msra.mxu0 0
        %4605 = vmatprep.subr.bf16.mxu0 0
        %4606 = vmatpush1.bf16.xpose.msra.mxu0 0
        %4607 = vmatprep.subr.bf16.mxu0 0
        %4608 = vmatpush1.bf16.xpose.msra.mxu0 0
        %4609 = vmatprep.subr.bf16.mxu0 0
        %4610 = vmatpush1.bf16.xpose.msra.mxu0 0
        %4611 = vmatprep.subr.bf16.mxu0 0
        %4612 = vmatpush1.bf16.xpose.msra.mxu0 0
        %4613 = vmatprep.subr.bf16.mxu0 0
        %4614 = vmatpush1.bf16.xpose.msra.mxu0 0
        %4615 = vmatprep.subr.bf16.mxu0 0
        %4616 = vmatpush1.bf16.xpose.msra.mxu0 0
        %4617 = vmatprep.subr.bf16.mxu0 0
        %4618 = vmatpush1.bf16.xpose.msra.mxu0 0
        %4619 = vmatprep.subr.bf16.mxu0 0
        %4620 = vmatpush1.bf16.xpose.msra.mxu0 0
        %4621 = vmatprep.subr.bf16.mxu0 0
        %4622 = vmatpush1.bf16.xpose.msra.mxu0 0
        %4623 = vmatprep.subr.bf16.mxu0 0
        %4624 = vmatpush1.bf16.xpose.msra.mxu0 0
        %4625 = vmatprep.subr.bf16.mxu0 0
        %4626 = vmatpush1.bf16.xpose.msra.mxu0 0
        %4627 = vmatprep.subr.bf16.mxu0 0
        %4628 = vmatpush1.bf16.xpose.msra.mxu0 0
        %4629 = vmatprep.subr.bf16.mxu0 0
        %4630 = vmatpush1.bf16.xpose.msra.mxu0 0
        %4631 = vmatprep.subr.bf16.mxu0 0
        %4632 = vmatpush1.bf16.xpose.msra.mxu0 0
        %4633 = vmatprep.mubr.bf16.mxu0 0
        %4634 = vmatmul.mubr.bf16.gmra.mrb[0].mxu0 %v4587
        %v4635 = vpop.f32.mrb[0].mxu0
        %v4636 = vadd.f32 0.0, %v4635
        %v4637 = vpop.f32.mrb[0].mxu0
        %v4638 = vpop.f32.mrb[0].mxu0
        %v4639 = vadd.f32 0.0, %v4638
        %v4640 = vpop.f32.mrb[0].mxu0
        %4641 = vmatprep.mubr.bf16.mxu0 0
        %4642 = vmatmul.mubr.bf16.gmra.mrb[0].mxu0 %v4590
        %v4643 = vpop.f32.mrb[0].mxu0
        %v4644 = vadd.f32 0.0, %v4643
        %v4645 = vpop.f32.mrb[0].mxu0
        %v4646 = vpop.f32.mrb[0].mxu0
        %v4647 = vadd.f32 0.0, %v4646
        %v4648 = vpop.f32.mrb[0].mxu0
        %4649 = vmatprep.mubr.bf16.mxu0 0
        %4650 = vmatmul.mubr.bf16.gmra.mrb[0].mxu0 %v4593
        %v4651 = vpop.f32.mrb[0].mxu0
        %v4652 = vadd.f32 0.0, %v4651
        %v4653 = vpop.f32.mrb[0].mxu0
        %v4654 = vpop.f32.mrb[0].mxu0
        %v4655 = vadd.f32 0.0, %v4654
        %v4656 = vpop.f32.mrb[0].mxu0
        %4657 = vmatprep.mubr.bf16.mxu0 0
        %4658 = vmatmul.mubr.bf16.gmra.mrb[0].mxu0 %v4596
        %v4659 = vpop.f32.mrb[0].mxu0
        %v4660 = vadd.f32 0.0, %v4659
        %v4661 = vpop.f32.mrb[0].mxu0
        %v4662 = vpop.f32.mrb[0].mxu0
        %v4663 = vadd.f32 0.0, %v4662
        %v4664 = vpop.f32.mrb[0].mxu0
        %4665 = vdwg.mxu0
        %4667 = vrot.lane.b32.xlu0 %v4582, 96
        %v4668 = vpop.permute.xlu0 %4667
        %v4670 = vsel %vm1029, %v4577, 0
        %v4673 = vsel %vm1029, %v4578, 0
        %v4676 = vsel %vm1029, %v4579, 0
        %v4679 = vsel %vm1029, %v4580, 0
        %v4682 = vsel %vm1029, %v4668, 0
        %4684 = vmatprep.subr.bf16.mxu0 0
        %4685 = vmatpush1.bf16.xpose.msra.mxu0 %v4682
        %4686 = vmatprep.subr.bf16.mxu0 0
        %4687 = vmatpush1.bf16.xpose.msra.mxu0 0
        %4688 = vmatprep.subr.bf16.mxu0 0
        %4689 = vmatpush1.bf16.xpose.msra.mxu0 0
        %4690 = vmatprep.subr.bf16.mxu0 0
        %4691 = vmatpush1.bf16.xpose.msra.mxu0 0
        %4692 = vmatprep.subr.bf16.mxu0 0
        %4693 = vmatpush1.bf16.xpose.msra.mxu0 0
        %4694 = vmatprep.subr.bf16.mxu0 0
        %4695 = vmatpush1.bf16.xpose.msra.mxu0 0
        %4696 = vmatprep.subr.bf16.mxu0 0
        %4697 = vmatpush1.bf16.xpose.msra.mxu0 0
        %4698 = vmatprep.subr.bf16.mxu0 0
        %4699 = vmatpush1.bf16.xpose.msra.mxu0 0
        %4700 = vmatprep.subr.bf16.mxu0 0
        %4701 = vmatpush1.bf16.xpose.msra.mxu0 0
        %4702 = vmatprep.subr.bf16.mxu0 0
        %4703 = vmatpush1.bf16.xpose.msra.mxu0 0
        %4704 = vmatprep.subr.bf16.mxu0 0
        %4705 = vmatpush1.bf16.xpose.msra.mxu0 0
        %4706 = vmatprep.subr.bf16.mxu0 0
        %4707 = vmatpush1.bf16.xpose.msra.mxu0 0
        %4708 = vmatprep.subr.bf16.mxu0 0
        %4709 = vmatpush1.bf16.xpose.msra.mxu0 0
        %4710 = vmatprep.subr.bf16.mxu0 0
        %4711 = vmatpush1.bf16.xpose.msra.mxu0 0
        %4712 = vmatprep.subr.bf16.mxu0 0
        %4713 = vmatpush1.bf16.xpose.msra.mxu0 0
        %4714 = vmatprep.subr.bf16.mxu0 0
        %4715 = vmatpush1.bf16.xpose.msra.mxu0 0
        %4716 = vmatprep.mubr.bf16.mxu0 0
        %4717 = vmatmul.mubr.bf16.gmra.mrb[0].mxu0 %v4670
        %v4718 = vpop.f32.mrb[0].mxu0
        %v4719 = vadd.f32 0.0, %v4718
        %v4720 = vpop.f32.mrb[0].mxu0
        %v4721 = vpop.f32.mrb[0].mxu0
        %v4722 = vadd.f32 0.0, %v4721
        %v4723 = vpop.f32.mrb[0].mxu0
        %4724 = vmatprep.mubr.bf16.mxu0 0
        %4725 = vmatmul.mubr.bf16.gmra.mrb[0].mxu0 %v4673
        %v4726 = vpop.f32.mrb[0].mxu0
        %v4727 = vadd.f32 0.0, %v4726
        %v4728 = vpop.f32.mrb[0].mxu0
        %v4729 = vpop.f32.mrb[0].mxu0
        %v4730 = vadd.f32 0.0, %v4729
        %v4731 = vpop.f32.mrb[0].mxu0
        %4732 = vmatprep.mubr.bf16.mxu0 0
        %4733 = vmatmul.mubr.bf16.gmra.mrb[0].mxu0 %v4676
        %v4734 = vpop.f32.mrb[0].mxu0
        %v4735 = vadd.f32 0.0, %v4734
        %v4736 = vpop.f32.mrb[0].mxu0
        %v4737 = vpop.f32.mrb[0].mxu0
        %v4738 = vadd.f32 0.0, %v4737
        %v4739 = vpop.f32.mrb[0].mxu0
        %4740 = vmatprep.mubr.bf16.mxu0 0
        %4741 = vmatmul.mubr.bf16.gmra.mrb[0].mxu0 %v4679
        %v4742 = vpop.f32.mrb[0].mxu0
        %v4743 = vadd.f32 0.0, %v4742
        %v4744 = vpop.f32.mrb[0].mxu0
        %v4745 = vpop.f32.mrb[0].mxu0
        %v4746 = vadd.f32 0.0, %v4745
        %v4747 = vpop.f32.mrb[0].mxu0
        %4748 = vdwg.mxu0
        %v4749 = vsel %vm1790, %v4636, -inf
        %4750 = vmax.xlane.f32.xlu0 %v4749
        %v4751 = vpop.xlane.xlu0 %4750
        %v4752 = vsel %vm1790, %v4639, -inf
        %4753 = vmax.xlane.f32.xlu0 %v4752
        %v4754 = vpop.xlane.xlu0 %4753
        %v4755 = vsel %vm1790, %v4644, -inf
        %4756 = vmax.xlane.f32.xlu0 %v4755
        %v4757 = vpop.xlane.xlu0 %4756
        %v4758 = vsel %vm1790, %v4647, -inf
        %4759 = vmax.xlane.f32.xlu0 %v4758
        %v4760 = vpop.xlane.xlu0 %4759
        %v4761 = vsel %vm1790, %v4652, -inf
        %4762 = vmax.xlane.f32.xlu0 %v4761
        %v4763 = vpop.xlane.xlu0 %4762
        %v4764 = vsel %vm1790, %v4655, -inf
        %4765 = vmax.xlane.f32.xlu0 %v4764
        %v4766 = vpop.xlane.xlu0 %4765
        %v4767 = vsel %vm1790, %v4660, -inf
        %4768 = vmax.xlane.f32.xlu0 %v4767
        %v4769 = vpop.xlane.xlu0 %4768
        %v4770 = vsel %vm1790, %v4663, -inf
        %4771 = vmax.xlane.f32.xlu0 %v4770
        %v4772 = vpop.xlane.xlu0 %4771
        %v4773 = vsel %vm1790, %v4719, -inf
        %4774 = vmax.xlane.f32.xlu0 %v4773
        %v4775 = vpop.xlane.xlu0 %4774
        %v4776 = vsel %vm1790, %v4722, -inf
        %4777 = vmax.xlane.f32.xlu0 %v4776
        %v4778 = vpop.xlane.xlu0 %4777
        %v4779 = vsel %vm1790, %v4727, -inf
        %4780 = vmax.xlane.f32.xlu0 %v4779
        %v4781 = vpop.xlane.xlu0 %4780
        %v4782 = vsel %vm1790, %v4730, -inf
        %4783 = vmax.xlane.f32.xlu0 %v4782
        %v4784 = vpop.xlane.xlu0 %4783
        %v4785 = vsel %vm1790, %v4735, -inf
        %4786 = vmax.xlane.f32.xlu0 %v4785
        %v4787 = vpop.xlane.xlu0 %4786
        %v4788 = vsel %vm1790, %v4738, -inf
        %4789 = vmax.xlane.f32.xlu0 %v4788
        %v4790 = vpop.xlane.xlu0 %4789
        %v4791 = vsel %vm1790, %v4743, -inf
        %4792 = vmax.xlane.f32.xlu0 %v4791
        %v4793 = vpop.xlane.xlu0 %4792
        %v4794 = vsel %vm1790, %v4746, -inf
        %4795 = vmax.xlane.f32.xlu0 %v4794
        %v4796 = vpop.xlane.xlu0 %4795
        %v4797 = vsub.f32 %v4636, %v4751
        %v4798 = vsub.f32 %v4639, %v4754
        %v4799 = vsub.f32 %v4644, %v4757
        %v4800 = vsub.f32 %v4647, %v4760
        %v4801 = vsub.f32 %v4652, %v4763
        %v4802 = vsub.f32 %v4655, %v4766
        %v4803 = vsub.f32 %v4660, %v4769
        %v4804 = vsub.f32 %v4663, %v4772
        %v4805 = vsub.f32 %v4719, %v4775
        %v4806 = vsub.f32 %v4722, %v4778
        %v4807 = vsub.f32 %v4727, %v4781
        %v4808 = vsub.f32 %v4730, %v4784
        %v4809 = vsub.f32 %v4735, %v4787
        %v4810 = vsub.f32 %v4738, %v4790
        %v4811 = vsub.f32 %v4743, %v4793
        %v4812 = vsub.f32 %v4746, %v4796
        %v4813 = vmul.f32 %v4797, 1.442695
        %v4814 = vpow.pop %v4813
        %v4815 = vmul.f32 %v4798, 1.442695
        %v4816 = vpow.pop %v4815
        %v4817 = vmul.f32 %v4799, 1.442695
        %v4818 = vpow.pop %v4817
        %v4819 = vmul.f32 %v4800, 1.442695
        %v4820 = vpow.pop %v4819
        %v4821 = vmul.f32 %v4801, 1.442695
        %v4822 = vpow.pop %v4821
        %v4823 = vmul.f32 %v4802, 1.442695
        %v4824 = vpow.pop %v4823
        %v4825 = vmul.f32 %v4803, 1.442695
        %v4826 = vpow.pop %v4825
        %v4827 = vmul.f32 %v4804, 1.442695
        %v4828 = vpow.pop %v4827
        %v4829 = vmul.f32 %v4805, 1.442695
        %v4830 = vpow.pop %v4829
        %v4831 = vmul.f32 %v4806, 1.442695
        %v4832 = vpow.pop %v4831
        %v4833 = vmul.f32 %v4807, 1.442695
        %v4834 = vpow.pop %v4833
        %v4835 = vmul.f32 %v4808, 1.442695
        %v4836 = vpow.pop %v4835
        %v4837 = vmul.f32 %v4809, 1.442695
        %v4838 = vpow.pop %v4837
        %v4839 = vmul.f32 %v4810, 1.442695
        %v4840 = vpow.pop %v4839
        %v4841 = vmul.f32 %v4811, 1.442695
        %v4842 = vpow.pop %v4841
        %v4843 = vmul.f32 %v4812, 1.442695
        %v4844 = vpow.pop %v4843
        %v4845 = vsel %vm1790, %v4814, 0.0
        %4846 = vadd.xlane.f32.xlu0 %v4845
        %v4847 = vpop.xlane.xlu0 %4846
        %v4848 = vsel %vm1790, %v4816, 0.0
        %4849 = vadd.xlane.f32.xlu0 %v4848
        %v4850 = vpop.xlane.xlu0 %4849
        %v4851 = vsel %vm1790, %v4818, 0.0
        %4852 = vadd.xlane.f32.xlu0 %v4851
        %v4853 = vpop.xlane.xlu0 %4852
        %v4854 = vsel %vm1790, %v4820, 0.0
        %4855 = vadd.xlane.f32.xlu0 %v4854
        %v4856 = vpop.xlane.xlu0 %4855
        %v4857 = vsel %vm1790, %v4822, 0.0
        %4858 = vadd.xlane.f32.xlu0 %v4857
        %v4859 = vpop.xlane.xlu0 %4858
        %v4860 = vsel %vm1790, %v4824, 0.0
        %4861 = vadd.xlane.f32.xlu0 %v4860
        %v4862 = vpop.xlane.xlu0 %4861
        %v4863 = vsel %vm1790, %v4826, 0.0
        %4864 = vadd.xlane.f32.xlu0 %v4863
        %v4865 = vpop.xlane.xlu0 %4864
        %v4866 = vsel %vm1790, %v4828, 0.0
        %4867 = vadd.xlane.f32.xlu0 %v4866
        %v4868 = vpop.xlane.xlu0 %4867
        %v4869 = vsel %vm1790, %v4830, 0.0
        %4870 = vadd.xlane.f32.xlu0 %v4869
        %v4871 = vpop.xlane.xlu0 %4870
        %v4872 = vsel %vm1790, %v4832, 0.0
        %4873 = vadd.xlane.f32.xlu0 %v4872
        %v4874 = vpop.xlane.xlu0 %4873
        %v4875 = vsel %vm1790, %v4834, 0.0
        %4876 = vadd.xlane.f32.xlu0 %v4875
        %v4877 = vpop.xlane.xlu0 %4876
        %v4878 = vsel %vm1790, %v4836, 0.0
        %4879 = vadd.xlane.f32.xlu0 %v4878
        %v4880 = vpop.xlane.xlu0 %4879
        %v4881 = vsel %vm1790, %v4838, 0.0
        %4882 = vadd.xlane.f32.xlu0 %v4881
        %v4883 = vpop.xlane.xlu0 %4882
        %v4884 = vsel %vm1790, %v4840, 0.0
        %4885 = vadd.xlane.f32.xlu0 %v4884
        %v4886 = vpop.xlane.xlu0 %4885
        %v4887 = vsel %vm1790, %v4842, 0.0
        %4888 = vadd.xlane.f32.xlu0 %v4887
        %v4889 = vpop.xlane.xlu0 %4888
        %v4890 = vsel %vm1790, %v4844, 0.0
        %4891 = vadd.xlane.f32.xlu0 %v4890
        %v4892 = vpop.xlane.xlu0 %4891
        %v4893 = vrcp.pop %v4847
        %v4894 = vrcp.pop %v4850
        %v4895 = vrcp.pop %v4853
        %v4896 = vrcp.pop %v4856
        %v4897 = vrcp.pop %v4859
        %v4898 = vrcp.pop %v4862
        %v4899 = vrcp.pop %v4865
        %v4900 = vrcp.pop %v4868
        %v4901 = vrcp.pop %v4871
        %v4902 = vrcp.pop %v4874
        %v4903 = vrcp.pop %v4877
        %v4904 = vrcp.pop %v4880
        %v4905 = vrcp.pop %v4883
        %v4906 = vrcp.pop %v4886
        %v4907 = vrcp.pop %v4889
        %v4908 = vrcp.pop %v4892
        %v4909 = vmul.f32 %v4814, %v4893
        %v4910 = vmul.f32 %v4816, %v4894
        %v4911 = vmul.f32 %v4818, %v4895
        %v4912 = vmul.f32 %v4820, %v4896
        %v4913 = vmul.f32 %v4822, %v4897
        %v4914 = vmul.f32 %v4824, %v4898
        %v4915 = vmul.f32 %v4826, %v4899
        %v4916 = vmul.f32 %v4828, %v4900
        %v4917 = vmul.f32 %v4830, %v4901
        %v4918 = vmul.f32 %v4832, %v4902
        %v4919 = vmul.f32 %v4834, %v4903
        %v4920 = vmul.f32 %v4836, %v4904
        %v4921 = vmul.f32 %v4838, %v4905
        %v4922 = vmul.f32 %v4840, %v4906
        %v4923 = vmul.f32 %v4842, %v4907
        %v4924 = vmul.f32 %v4844, %v4908
        %v4925 = vpack.c.bf16 %v4910, %v4909
        %v4926 = vpack.c.bf16 %v4912, %v4911
        %v4927 = vpack.c.bf16 %v4914, %v4913
        %v4928 = vpack.c.bf16 %v4916, %v4915
        %v4929 = vpack.c.bf16 %v4918, %v4917
        %v4930 = vpack.c.bf16 %v4920, %v4919
        %v4931 = vpack.c.bf16 %v4922, %v4921
        %v4932 = vpack.c.bf16 %v4924, %v4923
        %4933 = vrot.lane.b32.xlu0 %v4581, 64
        %v4934 = vpop.permute.xlu0 %4933
        %v4937 = vsel %vm1790, %v4925, 0
        %v4940 = vsel %vm1790, %v4926, 0
        %v4943 = vsel %vm1790, %v4927, 0
        %v4946 = vsel %vm1790, %v4928, 0
        %4948 = vmatprep.subr.bf16.mxu0 0
        %4949 = vmatpush1.bf16.msra.mxu0 %v4934
        %4950 = vmatprep.subr.bf16.mxu0 0
        %4951 = vmatpush1.bf16.msra.mxu0 0
        %4952 = vmatprep.subr.bf16.mxu0 0
        %4953 = vmatpush1.bf16.msra.mxu0 0
        %4954 = vmatprep.subr.bf16.mxu0 0
        %4955 = vmatpush1.bf16.msra.mxu0 0
        %4956 = vmatprep.subr.bf16.mxu0 0
        %4957 = vmatpush1.bf16.msra.mxu0 0
        %4958 = vmatprep.subr.bf16.mxu0 0
        %4959 = vmatpush1.bf16.msra.mxu0 0
        %4960 = vmatprep.subr.bf16.mxu0 0
        %4961 = vmatpush1.bf16.msra.mxu0 0
        %4962 = vmatprep.subr.bf16.mxu0 0
        %4963 = vmatpush1.bf16.msra.mxu0 0
        %4964 = vmatprep.subr.bf16.mxu0 0
        %4965 = vmatpush1.bf16.msra.mxu0 0
        %4966 = vmatprep.subr.bf16.mxu0 0
        %4967 = vmatpush1.bf16.msra.mxu0 0
        %4968 = vmatprep.subr.bf16.mxu0 0
        %4969 = vmatpush1.bf16.msra.mxu0 0
        %4970 = vmatprep.subr.bf16.mxu0 0
        %4971 = vmatpush1.bf16.msra.mxu0 0
        %4972 = vmatprep.subr.bf16.mxu0 0
        %4973 = vmatpush1.bf16.msra.mxu0 0
        %4974 = vmatprep.subr.bf16.mxu0 0
        %4975 = vmatpush1.bf16.msra.mxu0 0
        %4976 = vmatprep.subr.bf16.mxu0 0
        %4977 = vmatpush1.bf16.msra.mxu0 0
        %4978 = vmatprep.subr.bf16.mxu0 0
        %4979 = vmatpush1.bf16.msra.mxu0 0
        %4980 = vmatprep.mubr.bf16.mxu0 0
        %4981 = vmatmul.mubr.bf16.gmra.mrb[0].mxu0 %v4937
        %v4982 = vpop.f32.mrb[0].mxu0
        %v4983 = vadd.f32 0.0, %v4982
        %v4984 = vpop.f32.mrb[0].mxu0
        %v4985 = vpop.f32.mrb[0].mxu0
        %v4986 = vadd.f32 0.0, %v4985
        %v4987 = vpop.f32.mrb[0].mxu0
        %4988 = vmatprep.mubr.bf16.mxu0 0
        %4989 = vmatmul.mubr.bf16.gmra.mrb[0].mxu0 %v4940
        %v4990 = vpop.f32.mrb[0].mxu0
        %v4991 = vadd.f32 0.0, %v4990
        %v4992 = vpop.f32.mrb[0].mxu0
        %v4993 = vpop.f32.mrb[0].mxu0
        %v4994 = vadd.f32 0.0, %v4993
        %v4995 = vpop.f32.mrb[0].mxu0
        %4996 = vmatprep.mubr.bf16.mxu0 0
        %4997 = vmatmul.mubr.bf16.gmra.mrb[0].mxu0 %v4943
        %v4998 = vpop.f32.mrb[0].mxu0
        %v4999 = vadd.f32 0.0, %v4998
        %v5000 = vpop.f32.mrb[0].mxu0
        %v5001 = vpop.f32.mrb[0].mxu0
        %v5002 = vadd.f32 0.0, %v5001
        %v5003 = vpop.f32.mrb[0].mxu0
        %5004 = vmatprep.mubr.bf16.mxu0 0
        %5005 = vmatmul.mubr.bf16.gmra.mrb[0].mxu0 %v4946
        %v5006 = vpop.f32.mrb[0].mxu0
        %v5007 = vadd.f32 0.0, %v5006
        %v5008 = vpop.f32.mrb[0].mxu0
        %v5009 = vpop.f32.mrb[0].mxu0
        %v5010 = vadd.f32 0.0, %v5009
        %v5011 = vpop.f32.mrb[0].mxu0
        %5012 = vdwg.mxu0
        %5013 = vrot.lane.b32.xlu0 %v4582, 64
        %v5014 = vpop.permute.xlu0 %5013
        %v5017 = vsel %vm1790, %v4929, 0
        %v5020 = vsel %vm1790, %v4930, 0
        %v5023 = vsel %vm1790, %v4931, 0
        %v5026 = vsel %vm1790, %v4932, 0
        %5028 = vmatprep.subr.bf16.mxu0 0
        %5029 = vmatpush1.bf16.msra.mxu0 %v5014
        %5030 = vmatprep.subr.bf16.mxu0 0
        %5031 = vmatpush1.bf16.msra.mxu0 0
        %5032 = vmatprep.subr.bf16.mxu0 0
        %5033 = vmatpush1.bf16.msra.mxu0 0
        %5034 = vmatprep.subr.bf16.mxu0 0
        %5035 = vmatpush1.bf16.msra.mxu0 0
        %5036 = vmatprep.subr.bf16.mxu0 0
        %5037 = vmatpush1.bf16.msra.mxu0 0
        %5038 = vmatprep.subr.bf16.mxu0 0
        %5039 = vmatpush1.bf16.msra.mxu0 0
        %5040 = vmatprep.subr.bf16.mxu0 0
        %5041 = vmatpush1.bf16.msra.mxu0 0
        %5042 = vmatprep.subr.bf16.mxu0 0
        %5043 = vmatpush1.bf16.msra.mxu0 0
        %5044 = vmatprep.subr.bf16.mxu0 0
        %5045 = vmatpush1.bf16.msra.mxu0 0
        %5046 = vmatprep.subr.bf16.mxu0 0
        %5047 = vmatpush1.bf16.msra.mxu0 0
        %5048 = vmatprep.subr.bf16.mxu0 0
        %5049 = vmatpush1.bf16.msra.mxu0 0
        %5050 = vmatprep.subr.bf16.mxu0 0
        %5051 = vmatpush1.bf16.msra.mxu0 0
        %5052 = vmatprep.subr.bf16.mxu0 0
        %5053 = vmatpush1.bf16.msra.mxu0 0
        %5054 = vmatprep.subr.bf16.mxu0 0
        %5055 = vmatpush1.bf16.msra.mxu0 0
        %5056 = vmatprep.subr.bf16.mxu0 0
        %5057 = vmatpush1.bf16.msra.mxu0 0
        %5058 = vmatprep.subr.bf16.mxu0 0
        %5059 = vmatpush1.bf16.msra.mxu0 0
        %5060 = vmatprep.mubr.bf16.mxu0 0
        %5061 = vmatmul.mubr.bf16.gmra.mrb[0].mxu0 %v5017
        %v5062 = vpop.f32.mrb[0].mxu0
        %v5063 = vadd.f32 0.0, %v5062
        %v5064 = vpop.f32.mrb[0].mxu0
        %v5065 = vpop.f32.mrb[0].mxu0
        %v5066 = vadd.f32 0.0, %v5065
        %v5067 = vpop.f32.mrb[0].mxu0
        %5068 = vmatprep.mubr.bf16.mxu0 0
        %5069 = vmatmul.mubr.bf16.gmra.mrb[0].mxu0 %v5020
        %v5070 = vpop.f32.mrb[0].mxu0
        %v5071 = vadd.f32 0.0, %v5070
        %v5072 = vpop.f32.mrb[0].mxu0
        %v5073 = vpop.f32.mrb[0].mxu0
        %v5074 = vadd.f32 0.0, %v5073
        %v5075 = vpop.f32.mrb[0].mxu0
        %5076 = vmatprep.mubr.bf16.mxu0 0
        %5077 = vmatmul.mubr.bf16.gmra.mrb[0].mxu0 %v5023
        %v5078 = vpop.f32.mrb[0].mxu0
        %v5079 = vadd.f32 0.0, %v5078
        %v5080 = vpop.f32.mrb[0].mxu0
        %v5081 = vpop.f32.mrb[0].mxu0
        %v5082 = vadd.f32 0.0, %v5081
        %v5083 = vpop.f32.mrb[0].mxu0
        %5084 = vmatprep.mubr.bf16.mxu0 0
        %5085 = vmatmul.mubr.bf16.gmra.mrb[0].mxu0 %v5026
        %v5086 = vpop.f32.mrb[0].mxu0
        %v5087 = vadd.f32 0.0, %v5086
        %v5088 = vpop.f32.mrb[0].mxu0
        %v5089 = vpop.f32.mrb[0].mxu0
        %v5090 = vadd.f32 0.0, %v5089
        %v5091 = vpop.f32.mrb[0].mxu0
        %5092 = vdwg.mxu0
        %v5093 = vmul.f32 %v4983, %v1587
        %v5094 = vmul.f32 %v4986, %v1587
        %v5095 = vmul.f32 %v4991, %v1591
        %v5096 = vmul.f32 %v4994, %v1591
        %v5097 = vmul.f32 %v4999, %v1595
        %v5098 = vmul.f32 %v5002, %v1595
        %v5099 = vmul.f32 %v5007, %v1599
        %v5100 = vmul.f32 %v5010, %v1599
        %v5101 = vmul.f32 %v5063, %v1587
        %v5102 = vmul.f32 %v5066, %v1587
        %v5103 = vmul.f32 %v5071, %v1591
        %v5104 = vmul.f32 %v5074, %v1591
        %v5105 = vmul.f32 %v5079, %v1595
        %v5106 = vmul.f32 %v5082, %v1595
        %v5107 = vmul.f32 %v5087, %v1599
        %v5108 = vmul.f32 %v5090, %v1599
        %v5109 = vsel %vm1029, %v5093, 0.0
        %v5110 = vsel %vm1029, %v5095, 0.0
        %v5111 = vadd.f32 %v5109, %v5110
        %v5112 = vsel %vm1029, %v5097, 0.0
        %v5113 = vadd.f32 %v5111, %v5112
        %v5114 = vsel %vm1029, %v5099, 0.0
        %v5115 = vadd.f32 %v5113, %v5114
        %v5116 = vsel %vm1029, %v5094, 0.0
        %v5117 = vsel %vm1029, %v5096, 0.0
        %v5118 = vadd.f32 %v5116, %v5117
        %v5119 = vsel %vm1029, %v5098, 0.0
        %v5120 = vadd.f32 %v5118, %v5119
        %v5121 = vsel %vm1029, %v5100, 0.0
        %v5122 = vadd.f32 %v5120, %v5121
        %v5123 = vsel %vm1029, %v5101, 0.0
        %v5124 = vsel %vm1029, %v5103, 0.0
        %v5125 = vadd.f32 %v5123, %v5124
        %v5126 = vsel %vm1029, %v5105, 0.0
        %v5127 = vadd.f32 %v5125, %v5126
        %v5128 = vsel %vm1029, %v5107, 0.0
        %v5129 = vadd.f32 %v5127, %v5128
        %v5130 = vsel %vm1029, %v5102, 0.0
        %v5131 = vsel %vm1029, %v5104, 0.0
        %v5132 = vadd.f32 %v5130, %v5131
        %v5133 = vsel %vm1029, %v5106, 0.0
        %v5134 = vadd.f32 %v5132, %v5133
        %v5135 = vsel %vm1029, %v5108, 0.0
        %v5136 = vadd.f32 %v5134, %v5135
        %v5137 = vpack.c.bf16 %v5122, %v5115
        %v5138 = vpack.c.bf16 %v5136, %v5129
        %v5139 = vld [vmem:[%s20] sm:$0xff]
        %v5140 = vld [vmem:[%s20 + $0x8] sm:$0xff]
        %v5141 = vld [vmem:[%s20 + $0x10] sm:$0xff]
        %v5142 = vld [vmem:[%s20 + $0x18] sm:$0xff]
        %v5143 = vpack.c.bf16 %v5140, %v5139
        %v5144 = vpack.c.bf16 %v5142, %v5141
        %v5145 = vlaneseq
        %v5146 = vshrl.u32 %v5145, 7
        %v5147 = vsub.s32 0, %v5146
        %v5148 = vrot.slane %v4274, %v5147
        %v5150 = vsel %vm1029, %v5137, 0
        %v5153 = vsel %vm1029, %v5138, 0
        %5155 = vmatprep.subr.bf16.mxu0 0
        %5156 = vmatpush1.bf16.msra.mxu0 %v5143
        %5157 = vmatprep.subr.bf16.mxu0 0
        %5158 = vmatpush1.bf16.msra.mxu0 %v5144
        %5159 = vmatprep.subr.bf16.mxu0 0
        %5160 = vmatpush1.bf16.msra.mxu0 0
        %5161 = vmatprep.subr.bf16.mxu0 0
        %5162 = vmatpush1.bf16.msra.mxu0 0
        %5163 = vmatprep.subr.bf16.mxu0 0
        %5164 = vmatpush1.bf16.msra.mxu0 0
        %5165 = vmatprep.subr.bf16.mxu0 0
        %5166 = vmatpush1.bf16.msra.mxu0 0
        %5167 = vmatprep.subr.bf16.mxu0 0
        %5168 = vmatpush1.bf16.msra.mxu0 0
        %5169 = vmatprep.subr.bf16.mxu0 0
        %5170 = vmatpush1.bf16.msra.mxu0 0
        %5171 = vmatprep.subr.bf16.mxu0 0
        %5172 = vmatpush1.bf16.msra.mxu0 0
        %5173 = vmatprep.subr.bf16.mxu0 0
        %5174 = vmatpush1.bf16.msra.mxu0 0
        %5175 = vmatprep.subr.bf16.mxu0 0
        %5176 = vmatpush1.bf16.msra.mxu0 0
        %5177 = vmatprep.subr.bf16.mxu0 0
        %5178 = vmatpush1.bf16.msra.mxu0 0
        %5179 = vmatprep.subr.bf16.mxu0 0
        %5180 = vmatpush1.bf16.msra.mxu0 0
        %5181 = vmatprep.subr.bf16.mxu0 0
        %5182 = vmatpush1.bf16.msra.mxu0 0
        %5183 = vmatprep.subr.bf16.mxu0 0
        %5184 = vmatpush1.bf16.msra.mxu0 0
        %5185 = vmatprep.subr.bf16.mxu0 0
        %5186 = vmatpush1.bf16.msra.mxu0 0
        %5187 = vmatprep.mubr.bf16.mxu0 0
        %5188 = vmatmul.mubr.bf16.gmra.mrb[0].mxu0 %v5150
        %v5189 = vpop.f32.mrb[0].mxu0
        %v5190 = vadd.f32 %v5148, %v5189
        %v5191 = vpop.f32.mrb[0].mxu0
        %v5192 = vpop.f32.mrb[0].mxu0
        %v5193 = vadd.f32 %v5148, %v5192
        %v5194 = vpop.f32.mrb[0].mxu0
        %5195 = vmatprep.mubr.bf16.mxu0 0
        %5196 = vmatmul.mubr.bf16.gmra.mrb[0].mxu0 %v5153
        %v5197 = vpop.f32.mrb[0].mxu0
        %v5198 = vadd.f32 %v5148, %v5197
        %v5199 = vpop.f32.mrb[0].mxu0
        %v5200 = vpop.f32.mrb[0].mxu0
        %v5201 = vadd.f32 %v5148, %v5200
        %v5202 = vpop.f32.mrb[0].mxu0
        %5203 = vdwg.mxu0
        %v5204 = vadd.f32 %v5190, %v4479
        %v5205 = vadd.f32 %v5193, %v4480
        %v5206 = vadd.f32 %v5198, %v4481
        %v5207 = vadd.f32 %v5201, %v4482
        %v5208 = vsel %vm1029, %v5204, 0.0
        %5209 = vadd.xlane.f32.xlu0 %v5208
        %v5210 = vpop.xlane.xlu0 %5209
        %v5211 = vsel %vm1029, %v5205, 0.0
        %5212 = vadd.xlane.f32.xlu0 %v5211
        %v5213 = vpop.xlane.xlu0 %5212
        %v5214 = vsel %vm1029, %v5206, 0.0
        %5215 = vadd.xlane.f32.xlu0 %v5214
        %v5216 = vpop.xlane.xlu0 %5215
        %v5217 = vsel %vm1029, %v5207, 0.0
        %5218 = vadd.xlane.f32.xlu0 %v5217
        %v5219 = vpop.xlane.xlu0 %5218
        %v5220 = vmul.f32 %v5210, %v2203
        %v5221 = vmul.f32 %v5213, %v2203
        %v5222 = vmul.f32 %v5216, %v2203
        %v5223 = vmul.f32 %v5219, %v2203
        %v5224 = vsub.f32 %v5204, %v5220
        %v5225 = vsub.f32 %v5205, %v5221
        %v5226 = vsub.f32 %v5206, %v5222
        %v5227 = vsub.f32 %v5207, %v5223
        %v5228 = vmul.f32 %v5224, %v5224
        %v5229 = vmul.f32 %v5225, %v5225
        %v5230 = vmul.f32 %v5226, %v5226
        %v5231 = vmul.f32 %v5227, %v5227
        %v5232 = vsel %vm1029, %v5228, 0.0
        %5233 = vadd.xlane.f32.xlu0 %v5232
        %v5234 = vpop.xlane.xlu0 %5233
        %v5235 = vsel %vm1029, %v5229, 0.0
        %5236 = vadd.xlane.f32.xlu0 %v5235
        %v5237 = vpop.xlane.xlu0 %5236
        %v5238 = vsel %vm1029, %v5230, 0.0
        %5239 = vadd.xlane.f32.xlu0 %v5238
        %v5240 = vpop.xlane.xlu0 %5239
        %v5241 = vsel %vm1029, %v5231, 0.0
        %5242 = vadd.xlane.f32.xlu0 %v5241
        %v5243 = vpop.xlane.xlu0 %5242
        %v5244 = vmul.f32 %v5234, %v2203
        %v5245 = vmul.f32 %v5237, %v2203
        %v5246 = vmul.f32 %v5240, %v2203
        %v5247 = vmul.f32 %v5243, %v2203
        %v5248 = vadd.f32 %v5244, 1e-05
        %v5249 = vadd.f32 %v5245, 1e-05
        %v5250 = vadd.f32 %v5246, 1e-05
        %v5251 = vadd.f32 %v5247, 1e-05
        %v5252 = vrsqrt.pop %v5248
        %v5253 = vrsqrt.pop %v5249
        %v5254 = vrsqrt.pop %v5250
        %v5255 = vrsqrt.pop %v5251
        %v5256 = vmul.f32 %v5224, %v5252
        %v5257 = vmul.f32 %v5225, %v5253
        %v5258 = vmul.f32 %v5226, %v5254
        %v5259 = vmul.f32 %v5227, %v5255
        %v5260 = vlaneseq
        %v5261 = vshrl.u32 %v5260, 7
        %v5262 = vsub.s32 0, %v5261
        %v5263 = vrot.slane %v4275, %v5262
        %v5264 = vmul.f32 %v5256, %v5263
        %v5265 = vmul.f32 %v5257, %v5263
        %v5266 = vmul.f32 %v5258, %v5263
        %v5267 = vmul.f32 %v5259, %v5263
        %v5268 = vlaneseq
        %v5269 = vshrl.u32 %v5268, 7
        %v5270 = vsub.s32 0, %v5269
        %v5271 = vrot.slane %v4276, %v5270
        %v5272 = vadd.f32 %v5264, %v5271
        %v5273 = vadd.f32 %v5265, %v5271
        %v5274 = vadd.f32 %v5266, %v5271
        %v5275 = vadd.f32 %v5267, %v5271
        %5276 = vst.msk [vmem:[%s872] sm:$0xff] %vm1029, %v5272
        %5277 = vst.msk [vmem:[%s872 + $0x8] sm:$0xff] %vm1029, %v5273
        %5278 = vst.msk [vmem:[%s872 + $0x10] sm:$0xff] %vm1029, %v5274
        %5279 = vst.msk [vmem:[%s872 + $0x18] sm:$0xff] %vm1029, %v5275
        %5280 = vst.msk [vmem:[%s879] sm:$0xff] %vm1029, %v2478
        %5281 = vst.msk [vmem:[%s879 + $0x8] sm:$0xff] %vm1029, %v2479
        %5282 = vst.msk [vmem:[%s879 + $0x10] sm:$0xff] %vm1029, %v2480
        %5283 = vst.msk [vmem:[%s879 + $0x18] sm:$0xff] %vm1029, %v2481
        %5284 = vst.msk [vmem:[%s886] sm:$0xff] %vm1029, %v4267
        %5285 = vst.msk [vmem:[%s886 + $0x8] sm:$0xff] %vm1029, %v4268
        %5286 = vst.msk [vmem:[%s886 + $0x10] sm:$0xff] %vm1029, %v4269
        %5287 = vst.msk [vmem:[%s886 + $0x18] sm:$0xff] %vm1029, %v4270
        %5288 = vst.msk [vmem:[%s939] sm:$0xff] %vm1790, %v1936
        %5289 = vst.msk [vmem:[%s939 + $0x8] sm:$0xff] %vm1790, %v1938
        %5290 = vst.msk [vmem:[%s939 + $0x10] sm:$0xff] %vm1790, %v1940
        %5291 = vst.msk [vmem:[%s939 + $0x18] sm:$0xff] %vm1790, %v1942
        %5292 = vst.msk [vmem:[%s939 + $0x20] sm:$0xff] %vm1790, %v1944
        %5293 = vst.msk [vmem:[%s939 + $0x28] sm:$0xff] %vm1790, %v1946
        %5294 = vst.msk [vmem:[%s939 + $0x30] sm:$0xff] %vm1790, %v1948
        %5295 = vst.msk [vmem:[%s939 + $0x38] sm:$0xff] %vm1790, %v1950
        %5296 = vst.msk [vmem:[%s939 + $0x40] sm:$0xff] %vm1790, %v1952
        %5297 = vst.msk [vmem:[%s939 + $0x48] sm:$0xff] %vm1790, %v1954
        %5298 = vst.msk [vmem:[%s939 + $0x50] sm:$0xff] %vm1790, %v1956
        %5299 = vst.msk [vmem:[%s939 + $0x58] sm:$0xff] %vm1790, %v1958
        %5300 = vst.msk [vmem:[%s939 + $0x60] sm:$0xff] %vm1790, %v1960
        %5301 = vst.msk [vmem:[%s939 + $0x68] sm:$0xff] %vm1790, %v1962
        %5302 = vst.msk [vmem:[%s939 + $0x70] sm:$0xff] %vm1790, %v1964
        %5303 = vst.msk [vmem:[%s939 + $0x78] sm:$0xff] %vm1790, %v1966
        %5304 = vst.msk [vmem:[%s946] sm:$0xff] %vm1790, %v3726
        %5305 = vst.msk [vmem:[%s946 + $0x8] sm:$0xff] %vm1790, %v3728
        %5306 = vst.msk [vmem:[%s946 + $0x10] sm:$0xff] %vm1790, %v3730
        %5307 = vst.msk [vmem:[%s946 + $0x18] sm:$0xff] %vm1790, %v3732
        %5308 = vst.msk [vmem:[%s946 + $0x20] sm:$0xff] %vm1790, %v3734
        %5309 = vst.msk [vmem:[%s946 + $0x28] sm:$0xff] %vm1790, %v3736
        %5310 = vst.msk [vmem:[%s946 + $0x30] sm:$0xff] %vm1790, %v3738
        %5311 = vst.msk [vmem:[%s946 + $0x38] sm:$0xff] %vm1790, %v3740
        %5312 = vst.msk [vmem:[%s946 + $0x40] sm:$0xff] %vm1790, %v3742
        %5313 = vst.msk [vmem:[%s946 + $0x48] sm:$0xff] %vm1790, %v3744
        %5314 = vst.msk [vmem:[%s946 + $0x50] sm:$0xff] %vm1790, %v3746
        %5315 = vst.msk [vmem:[%s946 + $0x58] sm:$0xff] %vm1790, %v3748
        %5316 = vst.msk [vmem:[%s946 + $0x60] sm:$0xff] %vm1790, %v3750
        %5317 = vst.msk [vmem:[%s946 + $0x68] sm:$0xff] %vm1790, %v3752
        %5318 = vst.msk [vmem:[%s946 + $0x70] sm:$0xff] %vm1790, %v3754
        %5319 = vst.msk [vmem:[%s946 + $0x78] sm:$0xff] %vm1790, %v3756
        %s5320 = sand.u32 %s556, 1
        %s5321 = scalar_lea.sflag [#allocation3], %s5320
        %s5322 = sand.u32 %s556, 1
        %s5323 = smul.addr %s5322, 32
        %s5324 = scalar_lea.vmem [#allocation2], %s5323
        %s5325 = sand.u32 %s45, 1
        %s5326 = scalar_lea.sflag [#allocation5], %s5325
        %s5327 = sand.u32 %s582, 1
        %s5328 = smul.addr %s5327, 32
        %s5329 = scalar_lea.vmem [#allocation4], %s5328
        %s5330 = sand.u32 %s45, 1
        %s5331 = scalar_lea.sflag [#allocation5], %s5330
        %s5332 = sand.u32 %s608, 1
        %s5333 = smul.addr %s5332, 32
        %s5334 = scalar_lea.vmem [#allocation6], %s5333
        %s5335 = smul.u32 2, %s45
        %p5336 = scmp.lt.s32.totalorder %s5335, 3
        %s5337 = scalar_select %p5336, %s5335, 3
        %s5338 = smul.addr %s5337, 8
        %s5339 = smul.addr %s5338, 8
        %s5340 = scalar_lea.vmem %s26, %s5339
        %s5341 = smul.u32 2, %s45
        %p5342 = scmp.lt.s32.totalorder %s5341, 3
        %s5343 = scalar_select %p5342, %s5341, 3
        %s5344 = smul.addr %s5343, 8
        %s5345 = smul.addr %s5344, 8
        %s5346 = scalar_lea.vmem %s27, %s5345
        // Predicated region
        $region113: #{tpu_custom_call.1} parent=111 // pred_check
          %p5347 = pneg %p566
        $region114: #{tpu_custom_call.1} parent=111 // pred_check_branch
          %5349 = sbr.rel (%p5347) target = $region116
        $region115: #{tpu_custom_call.1} parent=111 // pred_region
          %s5350 = smul.u32 2, %s45
          %s5352 = ssub.s32 512, 512
          %5353 = vsyncadd %s5321, %s5352
          %s5354 = smul.addr %s5350, 2
          %s5355 = smul.addr %s5354, 128
          %s5356 = scalar_lea.hbm %s23, %s5355
          %s5357 = sshll.u32 %s5324, 4
          %s5358 = int_to_ptr.vmem [resolvable:$true] %s5357
          %5363 = dma.vmem_to_hbm [thread:$0]  %s5358, 512, %s5356, %s5321, 128, 128, 8
        $region116: #{tpu_custom_call.1} parent=111 // pred_fallthru
          _
        // Predicated region
        $region117: #{tpu_custom_call.1} parent=111 // pred_check
          %p5364 = pneg %p592
        $region118: #{tpu_custom_call.1} parent=111 // pred_check_branch
          %5366 = sbr.rel (%p5364) target = $region120
        $region119: #{tpu_custom_call.1} parent=111 // pred_region
          %s5367 = smul.u32 2, %s45
          %s5369 = ssub.s32 512, 512
          %5370 = vsyncadd %s5326, %s5369
          %s5371 = smul.addr %s5367, 2
          %s5372 = smul.addr %s5371, 128
          %s5373 = scalar_lea.hbm %s24, %s5372
          %s5374 = sshll.u32 %s5329, 4
          %s5375 = int_to_ptr.vmem [resolvable:$true] %s5374
          %5380 = dma.vmem_to_hbm [thread:$0]  %s5375, 512, %s5373, %s5326, 128, 128, 8
        $region120: #{tpu_custom_call.1} parent=111 // pred_fallthru
          _
        // Predicated region
        $region121: #{tpu_custom_call.1} parent=111 // pred_check
          %p5381 = pneg %p618
        $region122: #{tpu_custom_call.1} parent=111 // pred_check_branch
          %5383 = sbr.rel (%p5381) target = $region124
        $region123: #{tpu_custom_call.1} parent=111 // pred_region
          %s5384 = smul.u32 2, %s45
          %s5386 = ssub.s32 512, 512
          %5387 = vsyncadd %s5331, %s5386
          %s5388 = smul.addr %s5384, 2
          %s5389 = smul.addr %s5388, 128
          %s5390 = scalar_lea.hbm %s25, %s5389
          %s5391 = sshll.u32 %s5334, 4
          %s5392 = int_to_ptr.vmem [resolvable:$true] %s5391
          %5397 = dma.vmem_to_hbm [thread:$0]  %s5392, 512, %s5390, %s5331, 128, 128, 8
        $region124: #{tpu_custom_call.1} parent=111 // pred_fallthru
          _
        // Predicated region
        $region125: #{tpu_custom_call.1} parent=111 // pred_check
          %p5398 = pneg %p644
        $region126: #{tpu_custom_call.1} parent=111 // pred_check_branch
          %5400 = sbr.rel (%p5398) target = $region128
        $region127: #{tpu_custom_call.1} parent=111 // pred_region
          %s5401 = smul.u32 2, %s45
        $region128: #{tpu_custom_call.1} parent=111 // pred_fallthru
          _
        // Predicated region
        $region129: #{tpu_custom_call.1} parent=111 // pred_check
          %p5402 = pneg %p670
        $region130: #{tpu_custom_call.1} parent=111 // pred_check_branch
          %5404 = sbr.rel (%p5402) target = $region132
        $region131: #{tpu_custom_call.1} parent=111 // pred_region
          %s5405 = smul.u32 2, %s45
        $region132: #{tpu_custom_call.1} parent=111 // pred_fallthru
          _
      $region112: #{tpu_custom_call.1} parent=5 // pred_fallthru
        _
      %p5406 = scmp.le.s32.totalorder 2, %s40
      // Predicated region
      $region133: #{tpu_custom_call.1} parent=5 // pred_check
        %p5407 = pneg %p5406
      $region134: #{tpu_custom_call.1} parent=5 // pred_check_branch
        %5409 = sbr.rel (%p5407) target = $region136
      $region135: #{tpu_custom_call.1} parent=5 // pred_region
        %s5410 = ssub.s32 %s40, 2
        // Predicated region
        $region137: #{tpu_custom_call.1} parent=135 // pred_check
          %p5411 = pneg %p572
        $region138: #{tpu_custom_call.1} parent=135 // pred_check_branch
          %5413 = sbr.rel (%p5411) target = $region140
        $region139: #{tpu_custom_call.1} parent=135 // pred_region
          %s5414 = sand.u32 %s557, 1
          %s5415 = scalar_lea.sflag [#allocation3], %s5414
          %s5416 = sand.u32 %s557, 1
          %s5417 = smul.addr %s5416, 32
          %s5418 = scalar_lea.vmem [#allocation2], %s5417
          %5419 = dma.done %s5415, 512
        $region140: #{tpu_custom_call.1} parent=135 // pred_fallthru
          _
        // Predicated region
        $region141: #{tpu_custom_call.1} parent=135 // pred_check
          %p5420 = pneg %p598
        $region142: #{tpu_custom_call.1} parent=135 // pred_check_branch
          %5422 = sbr.rel (%p5420) target = $region144
        $region143: #{tpu_custom_call.1} parent=135 // pred_region
          %s5423 = sand.u32 %s46, 1
          %s5424 = scalar_lea.sflag [#allocation5], %s5423
          %s5425 = sand.u32 %s583, 1
          %s5426 = smul.addr %s5425, 32
          %s5427 = scalar_lea.vmem [#allocation4], %s5426
          %5428 = dma.done %s5424, 512
        $region144: #{tpu_custom_call.1} parent=135 // pred_fallthru
          _
        // Predicated region
        $region145: #{tpu_custom_call.1} parent=135 // pred_check
          %p5429 = pneg %p624
        $region146: #{tpu_custom_call.1} parent=135 // pred_check_branch
          %5431 = sbr.rel (%p5429) target = $region148
        $region147: #{tpu_custom_call.1} parent=135 // pred_region
          %s5432 = sand.u32 %s46, 1
          %s5433 = scalar_lea.sflag [#allocation5], %s5432
          %s5434 = sand.u32 %s609, 1
          %s5435 = smul.addr %s5434, 32
          %s5436 = scalar_lea.vmem [#allocation6], %s5435
          %5437 = dma.done %s5433, 512
        $region148: #{tpu_custom_call.1} parent=135 // pred_fallthru
          _
        // Predicated region
        $region149: #{tpu_custom_call.1} parent=135 // pred_check
          %p5438 = pneg %p650
        $region150: #{tpu_custom_call.1} parent=135 // pred_check_branch
          %5440 = sbr.rel (%p5438) target = $region152
        $region151: #{tpu_custom_call.1} parent=135 // pred_region
          %s5441 = smul.u32 2, %s46
          %p5442 = scmp.lt.s32.totalorder %s5441, 3
          %s5443 = scalar_select %p5442, %s5441, 3
          %s5444 = smul.addr %s5443, 8
          %s5445 = smul.addr %s5444, 8
          %s5446 = scalar_lea.vmem %s26, %s5445
        $region152: #{tpu_custom_call.1} parent=135 // pred_fallthru
          _
        // Predicated region
        $region153: #{tpu_custom_call.1} parent=135 // pred_check
          %p5447 = pneg %p676
        $region154: #{tpu_custom_call.1} parent=135 // pred_check_branch
          %5449 = sbr.rel (%p5447) target = $region156
        $region155: #{tpu_custom_call.1} parent=135 // pred_region
          %s5450 = smul.u32 2, %s46
          %p5451 = scmp.lt.s32.totalorder %s5450, 3
          %s5452 = scalar_select %p5451, %s5450, 3
          %s5453 = smul.addr %s5452, 8
          %s5454 = smul.addr %s5453, 8
          %s5455 = scalar_lea.vmem %s27, %s5454
        $region156: #{tpu_custom_call.1} parent=135 // pred_fallthru
          _
      $region136: #{tpu_custom_call.1} parent=5 // pred_fallthru
        _
    $region6: #{tpu_custom_call.1} parent=1 // loop_footer
      %s44 = sadd.s32 1, %s40
    $region7: #{tpu_custom_call.1} parent=1 // loop_footer_branch
      %39 = sbr.rel target = $region3
    $region8: #{tpu_custom_call.1} parent=1 // loop_exit
      _
    %5456 = vsyncpa [#allocation3], 1
    %s5457 = scalar_lea.sflag [#allocation3], 1
    %5458 = vsyncpa %s5457, 1
    %5459 = vsyncpa [#allocation5], 1
    %s5460 = scalar_lea.sflag [#allocation5], 1
    %5461 = vsyncpa %s5460, 1

</llo_original>
